<compile_context>
chip_gen: v7x
topology: tpu7x:2x2x1
jax: 0.10.0
libtpu: 0.0.40
codegen_flags: <defaults>
</compile_context>

<pallas_src>
import functools

import jax
import jax.numpy as jnp
from jax import lax
from jax.experimental import pallas as pl
from jax.experimental.pallas import tpu as pltpu

# Widths through the network: 800 -> conv(s2) 400 -> pool(s2) 200 -> 100 -> 50 -> 25 -> 13.
_W_IN = 800
_WC1, _WP1 = 400, 200
_WC2, _WP2 = 100, 50
_WC3, _WP3 = 25, 13
_C1, _C2, _C3 = 32, 64, 128


# ----------------------------- in-kernel helpers -----------------------------


def _conv7_mxu(a_ref, w_ref, b_row, wc):
    """7-tap stride-2 1-D conv + bias + ReLU via 7 accumulated MXU matmuls.

    a_ref: padded f32 scratch; input position j lives at scratch row 8 + j, rows 5..7 and
    8+Win, 9+Win are zero padding.  Output o, tap t reads input 2o + t - 3, i.e. scratch row
    2o + (t + 5) -> strided slice (start t+5, stride 2, length wc).
    w_ref: (7, Cin, Cout) bf16.  b_row: (1, Cout) f32.
    """
    acc = None
    for t in range(7):
        tap = a_ref[pl.ds(t + 5, wc, 2), :].astype(jnp.bfloat16)     # (wc, Cin)
        term = jnp.dot(tap, w_ref[t], preferred_element_type=jnp.float32)
        acc = term if acc is None else acc + term
    return jnp.maximum(acc + b_row, 0.0)


def _maxpool3s2(y, y_scr, wp):
    """MaxPool(3, stride 2, pad 1) of the ReLU'd conv output y: (wc, C) -> (wp, C).

    y_scr rows: 7 = left pad (zero), 8.. = y, 8+wc = right pad (zero, read only for odd wc).
    P[p] = max(Y[2p-1], Y[2p], Y[2p+1]); ReLU >= 0 makes zero padding equivalent to -inf.
    """
    y_scr[8:8 + y.shape[0], :] = y
    prev = y_scr[pl.ds(7, wp, 2), :]
    even = y_scr[pl.ds(8, wp, 2), :]
    odd = y_scr[pl.ds(9, wp, 2), :]
    return jnp.maximum(jnp.maximum(prev, even), odd)


# --------------------------------- the kernel --------------------------------


def _cnn_fused_kernel(x_ref, w1_ref, b1_ref, w2_ref, b2_ref, w3_ref, b3_ref,
                      wfc_ref, bfc_ref, wout_ref, bout_ref, o_ref,
                      a1_ref, a2_ref, a3_ref, y1_ref, y2_ref, y3_ref, hf_ref,
                      *, block_b):
    f32 = jnp.float32

    # Zero only the padding rows the convs / pools actually read (every grid step, so the
    # kernel is correct when the "parallel" batch axis is split across TensorCores; the data
    # rows are fully rewritten per sample below).
    a1_ref[6:8, :] = jnp.zeros((2, 2), f32)
    a1_ref[408:409, :] = jnp.zeros((1, 2), f32)
    a2_ref[5:8, :] = jnp.zeros((3, _C1), f32)
    a2_ref[208:210, :] = jnp.zeros((2, _C1), f32)
    a3_ref[5:8, :] = jnp.zeros((3, _C2), f32)
    a3_ref[58:60, :] = jnp.zeros((2, _C2), f32)
    y1_ref[7:8, :] = jnp.zeros((1, _C1), f32)
    y2_ref[7:8, :] = jnp.zeros((1, _C2), f32)
    y3_ref[7:8, :] = jnp.zeros((1, _C3), f32)
    y3_ref[33:34, :] = jnp.zeros((1, _C3), f32)

    for s in range(block_b):
        # ---- stage 1: conv1 (1 -> 32, k7, s2, p3) + ReLU, on the VPU (Cin == 1) ----
        a1_ref[8:8 + _WC1, :] = x_ref[s]            # row j = [x[2j], x[2j+1]] pairs
        acc = None
        # Output o, tap t reads x[2o + t - 3]; with the (even, odd) pairing that is
        # row 8 + o + {-2,-1,-1,0,0,1,1}, column {1,0,1,0,1,0,1} for t = 0..6.
        for t, (r0, col) in enumerate(
                ((6, 1), (7, 0), (7, 1), (8, 0), (8, 1), (9, 0), (9, 1))):
            tap = a1_ref[r0:r0 + _WC1, col:col + 1]              # (400, 1) f32
            term = tap * w1_ref[t:t + 1, :]                      # -> (400, 32)
            acc = term if acc is None else acc + term
        y1 = jnp.maximum(acc + b1_ref[...], 0.0)                 # (400, 32)
        p1 = _maxpool3s2(y1, y1_ref, _WP1)                       # (200, 32)

        # ---- stage 2: conv2 (32 -> 64) + ReLU + pool ----
        a2_ref[8:8 + 2 * _WC2, :] = p1
        y2 = _conv7_mxu(a2_ref, w2_ref, b2_ref[...], _WC2)       # (100, 64)
        p2 = _maxpool3s2(y2, y2_ref, _WP2)                       # (50, 64)

        # ---- stage 3: conv3 (64 -> 128) + ReLU + pool ----
        a3_ref[8:8 + 2 * _WC3, :] = p2
        y3 = _conv7_mxu(a3_ref, w3_ref, b3_ref[...], _WC3)       # (25, 128)
        p3 = _maxpool3s2(y3, y3_ref, _WP3)                       # (13, 128)

        # ---- flatten in (w-major, c-minor) order; matching permutation is folded into wfc ----
        for w in range(_WP3):
            hf_ref[s:s + 1, w * _C3:(w + 1) * _C3] = p3[w:w + 1, :]

    # ---- fc + ReLU + out + sigmoid, once per batch block ----
    h = jnp.dot(hf_ref[...].astype(jnp.bfloat16), wfc_ref[...],
                preferred_element_type=jnp.float32)              # (block_b, 64)
    h = jnp.maximum(h + bfc_ref[...], 0.0)
    yo = jnp.sum(h * wout_ref[...], axis=-1, keepdims=True) + bout_ref[...]
    o_ref[0] = jax.nn.sigmoid(yo)                                # (block_b, 1)


# --------------------------------- wrapper ------------------------------------


def _pick_block_b(batch):
    """Largest small divisor of batch that still leaves >= 2 grid steps (v7x megacore)."""
    for cand in (16, 8, 4, 2):
        if batch % cand == 0 and batch // cand >= 2:
            return cand
    return 1


def cnn_forward_pallas(x_nchw, pp, *, block_b=None):
    b = x_nchw.shape[0]
    assert x_nchw.shape[1:3] == (1, 1) and x_nchw.shape[-1] == _W_IN, (
        "fc(128*13) requires a (B, 1, 1, 800) input")
    if block_b is None:
        block_b = _pick_block_b(b)
    assert b % block_b == 0
    nb = b // block_b
    # Even/odd pairing of the width axis: row j = [x[2j], x[2j+1]] (a free reshape).
    x_pairs = x_nchw.reshape(b, _WC1, 2).astype(jnp.float32)

    kernel = functools.partial(_cnn_fused_kernel, block_b=block_b)
    flops = 2 * b * (7 * _WC1 * _C1 + 7 * _WC2 * _C1 * _C2 + 7 * _WC3 * _C2 * _C3
                     + _WP3 * _C3 * 64 + 64)
    bytes_accessed = (x_pairs.size * 4 + b * 4
                      + sum(int(v.size) * v.dtype.itemsize for v in pp.values()))

    out = pl.pallas_call(
        kernel,
        out_shape=jax.ShapeDtypeStruct((nb, block_b, 1), jnp.float32),
        grid=(nb,),
        in_specs=[
            pl.BlockSpec((block_b, _WC1, 2), lambda i: (i, 0, 0)),
            pl.BlockSpec((7, _C1), lambda i: (0, 0)),
            pl.BlockSpec((1, _C1), lambda i: (0, 0)),
            pl.BlockSpec((7, _C1, _C2), lambda i: (0, 0, 0)),
            pl.BlockSpec((1, _C2), lambda i: (0, 0)),
            pl.BlockSpec((7, _C2, _C3), lambda i: (0, 0, 0)),
            pl.BlockSpec((1, _C3), lambda i: (0, 0)),
            pl.BlockSpec((_WP3 * _C3, 64), lambda i: (0, 0)),
            pl.BlockSpec((1, 64), lambda i: (0, 0)),
            pl.BlockSpec((1, 64), lambda i: (0, 0)),
            pl.BlockSpec((1, 1), lambda i: (0, 0)),
        ],
        out_specs=pl.BlockSpec((1, block_b, 1), lambda i: (i, 0, 0)),
        scratch_shapes=[
            pltpu.VMEM((416, 2), jnp.float32),              # padded stage-1 input (pairs)
            pltpu.VMEM((216, _C1), jnp.float32),            # padded stage-2 input
            pltpu.VMEM((64, _C2), jnp.float32),             # padded stage-3 input
            pltpu.VMEM((408, _C1), jnp.float32),            # stage-1 conv+ReLU (pool staging)
            pltpu.VMEM((112, _C2), jnp.float32),            # stage-2 conv+ReLU
            pltpu.VMEM((40, _C3), jnp.float32),             # stage-3 conv+ReLU
            pltpu.VMEM((block_b, _WP3 * _C3), jnp.float32),  # flattened fc input
        ],
        compiler_params=pltpu.CompilerParams(dimension_semantics=("parallel",)),
        cost_estimate=pl.CostEstimate(flops=int(flops), transcendentals=int(b),
                                      bytes_accessed=int(bytes_accessed)),
    )(x_pairs, pp["w1"], pp["b1"], pp["w2"], pp["b2"], pp["w3"], pp["b3"],
      pp["wfc"], pp["bfc"], pp["wout"], pp["bout"])
    return out.reshape(b, 1)


# --------------------------- weight prep (hoisted) ----------------------------


def prepare_params(p):
    """One-time layout prep: drop dead 7x7 H taps (H==1, pad=3 -> only kernel row 3 sees
    data), tap-major 1-D conv tensors, NCHW-flatten permutation folded into wfc."""

    def conv_w_3d(w):
        # (Cout, Cin, 7, 7) -> (7, Cin, Cout), keeping only kernel row 3.
        return jnp.transpose(w[:, :, 3, :], (2, 1, 0)).astype(jnp.bfloat16)

    assert p["wout"].shape[0] == 1  # in-kernel out layer is a lane reduction (output_dim == 1)
    wfc = p["wfc"]                                        # (64, 128*13), cols = c*13 + w
    nh = wfc.shape[0]
    wfc_r = (wfc.reshape(nh, _C3, _WP3).transpose(2, 1, 0)   # rows reordered to w*128 + c
             .reshape(_WP3 * _C3, nh).astype(jnp.bfloat16))

    return {
        "w1": p["w1"][:, 0, 3, :].T.astype(jnp.float32),     # (7, 32) f32 (VPU path)
        "b1": p["b1"].reshape(1, -1).astype(jnp.float32),
        "w2": conv_w_3d(p["w2"]), "b2": p["b2"].reshape(1, -1).astype(jnp.float32),
        "w3": conv_w_3d(p["w3"]), "b3": p["b3"].reshape(1, -1).astype(jnp.float32),
        "wfc": wfc_r, "bfc": p["bfc"].reshape(1, -1).astype(jnp.float32),
        "wout": p["wout"].astype(jnp.float32).reshape(1, -1),  # (1, 64)
        "bout": p["bout"].reshape(1, -1).astype(jnp.float32),
    }


# ------------------------------ pure-JAX reference ----------------------------


def cnn_forward_ref(x_nchw, p):
    """Pure-JAX reference (NCHW, matches torch semantics)."""

    def conv(x, w, b):
        y = lax.conv_general_dilated(
            x, w, (2, 2), ((3, 3), (3, 3)),
            dimension_numbers=("NCHW", "OIHW", "NCHW"),
        )
        return jax.nn.relu(y + b.reshape(1, -1, 1, 1))

    def pool(x):
        return lax.reduce_window(
            x, -jnp.inf, lax.max, (1, 1, 3, 3), (1, 1, 2, 2),
            ((0, 0), (0, 0), (1, 1), (1, 1)),
        )

    h = pool(conv(x_nchw, p["w1"], p["b1"]))
    h = pool(conv(h, p["w2"], p["b2"]))
    h = pool(conv(h, p["w3"], p["b3"]))
    h = h.reshape(h.shape[0], -1)
    h = jax.nn.relu(h @ p["wfc"].T + p["bfc"])
    return jax.nn.sigmoid(h @ p["wout"].T + p["bout"])


def init_params(key, output_dim=1):
    ks = jax.random.split(key, 10)

    def w(k, shape, fan_in):
        return jax.random.normal(k, shape, jnp.float32) / jnp.sqrt(float(fan_in))

    return {
        "w1": w(ks[0], (32, 1, 7, 7), 1 * 49),
        "b1": 0.01 * jax.random.normal(ks[1], (32,), jnp.float32),
        "w2": w(ks[2], (64, 32, 7, 7), 32 * 49),
        "b2": 0.01 * jax.random.normal(ks[3], (64,), jnp.float32),
        "w3": w(ks[4], (128, 64, 7, 7), 64 * 49),
        "b3": 0.01 * jax.random.normal(ks[5], (128,), jnp.float32),
        "wfc": w(ks[6], (64, 128 * 13), 128 * 13),
        "bfc": 0.01 * jax.random.normal(ks[7], (64,), jnp.float32),
        "wout": w(ks[8], (output_dim, 64), 64),
        "bout": 0.01 * jax.random.normal(ks[9], (output_dim,), jnp.float32),
    }


if __name__ == "__main__":
    key = jax.random.PRNGKey(0)
    kx, kp = jax.random.split(key)

    # fc expects 128*13 inputs => a 1-row input of width 800:
    # 800 -> 400 -> 200 -> 100 -> 50 -> 25 -> 13 through three conv(s2)+pool(s2) stages.
    B, W = 2, 800
    x = jax.random.normal(kx, (B, 1, 1, W), jnp.float32)
    params = init_params(kp, output_dim=1)
    pp = prepare_params(params)          # weight layout work done once, outside the forward

    fwd = jax.jit(cnn_forward_pallas)
    y = jax.block_until_ready(fwd(x, pp))
    assert y.shape == (B, 1)

    y_ref = cnn_forward_ref(x, params)
    if not jnp.allclose(y, y_ref, atol=2e-2, rtol=2e-2):
        raise AssertionError(f"mismatch vs reference: {y} vs {y_ref}")

    print("KERNEL_OK")
</pallas_src>

<mosaic_0001>
module attributes {stable_mosaic.version = 11 : i64} {
  func.func @_cnn_fused_kernel(%arg0: i32, %arg1: memref<1x400x2xf32, #tpu.memory_space<vmem>>, %arg2: memref<7x32xf32, #tpu.memory_space<vmem>>, %arg3: memref<1x32xf32, #tpu.memory_space<vmem>>, %arg4: memref<7x32x64xbf16, #tpu.memory_space<vmem>>, %arg5: memref<1x64xf32, #tpu.memory_space<vmem>>, %arg6: memref<7x64x128xbf16, #tpu.memory_space<vmem>>, %arg7: memref<1x128xf32, #tpu.memory_space<vmem>>, %arg8: memref<1664x64xbf16, #tpu.memory_space<vmem>>, %arg9: memref<1x64xf32, #tpu.memory_space<vmem>>, %arg10: memref<1x64xf32, #tpu.memory_space<vmem>>, %arg11: memref<1x1xf32, #tpu.memory_space<vmem>>, %arg12: memref<1x1x1xf32, #tpu.memory_space<vmem>>, %arg13: memref<416x2xf32, #tpu.memory_space<vmem>>, %arg14: memref<216x32xf32, #tpu.memory_space<vmem>>, %arg15: memref<64x64xf32, #tpu.memory_space<vmem>>, %arg16: memref<408x32xf32, #tpu.memory_space<vmem>>, %arg17: memref<112x64xf32, #tpu.memory_space<vmem>>, %arg18: memref<40x128xf32, #tpu.memory_space<vmem>>, %arg19: memref<1x1664xf32, #tpu.memory_space<vmem>>) attributes {dimension_semantics = [#tpu.dimension_semantics<parallel>], iteration_bounds = array<i64: 2>, scalar_prefetch = 0 : i64, scratch_operands = 7 : i64, tpu.core_type = #tpu.core_type<tc>, window_params = [{transform_indices = @transform_0, window_bounds = array<i64: 1, 400, 2>}, {pipeline_mode = #tpu.pipeline_mode<synchronous>, transform_indices = @transform_1, window_bounds = array<i64: 7, 32>}, {pipeline_mode = #tpu.pipeline_mode<synchronous>, transform_indices = @transform_2, window_bounds = array<i64: 1, 32>}, {pipeline_mode = #tpu.pipeline_mode<synchronous>, transform_indices = @transform_3, window_bounds = array<i64: 7, 32, 64>}, {pipeline_mode = #tpu.pipeline_mode<synchronous>, transform_indices = @transform_4, window_bounds = array<i64: 1, 64>}, {pipeline_mode = #tpu.pipeline_mode<synchronous>, transform_indices = @transform_5, window_bounds = array<i64: 7, 64, 128>}, {pipeline_mode = #tpu.pipeline_mode<synchronous>, transform_indices = @transform_6, window_bounds = array<i64: 1, 128>}, {pipeline_mode = #tpu.pipeline_mode<synchronous>, transform_indices = @transform_7, window_bounds = array<i64: 1664, 64>}, {pipeline_mode = #tpu.pipeline_mode<synchronous>, transform_indices = @transform_8, window_bounds = array<i64: 1, 64>}, {pipeline_mode = #tpu.pipeline_mode<synchronous>, transform_indices = @transform_9, window_bounds = array<i64: 1, 64>}, {pipeline_mode = #tpu.pipeline_mode<synchronous>, transform_indices = @transform_10, window_bounds = array<i64: 1, 1>}, {transform_indices = @transform_11, window_bounds = array<i64: 1, 1, 1>}]} {
    %cst = arith.constant 0.000000e+00 : f32
    %0 = vector.broadcast %cst : f32 to vector<2x2xf32>
    %c6 = arith.constant 6 : index
    %c0 = arith.constant 0 : index
    %1 = vector.load %arg13[%c6, %c0] : memref<416x2xf32, #tpu.memory_space<vmem>>, vector<2x2xf32>
    tpu.vector_store %arg13[%c6, %c0], %0 {strides = array<i32>} : memref<416x2xf32, #tpu.memory_space<vmem>>, vector<2x2xf32>,
    %cst_0 = arith.constant 0.000000e+00 : f32
    %2 = vector.broadcast %cst_0 : f32 to vector<1x2xf32>
    %c408 = arith.constant 408 : index
    %c0_1 = arith.constant 0 : index
    %3 = vector.load %arg13[%c408, %c0_1] : memref<416x2xf32, #tpu.memory_space<vmem>>, vector<1x2xf32>
    tpu.vector_store %arg13[%c408, %c0_1], %2 {strides = array<i32>} : memref<416x2xf32, #tpu.memory_space<vmem>>, vector<1x2xf32>,
    %cst_2 = arith.constant 0.000000e+00 : f32
    %4 = vector.broadcast %cst_2 : f32 to vector<3x32xf32>
    %c5 = arith.constant 5 : index
    %c0_3 = arith.constant 0 : index
    %5 = vector.load %arg14[%c5, %c0_3] : memref<216x32xf32, #tpu.memory_space<vmem>>, vector<3x32xf32>
    tpu.vector_store %arg14[%c5, %c0_3], %4 {strides = array<i32>} : memref<216x32xf32, #tpu.memory_space<vmem>>, vector<3x32xf32>,
    %cst_4 = arith.constant 0.000000e+00 : f32
    %6 = vector.broadcast %cst_4 : f32 to vector<2x32xf32>
    %c208 = arith.constant 208 : index
    %c0_5 = arith.constant 0 : index
    %7 = vector.load %arg14[%c208, %c0_5] : memref<216x32xf32, #tpu.memory_space<vmem>>, vector<2x32xf32>
    tpu.vector_store %arg14[%c208, %c0_5], %6 {strides = array<i32>} : memref<216x32xf32, #tpu.memory_space<vmem>>, vector<2x32xf32>,
    %cst_6 = arith.constant 0.000000e+00 : f32
    %8 = vector.broadcast %cst_6 : f32 to vector<3x64xf32>
    %c5_7 = arith.constant 5 : index
    %c0_8 = arith.constant 0 : index
    %9 = vector.load %arg15[%c5_7, %c0_8] : memref<64x64xf32, #tpu.memory_space<vmem>>, vector<3x64xf32>
    tpu.vector_store %arg15[%c5_7, %c0_8], %8 {strides = array<i32>} : memref<64x64xf32, #tpu.memory_space<vmem>>, vector<3x64xf32>,
    %cst_9 = arith.constant 0.000000e+00 : f32
    %10 = vector.broadcast %cst_9 : f32 to vector<2x64xf32>
    %c58 = arith.constant 58 : index
    %c0_10 = arith.constant 0 : index
    %11 = vector.load %arg15[%c58, %c0_10] : memref<64x64xf32, #tpu.memory_space<vmem>>, vector<2x64xf32>
    tpu.vector_store %arg15[%c58, %c0_10], %10 {strides = array<i32>} : memref<64x64xf32, #tpu.memory_space<vmem>>, vector<2x64xf32>,
    %cst_11 = arith.constant 0.000000e+00 : f32
    %12 = vector.broadcast %cst_11 : f32 to vector<1x32xf32>
    %c7 = arith.constant 7 : index
    %c0_12 = arith.constant 0 : index
    %13 = vector.load %arg16[%c7, %c0_12] : memref<408x32xf32, #tpu.memory_space<vmem>>, vector<1x32xf32>
    tpu.vector_store %arg16[%c7, %c0_12], %12 {strides = array<i32>} : memref<408x32xf32, #tpu.memory_space<vmem>>, vector<1x32xf32>,
    %cst_13 = arith.constant 0.000000e+00 : f32
    %14 = vector.broadcast %cst_13 : f32 to vector<1x64xf32>
    %c7_14 = arith.constant 7 : index
    %c0_15 = arith.constant 0 : index
    %15 = vector.load %arg17[%c7_14, %c0_15] : memref<112x64xf32, #tpu.memory_space<vmem>>, vector<1x64xf32>
    tpu.vector_store %arg17[%c7_14, %c0_15], %14 {strides = array<i32>} : memref<112x64xf32, #tpu.memory_space<vmem>>, vector<1x64xf32>,
    %cst_16 = arith.constant 0.000000e+00 : f32
    %16 = vector.broadcast %cst_16 : f32 to vector<1x128xf32>
    %c7_17 = arith.constant 7 : index
    %c0_18 = arith.constant 0 : index
    %17 = vector.load %arg18[%c7_17, %c0_18] : memref<40x128xf32, #tpu.memory_space<vmem>>, vector<1x128xf32>
    tpu.vector_store %arg18[%c7_17, %c0_18], %16 {strides = array<i32>} : memref<40x128xf32, #tpu.memory_space<vmem>>, vector<1x128xf32>,
    %cst_19 = arith.constant 0.000000e+00 : f32
    %18 = vector.broadcast %cst_19 : f32 to vector<1x128xf32>
    %c33 = arith.constant 33 : index
    %c0_20 = arith.constant 0 : index
    %19 = vector.load %arg18[%c33, %c0_20] : memref<40x128xf32, #tpu.memory_space<vmem>>, vector<1x128xf32>
    tpu.vector_store %arg18[%c33, %c0_20], %18 {strides = array<i32>} : memref<40x128xf32, #tpu.memory_space<vmem>>, vector<1x128xf32>,
    %c0_21 = arith.constant 0 : index
    %c0_22 = arith.constant 0 : index
    %c0_23 = arith.constant 0 : index
    %20 = vector.load %arg1[%c0_21, %c0_22, %c0_23] : memref<1x400x2xf32, #tpu.memory_space<vmem>>, vector<1x400x2xf32>
    %21 = vector.shape_cast %20 : vector<1x400x2xf32> to vector<400x2xf32>
    %c8 = arith.constant 8 : index
    %c0_24 = arith.constant 0 : index
    %22 = vector.load %arg13[%c8, %c0_24] : memref<416x2xf32, #tpu.memory_space<vmem>>, vector<400x2xf32>
    tpu.vector_store %arg13[%c8, %c0_24], %21 {strides = array<i32>} : memref<416x2xf32, #tpu.memory_space<vmem>>, vector<400x2xf32>,
    %c6_25 = arith.constant 6 : index
    %c1 = arith.constant 1 : index
    %23 = vector.load %arg13[%c6_25, %c1] : memref<416x2xf32, #tpu.memory_space<vmem>>, vector<400x1xf32>
    %c0_26 = arith.constant 0 : index
    %c0_27 = arith.constant 0 : index
    %24 = vector.load %arg2[%c0_26, %c0_27] : memref<7x32xf32, #tpu.memory_space<vmem>>, vector<1x32xf32>
    %25 = vector.broadcast %23 : vector<400x1xf32> to vector<400x32xf32>
    %26 = vector.broadcast %24 : vector<1x32xf32> to vector<400x32xf32>
    %27 = arith.mulf %25, %26 : vector<400x32xf32>
    %c7_28 = arith.constant 7 : index
    %c0_29 = arith.constant 0 : index
    %28 = vector.load %arg13[%c7_28, %c0_29] : memref<416x2xf32, #tpu.memory_space<vmem>>, vector<400x1xf32>
    %c1_30 = arith.constant 1 : index
    %c0_31 = arith.constant 0 : index
    %29 = vector.load %arg2[%c1_30, %c0_31] : memref<7x32xf32, #tpu.memory_space<vmem>>, vector<1x32xf32>
    %30 = vector.broadcast %28 : vector<400x1xf32> to vector<400x32xf32>
    %31 = vector.broadcast %29 : vector<1x32xf32> to vector<400x32xf32>
    %32 = arith.mulf %30, %31 : vector<400x32xf32>
    %33 = arith.addf %27, %32 : vector<400x32xf32>
    %c7_32 = arith.constant 7 : index
    %c1_33 = arith.constant 1 : index
    %34 = vector.load %arg13[%c7_32, %c1_33] : memref<416x2xf32, #tpu.memory_space<vmem>>, vector<400x1xf32>
    %c2 = arith.constant 2 : index
    %c0_34 = arith.constant 0 : index
    %35 = vector.load %arg2[%c2, %c0_34] : memref<7x32xf32, #tpu.memory_space<vmem>>, vector<1x32xf32>
    %36 = vector.broadcast %34 : vector<400x1xf32> to vector<400x32xf32>
    %37 = vector.broadcast %35 : vector<1x32xf32> to vector<400x32xf32>
    %38 = arith.mulf %36, %37 : vector<400x32xf32>
    %39 = arith.addf %33, %38 : vector<400x32xf32>
    %c8_35 = arith.constant 8 : index
    %c0_36 = arith.constant 0 : index
    %40 = vector.load %arg13[%c8_35, %c0_36] : memref<416x2xf32, #tpu.memory_space<vmem>>, vector<400x1xf32>
    %c3 = arith.constant 3 : index
    %c0_37 = arith.constant 0 : index
    %41 = vector.load %arg2[%c3, %c0_37] : memref<7x32xf32, #tpu.memory_space<vmem>>, vector<1x32xf32>
    %42 = vector.broadcast %40 : vector<400x1xf32> to vector<400x32xf32>
    %43 = vector.broadcast %41 : vector<1x32xf32> to vector<400x32xf32>
    %44 = arith.mulf %42, %43 : vector<400x32xf32>
    %45 = arith.addf %39, %44 : vector<400x32xf32>
    %c8_38 = arith.constant 8 : index
    %c1_39 = arith.constant 1 : index
    %46 = vector.load %arg13[%c8_38, %c1_39] : memref<416x2xf32, #tpu.memory_space<vmem>>, vector<400x1xf32>
    %c4 = arith.constant 4 : index
    %c0_40 = arith.constant 0 : index
    %47 = vector.load %arg2[%c4, %c0_40] : memref<7x32xf32, #tpu.memory_space<vmem>>, vector<1x32xf32>
    %48 = vector.broadcast %46 : vector<400x1xf32> to vector<400x32xf32>
    %49 = vector.broadcast %47 : vector<1x32xf32> to vector<400x32xf32>
    %50 = arith.mulf %48, %49 : vector<400x32xf32>
    %51 = arith.addf %45, %50 : vector<400x32xf32>
    %c9 = arith.constant 9 : index
    %c0_41 = arith.constant 0 : index
    %52 = vector.load %arg13[%c9, %c0_41] : memref<416x2xf32, #tpu.memory_space<vmem>>, vector<400x1xf32>
    %c5_42 = arith.constant 5 : index
    %c0_43 = arith.constant 0 : index
    %53 = vector.load %arg2[%c5_42, %c0_43] : memref<7x32xf32, #tpu.memory_space<vmem>>, vector<1x32xf32>
    %54 = vector.broadcast %52 : vector<400x1xf32> to vector<400x32xf32>
    %55 = vector.broadcast %53 : vector<1x32xf32> to vector<400x32xf32>
    %56 = arith.mulf %54, %55 : vector<400x32xf32>
    %57 = arith.addf %51, %56 : vector<400x32xf32>
    %c9_44 = arith.constant 9 : index
    %c1_45 = arith.constant 1 : index
    %58 = vector.load %arg13[%c9_44, %c1_45] : memref<416x2xf32, #tpu.memory_space<vmem>>, vector<400x1xf32>
    %c6_46 = arith.constant 6 : index
    %c0_47 = arith.constant 0 : index
    %59 = vector.load %arg2[%c6_46, %c0_47] : memref<7x32xf32, #tpu.memory_space<vmem>>, vector<1x32xf32>
    %60 = vector.broadcast %58 : vector<400x1xf32> to vector<400x32xf32>
    %61 = vector.broadcast %59 : vector<1x32xf32> to vector<400x32xf32>
    %62 = arith.mulf %60, %61 : vector<400x32xf32>
    %63 = arith.addf %57, %62 : vector<400x32xf32>
    %c0_48 = arith.constant 0 : index
    %c0_49 = arith.constant 0 : index
    %64 = vector.load %arg3[%c0_48, %c0_49] : memref<1x32xf32, #tpu.memory_space<vmem>>, vector<1x32xf32>
    %65 = vector.broadcast %64 : vector<1x32xf32> to vector<400x32xf32>
    %66 = arith.addf %63, %65 : vector<400x32xf32>
    %cst_50 = arith.constant 0.000000e+00 : f32
    %67 = vector.broadcast %cst_50 : f32 to vector<400x32xf32>
    %68 = arith.maximumf %66, %67 : vector<400x32xf32>
    %c8_51 = arith.constant 8 : index
    %c0_52 = arith.constant 0 : index
    %69 = vector.load %arg16[%c8_51, %c0_52] : memref<408x32xf32, #tpu.memory_space<vmem>>, vector<400x32xf32>
    tpu.vector_store %arg16[%c8_51, %c0_52], %68 {strides = array<i32>} : memref<408x32xf32, #tpu.memory_space<vmem>>, vector<400x32xf32>,
    %c7_53 = arith.constant 7 : index
    %c0_54 = arith.constant 0 : index
    %70 = tpu.strided_load %arg16[%c7_53, %c0_54] {strides = array<i32: 2, 1>} : memref<408x32xf32, #tpu.memory_space<vmem>>, vector<200x32xf32>
    %c8_55 = arith.constant 8 : index
    %c0_56 = arith.constant 0 : index
    %71 = tpu.strided_load %arg16[%c8_55, %c0_56] {strides = array<i32: 2, 1>} : memref<408x32xf32, #tpu.memory_space<vmem>>, vector<200x32xf32>
    %c9_57 = arith.constant 9 : index
    %c0_58 = arith.constant 0 : index
    %72 = tpu.strided_load %arg16[%c9_57, %c0_58] {strides = array<i32: 2, 1>} : memref<408x32xf32, #tpu.memory_space<vmem>>, vector<200x32xf32>
    %73 = arith.maximumf %70, %71 : vector<200x32xf32>
    %74 = arith.maximumf %73, %72 : vector<200x32xf32>
    %c8_59 = arith.constant 8 : index
    %c0_60 = arith.constant 0 : index
    %75 = vector.load %arg14[%c8_59, %c0_60] : memref<216x32xf32, #tpu.memory_space<vmem>>, vector<200x32xf32>
    tpu.vector_store %arg14[%c8_59, %c0_60], %74 {strides = array<i32>} : memref<216x32xf32, #tpu.memory_space<vmem>>, vector<200x32xf32>,
    %c0_61 = arith.constant 0 : index
    %c0_62 = arith.constant 0 : index
    %76 = vector.load %arg5[%c0_61, %c0_62] : memref<1x64xf32, #tpu.memory_space<vmem>>, vector<1x64xf32>
    %c5_63 = arith.constant 5 : index
    %c0_64 = arith.constant 0 : index
    %77 = tpu.strided_load %arg14[%c5_63, %c0_64] {strides = array<i32: 2, 1>} : memref<216x32xf32, #tpu.memory_space<vmem>>, vector<100x32xf32>
    %78 = arith.truncf %77 : vector<100x32xf32> to vector<100x32xbf16>
    %c0_65 = arith.constant 0 : index
    %c0_66 = arith.constant 0 : index
    %c0_67 = arith.constant 0 : index
    %79 = vector.load %arg4[%c0_65, %c0_66, %c0_67] : memref<7x32x64xbf16, #tpu.memory_space<vmem>>, vector<1x32x64xbf16>
    %80 = vector.shape_cast %79 : vector<1x32x64xbf16> to vector<32x64xbf16>
    %cst_68 = arith.constant dense<0.000000e+00> : vector<100x64xf32>
    %81 = tpu.matmul %78, %80, %cst_68 {dimension_numbers = #tpu.dot_dimension_numbers<[1], [0], [0], [1], [0, 0, 1, 1], [], []>} : vector<100x32xbf16>, vector<32x64xbf16>, vector<100x64xf32> -> vector<100x64xf32>
    %c6_69 = arith.constant 6 : index
    %c0_70 = arith.constant 0 : index
    %82 = tpu.strided_load %arg14[%c6_69, %c0_70] {strides = array<i32: 2, 1>} : memref<216x32xf32, #tpu.memory_space<vmem>>, vector<100x32xf32>
    %83 = arith.truncf %82 : vector<100x32xf32> to vector<100x32xbf16>
    %c1_71 = arith.constant 1 : index
    %c0_72 = arith.constant 0 : index
    %c0_73 = arith.constant 0 : index
    %84 = vector.load %arg4[%c1_71, %c0_72, %c0_73] : memref<7x32x64xbf16, #tpu.memory_space<vmem>>, vector<1x32x64xbf16>
    %85 = vector.shape_cast %84 : vector<1x32x64xbf16> to vector<32x64xbf16>
    %cst_74 = arith.constant dense<0.000000e+00> : vector<100x64xf32>
    %86 = tpu.matmul %83, %85, %cst_74 {dimension_numbers = #tpu.dot_dimension_numbers<[1], [0], [0], [1], [0, 0, 1, 1], [], []>} : vector<100x32xbf16>, vector<32x64xbf16>, vector<100x64xf32> -> vector<100x64xf32>
    %87 = arith.addf %81, %86 : vector<100x64xf32>
    %c7_75 = arith.constant 7 : index
    %c0_76 = arith.constant 0 : index
    %88 = tpu.strided_load %arg14[%c7_75, %c0_76] {strides = array<i32: 2, 1>} : memref<216x32xf32, #tpu.memory_space<vmem>>, vector<100x32xf32>
    %89 = arith.truncf %88 : vector<100x32xf32> to vector<100x32xbf16>
    %c2_77 = arith.constant 2 : index
    %c0_78 = arith.constant 0 : index
    %c0_79 = arith.constant 0 : index
    %90 = vector.load %arg4[%c2_77, %c0_78, %c0_79] : memref<7x32x64xbf16, #tpu.memory_space<vmem>>, vector<1x32x64xbf16>
    %91 = vector.shape_cast %90 : vector<1x32x64xbf16> to vector<32x64xbf16>
    %cst_80 = arith.constant dense<0.000000e+00> : vector<100x64xf32>
    %92 = tpu.matmul %89, %91, %cst_80 {dimension_numbers = #tpu.dot_dimension_numbers<[1], [0], [0], [1], [0, 0, 1, 1], [], []>} : vector<100x32xbf16>, vector<32x64xbf16>, vector<100x64xf32> -> vector<100x64xf32>
    %93 = arith.addf %87, %92 : vector<100x64xf32>
    %c8_81 = arith.constant 8 : index
    %c0_82 = arith.constant 0 : index
    %94 = tpu.strided_load %arg14[%c8_81, %c0_82] {strides = array<i32: 2, 1>} : memref<216x32xf32, #tpu.memory_space<vmem>>, vector<100x32xf32>
    %95 = arith.truncf %94 : vector<100x32xf32> to vector<100x32xbf16>
    %c3_83 = arith.constant 3 : index
    %c0_84 = arith.constant 0 : index
    %c0_85 = arith.constant 0 : index
    %96 = vector.load %arg4[%c3_83, %c0_84, %c0_85] : memref<7x32x64xbf16, #tpu.memory_space<vmem>>, vector<1x32x64xbf16>
    %97 = vector.shape_cast %96 : vector<1x32x64xbf16> to vector<32x64xbf16>
    %cst_86 = arith.constant dense<0.000000e+00> : vector<100x64xf32>
    %98 = tpu.matmul %95, %97, %cst_86 {dimension_numbers = #tpu.dot_dimension_numbers<[1], [0], [0], [1], [0, 0, 1, 1], [], []>} : vector<100x32xbf16>, vector<32x64xbf16>, vector<100x64xf32> -> vector<100x64xf32>
    %99 = arith.addf %93, %98 : vector<100x64xf32>
    %c9_87 = arith.constant 9 : index
    %c0_88 = arith.constant 0 : index
    %100 = tpu.strided_load %arg14[%c9_87, %c0_88] {strides = array<i32: 2, 1>} : memref<216x32xf32, #tpu.memory_space<vmem>>, vector<100x32xf32>
    %101 = arith.truncf %100 : vector<100x32xf32> to vector<100x32xbf16>
    %c4_89 = arith.constant 4 : index
    %c0_90 = arith.constant 0 : index
    %c0_91 = arith.constant 0 : index
    %102 = vector.load %arg4[%c4_89, %c0_90, %c0_91] : memref<7x32x64xbf16, #tpu.memory_space<vmem>>, vector<1x32x64xbf16>
    %103 = vector.shape_cast %102 : vector<1x32x64xbf16> to vector<32x64xbf16>
    %cst_92 = arith.constant dense<0.000000e+00> : vector<100x64xf32>
    %104 = tpu.matmul %101, %103, %cst_92 {dimension_numbers = #tpu.dot_dimension_numbers<[1], [0], [0], [1], [0, 0, 1, 1], [], []>} : vector<100x32xbf16>, vector<32x64xbf16>, vector<100x64xf32> -> vector<100x64xf32>
    %105 = arith.addf %99, %104 : vector<100x64xf32>
    %c10 = arith.constant 10 : index
    %c0_93 = arith.constant 0 : index
    %106 = tpu.strided_load %arg14[%c10, %c0_93] {strides = array<i32: 2, 1>} : memref<216x32xf32, #tpu.memory_space<vmem>>, vector<100x32xf32>
    %107 = arith.truncf %106 : vector<100x32xf32> to vector<100x32xbf16>
    %c5_94 = arith.constant 5 : index
    %c0_95 = arith.constant 0 : index
    %c0_96 = arith.constant 0 : index
    %108 = vector.load %arg4[%c5_94, %c0_95, %c0_96] : memref<7x32x64xbf16, #tpu.memory_space<vmem>>, vector<1x32x64xbf16>
    %109 = vector.shape_cast %108 : vector<1x32x64xbf16> to vector<32x64xbf16>
    %cst_97 = arith.constant dense<0.000000e+00> : vector<100x64xf32>
    %110 = tpu.matmul %107, %109, %cst_97 {dimension_numbers = #tpu.dot_dimension_numbers<[1], [0], [0], [1], [0, 0, 1, 1], [], []>} : vector<100x32xbf16>, vector<32x64xbf16>, vector<100x64xf32> -> vector<100x64xf32>
    %111 = arith.addf %105, %110 : vector<100x64xf32>
    %c11 = arith.constant 11 : index
    %c0_98 = arith.constant 0 : index
    %112 = tpu.strided_load %arg14[%c11, %c0_98] {strides = array<i32: 2, 1>} : memref<216x32xf32, #tpu.memory_space<vmem>>, vector<100x32xf32>
    %113 = arith.truncf %112 : vector<100x32xf32> to vector<100x32xbf16>
    %c6_99 = arith.constant 6 : index
    %c0_100 = arith.constant 0 : index
    %c0_101 = arith.constant 0 : index
    %114 = vector.load %arg4[%c6_99, %c0_100, %c0_101] : memref<7x32x64xbf16, #tpu.memory_space<vmem>>, vector<1x32x64xbf16>
    %115 = vector.shape_cast %114 : vector<1x32x64xbf16> to vector<32x64xbf16>
    %cst_102 = arith.constant dense<0.000000e+00> : vector<100x64xf32>
    %116 = tpu.matmul %113, %115, %cst_102 {dimension_numbers = #tpu.dot_dimension_numbers<[1], [0], [0], [1], [0, 0, 1, 1], [], []>} : vector<100x32xbf16>, vector<32x64xbf16>, vector<100x64xf32> -> vector<100x64xf32>
    %117 = arith.addf %111, %116 : vector<100x64xf32>
    %118 = vector.broadcast %76 : vector<1x64xf32> to vector<100x64xf32>
    %119 = arith.addf %117, %118 : vector<100x64xf32>
    %cst_103 = arith.constant 0.000000e+00 : f32
    %120 = vector.broadcast %cst_103 : f32 to vector<100x64xf32>
    %121 = arith.maximumf %119, %120 : vector<100x64xf32>
    %c8_104 = arith.constant 8 : index
    %c0_105 = arith.constant 0 : index
    %122 = vector.load %arg17[%c8_104, %c0_105] : memref<112x64xf32, #tpu.memory_space<vmem>>, vector<100x64xf32>
    tpu.vector_store %arg17[%c8_104, %c0_105], %121 {strides = array<i32>} : memref<112x64xf32, #tpu.memory_space<vmem>>, vector<100x64xf32>,
    %c7_106 = arith.constant 7 : index
    %c0_107 = arith.constant 0 : index
    %123 = tpu.strided_load %arg17[%c7_106, %c0_107] {strides = array<i32: 2, 1>} : memref<112x64xf32, #tpu.memory_space<vmem>>, vector<50x64xf32>
    %c8_108 = arith.constant 8 : index
    %c0_109 = arith.constant 0 : index
    %124 = tpu.strided_load %arg17[%c8_108, %c0_109] {strides = array<i32: 2, 1>} : memref<112x64xf32, #tpu.memory_space<vmem>>, vector<50x64xf32>
    %c9_110 = arith.constant 9 : index
    %c0_111 = arith.constant 0 : index
    %125 = tpu.strided_load %arg17[%c9_110, %c0_111] {strides = array<i32: 2, 1>} : memref<112x64xf32, #tpu.memory_space<vmem>>, vector<50x64xf32>
    %126 = arith.maximumf %123, %124 : vector<50x64xf32>
    %127 = arith.maximumf %126, %125 : vector<50x64xf32>
    %c8_112 = arith.constant 8 : index
    %c0_113 = arith.constant 0 : index
    %128 = vector.load %arg15[%c8_112, %c0_113] : memref<64x64xf32, #tpu.memory_space<vmem>>, vector<50x64xf32>
    tpu.vector_store %arg15[%c8_112, %c0_113], %127 {strides = array<i32>} : memref<64x64xf32, #tpu.memory_space<vmem>>, vector<50x64xf32>,
    %c0_114 = arith.constant 0 : index
    %c0_115 = arith.constant 0 : index
    %129 = vector.load %arg7[%c0_114, %c0_115] : memref<1x128xf32, #tpu.memory_space<vmem>>, vector<1x128xf32>
    %c5_116 = arith.constant 5 : index
    %c0_117 = arith.constant 0 : index
    %130 = tpu.strided_load %arg15[%c5_116, %c0_117] {strides = array<i32: 2, 1>} : memref<64x64xf32, #tpu.memory_space<vmem>>, vector<25x64xf32>
    %131 = arith.truncf %130 : vector<25x64xf32> to vector<25x64xbf16>
    %c0_118 = arith.constant 0 : index
    %c0_119 = arith.constant 0 : index
    %c0_120 = arith.constant 0 : index
    %132 = vector.load %arg6[%c0_118, %c0_119, %c0_120] : memref<7x64x128xbf16, #tpu.memory_space<vmem>>, vector<1x64x128xbf16>
    %133 = vector.shape_cast %132 : vector<1x64x128xbf16> to vector<64x128xbf16>
    %cst_121 = arith.constant dense<0.000000e+00> : vector<25x128xf32>
    %134 = tpu.matmul %131, %133, %cst_121 {dimension_numbers = #tpu.dot_dimension_numbers<[1], [0], [0], [1], [0, 0, 1, 1], [], []>} : vector<25x64xbf16>, vector<64x128xbf16>, vector<25x128xf32> -> vector<25x128xf32>
    %c6_122 = arith.constant 6 : index
    %c0_123 = arith.constant 0 : index
    %135 = tpu.strided_load %arg15[%c6_122, %c0_123] {strides = array<i32: 2, 1>} : memref<64x64xf32, #tpu.memory_space<vmem>>, vector<25x64xf32>
    %136 = arith.truncf %135 : vector<25x64xf32> to vector<25x64xbf16>
    %c1_124 = arith.constant 1 : index
    %c0_125 = arith.constant 0 : index
    %c0_126 = arith.constant 0 : index
    %137 = vector.load %arg6[%c1_124, %c0_125, %c0_126] : memref<7x64x128xbf16, #tpu.memory_space<vmem>>, vector<1x64x128xbf16>
    %138 = vector.shape_cast %137 : vector<1x64x128xbf16> to vector<64x128xbf16>
    %cst_127 = arith.constant dense<0.000000e+00> : vector<25x128xf32>
    %139 = tpu.matmul %136, %138, %cst_127 {dimension_numbers = #tpu.dot_dimension_numbers<[1], [0], [0], [1], [0, 0, 1, 1], [], []>} : vector<25x64xbf16>, vector<64x128xbf16>, vector<25x128xf32> -> vector<25x128xf32>
    %140 = arith.addf %134, %139 : vector<25x128xf32>
    %c7_128 = arith.constant 7 : index
    %c0_129 = arith.constant 0 : index
    %141 = tpu.strided_load %arg15[%c7_128, %c0_129] {strides = array<i32: 2, 1>} : memref<64x64xf32, #tpu.memory_space<vmem>>, vector<25x64xf32>
    %142 = arith.truncf %141 : vector<25x64xf32> to vector<25x64xbf16>
    %c2_130 = arith.constant 2 : index
    %c0_131 = arith.constant 0 : index
    %c0_132 = arith.constant 0 : index
    %143 = vector.load %arg6[%c2_130, %c0_131, %c0_132] : memref<7x64x128xbf16, #tpu.memory_space<vmem>>, vector<1x64x128xbf16>
    %144 = vector.shape_cast %143 : vector<1x64x128xbf16> to vector<64x128xbf16>
    %cst_133 = arith.constant dense<0.000000e+00> : vector<25x128xf32>
    %145 = tpu.matmul %142, %144, %cst_133 {dimension_numbers = #tpu.dot_dimension_numbers<[1], [0], [0], [1], [0, 0, 1, 1], [], []>} : vector<25x64xbf16>, vector<64x128xbf16>, vector<25x128xf32> -> vector<25x128xf32>
    %146 = arith.addf %140, %145 : vector<25x128xf32>
    %c8_134 = arith.constant 8 : index
    %c0_135 = arith.constant 0 : index
    %147 = tpu.strided_load %arg15[%c8_134, %c0_135] {strides = array<i32: 2, 1>} : memref<64x64xf32, #tpu.memory_space<vmem>>, vector<25x64xf32>
    %148 = arith.truncf %147 : vector<25x64xf32> to vector<25x64xbf16>
    %c3_136 = arith.constant 3 : index
    %c0_137 = arith.constant 0 : index
    %c0_138 = arith.constant 0 : index
    %149 = vector.load %arg6[%c3_136, %c0_137, %c0_138] : memref<7x64x128xbf16, #tpu.memory_space<vmem>>, vector<1x64x128xbf16>
    %150 = vector.shape_cast %149 : vector<1x64x128xbf16> to vector<64x128xbf16>
    %cst_139 = arith.constant dense<0.000000e+00> : vector<25x128xf32>
    %151 = tpu.matmul %148, %150, %cst_139 {dimension_numbers = #tpu.dot_dimension_numbers<[1], [0], [0], [1], [0, 0, 1, 1], [], []>} : vector<25x64xbf16>, vector<64x128xbf16>, vector<25x128xf32> -> vector<25x128xf32>
    %152 = arith.addf %146, %151 : vector<25x128xf32>
    %c9_140 = arith.constant 9 : index
    %c0_141 = arith.constant 0 : index
    %153 = tpu.strided_load %arg15[%c9_140, %c0_141] {strides = array<i32: 2, 1>} : memref<64x64xf32, #tpu.memory_space<vmem>>, vector<25x64xf32>
    %154 = arith.truncf %153 : vector<25x64xf32> to vector<25x64xbf16>
    %c4_142 = arith.constant 4 : index
    %c0_143 = arith.constant 0 : index
    %c0_144 = arith.constant 0 : index
    %155 = vector.load %arg6[%c4_142, %c0_143, %c0_144] : memref<7x64x128xbf16, #tpu.memory_space<vmem>>, vector<1x64x128xbf16>
    %156 = vector.shape_cast %155 : vector<1x64x128xbf16> to vector<64x128xbf16>
    %cst_145 = arith.constant dense<0.000000e+00> : vector<25x128xf32>
    %157 = tpu.matmul %154, %156, %cst_145 {dimension_numbers = #tpu.dot_dimension_numbers<[1], [0], [0], [1], [0, 0, 1, 1], [], []>} : vector<25x64xbf16>, vector<64x128xbf16>, vector<25x128xf32> -> vector<25x128xf32>
    %158 = arith.addf %152, %157 : vector<25x128xf32>
    %c10_146 = arith.constant 10 : index
    %c0_147 = arith.constant 0 : index
    %159 = tpu.strided_load %arg15[%c10_146, %c0_147] {strides = array<i32: 2, 1>} : memref<64x64xf32, #tpu.memory_space<vmem>>, vector<25x64xf32>
    %160 = arith.truncf %159 : vector<25x64xf32> to vector<25x64xbf16>
    %c5_148 = arith.constant 5 : index
    %c0_149 = arith.constant 0 : index
    %c0_150 = arith.constant 0 : index
    %161 = vector.load %arg6[%c5_148, %c0_149, %c0_150] : memref<7x64x128xbf16, #tpu.memory_space<vmem>>, vector<1x64x128xbf16>
    %162 = vector.shape_cast %161 : vector<1x64x128xbf16> to vector<64x128xbf16>
    %cst_151 = arith.constant dense<0.000000e+00> : vector<25x128xf32>
    %163 = tpu.matmul %160, %162, %cst_151 {dimension_numbers = #tpu.dot_dimension_numbers<[1], [0], [0], [1], [0, 0, 1, 1], [], []>} : vector<25x64xbf16>, vector<64x128xbf16>, vector<25x128xf32> -> vector<25x128xf32>
    %164 = arith.addf %158, %163 : vector<25x128xf32>
    %c11_152 = arith.constant 11 : index
    %c0_153 = arith.constant 0 : index
    %165 = tpu.strided_load %arg15[%c11_152, %c0_153] {strides = array<i32: 2, 1>} : memref<64x64xf32, #tpu.memory_space<vmem>>, vector<25x64xf32>
    %166 = arith.truncf %165 : vector<25x64xf32> to vector<25x64xbf16>
    %c6_154 = arith.constant 6 : index
    %c0_155 = arith.constant 0 : index
    %c0_156 = arith.constant 0 : index
    %167 = vector.load %arg6[%c6_154, %c0_155, %c0_156] : memref<7x64x128xbf16, #tpu.memory_space<vmem>>, vector<1x64x128xbf16>
    %168 = vector.shape_cast %167 : vector<1x64x128xbf16> to vector<64x128xbf16>
    %cst_157 = arith.constant dense<0.000000e+00> : vector<25x128xf32>
    %169 = tpu.matmul %166, %168, %cst_157 {dimension_numbers = #tpu.dot_dimension_numbers<[1], [0], [0], [1], [0, 0, 1, 1], [], []>} : vector<25x64xbf16>, vector<64x128xbf16>, vector<25x128xf32> -> vector<25x128xf32>
    %170 = arith.addf %164, %169 : vector<25x128xf32>
    %171 = vector.broadcast %129 : vector<1x128xf32> to vector<25x128xf32>
    %172 = arith.addf %170, %171 : vector<25x128xf32>
    %cst_158 = arith.constant 0.000000e+00 : f32
    %173 = vector.broadcast %cst_158 : f32 to vector<25x128xf32>
    %174 = arith.maximumf %172, %173 : vector<25x128xf32>
    %c8_159 = arith.constant 8 : index
    %c0_160 = arith.constant 0 : index
    %175 = vector.load %arg18[%c8_159, %c0_160] : memref<40x128xf32, #tpu.memory_space<vmem>>, vector<25x128xf32>
    tpu.vector_store %arg18[%c8_159, %c0_160], %174 {strides = array<i32>} : memref<40x128xf32, #tpu.memory_space<vmem>>, vector<25x128xf32>,
    %c7_161 = arith.constant 7 : index
    %c0_162 = arith.constant 0 : index
    %176 = tpu.strided_load %arg18[%c7_161, %c0_162] {strides = array<i32: 2, 1>} : memref<40x128xf32, #tpu.memory_space<vmem>>, vector<13x128xf32>
    %c8_163 = arith.constant 8 : index
    %c0_164 = arith.constant 0 : index
    %177 = tpu.strided_load %arg18[%c8_163, %c0_164] {strides = array<i32: 2, 1>} : memref<40x128xf32, #tpu.memory_space<vmem>>, vector<13x128xf32>
    %c9_165 = arith.constant 9 : index
    %c0_166 = arith.constant 0 : index
    %178 = tpu.strided_load %arg18[%c9_165, %c0_166] {strides = array<i32: 2, 1>} : memref<40x128xf32, #tpu.memory_space<vmem>>, vector<13x128xf32>
    %179 = arith.maximumf %176, %177 : vector<13x128xf32>
    %180 = arith.maximumf %179, %178 : vector<13x128xf32>
    %181 = vector.extract_strided_slice %180 {offsets = [0, 0], sizes = [1, 128], strides = [1, 1]} : vector<13x128xf32> to vector<1x128xf32>
    %c0_167 = arith.constant 0 : index
    %c0_168 = arith.constant 0 : index
    %182 = vector.load %arg19[%c0_167, %c0_168] : memref<1x1664xf32, #tpu.memory_space<vmem>>, vector<1x128xf32>
    tpu.vector_store %arg19[%c0_167, %c0_168], %181 {strides = array<i32>} : memref<1x1664xf32, #tpu.memory_space<vmem>>, vector<1x128xf32>,
    %183 = vector.extract_strided_slice %180 {offsets = [1, 0], sizes = [1, 128], strides = [1, 1]} : vector<13x128xf32> to vector<1x128xf32>
    %c0_169 = arith.constant 0 : index
    %c128 = arith.constant 128 : index
    %184 = vector.load %arg19[%c0_169, %c128] : memref<1x1664xf32, #tpu.memory_space<vmem>>, vector<1x128xf32>
    tpu.vector_store %arg19[%c0_169, %c128], %183 {strides = array<i32>} : memref<1x1664xf32, #tpu.memory_space<vmem>>, vector<1x128xf32>,
    %185 = vector.extract_strided_slice %180 {offsets = [2, 0], sizes = [1, 128], strides = [1, 1]} : vector<13x128xf32> to vector<1x128xf32>
    %c0_170 = arith.constant 0 : index
    %c256 = arith.constant 256 : index
    %186 = vector.load %arg19[%c0_170, %c256] : memref<1x1664xf32, #tpu.memory_space<vmem>>, vector<1x128xf32>
    tpu.vector_store %arg19[%c0_170, %c256], %185 {strides = array<i32>} : memref<1x1664xf32, #tpu.memory_space<vmem>>, vector<1x128xf32>,
    %187 = vector.extract_strided_slice %180 {offsets = [3, 0], sizes = [1, 128], strides = [1, 1]} : vector<13x128xf32> to vector<1x128xf32>
    %c0_171 = arith.constant 0 : index
    %c384 = arith.constant 384 : index
    %188 = vector.load %arg19[%c0_171, %c384] : memref<1x1664xf32, #tpu.memory_space<vmem>>, vector<1x128xf32>
    tpu.vector_store %arg19[%c0_171, %c384], %187 {strides = array<i32>} : memref<1x1664xf32, #tpu.memory_space<vmem>>, vector<1x128xf32>,
    %189 = vector.extract_strided_slice %180 {offsets = [4, 0], sizes = [1, 128], strides = [1, 1]} : vector<13x128xf32> to vector<1x128xf32>
    %c0_172 = arith.constant 0 : index
    %c512 = arith.constant 512 : index
    %190 = vector.load %arg19[%c0_172, %c512] : memref<1x1664xf32, #tpu.memory_space<vmem>>, vector<1x128xf32>
    tpu.vector_store %arg19[%c0_172, %c512], %189 {strides = array<i32>} : memref<1x1664xf32, #tpu.memory_space<vmem>>, vector<1x128xf32>,
    %191 = vector.extract_strided_slice %180 {offsets = [5, 0], sizes = [1, 128], strides = [1, 1]} : vector<13x128xf32> to vector<1x128xf32>
    %c0_173 = arith.constant 0 : index
    %c640 = arith.constant 640 : index
    %192 = vector.load %arg19[%c0_173, %c640] : memref<1x1664xf32, #tpu.memory_space<vmem>>, vector<1x128xf32>
    tpu.vector_store %arg19[%c0_173, %c640], %191 {strides = array<i32>} : memref<1x1664xf32, #tpu.memory_space<vmem>>, vector<1x128xf32>,
    %193 = vector.extract_strided_slice %180 {offsets = [6, 0], sizes = [1, 128], strides = [1, 1]} : vector<13x128xf32> to vector<1x128xf32>
    %c0_174 = arith.constant 0 : index
    %c768 = arith.constant 768 : index
    %194 = vector.load %arg19[%c0_174, %c768] : memref<1x1664xf32, #tpu.memory_space<vmem>>, vector<1x128xf32>
    tpu.vector_store %arg19[%c0_174, %c768], %193 {strides = array<i32>} : memref<1x1664xf32, #tpu.memory_space<vmem>>, vector<1x128xf32>,
    %195 = vector.extract_strided_slice %180 {offsets = [7, 0], sizes = [1, 128], strides = [1, 1]} : vector<13x128xf32> to vector<1x128xf32>
    %c0_175 = arith.constant 0 : index
    %c896 = arith.constant 896 : index
    %196 = vector.load %arg19[%c0_175, %c896] : memref<1x1664xf32, #tpu.memory_space<vmem>>, vector<1x128xf32>
    tpu.vector_store %arg19[%c0_175, %c896], %195 {strides = array<i32>} : memref<1x1664xf32, #tpu.memory_space<vmem>>, vector<1x128xf32>,
    %197 = vector.extract_strided_slice %180 {offsets = [8, 0], sizes = [1, 128], strides = [1, 1]} : vector<13x128xf32> to vector<1x128xf32>
    %c0_176 = arith.constant 0 : index
    %c1024 = arith.constant 1024 : index
    %198 = vector.load %arg19[%c0_176, %c1024] : memref<1x1664xf32, #tpu.memory_space<vmem>>, vector<1x128xf32>
    tpu.vector_store %arg19[%c0_176, %c1024], %197 {strides = array<i32>} : memref<1x1664xf32, #tpu.memory_space<vmem>>, vector<1x128xf32>,
    %199 = vector.extract_strided_slice %180 {offsets = [9, 0], sizes = [1, 128], strides = [1, 1]} : vector<13x128xf32> to vector<1x128xf32>
    %c0_177 = arith.constant 0 : index
    %c1152 = arith.constant 1152 : index
    %200 = vector.load %arg19[%c0_177, %c1152] : memref<1x1664xf32, #tpu.memory_space<vmem>>, vector<1x128xf32>
    tpu.vector_store %arg19[%c0_177, %c1152], %199 {strides = array<i32>} : memref<1x1664xf32, #tpu.memory_space<vmem>>, vector<1x128xf32>,
    %201 = vector.extract_strided_slice %180 {offsets = [10, 0], sizes = [1, 128], strides = [1, 1]} : vector<13x128xf32> to vector<1x128xf32>
    %c0_178 = arith.constant 0 : index
    %c1280 = arith.constant 1280 : index
    %202 = vector.load %arg19[%c0_178, %c1280] : memref<1x1664xf32, #tpu.memory_space<vmem>>, vector<1x128xf32>
    tpu.vector_store %arg19[%c0_178, %c1280], %201 {strides = array<i32>} : memref<1x1664xf32, #tpu.memory_space<vmem>>, vector<1x128xf32>,
    %203 = vector.extract_strided_slice %180 {offsets = [11, 0], sizes = [1, 128], strides = [1, 1]} : vector<13x128xf32> to vector<1x128xf32>
    %c0_179 = arith.constant 0 : index
    %c1408 = arith.constant 1408 : index
    %204 = vector.load %arg19[%c0_179, %c1408] : memref<1x1664xf32, #tpu.memory_space<vmem>>, vector<1x128xf32>
    tpu.vector_store %arg19[%c0_179, %c1408], %203 {strides = array<i32>} : memref<1x1664xf32, #tpu.memory_space<vmem>>, vector<1x128xf32>,
    %205 = vector.extract_strided_slice %180 {offsets = [12, 0], sizes = [1, 128], strides = [1, 1]} : vector<13x128xf32> to vector<1x128xf32>
    %c0_180 = arith.constant 0 : index
    %c1536 = arith.constant 1536 : index
    %206 = vector.load %arg19[%c0_180, %c1536] : memref<1x1664xf32, #tpu.memory_space<vmem>>, vector<1x128xf32>
    tpu.vector_store %arg19[%c0_180, %c1536], %205 {strides = array<i32>} : memref<1x1664xf32, #tpu.memory_space<vmem>>, vector<1x128xf32>,
    %c0_181 = arith.constant 0 : index
    %c0_182 = arith.constant 0 : index
    %207 = vector.load %arg19[%c0_181, %c0_182] : memref<1x1664xf32, #tpu.memory_space<vmem>>, vector<1x1664xf32>
    %208 = arith.truncf %207 : vector<1x1664xf32> to vector<1x1664xbf16>
    %c0_183 = arith.constant 0 : index
    %c0_184 = arith.constant 0 : index
    %209 = vector.load %arg8[%c0_183, %c0_184] : memref<1664x64xbf16, #tpu.memory_space<vmem>>, vector<1664x64xbf16>
    %cst_185 = arith.constant dense<0.000000e+00> : vector<1x64xf32>
    %210 = tpu.matmul %208, %209, %cst_185 {dimension_numbers = #tpu.dot_dimension_numbers<[1], [0], [0], [1], [0, 0, 1, 1], [], []>} : vector<1x1664xbf16>, vector<1664x64xbf16>, vector<1x64xf32> -> vector<1x64xf32>
    %c0_186 = arith.constant 0 : index
    %c0_187 = arith.constant 0 : index
    %211 = vector.load %arg9[%c0_186, %c0_187] : memref<1x64xf32, #tpu.memory_space<vmem>>, vector<1x64xf32>
    %212 = arith.addf %210, %211 : vector<1x64xf32>
    %cst_188 = arith.constant 0.000000e+00 : f32
    %213 = vector.broadcast %cst_188 : f32 to vector<1x64xf32>
    %214 = arith.maximumf %212, %213 : vector<1x64xf32>
    %c0_189 = arith.constant 0 : index
    %c0_190 = arith.constant 0 : index
    %215 = vector.load %arg10[%c0_189, %c0_190] : memref<1x64xf32, #tpu.memory_space<vmem>>, vector<1x64xf32>
    %216 = arith.mulf %214, %215 : vector<1x64xf32>
    %cst_191 = arith.constant dense<0.000000e+00> : vector<1xf32>
    %217 = vector.multi_reduction <add>, %216, %cst_191 [1] : vector<1x64xf32> to vector<1xf32>
    %218 = vector.shape_cast %217 : vector<1xf32> to vector<1x1xf32>
    %c0_192 = arith.constant 0 : index
    %c0_193 = arith.constant 0 : index
    %219 = vector.load %arg11[%c0_192, %c0_193] : memref<1x1xf32, #tpu.memory_space<vmem>>, vector<1x1xf32>
    %220 = arith.addf %218, %219 : vector<1x1xf32>
    %221 = arith.negf %220 : vector<1x1xf32>
    %222 = math.exp %221 : vector<1x1xf32>
    %cst_194 = arith.constant 1.000000e+00 : f32
    %223 = vector.broadcast %cst_194 : f32 to vector<1x1xf32>
    %224 = arith.addf %223, %222 : vector<1x1xf32>
    %225 = arith.divf %223, %224 : vector<1x1xf32>
    %c0_195 = arith.constant 0 : index
    %c0_196 = arith.constant 0 : index
    %c0_197 = arith.constant 0 : index
    %226 = vector.load %arg12[%c0_195, %c0_196, %c0_197] : memref<1x1x1xf32, #tpu.memory_space<vmem>>, vector<1x1x1xf32>
    %227 = vector.shape_cast %226 : vector<1x1x1xf32> to vector<1x1xf32>
    %228 = vector.shape_cast %225 : vector<1x1xf32> to vector<1x1x1xf32>
    tpu.vector_store %arg12[%c0_195, %c0_196, %c0_197], %228 {strides = array<i32>} : memref<1x1x1xf32, #tpu.memory_space<vmem>>, vector<1x1x1xf32>,
    return
  }
  func.func @transform_0(%arg0: i32) -> (i32, i32, i32) {
    %c0_i32 = arith.constant 0 : i32
    %c0_i32_0 = arith.constant 0 : i32
    %c0_i32_1 = arith.constant 0 : i32
    return %arg0, %c0_i32, %c0_i32_0 : i32, i32, i32
  }
  func.func @transform_1(%arg0: i32) -> (i32, i32) {
    %c0_i32 = arith.constant 0 : i32
    %c0_i32_0 = arith.constant 0 : i32
    %c0_i32_1 = arith.constant 0 : i32
    return %c0_i32, %c0_i32_0 : i32, i32
  }
  func.func @transform_2(%arg0: i32) -> (i32, i32) {
    %c0_i32 = arith.constant 0 : i32
    %c0_i32_0 = arith.constant 0 : i32
    %c0_i32_1 = arith.constant 0 : i32
    return %c0_i32, %c0_i32_0 : i32, i32
  }
  func.func @transform_3(%arg0: i32) -> (i32, i32, i32) {
    %c0_i32 = arith.constant 0 : i32
    %c0_i32_0 = arith.constant 0 : i32
    %c0_i32_1 = arith.constant 0 : i32
    %c0_i32_2 = arith.constant 0 : i32
    return %c0_i32, %c0_i32_0, %c0_i32_1 : i32, i32, i32
  }
  func.func @transform_4(%arg0: i32) -> (i32, i32) {
    %c0_i32 = arith.constant 0 : i32
    %c0_i32_0 = arith.constant 0 : i32
    %c0_i32_1 = arith.constant 0 : i32
    return %c0_i32, %c0_i32_0 : i32, i32
  }
  func.func @transform_5(%arg0: i32) -> (i32, i32, i32) {
    %c0_i32 = arith.constant 0 : i32
    %c0_i32_0 = arith.constant 0 : i32
    %c0_i32_1 = arith.constant 0 : i32
    %c0_i32_2 = arith.constant 0 : i32
    return %c0_i32, %c0_i32_0, %c0_i32_1 : i32, i32, i32
  }
  func.func @transform_6(%arg0: i32) -> (i32, i32) {
    %c0_i32 = arith.constant 0 : i32
    %c0_i32_0 = arith.constant 0 : i32
    %c0_i32_1 = arith.constant 0 : i32
    return %c0_i32, %c0_i32_0 : i32, i32
  }
  func.func @transform_7(%arg0: i32) -> (i32, i32) {
    %c0_i32 = arith.constant 0 : i32
    %c0_i32_0 = arith.constant 0 : i32
    %c0_i32_1 = arith.constant 0 : i32
    return %c0_i32, %c0_i32_0 : i32, i32
  }
  func.func @transform_8(%arg0: i32) -> (i32, i32) {
    %c0_i32 = arith.constant 0 : i32
    %c0_i32_0 = arith.constant 0 : i32
    %c0_i32_1 = arith.constant 0 : i32
    return %c0_i32, %c0_i32_0 : i32, i32
  }
  func.func @transform_9(%arg0: i32) -> (i32, i32) {
    %c0_i32 = arith.constant 0 : i32
    %c0_i32_0 = arith.constant 0 : i32
    %c0_i32_1 = arith.constant 0 : i32
    return %c0_i32, %c0_i32_0 : i32, i32
  }
  func.func @transform_10(%arg0: i32) -> (i32, i32) {
    %c0_i32 = arith.constant 0 : i32
    %c0_i32_0 = arith.constant 0 : i32
    %c0_i32_1 = arith.constant 0 : i32
    return %c0_i32, %c0_i32_0 : i32, i32
  }
  func.func @transform_11(%arg0: i32) -> (i32, i32, i32) {
    %c0_i32 = arith.constant 0 : i32
    %c0_i32_0 = arith.constant 0 : i32
    %c0_i32_1 = arith.constant 0 : i32
    return %arg0, %c0_i32, %c0_i32_0 : i32, i32, i32
  }
}

</mosaic_0001>

<llo_original>
// kernel: cnn_forward_pallas.1
$region0: #{cnn_forward_pallas.1}
  #allocation0 [shape = 'u32[]', space=smem, size = 0x4, offset = 0x4, fixed_abs, tag = 'smem constant byte address 0x4 - core index']
  #allocation1 [shape = 'u32[144,128]{1,0:T(1,128)}', space=vmem, size = 0x12000, scoped, tag = 'internal scratch']
  #allocation2 [shape = 'f32[416,2]{1,0:T(8,128)}', space=vmem, size = 0x34000, scoped, tag = 'scratch operand']
  #allocation3 [shape = 'f32[216,32]{1,0:T(8,128)}', space=vmem, size = 0x1b000, scoped, tag = 'scratch operand']
  #allocation4 [shape = 'f32[64,64]{1,0:T(8,128)}', space=vmem, size = 0x8000, scoped, tag = 'scratch operand']
  #allocation5 [shape = 'f32[408,32]{1,0:T(8,128)}', space=vmem, size = 0x33000, scoped, tag = 'scratch operand']
  #allocation6 [shape = 'f32[112,64]{1,0:T(8,128)}', space=vmem, size = 0xe000, scoped, tag = 'scratch operand']
  #allocation7 [shape = 'f32[40,128]{1,0:T(8,128)}', space=vmem, size = 0x5000, scoped, tag = 'scratch operand']
  #allocation8 [shape = 'f32[1,1664]{1,0:T(1,128)}', space=vmem, size = 0x1a00, scoped, tag = 'scratch operand']
  #allocation9 [shape = 'f32[1,1]{1,0:T(1,128)S(1)}', space=vmem, size = 0x200, scoped, tag = 'scoped memory for cnn_forward_pallas.1']
  %s0 = inlined_call_operand.vmem [shape: f32[2,400,2], index: 0, kind: input, shape index: {}]
  %s1 = inlined_call_operand.vmem [shape: f32[7,32], index: 1, kind: input, shape index: {}]
  %s2 = inlined_call_operand.vmem [shape: f32[1,32], index: 2, kind: input, shape index: {}]
  %s3 = inlined_call_operand.vmem [shape: bf16[7,32,64], index: 3, kind: input, shape index: {}]
  %s4 = inlined_call_operand.vmem [shape: f32[1,64], index: 4, kind: input, shape index: {}]
  %s5 = inlined_call_operand.vmem [shape: bf16[7,64,128], index: 5, kind: input, shape index: {}]
  %s6 = inlined_call_operand.vmem [shape: f32[1,128], index: 6, kind: input, shape index: {}]
  %s7 = inlined_call_operand.vmem [shape: bf16[1664,64], index: 7, kind: input, shape index: {}]
  %s8 = inlined_call_operand.vmem [shape: f32[1,64], index: 8, kind: input, shape index: {}]
  %s9 = inlined_call_operand.vmem [shape: f32[1,64], index: 9, kind: input, shape index: {}]
  %s10 = inlined_call_operand.<no memory space> [shape: f32[1,1], index: 10, kind: input, shape index: {}]
  %s11 = inlined_call_operand.vmem [shape: f32[2,1,1], index: 11, kind: output, shape index: {}]
  %s12 = sld [smem:[#allocation0]]
  $region77: #{cnn_forward_pallas.1} parent=0
    _
  %s14 = ssub.s32 1, %s12
  %s15 = scalar_select 0, %s14, %s12
  %v16 = vstv %s10
  %17 = vst [vmem:[#allocation9] sm:$0x1] %v16
  loop: start=0, step=1, limit=4
  $region2: #{cnn_forward_pallas.1} parent=0 // loop_pre_header
    _
  $region3: #{cnn_forward_pallas.1} parent=0 // loop_header
    %s19 = sphi 0, %s23
    %p20 = scmp.ge.s32.totalorder %s19, 4
    %s29 = sphi 0, %s31
    %s32 = sphi 0, %s29
    %s33 = sphi 0, %s32
    %s49 = sphi 0, %s33
    %s53 = sphi 0, %s53
    %s55 = sphi 0, %s53
    %s56 = sphi 0, %s55
    %s70 = sphi 0, %s56
    %s74 = sphi 0, %s74
    %s76 = sphi 0, %s74
    %s77 = sphi 0, %s76
    %s91 = sphi 0, %s77
    %s95 = sphi 0, %s95
    %s97 = sphi 0, %s95
    %s98 = sphi 0, %s97
    %s112 = sphi 0, %s98
    %s116 = sphi 0, %s116
    %s118 = sphi 0, %s116
    %s119 = sphi 0, %s118
    %s133 = sphi 0, %s119
    %s137 = sphi 0, %s137
    %s139 = sphi 0, %s137
    %s140 = sphi 0, %s139
    %s154 = sphi 0, %s140
    %s158 = sphi 0, %s158
    %s160 = sphi 0, %s158
    %s161 = sphi 0, %s160
    %s175 = sphi 0, %s161
    %s179 = sphi 0, %s179
    %s181 = sphi 0, %s179
    %s182 = sphi 0, %s181
    %s196 = sphi 0, %s182
    %s200 = sphi 0, %s200
    %s202 = sphi 0, %s200
    %s203 = sphi 0, %s202
    %s217 = sphi 0, %s203
    %s221 = sphi 0, %s221
    %s223 = sphi 0, %s221
    %s224 = sphi 0, %s223
    %s238 = sphi 0, %s224
    %s242 = sphi 0, %s242
    %s244 = sphi 0, %s242
    %s245 = sphi 0, %s244
    %s259 = sphi 0, %s245
    %s265 = sphi 0, %s267
    %s268 = sphi 0, %s265
    %s269 = sphi 0, %s268
    %s285 = sphi 0, %s269
  $region4: #{cnn_forward_pallas.1} parent=0 // loop_header_branch
    %22 = sbr.rel (%p20) target = $region8
  $region5: #{cnn_forward_pallas.1} parent=0 // loop_body
    %s24 = ssub.s32 %s19, 1
    %s25 = ssub.s32 %s19, 2
    %s26 = sadd.s32 %s19, 1
    %s27 = ssub.s32 %s19, %s26
    %p28 = scmp.eq.s32.totalorder %s27, 0
    %s30 = sadd.s32 %s29, 1
    %s31 = scalar_select %p28, %s29, %s30
    %p34 = pneg %p28
    %p35 = scmp.eq.s32.totalorder %s19, 1
    %p36 = por %p34, %p35
    %p37 = scmp.ne.s32.totalorder %s29, %s32
    %p38 = scmp.eq.s32.totalorder %s19, 0
    %p39 = por %p37, %p38
    %p40 = scmp.ne.s32.totalorder %s29, %s32
    %p41 = scmp.eq.s32.totalorder %s24, 1
    %p42 = por %p40, %p41
    %p43 = scmp.ne.s32.totalorder %s32, %s33
    %p44 = scmp.eq.s32.totalorder %s24, 0
    %p45 = por %p43, %p44
    %p46 = scmp.ne.s32.totalorder %s32, %s33
    %p47 = scmp.eq.s32.totalorder %s25, 1
    %p48 = por %p46, %p47
    %p50 = scmp.ne.s32.totalorder %s33, %s49
    %p51 = scmp.eq.s32.totalorder %s25, 0
    %p52 = por %p50, %p51
    %s54 = sadd.s32 %s53, 1
    %p57 = scmp.eq.s32.totalorder %s19, 1
    %p58 = scmp.ne.s32.totalorder %s53, %s55
    %p59 = scmp.eq.s32.totalorder %s19, 0
    %p60 = por %p58, %p59
    %p61 = scmp.ne.s32.totalorder %s53, %s55
    %p62 = scmp.eq.s32.totalorder %s24, 1
    %p63 = por %p61, %p62
    %p64 = scmp.ne.s32.totalorder %s55, %s56
    %p65 = scmp.eq.s32.totalorder %s24, 0
    %p66 = por %p64, %p65
    %p67 = scmp.ne.s32.totalorder %s55, %s56
    %p68 = scmp.eq.s32.totalorder %s25, 1
    %p69 = por %p67, %p68
    %p71 = scmp.ne.s32.totalorder %s56, %s70
    %p72 = scmp.eq.s32.totalorder %s25, 0
    %p73 = por %p71, %p72
    %s75 = sadd.s32 %s74, 1
    %p78 = scmp.eq.s32.totalorder %s19, 1
    %p79 = scmp.ne.s32.totalorder %s74, %s76
    %p80 = scmp.eq.s32.totalorder %s19, 0
    %p81 = por %p79, %p80
    %p82 = scmp.ne.s32.totalorder %s74, %s76
    %p83 = scmp.eq.s32.totalorder %s24, 1
    %p84 = por %p82, %p83
    %p85 = scmp.ne.s32.totalorder %s76, %s77
    %p86 = scmp.eq.s32.totalorder %s24, 0
    %p87 = por %p85, %p86
    %p88 = scmp.ne.s32.totalorder %s76, %s77
    %p89 = scmp.eq.s32.totalorder %s25, 1
    %p90 = por %p88, %p89
    %p92 = scmp.ne.s32.totalorder %s77, %s91
    %p93 = scmp.eq.s32.totalorder %s25, 0
    %p94 = por %p92, %p93
    %s96 = sadd.s32 %s95, 1
    %p99 = scmp.eq.s32.totalorder %s19, 1
    %p100 = scmp.ne.s32.totalorder %s95, %s97
    %p101 = scmp.eq.s32.totalorder %s19, 0
    %p102 = por %p100, %p101
    %p103 = scmp.ne.s32.totalorder %s95, %s97
    %p104 = scmp.eq.s32.totalorder %s24, 1
    %p105 = por %p103, %p104
    %p106 = scmp.ne.s32.totalorder %s97, %s98
    %p107 = scmp.eq.s32.totalorder %s24, 0
    %p108 = por %p106, %p107
    %p109 = scmp.ne.s32.totalorder %s97, %s98
    %p110 = scmp.eq.s32.totalorder %s25, 1
    %p111 = por %p109, %p110
    %p113 = scmp.ne.s32.totalorder %s98, %s112
    %p114 = scmp.eq.s32.totalorder %s25, 0
    %p115 = por %p113, %p114
    %s117 = sadd.s32 %s116, 1
    %p120 = scmp.eq.s32.totalorder %s19, 1
    %p121 = scmp.ne.s32.totalorder %s116, %s118
    %p122 = scmp.eq.s32.totalorder %s19, 0
    %p123 = por %p121, %p122
    %p124 = scmp.ne.s32.totalorder %s116, %s118
    %p125 = scmp.eq.s32.totalorder %s24, 1
    %p126 = por %p124, %p125
    %p127 = scmp.ne.s32.totalorder %s118, %s119
    %p128 = scmp.eq.s32.totalorder %s24, 0
    %p129 = por %p127, %p128
    %p130 = scmp.ne.s32.totalorder %s118, %s119
    %p131 = scmp.eq.s32.totalorder %s25, 1
    %p132 = por %p130, %p131
    %p134 = scmp.ne.s32.totalorder %s119, %s133
    %p135 = scmp.eq.s32.totalorder %s25, 0
    %p136 = por %p134, %p135
    %s138 = sadd.s32 %s137, 1
    %p141 = scmp.eq.s32.totalorder %s19, 1
    %p142 = scmp.ne.s32.totalorder %s137, %s139
    %p143 = scmp.eq.s32.totalorder %s19, 0
    %p144 = por %p142, %p143
    %p145 = scmp.ne.s32.totalorder %s137, %s139
    %p146 = scmp.eq.s32.totalorder %s24, 1
    %p147 = por %p145, %p146
    %p148 = scmp.ne.s32.totalorder %s139, %s140
    %p149 = scmp.eq.s32.totalorder %s24, 0
    %p150 = por %p148, %p149
    %p151 = scmp.ne.s32.totalorder %s139, %s140
    %p152 = scmp.eq.s32.totalorder %s25, 1
    %p153 = por %p151, %p152
    %p155 = scmp.ne.s32.totalorder %s140, %s154
    %p156 = scmp.eq.s32.totalorder %s25, 0
    %p157 = por %p155, %p156
    %s159 = sadd.s32 %s158, 1
    %p162 = scmp.eq.s32.totalorder %s19, 1
    %p163 = scmp.ne.s32.totalorder %s158, %s160
    %p164 = scmp.eq.s32.totalorder %s19, 0
    %p165 = por %p163, %p164
    %p166 = scmp.ne.s32.totalorder %s158, %s160
    %p167 = scmp.eq.s32.totalorder %s24, 1
    %p168 = por %p166, %p167
    %p169 = scmp.ne.s32.totalorder %s160, %s161
    %p170 = scmp.eq.s32.totalorder %s24, 0
    %p171 = por %p169, %p170
    %p172 = scmp.ne.s32.totalorder %s160, %s161
    %p173 = scmp.eq.s32.totalorder %s25, 1
    %p174 = por %p172, %p173
    %p176 = scmp.ne.s32.totalorder %s161, %s175
    %p177 = scmp.eq.s32.totalorder %s25, 0
    %p178 = por %p176, %p177
    %s180 = sadd.s32 %s179, 1
    %p183 = scmp.eq.s32.totalorder %s19, 1
    %p184 = scmp.ne.s32.totalorder %s179, %s181
    %p185 = scmp.eq.s32.totalorder %s19, 0
    %p186 = por %p184, %p185
    %p187 = scmp.ne.s32.totalorder %s179, %s181
    %p188 = scmp.eq.s32.totalorder %s24, 1
    %p189 = por %p187, %p188
    %p190 = scmp.ne.s32.totalorder %s181, %s182
    %p191 = scmp.eq.s32.totalorder %s24, 0
    %p192 = por %p190, %p191
    %p193 = scmp.ne.s32.totalorder %s181, %s182
    %p194 = scmp.eq.s32.totalorder %s25, 1
    %p195 = por %p193, %p194
    %p197 = scmp.ne.s32.totalorder %s182, %s196
    %p198 = scmp.eq.s32.totalorder %s25, 0
    %p199 = por %p197, %p198
    %s201 = sadd.s32 %s200, 1
    %p204 = scmp.eq.s32.totalorder %s19, 1
    %p205 = scmp.ne.s32.totalorder %s200, %s202
    %p206 = scmp.eq.s32.totalorder %s19, 0
    %p207 = por %p205, %p206
    %p208 = scmp.ne.s32.totalorder %s200, %s202
    %p209 = scmp.eq.s32.totalorder %s24, 1
    %p210 = por %p208, %p209
    %p211 = scmp.ne.s32.totalorder %s202, %s203
    %p212 = scmp.eq.s32.totalorder %s24, 0
    %p213 = por %p211, %p212
    %p214 = scmp.ne.s32.totalorder %s202, %s203
    %p215 = scmp.eq.s32.totalorder %s25, 1
    %p216 = por %p214, %p215
    %p218 = scmp.ne.s32.totalorder %s203, %s217
    %p219 = scmp.eq.s32.totalorder %s25, 0
    %p220 = por %p218, %p219
    %s222 = sadd.s32 %s221, 1
    %p225 = scmp.eq.s32.totalorder %s19, 1
    %p226 = scmp.ne.s32.totalorder %s221, %s223
    %p227 = scmp.eq.s32.totalorder %s19, 0
    %p228 = por %p226, %p227
    %p229 = scmp.ne.s32.totalorder %s221, %s223
    %p230 = scmp.eq.s32.totalorder %s24, 1
    %p231 = por %p229, %p230
    %p232 = scmp.ne.s32.totalorder %s223, %s224
    %p233 = scmp.eq.s32.totalorder %s24, 0
    %p234 = por %p232, %p233
    %p235 = scmp.ne.s32.totalorder %s223, %s224
    %p236 = scmp.eq.s32.totalorder %s25, 1
    %p237 = por %p235, %p236
    %p239 = scmp.ne.s32.totalorder %s224, %s238
    %p240 = scmp.eq.s32.totalorder %s25, 0
    %p241 = por %p239, %p240
    %s243 = sadd.s32 %s242, 1
    %p246 = scmp.eq.s32.totalorder %s19, 1
    %p247 = scmp.ne.s32.totalorder %s242, %s244
    %p248 = scmp.eq.s32.totalorder %s19, 0
    %p249 = por %p247, %p248
    %p250 = scmp.ne.s32.totalorder %s242, %s244
    %p251 = scmp.eq.s32.totalorder %s24, 1
    %p252 = por %p250, %p251
    %p253 = scmp.ne.s32.totalorder %s244, %s245
    %p254 = scmp.eq.s32.totalorder %s24, 0
    %p255 = por %p253, %p254
    %p256 = scmp.ne.s32.totalorder %s244, %s245
    %p257 = scmp.eq.s32.totalorder %s25, 1
    %p258 = por %p256, %p257
    %p260 = scmp.ne.s32.totalorder %s245, %s259
    %p261 = scmp.eq.s32.totalorder %s25, 0
    %p262 = por %p260, %p261
    %s263 = ssub.s32 %s19, %s26
    %p264 = scmp.eq.s32.totalorder %s263, 0
    %s266 = sadd.s32 %s265, 1
    %s267 = scalar_select %p264, %s265, %s266
    %p270 = pneg %p264
    %p271 = scmp.eq.s32.totalorder %s19, 1
    %p272 = por %p270, %p271
    %p273 = scmp.ne.s32.totalorder %s265, %s268
    %p274 = scmp.eq.s32.totalorder %s19, 0
    %p275 = por %p273, %p274
    %p276 = scmp.ne.s32.totalorder %s265, %s268
    %p277 = scmp.eq.s32.totalorder %s24, 1
    %p278 = por %p276, %p277
    %p279 = scmp.ne.s32.totalorder %s268, %s269
    %p280 = scmp.eq.s32.totalorder %s24, 0
    %p281 = por %p279, %p280
    %p282 = scmp.ne.s32.totalorder %s268, %s269
    %p283 = scmp.eq.s32.totalorder %s25, 1
    %p284 = por %p282, %p283
    %p286 = scmp.ne.s32.totalorder %s269, %s285
    %p287 = scmp.eq.s32.totalorder %s25, 0
    %p288 = por %p286, %p287
    %p289 = scmp.le.s32.totalorder 1, %s19
    %p290 = scmp.lt.s32.totalorder %s19, 3
    %p291 = pnand %p289, %p290
    %p292 = pneg %p291
    // Predicated region
    $region9: #{cnn_forward_pallas.1} parent=5 // pred_check
      _
    $region10: #{cnn_forward_pallas.1} parent=5 // pred_check_branch
      %294 = sbr.rel (%p291) target = $region12
    $region11: #{cnn_forward_pallas.1} parent=5 // pred_region
      %s295 = ssub.s32 %s19, 1
      // Predicated region
      $region13: #{cnn_forward_pallas.1} parent=11 // pred_check
        %p296 = pneg %p66
      $region14: #{cnn_forward_pallas.1} parent=11 // pred_check_branch
        %298 = sbr.rel (%p296) target = $region16
      $region15: #{cnn_forward_pallas.1} parent=11 // pred_region
        _
      $region16: #{cnn_forward_pallas.1} parent=11 // pred_fallthru
        _
      // Predicated region
      $region17: #{cnn_forward_pallas.1} parent=11 // pred_check
        %p299 = pneg %p87
      $region18: #{cnn_forward_pallas.1} parent=11 // pred_check_branch
        %301 = sbr.rel (%p299) target = $region20
      $region19: #{cnn_forward_pallas.1} parent=11 // pred_region
        _
      $region20: #{cnn_forward_pallas.1} parent=11 // pred_fallthru
        _
      // Predicated region
      $region21: #{cnn_forward_pallas.1} parent=11 // pred_check
        %p302 = pneg %p108
      $region22: #{cnn_forward_pallas.1} parent=11 // pred_check_branch
        %304 = sbr.rel (%p302) target = $region24
      $region23: #{cnn_forward_pallas.1} parent=11 // pred_region
        _
      $region24: #{cnn_forward_pallas.1} parent=11 // pred_fallthru
        _
      // Predicated region
      $region25: #{cnn_forward_pallas.1} parent=11 // pred_check
        %p305 = pneg %p129
      $region26: #{cnn_forward_pallas.1} parent=11 // pred_check_branch
        %307 = sbr.rel (%p305) target = $region28
      $region27: #{cnn_forward_pallas.1} parent=11 // pred_region
        _
      $region28: #{cnn_forward_pallas.1} parent=11 // pred_fallthru
        _
      // Predicated region
      $region29: #{cnn_forward_pallas.1} parent=11 // pred_check
        %p308 = pneg %p150
      $region30: #{cnn_forward_pallas.1} parent=11 // pred_check_branch
        %310 = sbr.rel (%p308) target = $region32
      $region31: #{cnn_forward_pallas.1} parent=11 // pred_region
        _
      $region32: #{cnn_forward_pallas.1} parent=11 // pred_fallthru
        _
      // Predicated region
      $region33: #{cnn_forward_pallas.1} parent=11 // pred_check
        %p311 = pneg %p171
      $region34: #{cnn_forward_pallas.1} parent=11 // pred_check_branch
        %313 = sbr.rel (%p311) target = $region36
      $region35: #{cnn_forward_pallas.1} parent=11 // pred_region
        _
      $region36: #{cnn_forward_pallas.1} parent=11 // pred_fallthru
        _
      // Predicated region
      $region37: #{cnn_forward_pallas.1} parent=11 // pred_check
        %p314 = pneg %p192
      $region38: #{cnn_forward_pallas.1} parent=11 // pred_check_branch
        %316 = sbr.rel (%p314) target = $region40
      $region39: #{cnn_forward_pallas.1} parent=11 // pred_region
        _
      $region40: #{cnn_forward_pallas.1} parent=11 // pred_fallthru
        _
      // Predicated region
      $region41: #{cnn_forward_pallas.1} parent=11 // pred_check
        %p317 = pneg %p213
      $region42: #{cnn_forward_pallas.1} parent=11 // pred_check_branch
        %319 = sbr.rel (%p317) target = $region44
      $region43: #{cnn_forward_pallas.1} parent=11 // pred_region
        _
      $region44: #{cnn_forward_pallas.1} parent=11 // pred_fallthru
        _
      // Predicated region
      $region45: #{cnn_forward_pallas.1} parent=11 // pred_check
        %p320 = pneg %p234
      $region46: #{cnn_forward_pallas.1} parent=11 // pred_check_branch
        %322 = sbr.rel (%p320) target = $region48
      $region47: #{cnn_forward_pallas.1} parent=11 // pred_region
        _
      $region48: #{cnn_forward_pallas.1} parent=11 // pred_fallthru
        _
      // Predicated region
      $region49: #{cnn_forward_pallas.1} parent=11 // pred_check
        %p323 = pneg %p255
      $region50: #{cnn_forward_pallas.1} parent=11 // pred_check_branch
        %325 = sbr.rel (%p323) target = $region52
      $region51: #{cnn_forward_pallas.1} parent=11 // pred_region
        _
      $region52: #{cnn_forward_pallas.1} parent=11 // pred_fallthru
        _
    $region12: #{cnn_forward_pallas.1} parent=5 // pred_fallthru
      _
    %p326 = scmp.lt.s32.totalorder %s19, 2
    // Predicated region
    $region53: #{cnn_forward_pallas.1} parent=5 // pred_check
      %p327 = pneg %p326
    $region54: #{cnn_forward_pallas.1} parent=5 // pred_check_branch
      %329 = sbr.rel (%p327) target = $region56
    $region55: #{cnn_forward_pallas.1} parent=5 // pred_region
      // Predicated region
      $region57: #{cnn_forward_pallas.1} parent=55 // pred_check
        %p330 = pneg %p39
      $region58: #{cnn_forward_pallas.1} parent=55 // pred_check_branch
        %332 = sbr.rel (%p330) target = $region60
      $region59: #{cnn_forward_pallas.1} parent=55 // pred_region
        %p333 = scmp.lt.s32.totalorder %s19, 1
        %s334 = scalar_select %p333, %s19, 1
        %s335 = smul.addr %s334, 50
        %s336 = smul.addr %s335, 8
        %s337 = scalar_lea.vmem %s0, %s336
      $region60: #{cnn_forward_pallas.1} parent=55 // pred_fallthru
        _
    $region56: #{cnn_forward_pallas.1} parent=5 // pred_fallthru
      _
    %p338 = scmp.le.s32.totalorder 1, %s19
    %p339 = scmp.lt.s32.totalorder %s19, 3
    %p340 = pnand %p338, %p339
    %p341 = pneg %p340
    // Predicated region
    $region61: #{cnn_forward_pallas.1} parent=5 // pred_check
      _
    $region62: #{cnn_forward_pallas.1} parent=5 // pred_check_branch
      %343 = sbr.rel (%p340) target = $region64
    $region63: #{cnn_forward_pallas.1} parent=5 // pred_region
      %s344 = ssub.s32 %s19, 1
      %p345 = scmp.lt.s32.totalorder %s24, 1
      %s346 = scalar_select %p345, %s24, 1
      %s347 = smul.addr %s346, 50
      %s348 = smul.addr %s347, 8
      %s349 = scalar_lea.vmem %s0, %s348
      %p350 = pneg %p45
      %p351 = pneg %p42
      %p352 = pneg %p66
      %p353 = pneg %p63
      %p354 = pneg %p87
      %p355 = pneg %p84
      %p356 = pneg %p108
      %p357 = pneg %p105
      %p358 = pneg %p129
      %p359 = pneg %p126
      %p360 = pneg %p150
      %p361 = pneg %p147
      %p362 = pneg %p171
      %p363 = pneg %p168
      %p364 = pneg %p192
      %p365 = pneg %p189
      %p366 = pneg %p213
      %p367 = pneg %p210
      %p368 = pneg %p234
      %p369 = pneg %p231
      %p370 = pneg %p255
      %p371 = pneg %p252
      %p372 = pneg %p281
      %p373 = pneg %p278
      %p374 = scmp.lt.s32.totalorder %s24, 1
      %s375 = scalar_select %p374, %s24, 1
      %s376 = scalar_lea.vmem %s11, %s375
      %p377 = scmp.lt.s32.totalorder %s24, 1
      %s378 = scalar_select %p377, %s24, 1
      %s379 = smul.addr %s378, 50
      %s380 = smul.addr %s379, 8
      %s381 = scalar_lea.vmem %s0, %s380
      %p382 = scmp.lt.s32.totalorder %s24, 1
      %s383 = scalar_select %p382, %s24, 1
      %s384 = scalar_lea.vmem %s11, %s383
      %vm386 = vcmask 9216
      %387 = vst.msk [vmem:[#allocation2 + $0x6] sm:$0x3] %vm386, 0.0
      %vm388 = vcmask 8192
      %389 = vst.msk [vmem:[#allocation2 + $0x198] sm:$0x1] %vm388, 0.0
      %vm390 = vcmask 256000
      %391 = vst.msk [vmem:[#allocation3 + $0x5] sm:$0x7] %vm390, 0.0
      %vm392 = vcmask 254976
      %393 = vst.msk [vmem:[#allocation3 + $0xd0] sm:$0x3] %vm392, 0.0
      %vm394 = vcmask 518144
      %395 = vst.msk [vmem:[#allocation4 + $0x5] sm:$0x7] %vm394, 0.0
      %vm396 = vcmask 517120
      %397 = vst.msk [vmem:[#allocation4 + $0x3a] sm:$0x3] %vm396, 0.0
      %vm398 = vcmask 253952
      %399 = vst.msk [vmem:[#allocation5 + $0x7] sm:$0x1] %vm398, 0.0
      %vm400 = vcmask 516096
      %401 = vst.msk [vmem:[#allocation6 + $0x7] sm:$0x1] %vm400, 0.0
      %402 = vst [vmem:[#allocation7 + $0x7] sm:$0x1] 0.0
      %403 = vst [vmem:[#allocation7 + $0x21] sm:$0x1] 0.0
      %v404 = vld [vmem:[%s381] sm:$0xff]
      %v405 = vld [vmem:[%s381 + $0x8] sm:$0xff]
      %v406 = vld [vmem:[%s381 + $0x10] sm:$0xff]
      %v407 = vld [vmem:[%s381 + $0x18] sm:$0xff]
      %v408 = vld [vmem:[%s381 + $0x20] sm:$0xff]
      %v409 = vld [vmem:[%s381 + $0x28] sm:$0xff]
      %v410 = vld [vmem:[%s381 + $0x30] sm:$0xff]
      %v411 = vld [vmem:[%s381 + $0x38] sm:$0xff]
      %v412 = vld [vmem:[%s381 + $0x40] sm:$0xff]
      %v413 = vld [vmem:[%s381 + $0x48] sm:$0xff]
      %v414 = vld [vmem:[%s381 + $0x50] sm:$0xff]
      %v415 = vld [vmem:[%s381 + $0x58] sm:$0xff]
      %v416 = vld [vmem:[%s381 + $0x60] sm:$0xff]
      %v417 = vld [vmem:[%s381 + $0x68] sm:$0xff]
      %v418 = vld [vmem:[%s381 + $0x70] sm:$0xff]
      %v419 = vld [vmem:[%s381 + $0x78] sm:$0xff]
      %v420 = vld [vmem:[%s381 + $0x80] sm:$0xff]
      %v421 = vld [vmem:[%s381 + $0x88] sm:$0xff]
      %v422 = vld [vmem:[%s381 + $0x90] sm:$0xff]
      %v423 = vld [vmem:[%s381 + $0x98] sm:$0xff]
      %v424 = vld [vmem:[%s381 + $0xa0] sm:$0xff]
      %v425 = vld [vmem:[%s381 + $0xa8] sm:$0xff]
      %v426 = vld [vmem:[%s381 + $0xb0] sm:$0xff]
      %v427 = vld [vmem:[%s381 + $0xb8] sm:$0xff]
      %v428 = vld [vmem:[%s381 + $0xc0] sm:$0xff]
      %v429 = vld [vmem:[%s381 + $0xc8] sm:$0xff]
      %v430 = vld [vmem:[%s381 + $0xd0] sm:$0xff]
      %v431 = vld [vmem:[%s381 + $0xd8] sm:$0xff]
      %v432 = vld [vmem:[%s381 + $0xe0] sm:$0xff]
      %v433 = vld [vmem:[%s381 + $0xe8] sm:$0xff]
      %v434 = vld [vmem:[%s381 + $0xf0] sm:$0xff]
      %v435 = vld [vmem:[%s381 + $0xf8] sm:$0xff]
      %v436 = vld [vmem:[%s381 + $0x100] sm:$0xff]
      %v437 = vld [vmem:[%s381 + $0x108] sm:$0xff]
      %v438 = vld [vmem:[%s381 + $0x110] sm:$0xff]
      %v439 = vld [vmem:[%s381 + $0x118] sm:$0xff]
      %v440 = vld [vmem:[%s381 + $0x120] sm:$0xff]
      %v441 = vld [vmem:[%s381 + $0x128] sm:$0xff]
      %v442 = vld [vmem:[%s381 + $0x130] sm:$0xff]
      %v443 = vld [vmem:[%s381 + $0x138] sm:$0xff]
      %v444 = vld [vmem:[%s381 + $0x140] sm:$0xff]
      %v445 = vld [vmem:[%s381 + $0x148] sm:$0xff]
      %v446 = vld [vmem:[%s381 + $0x150] sm:$0xff]
      %v447 = vld [vmem:[%s381 + $0x158] sm:$0xff]
      %v448 = vld [vmem:[%s381 + $0x160] sm:$0xff]
      %v449 = vld [vmem:[%s381 + $0x168] sm:$0xff]
      %v450 = vld [vmem:[%s381 + $0x170] sm:$0xff]
      %v451 = vld [vmem:[%s381 + $0x178] sm:$0xff]
      %v452 = vld [vmem:[%s381 + $0x180] sm:$0xff]
      %v453 = vld [vmem:[%s381 + $0x188] sm:$0xff]
      %vm454 = vcmask 15360
      %455 = vst.msk [vmem:[#allocation2 + $0x8] sm:$0xff] %vm454, %v404
      %456 = vst.msk [vmem:[#allocation2 + $0x10] sm:$0xff] %vm454, %v405
      %457 = vst.msk [vmem:[#allocation2 + $0x18] sm:$0xff] %vm454, %v406
      %458 = vst.msk [vmem:[#allocation2 + $0x20] sm:$0xff] %vm454, %v407
      %459 = vst.msk [vmem:[#allocation2 + $0x28] sm:$0xff] %vm454, %v408
      %460 = vst.msk [vmem:[#allocation2 + $0x30] sm:$0xff] %vm454, %v409
      %461 = vst.msk [vmem:[#allocation2 + $0x38] sm:$0xff] %vm454, %v410
      %462 = vst.msk [vmem:[#allocation2 + $0x40] sm:$0xff] %vm454, %v411
      %463 = vst.msk [vmem:[#allocation2 + $0x48] sm:$0xff] %vm454, %v412
      %464 = vst.msk [vmem:[#allocation2 + $0x50] sm:$0xff] %vm454, %v413
      %465 = vst.msk [vmem:[#allocation2 + $0x58] sm:$0xff] %vm454, %v414
      %466 = vst.msk [vmem:[#allocation2 + $0x60] sm:$0xff] %vm454, %v415
      %467 = vst.msk [vmem:[#allocation2 + $0x68] sm:$0xff] %vm454, %v416
      %468 = vst.msk [vmem:[#allocation2 + $0x70] sm:$0xff] %vm454, %v417
      %469 = vst.msk [vmem:[#allocation2 + $0x78] sm:$0xff] %vm454, %v418
      %470 = vst.msk [vmem:[#allocation2 + $0x80] sm:$0xff] %vm454, %v419
      %471 = vst.msk [vmem:[#allocation2 + $0x88] sm:$0xff] %vm454, %v420
      %472 = vst.msk [vmem:[#allocation2 + $0x90] sm:$0xff] %vm454, %v421
      %473 = vst.msk [vmem:[#allocation2 + $0x98] sm:$0xff] %vm454, %v422
      %474 = vst.msk [vmem:[#allocation2 + $0xa0] sm:$0xff] %vm454, %v423
      %475 = vst.msk [vmem:[#allocation2 + $0xa8] sm:$0xff] %vm454, %v424
      %476 = vst.msk [vmem:[#allocation2 + $0xb0] sm:$0xff] %vm454, %v425
      %477 = vst.msk [vmem:[#allocation2 + $0xb8] sm:$0xff] %vm454, %v426
      %478 = vst.msk [vmem:[#allocation2 + $0xc0] sm:$0xff] %vm454, %v427
      %479 = vst.msk [vmem:[#allocation2 + $0xc8] sm:$0xff] %vm454, %v428
      %480 = vst.msk [vmem:[#allocation2 + $0xd0] sm:$0xff] %vm454, %v429
      %481 = vst.msk [vmem:[#allocation2 + $0xd8] sm:$0xff] %vm454, %v430
      %482 = vst.msk [vmem:[#allocation2 + $0xe0] sm:$0xff] %vm454, %v431
      %483 = vst.msk [vmem:[#allocation2 + $0xe8] sm:$0xff] %vm454, %v432
      %484 = vst.msk [vmem:[#allocation2 + $0xf0] sm:$0xff] %vm454, %v433
      %485 = vst.msk [vmem:[#allocation2 + $0xf8] sm:$0xff] %vm454, %v434
      %486 = vst.msk [vmem:[#allocation2 + $0x100] sm:$0xff] %vm454, %v435
      %487 = vst.msk [vmem:[#allocation2 + $0x108] sm:$0xff] %vm454, %v436
      %488 = vst.msk [vmem:[#allocation2 + $0x110] sm:$0xff] %vm454, %v437
      %489 = vst.msk [vmem:[#allocation2 + $0x118] sm:$0xff] %vm454, %v438
      %490 = vst.msk [vmem:[#allocation2 + $0x120] sm:$0xff] %vm454, %v439
      %491 = vst.msk [vmem:[#allocation2 + $0x128] sm:$0xff] %vm454, %v440
      %492 = vst.msk [vmem:[#allocation2 + $0x130] sm:$0xff] %vm454, %v441
      %493 = vst.msk [vmem:[#allocation2 + $0x138] sm:$0xff] %vm454, %v442
      %494 = vst.msk [vmem:[#allocation2 + $0x140] sm:$0xff] %vm454, %v443
      %495 = vst.msk [vmem:[#allocation2 + $0x148] sm:$0xff] %vm454, %v444
      %496 = vst.msk [vmem:[#allocation2 + $0x150] sm:$0xff] %vm454, %v445
      %497 = vst.msk [vmem:[#allocation2 + $0x158] sm:$0xff] %vm454, %v446
      %498 = vst.msk [vmem:[#allocation2 + $0x160] sm:$0xff] %vm454, %v447
      %499 = vst.msk [vmem:[#allocation2 + $0x168] sm:$0xff] %vm454, %v448
      %500 = vst.msk [vmem:[#allocation2 + $0x170] sm:$0xff] %vm454, %v449
      %501 = vst.msk [vmem:[#allocation2 + $0x178] sm:$0xff] %vm454, %v450
      %502 = vst.msk [vmem:[#allocation2 + $0x180] sm:$0xff] %vm454, %v451
      %503 = vst.msk [vmem:[#allocation2 + $0x188] sm:$0xff] %vm454, %v452
      %504 = vst.msk [vmem:[#allocation2 + $0x190] sm:$0xff] %vm454, %v453
      %v505 = vld [vmem:[#allocation2 + $0x6] sm:$0xff]
      %v506 = vld [vmem:[#allocation2 + $0xe] sm:$0xff]
      %v507 = vld [vmem:[#allocation2 + $0x16] sm:$0xff]
      %v508 = vld [vmem:[#allocation2 + $0x1e] sm:$0xff]
      %v509 = vld [vmem:[#allocation2 + $0x26] sm:$0xff]
      %v510 = vld [vmem:[#allocation2 + $0x2e] sm:$0xff]
      %v511 = vld [vmem:[#allocation2 + $0x36] sm:$0xff]
      %v512 = vld [vmem:[#allocation2 + $0x3e] sm:$0xff]
      %v513 = vld [vmem:[#allocation2 + $0x46] sm:$0xff]
      %v514 = vld [vmem:[#allocation2 + $0x4e] sm:$0xff]
      %v515 = vld [vmem:[#allocation2 + $0x56] sm:$0xff]
      %v516 = vld [vmem:[#allocation2 + $0x5e] sm:$0xff]
      %v517 = vld [vmem:[#allocation2 + $0x66] sm:$0xff]
      %v518 = vld [vmem:[#allocation2 + $0x6e] sm:$0xff]
      %v519 = vld [vmem:[#allocation2 + $0x76] sm:$0xff]
      %v520 = vld [vmem:[#allocation2 + $0x7e] sm:$0xff]
      %v521 = vld [vmem:[#allocation2 + $0x86] sm:$0xff]
      %v522 = vld [vmem:[#allocation2 + $0x8e] sm:$0xff]
      %v523 = vld [vmem:[#allocation2 + $0x96] sm:$0xff]
      %v524 = vld [vmem:[#allocation2 + $0x9e] sm:$0xff]
      %v525 = vld [vmem:[#allocation2 + $0xa6] sm:$0xff]
      %v526 = vld [vmem:[#allocation2 + $0xae] sm:$0xff]
      %v527 = vld [vmem:[#allocation2 + $0xb6] sm:$0xff]
      %v528 = vld [vmem:[#allocation2 + $0xbe] sm:$0xff]
      %v529 = vld [vmem:[#allocation2 + $0xc6] sm:$0xff]
      %v530 = vld [vmem:[#allocation2 + $0xce] sm:$0xff]
      %v531 = vld [vmem:[#allocation2 + $0xd6] sm:$0xff]
      %v532 = vld [vmem:[#allocation2 + $0xde] sm:$0xff]
      %v533 = vld [vmem:[#allocation2 + $0xe6] sm:$0xff]
      %v534 = vld [vmem:[#allocation2 + $0xee] sm:$0xff]
      %v535 = vld [vmem:[#allocation2 + $0xf6] sm:$0xff]
      %v536 = vld [vmem:[#allocation2 + $0xfe] sm:$0xff]
      %v537 = vld [vmem:[#allocation2 + $0x106] sm:$0xff]
      %v538 = vld [vmem:[#allocation2 + $0x10e] sm:$0xff]
      %v539 = vld [vmem:[#allocation2 + $0x116] sm:$0xff]
      %v540 = vld [vmem:[#allocation2 + $0x11e] sm:$0xff]
      %v541 = vld [vmem:[#allocation2 + $0x126] sm:$0xff]
      %v542 = vld [vmem:[#allocation2 + $0x12e] sm:$0xff]
      %v543 = vld [vmem:[#allocation2 + $0x136] sm:$0xff]
      %v544 = vld [vmem:[#allocation2 + $0x13e] sm:$0xff]
      %v545 = vld [vmem:[#allocation2 + $0x146] sm:$0xff]
      %v546 = vld [vmem:[#allocation2 + $0x14e] sm:$0xff]
      %v547 = vld [vmem:[#allocation2 + $0x156] sm:$0xff]
      %v548 = vld [vmem:[#allocation2 + $0x15e] sm:$0xff]
      %v549 = vld [vmem:[#allocation2 + $0x166] sm:$0xff]
      %v550 = vld [vmem:[#allocation2 + $0x16e] sm:$0xff]
      %v551 = vld [vmem:[#allocation2 + $0x176] sm:$0xff]
      %v552 = vld [vmem:[#allocation2 + $0x17e] sm:$0xff]
      %v553 = vld [vmem:[#allocation2 + $0x186] sm:$0xff]
      %v554 = vld [vmem:[#allocation2 + $0x18e] sm:$0xff]
      %v555 = vld [vmem:[%s1] sm:$0x1]
      %557 = vset.pattern.permute.xlu0 1
      %558 = vperm.xlu0 %557, %v505
      %v559 = vpop.permute.xlu0 %558
      %562 = vset.pattern.permute.xlu0 1
      %563 = vperm.xlu0 %562, %v506
      %v564 = vpop.permute.xlu0 %563
      %567 = vset.pattern.permute.xlu0 1
      %568 = vperm.xlu0 %567, %v507
      %v569 = vpop.permute.xlu0 %568
      %572 = vset.pattern.permute.xlu0 1
      %573 = vperm.xlu0 %572, %v508
      %v574 = vpop.permute.xlu0 %573
      %577 = vset.pattern.permute.xlu0 1
      %578 = vperm.xlu0 %577, %v509
      %v579 = vpop.permute.xlu0 %578
      %582 = vset.pattern.permute.xlu0 1
      %583 = vperm.xlu0 %582, %v510
      %v584 = vpop.permute.xlu0 %583
      %587 = vset.pattern.permute.xlu0 1
      %588 = vperm.xlu0 %587, %v511
      %v589 = vpop.permute.xlu0 %588
      %592 = vset.pattern.permute.xlu0 1
      %593 = vperm.xlu0 %592, %v512
      %v594 = vpop.permute.xlu0 %593
      %597 = vset.pattern.permute.xlu0 1
      %598 = vperm.xlu0 %597, %v513
      %v599 = vpop.permute.xlu0 %598
      %602 = vset.pattern.permute.xlu0 1
      %603 = vperm.xlu0 %602, %v514
      %v604 = vpop.permute.xlu0 %603
      %607 = vset.pattern.permute.xlu0 1
      %608 = vperm.xlu0 %607, %v515
      %v609 = vpop.permute.xlu0 %608
      %612 = vset.pattern.permute.xlu0 1
      %613 = vperm.xlu0 %612, %v516
      %v614 = vpop.permute.xlu0 %613
      %617 = vset.pattern.permute.xlu0 1
      %618 = vperm.xlu0 %617, %v517
      %v619 = vpop.permute.xlu0 %618
      %622 = vset.pattern.permute.xlu0 1
      %623 = vperm.xlu0 %622, %v518
      %v624 = vpop.permute.xlu0 %623
      %627 = vset.pattern.permute.xlu0 1
      %628 = vperm.xlu0 %627, %v519
      %v629 = vpop.permute.xlu0 %628
      %632 = vset.pattern.permute.xlu0 1
      %633 = vperm.xlu0 %632, %v520
      %v634 = vpop.permute.xlu0 %633
      %637 = vset.pattern.permute.xlu0 1
      %638 = vperm.xlu0 %637, %v521
      %v639 = vpop.permute.xlu0 %638
      %642 = vset.pattern.permute.xlu0 1
      %643 = vperm.xlu0 %642, %v522
      %v644 = vpop.permute.xlu0 %643
      %647 = vset.pattern.permute.xlu0 1
      %648 = vperm.xlu0 %647, %v523
      %v649 = vpop.permute.xlu0 %648
      %652 = vset.pattern.permute.xlu0 1
      %653 = vperm.xlu0 %652, %v524
      %v654 = vpop.permute.xlu0 %653
      %657 = vset.pattern.permute.xlu0 1
      %658 = vperm.xlu0 %657, %v525
      %v659 = vpop.permute.xlu0 %658
      %662 = vset.pattern.permute.xlu0 1
      %663 = vperm.xlu0 %662, %v526
      %v664 = vpop.permute.xlu0 %663
      %667 = vset.pattern.permute.xlu0 1
      %668 = vperm.xlu0 %667, %v527
      %v669 = vpop.permute.xlu0 %668
      %672 = vset.pattern.permute.xlu0 1
      %673 = vperm.xlu0 %672, %v528
      %v674 = vpop.permute.xlu0 %673
      %677 = vset.pattern.permute.xlu0 1
      %678 = vperm.xlu0 %677, %v529
      %v679 = vpop.permute.xlu0 %678
      %682 = vset.pattern.permute.xlu0 1
      %683 = vperm.xlu0 %682, %v530
      %v684 = vpop.permute.xlu0 %683
      %687 = vset.pattern.permute.xlu0 1
      %688 = vperm.xlu0 %687, %v531
      %v689 = vpop.permute.xlu0 %688
      %692 = vset.pattern.permute.xlu0 1
      %693 = vperm.xlu0 %692, %v532
      %v694 = vpop.permute.xlu0 %693
      %697 = vset.pattern.permute.xlu0 1
      %698 = vperm.xlu0 %697, %v533
      %v699 = vpop.permute.xlu0 %698
      %702 = vset.pattern.permute.xlu0 1
      %703 = vperm.xlu0 %702, %v534
      %v704 = vpop.permute.xlu0 %703
      %707 = vset.pattern.permute.xlu0 1
      %708 = vperm.xlu0 %707, %v535
      %v709 = vpop.permute.xlu0 %708
      %712 = vset.pattern.permute.xlu0 1
      %713 = vperm.xlu0 %712, %v536
      %v714 = vpop.permute.xlu0 %713
      %717 = vset.pattern.permute.xlu0 1
      %718 = vperm.xlu0 %717, %v537
      %v719 = vpop.permute.xlu0 %718
      %722 = vset.pattern.permute.xlu0 1
      %723 = vperm.xlu0 %722, %v538
      %v724 = vpop.permute.xlu0 %723
      %727 = vset.pattern.permute.xlu0 1
      %728 = vperm.xlu0 %727, %v539
      %v729 = vpop.permute.xlu0 %728
      %732 = vset.pattern.permute.xlu0 1
      %733 = vperm.xlu0 %732, %v540
      %v734 = vpop.permute.xlu0 %733
      %737 = vset.pattern.permute.xlu0 1
      %738 = vperm.xlu0 %737, %v541
      %v739 = vpop.permute.xlu0 %738
      %742 = vset.pattern.permute.xlu0 1
      %743 = vperm.xlu0 %742, %v542
      %v744 = vpop.permute.xlu0 %743
      %747 = vset.pattern.permute.xlu0 1
      %748 = vperm.xlu0 %747, %v543
      %v749 = vpop.permute.xlu0 %748
      %752 = vset.pattern.permute.xlu0 1
      %753 = vperm.xlu0 %752, %v544
      %v754 = vpop.permute.xlu0 %753
      %757 = vset.pattern.permute.xlu0 1
      %758 = vperm.xlu0 %757, %v545
      %v759 = vpop.permute.xlu0 %758
      %762 = vset.pattern.permute.xlu0 1
      %763 = vperm.xlu0 %762, %v546
      %v764 = vpop.permute.xlu0 %763
      %767 = vset.pattern.permute.xlu0 1
      %768 = vperm.xlu0 %767, %v547
      %v769 = vpop.permute.xlu0 %768
      %772 = vset.pattern.permute.xlu0 1
      %773 = vperm.xlu0 %772, %v548
      %v774 = vpop.permute.xlu0 %773
      %777 = vset.pattern.permute.xlu0 1
      %778 = vperm.xlu0 %777, %v549
      %v779 = vpop.permute.xlu0 %778
      %782 = vset.pattern.permute.xlu0 1
      %783 = vperm.xlu0 %782, %v550
      %v784 = vpop.permute.xlu0 %783
      %787 = vset.pattern.permute.xlu0 1
      %788 = vperm.xlu0 %787, %v551
      %v789 = vpop.permute.xlu0 %788
      %792 = vset.pattern.permute.xlu0 1
      %793 = vperm.xlu0 %792, %v552
      %v794 = vpop.permute.xlu0 %793
      %797 = vset.pattern.permute.xlu0 1
      %798 = vperm.xlu0 %797, %v553
      %v799 = vpop.permute.xlu0 %798
      %802 = vset.pattern.permute.xlu0 1
      %803 = vperm.xlu0 %802, %v554
      %v804 = vpop.permute.xlu0 %803
      %v806 = vlaneseq
      %v807 = vshrl.u32 %v806, 7
      %v808 = vsub.s32 0, %v807
      %v809 = vrot.slane %v555, %v808
      %v810 = vmul.f32 %v559, %v809
      %v811 = vmul.f32 %v564, %v809
      %v812 = vmul.f32 %v569, %v809
      %v813 = vmul.f32 %v574, %v809
      %v814 = vmul.f32 %v579, %v809
      %v815 = vmul.f32 %v584, %v809
      %v816 = vmul.f32 %v589, %v809
      %v817 = vmul.f32 %v594, %v809
      %v818 = vmul.f32 %v599, %v809
      %v819 = vmul.f32 %v604, %v809
      %v820 = vmul.f32 %v609, %v809
      %v821 = vmul.f32 %v614, %v809
      %v822 = vmul.f32 %v619, %v809
      %v823 = vmul.f32 %v624, %v809
      %v824 = vmul.f32 %v629, %v809
      %v825 = vmul.f32 %v634, %v809
      %v826 = vmul.f32 %v639, %v809
      %v827 = vmul.f32 %v644, %v809
      %v828 = vmul.f32 %v649, %v809
      %v829 = vmul.f32 %v654, %v809
      %v830 = vmul.f32 %v659, %v809
      %v831 = vmul.f32 %v664, %v809
      %v832 = vmul.f32 %v669, %v809
      %v833 = vmul.f32 %v674, %v809
      %v834 = vmul.f32 %v679, %v809
      %v835 = vmul.f32 %v684, %v809
      %v836 = vmul.f32 %v689, %v809
      %v837 = vmul.f32 %v694, %v809
      %v838 = vmul.f32 %v699, %v809
      %v839 = vmul.f32 %v704, %v809
      %v840 = vmul.f32 %v709, %v809
      %v841 = vmul.f32 %v714, %v809
      %v842 = vmul.f32 %v719, %v809
      %v843 = vmul.f32 %v724, %v809
      %v844 = vmul.f32 %v729, %v809
      %v845 = vmul.f32 %v734, %v809
      %v846 = vmul.f32 %v739, %v809
      %v847 = vmul.f32 %v744, %v809
      %v848 = vmul.f32 %v749, %v809
      %v849 = vmul.f32 %v754, %v809
      %v850 = vmul.f32 %v759, %v809
      %v851 = vmul.f32 %v764, %v809
      %v852 = vmul.f32 %v769, %v809
      %v853 = vmul.f32 %v774, %v809
      %v854 = vmul.f32 %v779, %v809
      %v855 = vmul.f32 %v784, %v809
      %v856 = vmul.f32 %v789, %v809
      %v857 = vmul.f32 %v794, %v809
      %v858 = vmul.f32 %v799, %v809
      %v859 = vmul.f32 %v804, %v809
      %v860 = vld [vmem:[#allocation2 + $0x7] sm:$0xff]
      %v861 = vld [vmem:[#allocation2 + $0xf] sm:$0xff]
      %v862 = vld [vmem:[#allocation2 + $0x17] sm:$0xff]
      %v863 = vld [vmem:[#allocation2 + $0x1f] sm:$0xff]
      %v864 = vld [vmem:[#allocation2 + $0x27] sm:$0xff]
      %v865 = vld [vmem:[#allocation2 + $0x2f] sm:$0xff]
      %v866 = vld [vmem:[#allocation2 + $0x37] sm:$0xff]
      %v867 = vld [vmem:[#allocation2 + $0x3f] sm:$0xff]
      %v868 = vld [vmem:[#allocation2 + $0x47] sm:$0xff]
      %v869 = vld [vmem:[#allocation2 + $0x4f] sm:$0xff]
      %v870 = vld [vmem:[#allocation2 + $0x57] sm:$0xff]
      %v871 = vld [vmem:[#allocation2 + $0x5f] sm:$0xff]
      %v872 = vld [vmem:[#allocation2 + $0x67] sm:$0xff]
      %v873 = vld [vmem:[#allocation2 + $0x6f] sm:$0xff]
      %v874 = vld [vmem:[#allocation2 + $0x77] sm:$0xff]
      %v875 = vld [vmem:[#allocation2 + $0x7f] sm:$0xff]
      %v876 = vld [vmem:[#allocation2 + $0x87] sm:$0xff]
      %v877 = vld [vmem:[#allocation2 + $0x8f] sm:$0xff]
      %v878 = vld [vmem:[#allocation2 + $0x97] sm:$0xff]
      %v879 = vld [vmem:[#allocation2 + $0x9f] sm:$0xff]
      %v880 = vld [vmem:[#allocation2 + $0xa7] sm:$0xff]
      %v881 = vld [vmem:[#allocation2 + $0xaf] sm:$0xff]
      %v882 = vld [vmem:[#allocation2 + $0xb7] sm:$0xff]
      %v883 = vld [vmem:[#allocation2 + $0xbf] sm:$0xff]
      %v884 = vld [vmem:[#allocation2 + $0xc7] sm:$0xff]
      %v885 = vld [vmem:[#allocation2 + $0xcf] sm:$0xff]
      %v886 = vld [vmem:[#allocation2 + $0xd7] sm:$0xff]
      %v887 = vld [vmem:[#allocation2 + $0xdf] sm:$0xff]
      %v888 = vld [vmem:[#allocation2 + $0xe7] sm:$0xff]
      %v889 = vld [vmem:[#allocation2 + $0xef] sm:$0xff]
      %v890 = vld [vmem:[#allocation2 + $0xf7] sm:$0xff]
      %v891 = vld [vmem:[#allocation2 + $0xff] sm:$0xff]
      %v892 = vld [vmem:[#allocation2 + $0x107] sm:$0xff]
      %v893 = vld [vmem:[#allocation2 + $0x10f] sm:$0xff]
      %v894 = vld [vmem:[#allocation2 + $0x117] sm:$0xff]
      %v895 = vld [vmem:[#allocation2 + $0x11f] sm:$0xff]
      %v896 = vld [vmem:[#allocation2 + $0x127] sm:$0xff]
      %v897 = vld [vmem:[#allocation2 + $0x12f] sm:$0xff]
      %v898 = vld [vmem:[#allocation2 + $0x137] sm:$0xff]
      %v899 = vld [vmem:[#allocation2 + $0x13f] sm:$0xff]
      %v900 = vld [vmem:[#allocation2 + $0x147] sm:$0xff]
      %v901 = vld [vmem:[#allocation2 + $0x14f] sm:$0xff]
      %v902 = vld [vmem:[#allocation2 + $0x157] sm:$0xff]
      %v903 = vld [vmem:[#allocation2 + $0x15f] sm:$0xff]
      %v904 = vld [vmem:[#allocation2 + $0x167] sm:$0xff]
      %v905 = vld [vmem:[#allocation2 + $0x16f] sm:$0xff]
      %v906 = vld [vmem:[#allocation2 + $0x177] sm:$0xff]
      %v907 = vld [vmem:[#allocation2 + $0x17f] sm:$0xff]
      %v908 = vld [vmem:[#allocation2 + $0x187] sm:$0xff]
      %v909 = vld [vmem:[#allocation2 + $0x18f] sm:$0xff]
      %v910 = vld [vmem:[%s1 + $0x1] sm:$0x1]
      %912 = vset.pattern.permute.xlu0 0
      %913 = vperm.xlu0 %912, %v860
      %v914 = vpop.permute.xlu0 %913
      %917 = vset.pattern.permute.xlu0 0
      %918 = vperm.xlu0 %917, %v861
      %v919 = vpop.permute.xlu0 %918
      %922 = vset.pattern.permute.xlu0 0
      %923 = vperm.xlu0 %922, %v862
      %v924 = vpop.permute.xlu0 %923
      %927 = vset.pattern.permute.xlu0 0
      %928 = vperm.xlu0 %927, %v863
      %v929 = vpop.permute.xlu0 %928
      %932 = vset.pattern.permute.xlu0 0
      %933 = vperm.xlu0 %932, %v864
      %v934 = vpop.permute.xlu0 %933
      %937 = vset.pattern.permute.xlu0 0
      %938 = vperm.xlu0 %937, %v865
      %v939 = vpop.permute.xlu0 %938
      %942 = vset.pattern.permute.xlu0 0
      %943 = vperm.xlu0 %942, %v866
      %v944 = vpop.permute.xlu0 %943
      %947 = vset.pattern.permute.xlu0 0
      %948 = vperm.xlu0 %947, %v867
      %v949 = vpop.permute.xlu0 %948
      %952 = vset.pattern.permute.xlu0 0
      %953 = vperm.xlu0 %952, %v868
      %v954 = vpop.permute.xlu0 %953
      %957 = vset.pattern.permute.xlu0 0
      %958 = vperm.xlu0 %957, %v869
      %v959 = vpop.permute.xlu0 %958
      %962 = vset.pattern.permute.xlu0 0
      %963 = vperm.xlu0 %962, %v870
      %v964 = vpop.permute.xlu0 %963
      %967 = vset.pattern.permute.xlu0 0
      %968 = vperm.xlu0 %967, %v871
      %v969 = vpop.permute.xlu0 %968
      %972 = vset.pattern.permute.xlu0 0
      %973 = vperm.xlu0 %972, %v872
      %v974 = vpop.permute.xlu0 %973
      %977 = vset.pattern.permute.xlu0 0
      %978 = vperm.xlu0 %977, %v873
      %v979 = vpop.permute.xlu0 %978
      %982 = vset.pattern.permute.xlu0 0
      %983 = vperm.xlu0 %982, %v874
      %v984 = vpop.permute.xlu0 %983
      %987 = vset.pattern.permute.xlu0 0
      %988 = vperm.xlu0 %987, %v875
      %v989 = vpop.permute.xlu0 %988
      %992 = vset.pattern.permute.xlu0 0
      %993 = vperm.xlu0 %992, %v876
      %v994 = vpop.permute.xlu0 %993
      %997 = vset.pattern.permute.xlu0 0
      %998 = vperm.xlu0 %997, %v877
      %v999 = vpop.permute.xlu0 %998
      %1002 = vset.pattern.permute.xlu0 0
      %1003 = vperm.xlu0 %1002, %v878
      %v1004 = vpop.permute.xlu0 %1003
      %1007 = vset.pattern.permute.xlu0 0
      %1008 = vperm.xlu0 %1007, %v879
      %v1009 = vpop.permute.xlu0 %1008
      %1012 = vset.pattern.permute.xlu0 0
      %1013 = vperm.xlu0 %1012, %v880
      %v1014 = vpop.permute.xlu0 %1013
      %1017 = vset.pattern.permute.xlu0 0
      %1018 = vperm.xlu0 %1017, %v881
      %v1019 = vpop.permute.xlu0 %1018
      %1022 = vset.pattern.permute.xlu0 0
      %1023 = vperm.xlu0 %1022, %v882
      %v1024 = vpop.permute.xlu0 %1023
      %1027 = vset.pattern.permute.xlu0 0
      %1028 = vperm.xlu0 %1027, %v883
      %v1029 = vpop.permute.xlu0 %1028
      %1032 = vset.pattern.permute.xlu0 0
      %1033 = vperm.xlu0 %1032, %v884
      %v1034 = vpop.permute.xlu0 %1033
      %1037 = vset.pattern.permute.xlu0 0
      %1038 = vperm.xlu0 %1037, %v885
      %v1039 = vpop.permute.xlu0 %1038
      %1042 = vset.pattern.permute.xlu0 0
      %1043 = vperm.xlu0 %1042, %v886
      %v1044 = vpop.permute.xlu0 %1043
      %1047 = vset.pattern.permute.xlu0 0
      %1048 = vperm.xlu0 %1047, %v887
      %v1049 = vpop.permute.xlu0 %1048
      %1052 = vset.pattern.permute.xlu0 0
      %1053 = vperm.xlu0 %1052, %v888
      %v1054 = vpop.permute.xlu0 %1053
      %1057 = vset.pattern.permute.xlu0 0
      %1058 = vperm.xlu0 %1057, %v889
      %v1059 = vpop.permute.xlu0 %1058
      %1062 = vset.pattern.permute.xlu0 0
      %1063 = vperm.xlu0 %1062, %v890
      %v1064 = vpop.permute.xlu0 %1063
      %1067 = vset.pattern.permute.xlu0 0
      %1068 = vperm.xlu0 %1067, %v891
      %v1069 = vpop.permute.xlu0 %1068
      %1072 = vset.pattern.permute.xlu0 0
      %1073 = vperm.xlu0 %1072, %v892
      %v1074 = vpop.permute.xlu0 %1073
      %1077 = vset.pattern.permute.xlu0 0
      %1078 = vperm.xlu0 %1077, %v893
      %v1079 = vpop.permute.xlu0 %1078
      %1082 = vset.pattern.permute.xlu0 0
      %1083 = vperm.xlu0 %1082, %v894
      %v1084 = vpop.permute.xlu0 %1083
      %1087 = vset.pattern.permute.xlu0 0
      %1088 = vperm.xlu0 %1087, %v895
      %v1089 = vpop.permute.xlu0 %1088
      %1092 = vset.pattern.permute.xlu0 0
      %1093 = vperm.xlu0 %1092, %v896
      %v1094 = vpop.permute.xlu0 %1093
      %1097 = vset.pattern.permute.xlu0 0
      %1098 = vperm.xlu0 %1097, %v897
      %v1099 = vpop.permute.xlu0 %1098
      %1102 = vset.pattern.permute.xlu0 0
      %1103 = vperm.xlu0 %1102, %v898
      %v1104 = vpop.permute.xlu0 %1103
      %1107 = vset.pattern.permute.xlu0 0
      %1108 = vperm.xlu0 %1107, %v899
      %v1109 = vpop.permute.xlu0 %1108
      %1112 = vset.pattern.permute.xlu0 0
      %1113 = vperm.xlu0 %1112, %v900
      %v1114 = vpop.permute.xlu0 %1113
      %1117 = vset.pattern.permute.xlu0 0
      %1118 = vperm.xlu0 %1117, %v901
      %v1119 = vpop.permute.xlu0 %1118
      %1122 = vset.pattern.permute.xlu0 0
      %1123 = vperm.xlu0 %1122, %v902
      %v1124 = vpop.permute.xlu0 %1123
      %1127 = vset.pattern.permute.xlu0 0
      %1128 = vperm.xlu0 %1127, %v903
      %v1129 = vpop.permute.xlu0 %1128
      %1132 = vset.pattern.permute.xlu0 0
      %1133 = vperm.xlu0 %1132, %v904
      %v1134 = vpop.permute.xlu0 %1133
      %1137 = vset.pattern.permute.xlu0 0
      %1138 = vperm.xlu0 %1137, %v905
      %v1139 = vpop.permute.xlu0 %1138
      %1142 = vset.pattern.permute.xlu0 0
      %1143 = vperm.xlu0 %1142, %v906
      %v1144 = vpop.permute.xlu0 %1143
      %1147 = vset.pattern.permute.xlu0 0
      %1148 = vperm.xlu0 %1147, %v907
      %v1149 = vpop.permute.xlu0 %1148
      %1152 = vset.pattern.permute.xlu0 0
      %1153 = vperm.xlu0 %1152, %v908
      %v1154 = vpop.permute.xlu0 %1153
      %1157 = vset.pattern.permute.xlu0 0
      %1158 = vperm.xlu0 %1157, %v909
      %v1159 = vpop.permute.xlu0 %1158
      %v1161 = vlaneseq
      %v1162 = vshrl.u32 %v1161, 7
      %v1163 = vsub.s32 0, %v1162
      %v1164 = vrot.slane %v910, %v1163
      %v1165 = vmul.f32 %v914, %v1164
      %v1166 = vmul.f32 %v919, %v1164
      %v1167 = vmul.f32 %v924, %v1164
      %v1168 = vmul.f32 %v929, %v1164
      %v1169 = vmul.f32 %v934, %v1164
      %v1170 = vmul.f32 %v939, %v1164
      %v1171 = vmul.f32 %v944, %v1164
      %v1172 = vmul.f32 %v949, %v1164
      %v1173 = vmul.f32 %v954, %v1164
      %v1174 = vmul.f32 %v959, %v1164
      %v1175 = vmul.f32 %v964, %v1164
      %v1176 = vmul.f32 %v969, %v1164
      %v1177 = vmul.f32 %v974, %v1164
      %v1178 = vmul.f32 %v979, %v1164
      %v1179 = vmul.f32 %v984, %v1164
      %v1180 = vmul.f32 %v989, %v1164
      %v1181 = vmul.f32 %v994, %v1164
      %v1182 = vmul.f32 %v999, %v1164
      %v1183 = vmul.f32 %v1004, %v1164
      %v1184 = vmul.f32 %v1009, %v1164
      %v1185 = vmul.f32 %v1014, %v1164
      %v1186 = vmul.f32 %v1019, %v1164
      %v1187 = vmul.f32 %v1024, %v1164
      %v1188 = vmul.f32 %v1029, %v1164
      %v1189 = vmul.f32 %v1034, %v1164
      %v1190 = vmul.f32 %v1039, %v1164
      %v1191 = vmul.f32 %v1044, %v1164
      %v1192 = vmul.f32 %v1049, %v1164
      %v1193 = vmul.f32 %v1054, %v1164
      %v1194 = vmul.f32 %v1059, %v1164
      %v1195 = vmul.f32 %v1064, %v1164
      %v1196 = vmul.f32 %v1069, %v1164
      %v1197 = vmul.f32 %v1074, %v1164
      %v1198 = vmul.f32 %v1079, %v1164
      %v1199 = vmul.f32 %v1084, %v1164
      %v1200 = vmul.f32 %v1089, %v1164
      %v1201 = vmul.f32 %v1094, %v1164
      %v1202 = vmul.f32 %v1099, %v1164
      %v1203 = vmul.f32 %v1104, %v1164
      %v1204 = vmul.f32 %v1109, %v1164
      %v1205 = vmul.f32 %v1114, %v1164
      %v1206 = vmul.f32 %v1119, %v1164
      %v1207 = vmul.f32 %v1124, %v1164
      %v1208 = vmul.f32 %v1129, %v1164
      %v1209 = vmul.f32 %v1134, %v1164
      %v1210 = vmul.f32 %v1139, %v1164
      %v1211 = vmul.f32 %v1144, %v1164
      %v1212 = vmul.f32 %v1149, %v1164
      %v1213 = vmul.f32 %v1154, %v1164
      %v1214 = vmul.f32 %v1159, %v1164
      %v1215 = vadd.f32 %v810, %v1165
      %v1216 = vadd.f32 %v811, %v1166
      %v1217 = vadd.f32 %v812, %v1167
      %v1218 = vadd.f32 %v813, %v1168
      %v1219 = vadd.f32 %v814, %v1169
      %v1220 = vadd.f32 %v815, %v1170
      %v1221 = vadd.f32 %v816, %v1171
      %v1222 = vadd.f32 %v817, %v1172
      %v1223 = vadd.f32 %v818, %v1173
      %v1224 = vadd.f32 %v819, %v1174
      %v1225 = vadd.f32 %v820, %v1175
      %v1226 = vadd.f32 %v821, %v1176
      %v1227 = vadd.f32 %v822, %v1177
      %v1228 = vadd.f32 %v823, %v1178
      %v1229 = vadd.f32 %v824, %v1179
      %v1230 = vadd.f32 %v825, %v1180
      %v1231 = vadd.f32 %v826, %v1181
      %v1232 = vadd.f32 %v827, %v1182
      %v1233 = vadd.f32 %v828, %v1183
      %v1234 = vadd.f32 %v829, %v1184
      %v1235 = vadd.f32 %v830, %v1185
      %v1236 = vadd.f32 %v831, %v1186
      %v1237 = vadd.f32 %v832, %v1187
      %v1238 = vadd.f32 %v833, %v1188
      %v1239 = vadd.f32 %v834, %v1189
      %v1240 = vadd.f32 %v835, %v1190
      %v1241 = vadd.f32 %v836, %v1191
      %v1242 = vadd.f32 %v837, %v1192
      %v1243 = vadd.f32 %v838, %v1193
      %v1244 = vadd.f32 %v839, %v1194
      %v1245 = vadd.f32 %v840, %v1195
      %v1246 = vadd.f32 %v841, %v1196
      %v1247 = vadd.f32 %v842, %v1197
      %v1248 = vadd.f32 %v843, %v1198
      %v1249 = vadd.f32 %v844, %v1199
      %v1250 = vadd.f32 %v845, %v1200
      %v1251 = vadd.f32 %v846, %v1201
      %v1252 = vadd.f32 %v847, %v1202
      %v1253 = vadd.f32 %v848, %v1203
      %v1254 = vadd.f32 %v849, %v1204
      %v1255 = vadd.f32 %v850, %v1205
      %v1256 = vadd.f32 %v851, %v1206
      %v1257 = vadd.f32 %v852, %v1207
      %v1258 = vadd.f32 %v853, %v1208
      %v1259 = vadd.f32 %v854, %v1209
      %v1260 = vadd.f32 %v855, %v1210
      %v1261 = vadd.f32 %v856, %v1211
      %v1262 = vadd.f32 %v857, %v1212
      %v1263 = vadd.f32 %v858, %v1213
      %v1264 = vadd.f32 %v859, %v1214
      %v1265 = vld [vmem:[%s1 + $0x2] sm:$0x1]
      %1266 = vset.pattern.permute.xlu0 1
      %1267 = vperm.xlu0 %1266, %v860
      %v1268 = vpop.permute.xlu0 %1267
      %1270 = vset.pattern.permute.xlu0 1
      %1271 = vperm.xlu0 %1270, %v861
      %v1272 = vpop.permute.xlu0 %1271
      %1274 = vset.pattern.permute.xlu0 1
      %1275 = vperm.xlu0 %1274, %v862
      %v1276 = vpop.permute.xlu0 %1275
      %1278 = vset.pattern.permute.xlu0 1
      %1279 = vperm.xlu0 %1278, %v863
      %v1280 = vpop.permute.xlu0 %1279
      %1282 = vset.pattern.permute.xlu0 1
      %1283 = vperm.xlu0 %1282, %v864
      %v1284 = vpop.permute.xlu0 %1283
      %1286 = vset.pattern.permute.xlu0 1
      %1287 = vperm.xlu0 %1286, %v865
      %v1288 = vpop.permute.xlu0 %1287
      %1290 = vset.pattern.permute.xlu0 1
      %1291 = vperm.xlu0 %1290, %v866
      %v1292 = vpop.permute.xlu0 %1291
      %1294 = vset.pattern.permute.xlu0 1
      %1295 = vperm.xlu0 %1294, %v867
      %v1296 = vpop.permute.xlu0 %1295
      %1298 = vset.pattern.permute.xlu0 1
      %1299 = vperm.xlu0 %1298, %v868
      %v1300 = vpop.permute.xlu0 %1299
      %1302 = vset.pattern.permute.xlu0 1
      %1303 = vperm.xlu0 %1302, %v869
      %v1304 = vpop.permute.xlu0 %1303
      %1306 = vset.pattern.permute.xlu0 1
      %1307 = vperm.xlu0 %1306, %v870
      %v1308 = vpop.permute.xlu0 %1307
      %1310 = vset.pattern.permute.xlu0 1
      %1311 = vperm.xlu0 %1310, %v871
      %v1312 = vpop.permute.xlu0 %1311
      %1314 = vset.pattern.permute.xlu0 1
      %1315 = vperm.xlu0 %1314, %v872
      %v1316 = vpop.permute.xlu0 %1315
      %1318 = vset.pattern.permute.xlu0 1
      %1319 = vperm.xlu0 %1318, %v873
      %v1320 = vpop.permute.xlu0 %1319
      %1322 = vset.pattern.permute.xlu0 1
      %1323 = vperm.xlu0 %1322, %v874
      %v1324 = vpop.permute.xlu0 %1323
      %1326 = vset.pattern.permute.xlu0 1
      %1327 = vperm.xlu0 %1326, %v875
      %v1328 = vpop.permute.xlu0 %1327
      %1330 = vset.pattern.permute.xlu0 1
      %1331 = vperm.xlu0 %1330, %v876
      %v1332 = vpop.permute.xlu0 %1331
      %1334 = vset.pattern.permute.xlu0 1
      %1335 = vperm.xlu0 %1334, %v877
      %v1336 = vpop.permute.xlu0 %1335
      %1338 = vset.pattern.permute.xlu0 1
      %1339 = vperm.xlu0 %1338, %v878
      %v1340 = vpop.permute.xlu0 %1339
      %1342 = vset.pattern.permute.xlu0 1
      %1343 = vperm.xlu0 %1342, %v879
      %v1344 = vpop.permute.xlu0 %1343
      %1346 = vset.pattern.permute.xlu0 1
      %1347 = vperm.xlu0 %1346, %v880
      %v1348 = vpop.permute.xlu0 %1347
      %1350 = vset.pattern.permute.xlu0 1
      %1351 = vperm.xlu0 %1350, %v881
      %v1352 = vpop.permute.xlu0 %1351
      %1354 = vset.pattern.permute.xlu0 1
      %1355 = vperm.xlu0 %1354, %v882
      %v1356 = vpop.permute.xlu0 %1355
      %1358 = vset.pattern.permute.xlu0 1
      %1359 = vperm.xlu0 %1358, %v883
      %v1360 = vpop.permute.xlu0 %1359
      %1362 = vset.pattern.permute.xlu0 1
      %1363 = vperm.xlu0 %1362, %v884
      %v1364 = vpop.permute.xlu0 %1363
      %1366 = vset.pattern.permute.xlu0 1
      %1367 = vperm.xlu0 %1366, %v885
      %v1368 = vpop.permute.xlu0 %1367
      %1370 = vset.pattern.permute.xlu0 1
      %1371 = vperm.xlu0 %1370, %v886
      %v1372 = vpop.permute.xlu0 %1371
      %1374 = vset.pattern.permute.xlu0 1
      %1375 = vperm.xlu0 %1374, %v887
      %v1376 = vpop.permute.xlu0 %1375
      %1378 = vset.pattern.permute.xlu0 1
      %1379 = vperm.xlu0 %1378, %v888
      %v1380 = vpop.permute.xlu0 %1379
      %1382 = vset.pattern.permute.xlu0 1
      %1383 = vperm.xlu0 %1382, %v889
      %v1384 = vpop.permute.xlu0 %1383
      %1386 = vset.pattern.permute.xlu0 1
      %1387 = vperm.xlu0 %1386, %v890
      %v1388 = vpop.permute.xlu0 %1387
      %1390 = vset.pattern.permute.xlu0 1
      %1391 = vperm.xlu0 %1390, %v891
      %v1392 = vpop.permute.xlu0 %1391
      %1394 = vset.pattern.permute.xlu0 1
      %1395 = vperm.xlu0 %1394, %v892
      %v1396 = vpop.permute.xlu0 %1395
      %1398 = vset.pattern.permute.xlu0 1
      %1399 = vperm.xlu0 %1398, %v893
      %v1400 = vpop.permute.xlu0 %1399
      %1402 = vset.pattern.permute.xlu0 1
      %1403 = vperm.xlu0 %1402, %v894
      %v1404 = vpop.permute.xlu0 %1403
      %1406 = vset.pattern.permute.xlu0 1
      %1407 = vperm.xlu0 %1406, %v895
      %v1408 = vpop.permute.xlu0 %1407
      %1410 = vset.pattern.permute.xlu0 1
      %1411 = vperm.xlu0 %1410, %v896
      %v1412 = vpop.permute.xlu0 %1411
      %1414 = vset.pattern.permute.xlu0 1
      %1415 = vperm.xlu0 %1414, %v897
      %v1416 = vpop.permute.xlu0 %1415
      %1418 = vset.pattern.permute.xlu0 1
      %1419 = vperm.xlu0 %1418, %v898
      %v1420 = vpop.permute.xlu0 %1419
      %1422 = vset.pattern.permute.xlu0 1
      %1423 = vperm.xlu0 %1422, %v899
      %v1424 = vpop.permute.xlu0 %1423
      %1426 = vset.pattern.permute.xlu0 1
      %1427 = vperm.xlu0 %1426, %v900
      %v1428 = vpop.permute.xlu0 %1427
      %1430 = vset.pattern.permute.xlu0 1
      %1431 = vperm.xlu0 %1430, %v901
      %v1432 = vpop.permute.xlu0 %1431
      %1434 = vset.pattern.permute.xlu0 1
      %1435 = vperm.xlu0 %1434, %v902
      %v1436 = vpop.permute.xlu0 %1435
      %1438 = vset.pattern.permute.xlu0 1
      %1439 = vperm.xlu0 %1438, %v903
      %v1440 = vpop.permute.xlu0 %1439
      %1442 = vset.pattern.permute.xlu0 1
      %1443 = vperm.xlu0 %1442, %v904
      %v1444 = vpop.permute.xlu0 %1443
      %1446 = vset.pattern.permute.xlu0 1
      %1447 = vperm.xlu0 %1446, %v905
      %v1448 = vpop.permute.xlu0 %1447
      %1450 = vset.pattern.permute.xlu0 1
      %1451 = vperm.xlu0 %1450, %v906
      %v1452 = vpop.permute.xlu0 %1451
      %1454 = vset.pattern.permute.xlu0 1
      %1455 = vperm.xlu0 %1454, %v907
      %v1456 = vpop.permute.xlu0 %1455
      %1458 = vset.pattern.permute.xlu0 1
      %1459 = vperm.xlu0 %1458, %v908
      %v1460 = vpop.permute.xlu0 %1459
      %1462 = vset.pattern.permute.xlu0 1
      %1463 = vperm.xlu0 %1462, %v909
      %v1464 = vpop.permute.xlu0 %1463
      %v1466 = vlaneseq
      %v1467 = vshrl.u32 %v1466, 7
      %v1468 = vsub.s32 0, %v1467
      %v1469 = vrot.slane %v1265, %v1468
      %v1470 = vmul.f32 %v1268, %v1469
      %v1471 = vmul.f32 %v1272, %v1469
      %v1472 = vmul.f32 %v1276, %v1469
      %v1473 = vmul.f32 %v1280, %v1469
      %v1474 = vmul.f32 %v1284, %v1469
      %v1475 = vmul.f32 %v1288, %v1469
      %v1476 = vmul.f32 %v1292, %v1469
      %v1477 = vmul.f32 %v1296, %v1469
      %v1478 = vmul.f32 %v1300, %v1469
      %v1479 = vmul.f32 %v1304, %v1469
      %v1480 = vmul.f32 %v1308, %v1469
      %v1481 = vmul.f32 %v1312, %v1469
      %v1482 = vmul.f32 %v1316, %v1469
      %v1483 = vmul.f32 %v1320, %v1469
      %v1484 = vmul.f32 %v1324, %v1469
      %v1485 = vmul.f32 %v1328, %v1469
      %v1486 = vmul.f32 %v1332, %v1469
      %v1487 = vmul.f32 %v1336, %v1469
      %v1488 = vmul.f32 %v1340, %v1469
      %v1489 = vmul.f32 %v1344, %v1469
      %v1490 = vmul.f32 %v1348, %v1469
      %v1491 = vmul.f32 %v1352, %v1469
      %v1492 = vmul.f32 %v1356, %v1469
      %v1493 = vmul.f32 %v1360, %v1469
      %v1494 = vmul.f32 %v1364, %v1469
      %v1495 = vmul.f32 %v1368, %v1469
      %v1496 = vmul.f32 %v1372, %v1469
      %v1497 = vmul.f32 %v1376, %v1469
      %v1498 = vmul.f32 %v1380, %v1469
      %v1499 = vmul.f32 %v1384, %v1469
      %v1500 = vmul.f32 %v1388, %v1469
      %v1501 = vmul.f32 %v1392, %v1469
      %v1502 = vmul.f32 %v1396, %v1469
      %v1503 = vmul.f32 %v1400, %v1469
      %v1504 = vmul.f32 %v1404, %v1469
      %v1505 = vmul.f32 %v1408, %v1469
      %v1506 = vmul.f32 %v1412, %v1469
      %v1507 = vmul.f32 %v1416, %v1469
      %v1508 = vmul.f32 %v1420, %v1469
      %v1509 = vmul.f32 %v1424, %v1469
      %v1510 = vmul.f32 %v1428, %v1469
      %v1511 = vmul.f32 %v1432, %v1469
      %v1512 = vmul.f32 %v1436, %v1469
      %v1513 = vmul.f32 %v1440, %v1469
      %v1514 = vmul.f32 %v1444, %v1469
      %v1515 = vmul.f32 %v1448, %v1469
      %v1516 = vmul.f32 %v1452, %v1469
      %v1517 = vmul.f32 %v1456, %v1469
      %v1518 = vmul.f32 %v1460, %v1469
      %v1519 = vmul.f32 %v1464, %v1469
      %v1520 = vadd.f32 %v1215, %v1470
      %v1521 = vadd.f32 %v1216, %v1471
      %v1522 = vadd.f32 %v1217, %v1472
      %v1523 = vadd.f32 %v1218, %v1473
      %v1524 = vadd.f32 %v1219, %v1474
      %v1525 = vadd.f32 %v1220, %v1475
      %v1526 = vadd.f32 %v1221, %v1476
      %v1527 = vadd.f32 %v1222, %v1477
      %v1528 = vadd.f32 %v1223, %v1478
      %v1529 = vadd.f32 %v1224, %v1479
      %v1530 = vadd.f32 %v1225, %v1480
      %v1531 = vadd.f32 %v1226, %v1481
      %v1532 = vadd.f32 %v1227, %v1482
      %v1533 = vadd.f32 %v1228, %v1483
      %v1534 = vadd.f32 %v1229, %v1484
      %v1535 = vadd.f32 %v1230, %v1485
      %v1536 = vadd.f32 %v1231, %v1486
      %v1537 = vadd.f32 %v1232, %v1487
      %v1538 = vadd.f32 %v1233, %v1488
      %v1539 = vadd.f32 %v1234, %v1489
      %v1540 = vadd.f32 %v1235, %v1490
      %v1541 = vadd.f32 %v1236, %v1491
      %v1542 = vadd.f32 %v1237, %v1492
      %v1543 = vadd.f32 %v1238, %v1493
      %v1544 = vadd.f32 %v1239, %v1494
      %v1545 = vadd.f32 %v1240, %v1495
      %v1546 = vadd.f32 %v1241, %v1496
      %v1547 = vadd.f32 %v1242, %v1497
      %v1548 = vadd.f32 %v1243, %v1498
      %v1549 = vadd.f32 %v1244, %v1499
      %v1550 = vadd.f32 %v1245, %v1500
      %v1551 = vadd.f32 %v1246, %v1501
      %v1552 = vadd.f32 %v1247, %v1502
      %v1553 = vadd.f32 %v1248, %v1503
      %v1554 = vadd.f32 %v1249, %v1504
      %v1555 = vadd.f32 %v1250, %v1505
      %v1556 = vadd.f32 %v1251, %v1506
      %v1557 = vadd.f32 %v1252, %v1507
      %v1558 = vadd.f32 %v1253, %v1508
      %v1559 = vadd.f32 %v1254, %v1509
      %v1560 = vadd.f32 %v1255, %v1510
      %v1561 = vadd.f32 %v1256, %v1511
      %v1562 = vadd.f32 %v1257, %v1512
      %v1563 = vadd.f32 %v1258, %v1513
      %v1564 = vadd.f32 %v1259, %v1514
      %v1565 = vadd.f32 %v1260, %v1515
      %v1566 = vadd.f32 %v1261, %v1516
      %v1567 = vadd.f32 %v1262, %v1517
      %v1568 = vadd.f32 %v1263, %v1518
      %v1569 = vadd.f32 %v1264, %v1519
      %v1570 = vld [vmem:[#allocation2 + $0x8] sm:$0xff]
      %v1571 = vld [vmem:[#allocation2 + $0x10] sm:$0xff]
      %v1572 = vld [vmem:[#allocation2 + $0x18] sm:$0xff]
      %v1573 = vld [vmem:[#allocation2 + $0x20] sm:$0xff]
      %v1574 = vld [vmem:[#allocation2 + $0x28] sm:$0xff]
      %v1575 = vld [vmem:[#allocation2 + $0x30] sm:$0xff]
      %v1576 = vld [vmem:[#allocation2 + $0x38] sm:$0xff]
      %v1577 = vld [vmem:[#allocation2 + $0x40] sm:$0xff]
      %v1578 = vld [vmem:[#allocation2 + $0x48] sm:$0xff]
      %v1579 = vld [vmem:[#allocation2 + $0x50] sm:$0xff]
      %v1580 = vld [vmem:[#allocation2 + $0x58] sm:$0xff]
      %v1581 = vld [vmem:[#allocation2 + $0x60] sm:$0xff]
      %v1582 = vld [vmem:[#allocation2 + $0x68] sm:$0xff]
      %v1583 = vld [vmem:[#allocation2 + $0x70] sm:$0xff]
      %v1584 = vld [vmem:[#allocation2 + $0x78] sm:$0xff]
      %v1585 = vld [vmem:[#allocation2 + $0x80] sm:$0xff]
      %v1586 = vld [vmem:[#allocation2 + $0x88] sm:$0xff]
      %v1587 = vld [vmem:[#allocation2 + $0x90] sm:$0xff]
      %v1588 = vld [vmem:[#allocation2 + $0x98] sm:$0xff]
      %v1589 = vld [vmem:[#allocation2 + $0xa0] sm:$0xff]
      %v1590 = vld [vmem:[#allocation2 + $0xa8] sm:$0xff]
      %v1591 = vld [vmem:[#allocation2 + $0xb0] sm:$0xff]
      %v1592 = vld [vmem:[#allocation2 + $0xb8] sm:$0xff]
      %v1593 = vld [vmem:[#allocation2 + $0xc0] sm:$0xff]
      %v1594 = vld [vmem:[#allocation2 + $0xc8] sm:$0xff]
      %v1595 = vld [vmem:[#allocation2 + $0xd0] sm:$0xff]
      %v1596 = vld [vmem:[#allocation2 + $0xd8] sm:$0xff]
      %v1597 = vld [vmem:[#allocation2 + $0xe0] sm:$0xff]
      %v1598 = vld [vmem:[#allocation2 + $0xe8] sm:$0xff]
      %v1599 = vld [vmem:[#allocation2 + $0xf0] sm:$0xff]
      %v1600 = vld [vmem:[#allocation2 + $0xf8] sm:$0xff]
      %v1601 = vld [vmem:[#allocation2 + $0x100] sm:$0xff]
      %v1602 = vld [vmem:[#allocation2 + $0x108] sm:$0xff]
      %v1603 = vld [vmem:[#allocation2 + $0x110] sm:$0xff]
      %v1604 = vld [vmem:[#allocation2 + $0x118] sm:$0xff]
      %v1605 = vld [vmem:[#allocation2 + $0x120] sm:$0xff]
      %v1606 = vld [vmem:[#allocation2 + $0x128] sm:$0xff]
      %v1607 = vld [vmem:[#allocation2 + $0x130] sm:$0xff]
      %v1608 = vld [vmem:[#allocation2 + $0x138] sm:$0xff]
      %v1609 = vld [vmem:[#allocation2 + $0x140] sm:$0xff]
      %v1610 = vld [vmem:[#allocation2 + $0x148] sm:$0xff]
      %v1611 = vld [vmem:[#allocation2 + $0x150] sm:$0xff]
      %v1612 = vld [vmem:[#allocation2 + $0x158] sm:$0xff]
      %v1613 = vld [vmem:[#allocation2 + $0x160] sm:$0xff]
      %v1614 = vld [vmem:[#allocation2 + $0x168] sm:$0xff]
      %v1615 = vld [vmem:[#allocation2 + $0x170] sm:$0xff]
      %v1616 = vld [vmem:[#allocation2 + $0x178] sm:$0xff]
      %v1617 = vld [vmem:[#allocation2 + $0x180] sm:$0xff]
      %v1618 = vld [vmem:[#allocation2 + $0x188] sm:$0xff]
      %v1619 = vld [vmem:[#allocation2 + $0x190] sm:$0xff]
      %v1620 = vld [vmem:[%s1 + $0x3] sm:$0x1]
      %1622 = vset.pattern.permute.xlu0 0
      %1623 = vperm.xlu0 %1622, %v1570
      %v1624 = vpop.permute.xlu0 %1623
      %1627 = vset.pattern.permute.xlu0 0
      %1628 = vperm.xlu0 %1627, %v1571
      %v1629 = vpop.permute.xlu0 %1628
      %1632 = vset.pattern.permute.xlu0 0
      %1633 = vperm.xlu0 %1632, %v1572
      %v1634 = vpop.permute.xlu0 %1633
      %1637 = vset.pattern.permute.xlu0 0
      %1638 = vperm.xlu0 %1637, %v1573
      %v1639 = vpop.permute.xlu0 %1638
      %1642 = vset.pattern.permute.xlu0 0
      %1643 = vperm.xlu0 %1642, %v1574
      %v1644 = vpop.permute.xlu0 %1643
      %1647 = vset.pattern.permute.xlu0 0
      %1648 = vperm.xlu0 %1647, %v1575
      %v1649 = vpop.permute.xlu0 %1648
      %1652 = vset.pattern.permute.xlu0 0
      %1653 = vperm.xlu0 %1652, %v1576
      %v1654 = vpop.permute.xlu0 %1653
      %1657 = vset.pattern.permute.xlu0 0
      %1658 = vperm.xlu0 %1657, %v1577
      %v1659 = vpop.permute.xlu0 %1658
      %1662 = vset.pattern.permute.xlu0 0
      %1663 = vperm.xlu0 %1662, %v1578
      %v1664 = vpop.permute.xlu0 %1663
      %1667 = vset.pattern.permute.xlu0 0
      %1668 = vperm.xlu0 %1667, %v1579
      %v1669 = vpop.permute.xlu0 %1668
      %1672 = vset.pattern.permute.xlu0 0
      %1673 = vperm.xlu0 %1672, %v1580
      %v1674 = vpop.permute.xlu0 %1673
      %1677 = vset.pattern.permute.xlu0 0
      %1678 = vperm.xlu0 %1677, %v1581
      %v1679 = vpop.permute.xlu0 %1678
      %1682 = vset.pattern.permute.xlu0 0
      %1683 = vperm.xlu0 %1682, %v1582
      %v1684 = vpop.permute.xlu0 %1683
      %1687 = vset.pattern.permute.xlu0 0
      %1688 = vperm.xlu0 %1687, %v1583
      %v1689 = vpop.permute.xlu0 %1688
      %1692 = vset.pattern.permute.xlu0 0
      %1693 = vperm.xlu0 %1692, %v1584
      %v1694 = vpop.permute.xlu0 %1693
      %1697 = vset.pattern.permute.xlu0 0
      %1698 = vperm.xlu0 %1697, %v1585
      %v1699 = vpop.permute.xlu0 %1698
      %1702 = vset.pattern.permute.xlu0 0
      %1703 = vperm.xlu0 %1702, %v1586
      %v1704 = vpop.permute.xlu0 %1703
      %1707 = vset.pattern.permute.xlu0 0
      %1708 = vperm.xlu0 %1707, %v1587
      %v1709 = vpop.permute.xlu0 %1708
      %1712 = vset.pattern.permute.xlu0 0
      %1713 = vperm.xlu0 %1712, %v1588
      %v1714 = vpop.permute.xlu0 %1713
      %1717 = vset.pattern.permute.xlu0 0
      %1718 = vperm.xlu0 %1717, %v1589
      %v1719 = vpop.permute.xlu0 %1718
      %1722 = vset.pattern.permute.xlu0 0
      %1723 = vperm.xlu0 %1722, %v1590
      %v1724 = vpop.permute.xlu0 %1723
      %1727 = vset.pattern.permute.xlu0 0
      %1728 = vperm.xlu0 %1727, %v1591
      %v1729 = vpop.permute.xlu0 %1728
      %1732 = vset.pattern.permute.xlu0 0
      %1733 = vperm.xlu0 %1732, %v1592
      %v1734 = vpop.permute.xlu0 %1733
      %1737 = vset.pattern.permute.xlu0 0
      %1738 = vperm.xlu0 %1737, %v1593
      %v1739 = vpop.permute.xlu0 %1738
      %1742 = vset.pattern.permute.xlu0 0
      %1743 = vperm.xlu0 %1742, %v1594
      %v1744 = vpop.permute.xlu0 %1743
      %1747 = vset.pattern.permute.xlu0 0
      %1748 = vperm.xlu0 %1747, %v1595
      %v1749 = vpop.permute.xlu0 %1748
      %1752 = vset.pattern.permute.xlu0 0
      %1753 = vperm.xlu0 %1752, %v1596
      %v1754 = vpop.permute.xlu0 %1753
      %1757 = vset.pattern.permute.xlu0 0
      %1758 = vperm.xlu0 %1757, %v1597
      %v1759 = vpop.permute.xlu0 %1758
      %1762 = vset.pattern.permute.xlu0 0
      %1763 = vperm.xlu0 %1762, %v1598
      %v1764 = vpop.permute.xlu0 %1763
      %1767 = vset.pattern.permute.xlu0 0
      %1768 = vperm.xlu0 %1767, %v1599
      %v1769 = vpop.permute.xlu0 %1768
      %1772 = vset.pattern.permute.xlu0 0
      %1773 = vperm.xlu0 %1772, %v1600
      %v1774 = vpop.permute.xlu0 %1773
      %1777 = vset.pattern.permute.xlu0 0
      %1778 = vperm.xlu0 %1777, %v1601
      %v1779 = vpop.permute.xlu0 %1778
      %1782 = vset.pattern.permute.xlu0 0
      %1783 = vperm.xlu0 %1782, %v1602
      %v1784 = vpop.permute.xlu0 %1783
      %1787 = vset.pattern.permute.xlu0 0
      %1788 = vperm.xlu0 %1787, %v1603
      %v1789 = vpop.permute.xlu0 %1788
      %1792 = vset.pattern.permute.xlu0 0
      %1793 = vperm.xlu0 %1792, %v1604
      %v1794 = vpop.permute.xlu0 %1793
      %1797 = vset.pattern.permute.xlu0 0
      %1798 = vperm.xlu0 %1797, %v1605
      %v1799 = vpop.permute.xlu0 %1798
      %1802 = vset.pattern.permute.xlu0 0
      %1803 = vperm.xlu0 %1802, %v1606
      %v1804 = vpop.permute.xlu0 %1803
      %1807 = vset.pattern.permute.xlu0 0
      %1808 = vperm.xlu0 %1807, %v1607
      %v1809 = vpop.permute.xlu0 %1808
      %1812 = vset.pattern.permute.xlu0 0
      %1813 = vperm.xlu0 %1812, %v1608
      %v1814 = vpop.permute.xlu0 %1813
      %1817 = vset.pattern.permute.xlu0 0
      %1818 = vperm.xlu0 %1817, %v1609
      %v1819 = vpop.permute.xlu0 %1818
      %1822 = vset.pattern.permute.xlu0 0
      %1823 = vperm.xlu0 %1822, %v1610
      %v1824 = vpop.permute.xlu0 %1823
      %1827 = vset.pattern.permute.xlu0 0
      %1828 = vperm.xlu0 %1827, %v1611
      %v1829 = vpop.permute.xlu0 %1828
      %1832 = vset.pattern.permute.xlu0 0
      %1833 = vperm.xlu0 %1832, %v1612
      %v1834 = vpop.permute.xlu0 %1833
      %1837 = vset.pattern.permute.xlu0 0
      %1838 = vperm.xlu0 %1837, %v1613
      %v1839 = vpop.permute.xlu0 %1838
      %1842 = vset.pattern.permute.xlu0 0
      %1843 = vperm.xlu0 %1842, %v1614
      %v1844 = vpop.permute.xlu0 %1843
      %1847 = vset.pattern.permute.xlu0 0
      %1848 = vperm.xlu0 %1847, %v1615
      %v1849 = vpop.permute.xlu0 %1848
      %1852 = vset.pattern.permute.xlu0 0
      %1853 = vperm.xlu0 %1852, %v1616
      %v1854 = vpop.permute.xlu0 %1853
      %1857 = vset.pattern.permute.xlu0 0
      %1858 = vperm.xlu0 %1857, %v1617
      %v1859 = vpop.permute.xlu0 %1858
      %1862 = vset.pattern.permute.xlu0 0
      %1863 = vperm.xlu0 %1862, %v1618
      %v1864 = vpop.permute.xlu0 %1863
      %1867 = vset.pattern.permute.xlu0 0
      %1868 = vperm.xlu0 %1867, %v1619
      %v1869 = vpop.permute.xlu0 %1868
      %v1871 = vlaneseq
      %v1872 = vshrl.u32 %v1871, 7
      %v1873 = vsub.s32 0, %v1872
      %v1874 = vrot.slane %v1620, %v1873
      %v1875 = vmul.f32 %v1624, %v1874
      %v1876 = vmul.f32 %v1629, %v1874
      %v1877 = vmul.f32 %v1634, %v1874
      %v1878 = vmul.f32 %v1639, %v1874
      %v1879 = vmul.f32 %v1644, %v1874
      %v1880 = vmul.f32 %v1649, %v1874
      %v1881 = vmul.f32 %v1654, %v1874
      %v1882 = vmul.f32 %v1659, %v1874
      %v1883 = vmul.f32 %v1664, %v1874
      %v1884 = vmul.f32 %v1669, %v1874
      %v1885 = vmul.f32 %v1674, %v1874
      %v1886 = vmul.f32 %v1679, %v1874
      %v1887 = vmul.f32 %v1684, %v1874
      %v1888 = vmul.f32 %v1689, %v1874
      %v1889 = vmul.f32 %v1694, %v1874
      %v1890 = vmul.f32 %v1699, %v1874
      %v1891 = vmul.f32 %v1704, %v1874
      %v1892 = vmul.f32 %v1709, %v1874
      %v1893 = vmul.f32 %v1714, %v1874
      %v1894 = vmul.f32 %v1719, %v1874
      %v1895 = vmul.f32 %v1724, %v1874
      %v1896 = vmul.f32 %v1729, %v1874
      %v1897 = vmul.f32 %v1734, %v1874
      %v1898 = vmul.f32 %v1739, %v1874
      %v1899 = vmul.f32 %v1744, %v1874
      %v1900 = vmul.f32 %v1749, %v1874
      %v1901 = vmul.f32 %v1754, %v1874
      %v1902 = vmul.f32 %v1759, %v1874
      %v1903 = vmul.f32 %v1764, %v1874
      %v1904 = vmul.f32 %v1769, %v1874
      %v1905 = vmul.f32 %v1774, %v1874
      %v1906 = vmul.f32 %v1779, %v1874
      %v1907 = vmul.f32 %v1784, %v1874
      %v1908 = vmul.f32 %v1789, %v1874
      %v1909 = vmul.f32 %v1794, %v1874
      %v1910 = vmul.f32 %v1799, %v1874
      %v1911 = vmul.f32 %v1804, %v1874
      %v1912 = vmul.f32 %v1809, %v1874
      %v1913 = vmul.f32 %v1814, %v1874
      %v1914 = vmul.f32 %v1819, %v1874
      %v1915 = vmul.f32 %v1824, %v1874
      %v1916 = vmul.f32 %v1829, %v1874
      %v1917 = vmul.f32 %v1834, %v1874
      %v1918 = vmul.f32 %v1839, %v1874
      %v1919 = vmul.f32 %v1844, %v1874
      %v1920 = vmul.f32 %v1849, %v1874
      %v1921 = vmul.f32 %v1854, %v1874
      %v1922 = vmul.f32 %v1859, %v1874
      %v1923 = vmul.f32 %v1864, %v1874
      %v1924 = vmul.f32 %v1869, %v1874
      %v1925 = vadd.f32 %v1520, %v1875
      %v1926 = vadd.f32 %v1521, %v1876
      %v1927 = vadd.f32 %v1522, %v1877
      %v1928 = vadd.f32 %v1523, %v1878
      %v1929 = vadd.f32 %v1524, %v1879
      %v1930 = vadd.f32 %v1525, %v1880
      %v1931 = vadd.f32 %v1526, %v1881
      %v1932 = vadd.f32 %v1527, %v1882
      %v1933 = vadd.f32 %v1528, %v1883
      %v1934 = vadd.f32 %v1529, %v1884
      %v1935 = vadd.f32 %v1530, %v1885
      %v1936 = vadd.f32 %v1531, %v1886
      %v1937 = vadd.f32 %v1532, %v1887
      %v1938 = vadd.f32 %v1533, %v1888
      %v1939 = vadd.f32 %v1534, %v1889
      %v1940 = vadd.f32 %v1535, %v1890
      %v1941 = vadd.f32 %v1536, %v1891
      %v1942 = vadd.f32 %v1537, %v1892
      %v1943 = vadd.f32 %v1538, %v1893
      %v1944 = vadd.f32 %v1539, %v1894
      %v1945 = vadd.f32 %v1540, %v1895
      %v1946 = vadd.f32 %v1541, %v1896
      %v1947 = vadd.f32 %v1542, %v1897
      %v1948 = vadd.f32 %v1543, %v1898
      %v1949 = vadd.f32 %v1544, %v1899
      %v1950 = vadd.f32 %v1545, %v1900
      %v1951 = vadd.f32 %v1546, %v1901
      %v1952 = vadd.f32 %v1547, %v1902
      %v1953 = vadd.f32 %v1548, %v1903
      %v1954 = vadd.f32 %v1549, %v1904
      %v1955 = vadd.f32 %v1550, %v1905
      %v1956 = vadd.f32 %v1551, %v1906
      %v1957 = vadd.f32 %v1552, %v1907
      %v1958 = vadd.f32 %v1553, %v1908
      %v1959 = vadd.f32 %v1554, %v1909
      %v1960 = vadd.f32 %v1555, %v1910
      %v1961 = vadd.f32 %v1556, %v1911
      %v1962 = vadd.f32 %v1557, %v1912
      %v1963 = vadd.f32 %v1558, %v1913
      %v1964 = vadd.f32 %v1559, %v1914
      %v1965 = vadd.f32 %v1560, %v1915
      %v1966 = vadd.f32 %v1561, %v1916
      %v1967 = vadd.f32 %v1562, %v1917
      %v1968 = vadd.f32 %v1563, %v1918
      %v1969 = vadd.f32 %v1564, %v1919
      %v1970 = vadd.f32 %v1565, %v1920
      %v1971 = vadd.f32 %v1566, %v1921
      %v1972 = vadd.f32 %v1567, %v1922
      %v1973 = vadd.f32 %v1568, %v1923
      %v1974 = vadd.f32 %v1569, %v1924
      %v1975 = vld [vmem:[%s1 + $0x4] sm:$0x1]
      %1976 = vset.pattern.permute.xlu0 1
      %1977 = vperm.xlu0 %1976, %v1570
      %v1978 = vpop.permute.xlu0 %1977
      %1980 = vset.pattern.permute.xlu0 1
      %1981 = vperm.xlu0 %1980, %v1571
      %v1982 = vpop.permute.xlu0 %1981
      %1984 = vset.pattern.permute.xlu0 1
      %1985 = vperm.xlu0 %1984, %v1572
      %v1986 = vpop.permute.xlu0 %1985
      %1988 = vset.pattern.permute.xlu0 1
      %1989 = vperm.xlu0 %1988, %v1573
      %v1990 = vpop.permute.xlu0 %1989
      %1992 = vset.pattern.permute.xlu0 1
      %1993 = vperm.xlu0 %1992, %v1574
      %v1994 = vpop.permute.xlu0 %1993
      %1996 = vset.pattern.permute.xlu0 1
      %1997 = vperm.xlu0 %1996, %v1575
      %v1998 = vpop.permute.xlu0 %1997
      %2000 = vset.pattern.permute.xlu0 1
      %2001 = vperm.xlu0 %2000, %v1576
      %v2002 = vpop.permute.xlu0 %2001
      %2004 = vset.pattern.permute.xlu0 1
      %2005 = vperm.xlu0 %2004, %v1577
      %v2006 = vpop.permute.xlu0 %2005
      %2008 = vset.pattern.permute.xlu0 1
      %2009 = vperm.xlu0 %2008, %v1578
      %v2010 = vpop.permute.xlu0 %2009
      %2012 = vset.pattern.permute.xlu0 1
      %2013 = vperm.xlu0 %2012, %v1579
      %v2014 = vpop.permute.xlu0 %2013
      %2016 = vset.pattern.permute.xlu0 1
      %2017 = vperm.xlu0 %2016, %v1580
      %v2018 = vpop.permute.xlu0 %2017
      %2020 = vset.pattern.permute.xlu0 1
      %2021 = vperm.xlu0 %2020, %v1581
      %v2022 = vpop.permute.xlu0 %2021
      %2024 = vset.pattern.permute.xlu0 1
      %2025 = vperm.xlu0 %2024, %v1582
      %v2026 = vpop.permute.xlu0 %2025
      %2028 = vset.pattern.permute.xlu0 1
      %2029 = vperm.xlu0 %2028, %v1583
      %v2030 = vpop.permute.xlu0 %2029
      %2032 = vset.pattern.permute.xlu0 1
      %2033 = vperm.xlu0 %2032, %v1584
      %v2034 = vpop.permute.xlu0 %2033
      %2036 = vset.pattern.permute.xlu0 1
      %2037 = vperm.xlu0 %2036, %v1585
      %v2038 = vpop.permute.xlu0 %2037
      %2040 = vset.pattern.permute.xlu0 1
      %2041 = vperm.xlu0 %2040, %v1586
      %v2042 = vpop.permute.xlu0 %2041
      %2044 = vset.pattern.permute.xlu0 1
      %2045 = vperm.xlu0 %2044, %v1587
      %v2046 = vpop.permute.xlu0 %2045
      %2048 = vset.pattern.permute.xlu0 1
      %2049 = vperm.xlu0 %2048, %v1588
      %v2050 = vpop.permute.xlu0 %2049
      %2052 = vset.pattern.permute.xlu0 1
      %2053 = vperm.xlu0 %2052, %v1589
      %v2054 = vpop.permute.xlu0 %2053
      %2056 = vset.pattern.permute.xlu0 1
      %2057 = vperm.xlu0 %2056, %v1590
      %v2058 = vpop.permute.xlu0 %2057
      %2060 = vset.pattern.permute.xlu0 1
      %2061 = vperm.xlu0 %2060, %v1591
      %v2062 = vpop.permute.xlu0 %2061
      %2064 = vset.pattern.permute.xlu0 1
      %2065 = vperm.xlu0 %2064, %v1592
      %v2066 = vpop.permute.xlu0 %2065
      %2068 = vset.pattern.permute.xlu0 1
      %2069 = vperm.xlu0 %2068, %v1593
      %v2070 = vpop.permute.xlu0 %2069
      %2072 = vset.pattern.permute.xlu0 1
      %2073 = vperm.xlu0 %2072, %v1594
      %v2074 = vpop.permute.xlu0 %2073
      %2076 = vset.pattern.permute.xlu0 1
      %2077 = vperm.xlu0 %2076, %v1595
      %v2078 = vpop.permute.xlu0 %2077
      %2080 = vset.pattern.permute.xlu0 1
      %2081 = vperm.xlu0 %2080, %v1596
      %v2082 = vpop.permute.xlu0 %2081
      %2084 = vset.pattern.permute.xlu0 1
      %2085 = vperm.xlu0 %2084, %v1597
      %v2086 = vpop.permute.xlu0 %2085
      %2088 = vset.pattern.permute.xlu0 1
      %2089 = vperm.xlu0 %2088, %v1598
      %v2090 = vpop.permute.xlu0 %2089
      %2092 = vset.pattern.permute.xlu0 1
      %2093 = vperm.xlu0 %2092, %v1599
      %v2094 = vpop.permute.xlu0 %2093
      %2096 = vset.pattern.permute.xlu0 1
      %2097 = vperm.xlu0 %2096, %v1600
      %v2098 = vpop.permute.xlu0 %2097
      %2100 = vset.pattern.permute.xlu0 1
      %2101 = vperm.xlu0 %2100, %v1601
      %v2102 = vpop.permute.xlu0 %2101
      %2104 = vset.pattern.permute.xlu0 1
      %2105 = vperm.xlu0 %2104, %v1602
      %v2106 = vpop.permute.xlu0 %2105
      %2108 = vset.pattern.permute.xlu0 1
      %2109 = vperm.xlu0 %2108, %v1603
      %v2110 = vpop.permute.xlu0 %2109
      %2112 = vset.pattern.permute.xlu0 1
      %2113 = vperm.xlu0 %2112, %v1604
      %v2114 = vpop.permute.xlu0 %2113
      %2116 = vset.pattern.permute.xlu0 1
      %2117 = vperm.xlu0 %2116, %v1605
      %v2118 = vpop.permute.xlu0 %2117
      %2120 = vset.pattern.permute.xlu0 1
      %2121 = vperm.xlu0 %2120, %v1606
      %v2122 = vpop.permute.xlu0 %2121
      %2124 = vset.pattern.permute.xlu0 1
      %2125 = vperm.xlu0 %2124, %v1607
      %v2126 = vpop.permute.xlu0 %2125
      %2128 = vset.pattern.permute.xlu0 1
      %2129 = vperm.xlu0 %2128, %v1608
      %v2130 = vpop.permute.xlu0 %2129
      %2132 = vset.pattern.permute.xlu0 1
      %2133 = vperm.xlu0 %2132, %v1609
      %v2134 = vpop.permute.xlu0 %2133
      %2136 = vset.pattern.permute.xlu0 1
      %2137 = vperm.xlu0 %2136, %v1610
      %v2138 = vpop.permute.xlu0 %2137
      %2140 = vset.pattern.permute.xlu0 1
      %2141 = vperm.xlu0 %2140, %v1611
      %v2142 = vpop.permute.xlu0 %2141
      %2144 = vset.pattern.permute.xlu0 1
      %2145 = vperm.xlu0 %2144, %v1612
      %v2146 = vpop.permute.xlu0 %2145
      %2148 = vset.pattern.permute.xlu0 1
      %2149 = vperm.xlu0 %2148, %v1613
      %v2150 = vpop.permute.xlu0 %2149
      %2152 = vset.pattern.permute.xlu0 1
      %2153 = vperm.xlu0 %2152, %v1614
      %v2154 = vpop.permute.xlu0 %2153
      %2156 = vset.pattern.permute.xlu0 1
      %2157 = vperm.xlu0 %2156, %v1615
      %v2158 = vpop.permute.xlu0 %2157
      %2160 = vset.pattern.permute.xlu0 1
      %2161 = vperm.xlu0 %2160, %v1616
      %v2162 = vpop.permute.xlu0 %2161
      %2164 = vset.pattern.permute.xlu0 1
      %2165 = vperm.xlu0 %2164, %v1617
      %v2166 = vpop.permute.xlu0 %2165
      %2168 = vset.pattern.permute.xlu0 1
      %2169 = vperm.xlu0 %2168, %v1618
      %v2170 = vpop.permute.xlu0 %2169
      %2172 = vset.pattern.permute.xlu0 1
      %2173 = vperm.xlu0 %2172, %v1619
      %v2174 = vpop.permute.xlu0 %2173
      %v2176 = vlaneseq
      %v2177 = vshrl.u32 %v2176, 7
      %v2178 = vsub.s32 0, %v2177
      %v2179 = vrot.slane %v1975, %v2178
      %v2180 = vmul.f32 %v1978, %v2179
      %v2181 = vmul.f32 %v1982, %v2179
      %v2182 = vmul.f32 %v1986, %v2179
      %v2183 = vmul.f32 %v1990, %v2179
      %v2184 = vmul.f32 %v1994, %v2179
      %v2185 = vmul.f32 %v1998, %v2179
      %v2186 = vmul.f32 %v2002, %v2179
      %v2187 = vmul.f32 %v2006, %v2179
      %v2188 = vmul.f32 %v2010, %v2179
      %v2189 = vmul.f32 %v2014, %v2179
      %v2190 = vmul.f32 %v2018, %v2179
      %v2191 = vmul.f32 %v2022, %v2179
      %v2192 = vmul.f32 %v2026, %v2179
      %v2193 = vmul.f32 %v2030, %v2179
      %v2194 = vmul.f32 %v2034, %v2179
      %v2195 = vmul.f32 %v2038, %v2179
      %v2196 = vmul.f32 %v2042, %v2179
      %v2197 = vmul.f32 %v2046, %v2179
      %v2198 = vmul.f32 %v2050, %v2179
      %v2199 = vmul.f32 %v2054, %v2179
      %v2200 = vmul.f32 %v2058, %v2179
      %v2201 = vmul.f32 %v2062, %v2179
      %v2202 = vmul.f32 %v2066, %v2179
      %v2203 = vmul.f32 %v2070, %v2179
      %v2204 = vmul.f32 %v2074, %v2179
      %v2205 = vmul.f32 %v2078, %v2179
      %v2206 = vmul.f32 %v2082, %v2179
      %v2207 = vmul.f32 %v2086, %v2179
      %v2208 = vmul.f32 %v2090, %v2179
      %v2209 = vmul.f32 %v2094, %v2179
      %v2210 = vmul.f32 %v2098, %v2179
      %v2211 = vmul.f32 %v2102, %v2179
      %v2212 = vmul.f32 %v2106, %v2179
      %v2213 = vmul.f32 %v2110, %v2179
      %v2214 = vmul.f32 %v2114, %v2179
      %v2215 = vmul.f32 %v2118, %v2179
      %v2216 = vmul.f32 %v2122, %v2179
      %v2217 = vmul.f32 %v2126, %v2179
      %v2218 = vmul.f32 %v2130, %v2179
      %v2219 = vmul.f32 %v2134, %v2179
      %v2220 = vmul.f32 %v2138, %v2179
      %v2221 = vmul.f32 %v2142, %v2179
      %v2222 = vmul.f32 %v2146, %v2179
      %v2223 = vmul.f32 %v2150, %v2179
      %v2224 = vmul.f32 %v2154, %v2179
      %v2225 = vmul.f32 %v2158, %v2179
      %v2226 = vmul.f32 %v2162, %v2179
      %v2227 = vmul.f32 %v2166, %v2179
      %v2228 = vmul.f32 %v2170, %v2179
      %v2229 = vmul.f32 %v2174, %v2179
      %v2230 = vadd.f32 %v1925, %v2180
      %v2231 = vadd.f32 %v1926, %v2181
      %v2232 = vadd.f32 %v1927, %v2182
      %v2233 = vadd.f32 %v1928, %v2183
      %v2234 = vadd.f32 %v1929, %v2184
      %v2235 = vadd.f32 %v1930, %v2185
      %v2236 = vadd.f32 %v1931, %v2186
      %v2237 = vadd.f32 %v1932, %v2187
      %v2238 = vadd.f32 %v1933, %v2188
      %v2239 = vadd.f32 %v1934, %v2189
      %v2240 = vadd.f32 %v1935, %v2190
      %v2241 = vadd.f32 %v1936, %v2191
      %v2242 = vadd.f32 %v1937, %v2192
      %v2243 = vadd.f32 %v1938, %v2193
      %v2244 = vadd.f32 %v1939, %v2194
      %v2245 = vadd.f32 %v1940, %v2195
      %v2246 = vadd.f32 %v1941, %v2196
      %v2247 = vadd.f32 %v1942, %v2197
      %v2248 = vadd.f32 %v1943, %v2198
      %v2249 = vadd.f32 %v1944, %v2199
      %v2250 = vadd.f32 %v1945, %v2200
      %v2251 = vadd.f32 %v1946, %v2201
      %v2252 = vadd.f32 %v1947, %v2202
      %v2253 = vadd.f32 %v1948, %v2203
      %v2254 = vadd.f32 %v1949, %v2204
      %v2255 = vadd.f32 %v1950, %v2205
      %v2256 = vadd.f32 %v1951, %v2206
      %v2257 = vadd.f32 %v1952, %v2207
      %v2258 = vadd.f32 %v1953, %v2208
      %v2259 = vadd.f32 %v1954, %v2209
      %v2260 = vadd.f32 %v1955, %v2210
      %v2261 = vadd.f32 %v1956, %v2211
      %v2262 = vadd.f32 %v1957, %v2212
      %v2263 = vadd.f32 %v1958, %v2213
      %v2264 = vadd.f32 %v1959, %v2214
      %v2265 = vadd.f32 %v1960, %v2215
      %v2266 = vadd.f32 %v1961, %v2216
      %v2267 = vadd.f32 %v1962, %v2217
      %v2268 = vadd.f32 %v1963, %v2218
      %v2269 = vadd.f32 %v1964, %v2219
      %v2270 = vadd.f32 %v1965, %v2220
      %v2271 = vadd.f32 %v1966, %v2221
      %v2272 = vadd.f32 %v1967, %v2222
      %v2273 = vadd.f32 %v1968, %v2223
      %v2274 = vadd.f32 %v1969, %v2224
      %v2275 = vadd.f32 %v1970, %v2225
      %v2276 = vadd.f32 %v1971, %v2226
      %v2277 = vadd.f32 %v1972, %v2227
      %v2278 = vadd.f32 %v1973, %v2228
      %v2279 = vadd.f32 %v1974, %v2229
      %v2280 = vld [vmem:[#allocation2 + $0x9] sm:$0xff]
      %v2281 = vld [vmem:[#allocation2 + $0x11] sm:$0xff]
      %v2282 = vld [vmem:[#allocation2 + $0x19] sm:$0xff]
      %v2283 = vld [vmem:[#allocation2 + $0x21] sm:$0xff]
      %v2284 = vld [vmem:[#allocation2 + $0x29] sm:$0xff]
      %v2285 = vld [vmem:[#allocation2 + $0x31] sm:$0xff]
      %v2286 = vld [vmem:[#allocation2 + $0x39] sm:$0xff]
      %v2287 = vld [vmem:[#allocation2 + $0x41] sm:$0xff]
      %v2288 = vld [vmem:[#allocation2 + $0x49] sm:$0xff]
      %v2289 = vld [vmem:[#allocation2 + $0x51] sm:$0xff]
      %v2290 = vld [vmem:[#allocation2 + $0x59] sm:$0xff]
      %v2291 = vld [vmem:[#allocation2 + $0x61] sm:$0xff]
      %v2292 = vld [vmem:[#allocation2 + $0x69] sm:$0xff]
      %v2293 = vld [vmem:[#allocation2 + $0x71] sm:$0xff]
      %v2294 = vld [vmem:[#allocation2 + $0x79] sm:$0xff]
      %v2295 = vld [vmem:[#allocation2 + $0x81] sm:$0xff]
      %v2296 = vld [vmem:[#allocation2 + $0x89] sm:$0xff]
      %v2297 = vld [vmem:[#allocation2 + $0x91] sm:$0xff]
      %v2298 = vld [vmem:[#allocation2 + $0x99] sm:$0xff]
      %v2299 = vld [vmem:[#allocation2 + $0xa1] sm:$0xff]
      %v2300 = vld [vmem:[#allocation2 + $0xa9] sm:$0xff]
      %v2301 = vld [vmem:[#allocation2 + $0xb1] sm:$0xff]
      %v2302 = vld [vmem:[#allocation2 + $0xb9] sm:$0xff]
      %v2303 = vld [vmem:[#allocation2 + $0xc1] sm:$0xff]
      %v2304 = vld [vmem:[#allocation2 + $0xc9] sm:$0xff]
      %v2305 = vld [vmem:[#allocation2 + $0xd1] sm:$0xff]
      %v2306 = vld [vmem:[#allocation2 + $0xd9] sm:$0xff]
      %v2307 = vld [vmem:[#allocation2 + $0xe1] sm:$0xff]
      %v2308 = vld [vmem:[#allocation2 + $0xe9] sm:$0xff]
      %v2309 = vld [vmem:[#allocation2 + $0xf1] sm:$0xff]
      %v2310 = vld [vmem:[#allocation2 + $0xf9] sm:$0xff]
      %v2311 = vld [vmem:[#allocation2 + $0x101] sm:$0xff]
      %v2312 = vld [vmem:[#allocation2 + $0x109] sm:$0xff]
      %v2313 = vld [vmem:[#allocation2 + $0x111] sm:$0xff]
      %v2314 = vld [vmem:[#allocation2 + $0x119] sm:$0xff]
      %v2315 = vld [vmem:[#allocation2 + $0x121] sm:$0xff]
      %v2316 = vld [vmem:[#allocation2 + $0x129] sm:$0xff]
      %v2317 = vld [vmem:[#allocation2 + $0x131] sm:$0xff]
      %v2318 = vld [vmem:[#allocation2 + $0x139] sm:$0xff]
      %v2319 = vld [vmem:[#allocation2 + $0x141] sm:$0xff]
      %v2320 = vld [vmem:[#allocation2 + $0x149] sm:$0xff]
      %v2321 = vld [vmem:[#allocation2 + $0x151] sm:$0xff]
      %v2322 = vld [vmem:[#allocation2 + $0x159] sm:$0xff]
      %v2323 = vld [vmem:[#allocation2 + $0x161] sm:$0xff]
      %v2324 = vld [vmem:[#allocation2 + $0x169] sm:$0xff]
      %v2325 = vld [vmem:[#allocation2 + $0x171] sm:$0xff]
      %v2326 = vld [vmem:[#allocation2 + $0x179] sm:$0xff]
      %v2327 = vld [vmem:[#allocation2 + $0x181] sm:$0xff]
      %v2328 = vld [vmem:[#allocation2 + $0x189] sm:$0xff]
      %v2329 = vld [vmem:[#allocation2 + $0x191] sm:$0xff]
      %v2330 = vld [vmem:[%s1 + $0x5] sm:$0x1]
      %2332 = vset.pattern.permute.xlu0 0
      %2333 = vperm.xlu0 %2332, %v2280
      %v2334 = vpop.permute.xlu0 %2333
      %2337 = vset.pattern.permute.xlu0 0
      %2338 = vperm.xlu0 %2337, %v2281
      %v2339 = vpop.permute.xlu0 %2338
      %2342 = vset.pattern.permute.xlu0 0
      %2343 = vperm.xlu0 %2342, %v2282
      %v2344 = vpop.permute.xlu0 %2343
      %2347 = vset.pattern.permute.xlu0 0
      %2348 = vperm.xlu0 %2347, %v2283
      %v2349 = vpop.permute.xlu0 %2348
      %2352 = vset.pattern.permute.xlu0 0
      %2353 = vperm.xlu0 %2352, %v2284
      %v2354 = vpop.permute.xlu0 %2353
      %2357 = vset.pattern.permute.xlu0 0
      %2358 = vperm.xlu0 %2357, %v2285
      %v2359 = vpop.permute.xlu0 %2358
      %2362 = vset.pattern.permute.xlu0 0
      %2363 = vperm.xlu0 %2362, %v2286
      %v2364 = vpop.permute.xlu0 %2363
      %2367 = vset.pattern.permute.xlu0 0
      %2368 = vperm.xlu0 %2367, %v2287
      %v2369 = vpop.permute.xlu0 %2368
      %2372 = vset.pattern.permute.xlu0 0
      %2373 = vperm.xlu0 %2372, %v2288
      %v2374 = vpop.permute.xlu0 %2373
      %2377 = vset.pattern.permute.xlu0 0
      %2378 = vperm.xlu0 %2377, %v2289
      %v2379 = vpop.permute.xlu0 %2378
      %2382 = vset.pattern.permute.xlu0 0
      %2383 = vperm.xlu0 %2382, %v2290
      %v2384 = vpop.permute.xlu0 %2383
      %2387 = vset.pattern.permute.xlu0 0
      %2388 = vperm.xlu0 %2387, %v2291
      %v2389 = vpop.permute.xlu0 %2388
      %2392 = vset.pattern.permute.xlu0 0
      %2393 = vperm.xlu0 %2392, %v2292
      %v2394 = vpop.permute.xlu0 %2393
      %2397 = vset.pattern.permute.xlu0 0
      %2398 = vperm.xlu0 %2397, %v2293
      %v2399 = vpop.permute.xlu0 %2398
      %2402 = vset.pattern.permute.xlu0 0
      %2403 = vperm.xlu0 %2402, %v2294
      %v2404 = vpop.permute.xlu0 %2403
      %2407 = vset.pattern.permute.xlu0 0
      %2408 = vperm.xlu0 %2407, %v2295
      %v2409 = vpop.permute.xlu0 %2408
      %2412 = vset.pattern.permute.xlu0 0
      %2413 = vperm.xlu0 %2412, %v2296
      %v2414 = vpop.permute.xlu0 %2413
      %2417 = vset.pattern.permute.xlu0 0
      %2418 = vperm.xlu0 %2417, %v2297
      %v2419 = vpop.permute.xlu0 %2418
      %2422 = vset.pattern.permute.xlu0 0
      %2423 = vperm.xlu0 %2422, %v2298
      %v2424 = vpop.permute.xlu0 %2423
      %2427 = vset.pattern.permute.xlu0 0
      %2428 = vperm.xlu0 %2427, %v2299
      %v2429 = vpop.permute.xlu0 %2428
      %2432 = vset.pattern.permute.xlu0 0
      %2433 = vperm.xlu0 %2432, %v2300
      %v2434 = vpop.permute.xlu0 %2433
      %2437 = vset.pattern.permute.xlu0 0
      %2438 = vperm.xlu0 %2437, %v2301
      %v2439 = vpop.permute.xlu0 %2438
      %2442 = vset.pattern.permute.xlu0 0
      %2443 = vperm.xlu0 %2442, %v2302
      %v2444 = vpop.permute.xlu0 %2443
      %2447 = vset.pattern.permute.xlu0 0
      %2448 = vperm.xlu0 %2447, %v2303
      %v2449 = vpop.permute.xlu0 %2448
      %2452 = vset.pattern.permute.xlu0 0
      %2453 = vperm.xlu0 %2452, %v2304
      %v2454 = vpop.permute.xlu0 %2453
      %2457 = vset.pattern.permute.xlu0 0
      %2458 = vperm.xlu0 %2457, %v2305
      %v2459 = vpop.permute.xlu0 %2458
      %2462 = vset.pattern.permute.xlu0 0
      %2463 = vperm.xlu0 %2462, %v2306
      %v2464 = vpop.permute.xlu0 %2463
      %2467 = vset.pattern.permute.xlu0 0
      %2468 = vperm.xlu0 %2467, %v2307
      %v2469 = vpop.permute.xlu0 %2468
      %2472 = vset.pattern.permute.xlu0 0
      %2473 = vperm.xlu0 %2472, %v2308
      %v2474 = vpop.permute.xlu0 %2473
      %2477 = vset.pattern.permute.xlu0 0
      %2478 = vperm.xlu0 %2477, %v2309
      %v2479 = vpop.permute.xlu0 %2478
      %2482 = vset.pattern.permute.xlu0 0
      %2483 = vperm.xlu0 %2482, %v2310
      %v2484 = vpop.permute.xlu0 %2483
      %2487 = vset.pattern.permute.xlu0 0
      %2488 = vperm.xlu0 %2487, %v2311
      %v2489 = vpop.permute.xlu0 %2488
      %2492 = vset.pattern.permute.xlu0 0
      %2493 = vperm.xlu0 %2492, %v2312
      %v2494 = vpop.permute.xlu0 %2493
      %2497 = vset.pattern.permute.xlu0 0
      %2498 = vperm.xlu0 %2497, %v2313
      %v2499 = vpop.permute.xlu0 %2498
      %2502 = vset.pattern.permute.xlu0 0
      %2503 = vperm.xlu0 %2502, %v2314
      %v2504 = vpop.permute.xlu0 %2503
      %2507 = vset.pattern.permute.xlu0 0
      %2508 = vperm.xlu0 %2507, %v2315
      %v2509 = vpop.permute.xlu0 %2508
      %2512 = vset.pattern.permute.xlu0 0
      %2513 = vperm.xlu0 %2512, %v2316
      %v2514 = vpop.permute.xlu0 %2513
      %2517 = vset.pattern.permute.xlu0 0
      %2518 = vperm.xlu0 %2517, %v2317
      %v2519 = vpop.permute.xlu0 %2518
      %2522 = vset.pattern.permute.xlu0 0
      %2523 = vperm.xlu0 %2522, %v2318
      %v2524 = vpop.permute.xlu0 %2523
      %2527 = vset.pattern.permute.xlu0 0
      %2528 = vperm.xlu0 %2527, %v2319
      %v2529 = vpop.permute.xlu0 %2528
      %2532 = vset.pattern.permute.xlu0 0
      %2533 = vperm.xlu0 %2532, %v2320
      %v2534 = vpop.permute.xlu0 %2533
      %2537 = vset.pattern.permute.xlu0 0
      %2538 = vperm.xlu0 %2537, %v2321
      %v2539 = vpop.permute.xlu0 %2538
      %2542 = vset.pattern.permute.xlu0 0
      %2543 = vperm.xlu0 %2542, %v2322
      %v2544 = vpop.permute.xlu0 %2543
      %2547 = vset.pattern.permute.xlu0 0
      %2548 = vperm.xlu0 %2547, %v2323
      %v2549 = vpop.permute.xlu0 %2548
      %2552 = vset.pattern.permute.xlu0 0
      %2553 = vperm.xlu0 %2552, %v2324
      %v2554 = vpop.permute.xlu0 %2553
      %2557 = vset.pattern.permute.xlu0 0
      %2558 = vperm.xlu0 %2557, %v2325
      %v2559 = vpop.permute.xlu0 %2558
      %2562 = vset.pattern.permute.xlu0 0
      %2563 = vperm.xlu0 %2562, %v2326
      %v2564 = vpop.permute.xlu0 %2563
      %2567 = vset.pattern.permute.xlu0 0
      %2568 = vperm.xlu0 %2567, %v2327
      %v2569 = vpop.permute.xlu0 %2568
      %2572 = vset.pattern.permute.xlu0 0
      %2573 = vperm.xlu0 %2572, %v2328
      %v2574 = vpop.permute.xlu0 %2573
      %2577 = vset.pattern.permute.xlu0 0
      %2578 = vperm.xlu0 %2577, %v2329
      %v2579 = vpop.permute.xlu0 %2578
      %v2581 = vlaneseq
      %v2582 = vshrl.u32 %v2581, 7
      %v2583 = vsub.s32 0, %v2582
      %v2584 = vrot.slane %v2330, %v2583
      %v2585 = vmul.f32 %v2334, %v2584
      %v2586 = vmul.f32 %v2339, %v2584
      %v2587 = vmul.f32 %v2344, %v2584
      %v2588 = vmul.f32 %v2349, %v2584
      %v2589 = vmul.f32 %v2354, %v2584
      %v2590 = vmul.f32 %v2359, %v2584
      %v2591 = vmul.f32 %v2364, %v2584
      %v2592 = vmul.f32 %v2369, %v2584
      %v2593 = vmul.f32 %v2374, %v2584
      %v2594 = vmul.f32 %v2379, %v2584
      %v2595 = vmul.f32 %v2384, %v2584
      %v2596 = vmul.f32 %v2389, %v2584
      %v2597 = vmul.f32 %v2394, %v2584
      %v2598 = vmul.f32 %v2399, %v2584
      %v2599 = vmul.f32 %v2404, %v2584
      %v2600 = vmul.f32 %v2409, %v2584
      %v2601 = vmul.f32 %v2414, %v2584
      %v2602 = vmul.f32 %v2419, %v2584
      %v2603 = vmul.f32 %v2424, %v2584
      %v2604 = vmul.f32 %v2429, %v2584
      %v2605 = vmul.f32 %v2434, %v2584
      %v2606 = vmul.f32 %v2439, %v2584
      %v2607 = vmul.f32 %v2444, %v2584
      %v2608 = vmul.f32 %v2449, %v2584
      %v2609 = vmul.f32 %v2454, %v2584
      %v2610 = vmul.f32 %v2459, %v2584
      %v2611 = vmul.f32 %v2464, %v2584
      %v2612 = vmul.f32 %v2469, %v2584
      %v2613 = vmul.f32 %v2474, %v2584
      %v2614 = vmul.f32 %v2479, %v2584
      %v2615 = vmul.f32 %v2484, %v2584
      %v2616 = vmul.f32 %v2489, %v2584
      %v2617 = vmul.f32 %v2494, %v2584
      %v2618 = vmul.f32 %v2499, %v2584
      %v2619 = vmul.f32 %v2504, %v2584
      %v2620 = vmul.f32 %v2509, %v2584
      %v2621 = vmul.f32 %v2514, %v2584
      %v2622 = vmul.f32 %v2519, %v2584
      %v2623 = vmul.f32 %v2524, %v2584
      %v2624 = vmul.f32 %v2529, %v2584
      %v2625 = vmul.f32 %v2534, %v2584
      %v2626 = vmul.f32 %v2539, %v2584
      %v2627 = vmul.f32 %v2544, %v2584
      %v2628 = vmul.f32 %v2549, %v2584
      %v2629 = vmul.f32 %v2554, %v2584
      %v2630 = vmul.f32 %v2559, %v2584
      %v2631 = vmul.f32 %v2564, %v2584
      %v2632 = vmul.f32 %v2569, %v2584
      %v2633 = vmul.f32 %v2574, %v2584
      %v2634 = vmul.f32 %v2579, %v2584
      %v2635 = vadd.f32 %v2230, %v2585
      %v2636 = vadd.f32 %v2231, %v2586
      %v2637 = vadd.f32 %v2232, %v2587
      %v2638 = vadd.f32 %v2233, %v2588
      %v2639 = vadd.f32 %v2234, %v2589
      %v2640 = vadd.f32 %v2235, %v2590
      %v2641 = vadd.f32 %v2236, %v2591
      %v2642 = vadd.f32 %v2237, %v2592
      %v2643 = vadd.f32 %v2238, %v2593
      %v2644 = vadd.f32 %v2239, %v2594
      %v2645 = vadd.f32 %v2240, %v2595
      %v2646 = vadd.f32 %v2241, %v2596
      %v2647 = vadd.f32 %v2242, %v2597
      %v2648 = vadd.f32 %v2243, %v2598
      %v2649 = vadd.f32 %v2244, %v2599
      %v2650 = vadd.f32 %v2245, %v2600
      %v2651 = vadd.f32 %v2246, %v2601
      %v2652 = vadd.f32 %v2247, %v2602
      %v2653 = vadd.f32 %v2248, %v2603
      %v2654 = vadd.f32 %v2249, %v2604
      %v2655 = vadd.f32 %v2250, %v2605
      %v2656 = vadd.f32 %v2251, %v2606
      %v2657 = vadd.f32 %v2252, %v2607
      %v2658 = vadd.f32 %v2253, %v2608
      %v2659 = vadd.f32 %v2254, %v2609
      %v2660 = vadd.f32 %v2255, %v2610
      %v2661 = vadd.f32 %v2256, %v2611
      %v2662 = vadd.f32 %v2257, %v2612
      %v2663 = vadd.f32 %v2258, %v2613
      %v2664 = vadd.f32 %v2259, %v2614
      %v2665 = vadd.f32 %v2260, %v2615
      %v2666 = vadd.f32 %v2261, %v2616
      %v2667 = vadd.f32 %v2262, %v2617
      %v2668 = vadd.f32 %v2263, %v2618
      %v2669 = vadd.f32 %v2264, %v2619
      %v2670 = vadd.f32 %v2265, %v2620
      %v2671 = vadd.f32 %v2266, %v2621
      %v2672 = vadd.f32 %v2267, %v2622
      %v2673 = vadd.f32 %v2268, %v2623
      %v2674 = vadd.f32 %v2269, %v2624
      %v2675 = vadd.f32 %v2270, %v2625
      %v2676 = vadd.f32 %v2271, %v2626
      %v2677 = vadd.f32 %v2272, %v2627
      %v2678 = vadd.f32 %v2273, %v2628
      %v2679 = vadd.f32 %v2274, %v2629
      %v2680 = vadd.f32 %v2275, %v2630
      %v2681 = vadd.f32 %v2276, %v2631
      %v2682 = vadd.f32 %v2277, %v2632
      %v2683 = vadd.f32 %v2278, %v2633
      %v2684 = vadd.f32 %v2279, %v2634
      %v2685 = vld [vmem:[%s1 + $0x6] sm:$0x1]
      %2686 = vset.pattern.permute.xlu0 1
      %2687 = vperm.xlu0 %2686, %v2280
      %v2688 = vpop.permute.xlu0 %2687
      %2690 = vset.pattern.permute.xlu0 1
      %2691 = vperm.xlu0 %2690, %v2281
      %v2692 = vpop.permute.xlu0 %2691
      %2694 = vset.pattern.permute.xlu0 1
      %2695 = vperm.xlu0 %2694, %v2282
      %v2696 = vpop.permute.xlu0 %2695
      %2698 = vset.pattern.permute.xlu0 1
      %2699 = vperm.xlu0 %2698, %v2283
      %v2700 = vpop.permute.xlu0 %2699
      %2702 = vset.pattern.permute.xlu0 1
      %2703 = vperm.xlu0 %2702, %v2284
      %v2704 = vpop.permute.xlu0 %2703
      %2706 = vset.pattern.permute.xlu0 1
      %2707 = vperm.xlu0 %2706, %v2285
      %v2708 = vpop.permute.xlu0 %2707
      %2710 = vset.pattern.permute.xlu0 1
      %2711 = vperm.xlu0 %2710, %v2286
      %v2712 = vpop.permute.xlu0 %2711
      %2714 = vset.pattern.permute.xlu0 1
      %2715 = vperm.xlu0 %2714, %v2287
      %v2716 = vpop.permute.xlu0 %2715
      %2718 = vset.pattern.permute.xlu0 1
      %2719 = vperm.xlu0 %2718, %v2288
      %v2720 = vpop.permute.xlu0 %2719
      %2722 = vset.pattern.permute.xlu0 1
      %2723 = vperm.xlu0 %2722, %v2289
      %v2724 = vpop.permute.xlu0 %2723
      %2726 = vset.pattern.permute.xlu0 1
      %2727 = vperm.xlu0 %2726, %v2290
      %v2728 = vpop.permute.xlu0 %2727
      %2730 = vset.pattern.permute.xlu0 1
      %2731 = vperm.xlu0 %2730, %v2291
      %v2732 = vpop.permute.xlu0 %2731
      %2734 = vset.pattern.permute.xlu0 1
      %2735 = vperm.xlu0 %2734, %v2292
      %v2736 = vpop.permute.xlu0 %2735
      %2738 = vset.pattern.permute.xlu0 1
      %2739 = vperm.xlu0 %2738, %v2293
      %v2740 = vpop.permute.xlu0 %2739
      %2742 = vset.pattern.permute.xlu0 1
      %2743 = vperm.xlu0 %2742, %v2294
      %v2744 = vpop.permute.xlu0 %2743
      %2746 = vset.pattern.permute.xlu0 1
      %2747 = vperm.xlu0 %2746, %v2295
      %v2748 = vpop.permute.xlu0 %2747
      %2750 = vset.pattern.permute.xlu0 1
      %2751 = vperm.xlu0 %2750, %v2296
      %v2752 = vpop.permute.xlu0 %2751
      %2754 = vset.pattern.permute.xlu0 1
      %2755 = vperm.xlu0 %2754, %v2297
      %v2756 = vpop.permute.xlu0 %2755
      %2758 = vset.pattern.permute.xlu0 1
      %2759 = vperm.xlu0 %2758, %v2298
      %v2760 = vpop.permute.xlu0 %2759
      %2762 = vset.pattern.permute.xlu0 1
      %2763 = vperm.xlu0 %2762, %v2299
      %v2764 = vpop.permute.xlu0 %2763
      %2766 = vset.pattern.permute.xlu0 1
      %2767 = vperm.xlu0 %2766, %v2300
      %v2768 = vpop.permute.xlu0 %2767
      %2770 = vset.pattern.permute.xlu0 1
      %2771 = vperm.xlu0 %2770, %v2301
      %v2772 = vpop.permute.xlu0 %2771
      %2774 = vset.pattern.permute.xlu0 1
      %2775 = vperm.xlu0 %2774, %v2302
      %v2776 = vpop.permute.xlu0 %2775
      %2778 = vset.pattern.permute.xlu0 1
      %2779 = vperm.xlu0 %2778, %v2303
      %v2780 = vpop.permute.xlu0 %2779
      %2782 = vset.pattern.permute.xlu0 1
      %2783 = vperm.xlu0 %2782, %v2304
      %v2784 = vpop.permute.xlu0 %2783
      %2786 = vset.pattern.permute.xlu0 1
      %2787 = vperm.xlu0 %2786, %v2305
      %v2788 = vpop.permute.xlu0 %2787
      %2790 = vset.pattern.permute.xlu0 1
      %2791 = vperm.xlu0 %2790, %v2306
      %v2792 = vpop.permute.xlu0 %2791
      %2794 = vset.pattern.permute.xlu0 1
      %2795 = vperm.xlu0 %2794, %v2307
      %v2796 = vpop.permute.xlu0 %2795
      %2798 = vset.pattern.permute.xlu0 1
      %2799 = vperm.xlu0 %2798, %v2308
      %v2800 = vpop.permute.xlu0 %2799
      %2802 = vset.pattern.permute.xlu0 1
      %2803 = vperm.xlu0 %2802, %v2309
      %v2804 = vpop.permute.xlu0 %2803
      %2806 = vset.pattern.permute.xlu0 1
      %2807 = vperm.xlu0 %2806, %v2310
      %v2808 = vpop.permute.xlu0 %2807
      %2810 = vset.pattern.permute.xlu0 1
      %2811 = vperm.xlu0 %2810, %v2311
      %v2812 = vpop.permute.xlu0 %2811
      %2814 = vset.pattern.permute.xlu0 1
      %2815 = vperm.xlu0 %2814, %v2312
      %v2816 = vpop.permute.xlu0 %2815
      %2818 = vset.pattern.permute.xlu0 1
      %2819 = vperm.xlu0 %2818, %v2313
      %v2820 = vpop.permute.xlu0 %2819
      %2822 = vset.pattern.permute.xlu0 1
      %2823 = vperm.xlu0 %2822, %v2314
      %v2824 = vpop.permute.xlu0 %2823
      %2826 = vset.pattern.permute.xlu0 1
      %2827 = vperm.xlu0 %2826, %v2315
      %v2828 = vpop.permute.xlu0 %2827
      %2830 = vset.pattern.permute.xlu0 1
      %2831 = vperm.xlu0 %2830, %v2316
      %v2832 = vpop.permute.xlu0 %2831
      %2834 = vset.pattern.permute.xlu0 1
      %2835 = vperm.xlu0 %2834, %v2317
      %v2836 = vpop.permute.xlu0 %2835
      %2838 = vset.pattern.permute.xlu0 1
      %2839 = vperm.xlu0 %2838, %v2318
      %v2840 = vpop.permute.xlu0 %2839
      %2842 = vset.pattern.permute.xlu0 1
      %2843 = vperm.xlu0 %2842, %v2319
      %v2844 = vpop.permute.xlu0 %2843
      %2846 = vset.pattern.permute.xlu0 1
      %2847 = vperm.xlu0 %2846, %v2320
      %v2848 = vpop.permute.xlu0 %2847
      %2850 = vset.pattern.permute.xlu0 1
      %2851 = vperm.xlu0 %2850, %v2321
      %v2852 = vpop.permute.xlu0 %2851
      %2854 = vset.pattern.permute.xlu0 1
      %2855 = vperm.xlu0 %2854, %v2322
      %v2856 = vpop.permute.xlu0 %2855
      %2858 = vset.pattern.permute.xlu0 1
      %2859 = vperm.xlu0 %2858, %v2323
      %v2860 = vpop.permute.xlu0 %2859
      %2862 = vset.pattern.permute.xlu0 1
      %2863 = vperm.xlu0 %2862, %v2324
      %v2864 = vpop.permute.xlu0 %2863
      %2866 = vset.pattern.permute.xlu0 1
      %2867 = vperm.xlu0 %2866, %v2325
      %v2868 = vpop.permute.xlu0 %2867
      %2870 = vset.pattern.permute.xlu0 1
      %2871 = vperm.xlu0 %2870, %v2326
      %v2872 = vpop.permute.xlu0 %2871
      %2874 = vset.pattern.permute.xlu0 1
      %2875 = vperm.xlu0 %2874, %v2327
      %v2876 = vpop.permute.xlu0 %2875
      %2878 = vset.pattern.permute.xlu0 1
      %2879 = vperm.xlu0 %2878, %v2328
      %v2880 = vpop.permute.xlu0 %2879
      %2882 = vset.pattern.permute.xlu0 1
      %2883 = vperm.xlu0 %2882, %v2329
      %v2884 = vpop.permute.xlu0 %2883
      %v2886 = vlaneseq
      %v2887 = vshrl.u32 %v2886, 7
      %v2888 = vsub.s32 0, %v2887
      %v2889 = vrot.slane %v2685, %v2888
      %v2890 = vmul.f32 %v2688, %v2889
      %v2891 = vmul.f32 %v2692, %v2889
      %v2892 = vmul.f32 %v2696, %v2889
      %v2893 = vmul.f32 %v2700, %v2889
      %v2894 = vmul.f32 %v2704, %v2889
      %v2895 = vmul.f32 %v2708, %v2889
      %v2896 = vmul.f32 %v2712, %v2889
      %v2897 = vmul.f32 %v2716, %v2889
      %v2898 = vmul.f32 %v2720, %v2889
      %v2899 = vmul.f32 %v2724, %v2889
      %v2900 = vmul.f32 %v2728, %v2889
      %v2901 = vmul.f32 %v2732, %v2889
      %v2902 = vmul.f32 %v2736, %v2889
      %v2903 = vmul.f32 %v2740, %v2889
      %v2904 = vmul.f32 %v2744, %v2889
      %v2905 = vmul.f32 %v2748, %v2889
      %v2906 = vmul.f32 %v2752, %v2889
      %v2907 = vmul.f32 %v2756, %v2889
      %v2908 = vmul.f32 %v2760, %v2889
      %v2909 = vmul.f32 %v2764, %v2889
      %v2910 = vmul.f32 %v2768, %v2889
      %v2911 = vmul.f32 %v2772, %v2889
      %v2912 = vmul.f32 %v2776, %v2889
      %v2913 = vmul.f32 %v2780, %v2889
      %v2914 = vmul.f32 %v2784, %v2889
      %v2915 = vmul.f32 %v2788, %v2889
      %v2916 = vmul.f32 %v2792, %v2889
      %v2917 = vmul.f32 %v2796, %v2889
      %v2918 = vmul.f32 %v2800, %v2889
      %v2919 = vmul.f32 %v2804, %v2889
      %v2920 = vmul.f32 %v2808, %v2889
      %v2921 = vmul.f32 %v2812, %v2889
      %v2922 = vmul.f32 %v2816, %v2889
      %v2923 = vmul.f32 %v2820, %v2889
      %v2924 = vmul.f32 %v2824, %v2889
      %v2925 = vmul.f32 %v2828, %v2889
      %v2926 = vmul.f32 %v2832, %v2889
      %v2927 = vmul.f32 %v2836, %v2889
      %v2928 = vmul.f32 %v2840, %v2889
      %v2929 = vmul.f32 %v2844, %v2889
      %v2930 = vmul.f32 %v2848, %v2889
      %v2931 = vmul.f32 %v2852, %v2889
      %v2932 = vmul.f32 %v2856, %v2889
      %v2933 = vmul.f32 %v2860, %v2889
      %v2934 = vmul.f32 %v2864, %v2889
      %v2935 = vmul.f32 %v2868, %v2889
      %v2936 = vmul.f32 %v2872, %v2889
      %v2937 = vmul.f32 %v2876, %v2889
      %v2938 = vmul.f32 %v2880, %v2889
      %v2939 = vmul.f32 %v2884, %v2889
      %v2940 = vadd.f32 %v2635, %v2890
      %v2941 = vadd.f32 %v2636, %v2891
      %v2942 = vadd.f32 %v2637, %v2892
      %v2943 = vadd.f32 %v2638, %v2893
      %v2944 = vadd.f32 %v2639, %v2894
      %v2945 = vadd.f32 %v2640, %v2895
      %v2946 = vadd.f32 %v2641, %v2896
      %v2947 = vadd.f32 %v2642, %v2897
      %v2948 = vadd.f32 %v2643, %v2898
      %v2949 = vadd.f32 %v2644, %v2899
      %v2950 = vadd.f32 %v2645, %v2900
      %v2951 = vadd.f32 %v2646, %v2901
      %v2952 = vadd.f32 %v2647, %v2902
      %v2953 = vadd.f32 %v2648, %v2903
      %v2954 = vadd.f32 %v2649, %v2904
      %v2955 = vadd.f32 %v2650, %v2905
      %v2956 = vadd.f32 %v2651, %v2906
      %v2957 = vadd.f32 %v2652, %v2907
      %v2958 = vadd.f32 %v2653, %v2908
      %v2959 = vadd.f32 %v2654, %v2909
      %v2960 = vadd.f32 %v2655, %v2910
      %v2961 = vadd.f32 %v2656, %v2911
      %v2962 = vadd.f32 %v2657, %v2912
      %v2963 = vadd.f32 %v2658, %v2913
      %v2964 = vadd.f32 %v2659, %v2914
      %v2965 = vadd.f32 %v2660, %v2915
      %v2966 = vadd.f32 %v2661, %v2916
      %v2967 = vadd.f32 %v2662, %v2917
      %v2968 = vadd.f32 %v2663, %v2918
      %v2969 = vadd.f32 %v2664, %v2919
      %v2970 = vadd.f32 %v2665, %v2920
      %v2971 = vadd.f32 %v2666, %v2921
      %v2972 = vadd.f32 %v2667, %v2922
      %v2973 = vadd.f32 %v2668, %v2923
      %v2974 = vadd.f32 %v2669, %v2924
      %v2975 = vadd.f32 %v2670, %v2925
      %v2976 = vadd.f32 %v2671, %v2926
      %v2977 = vadd.f32 %v2672, %v2927
      %v2978 = vadd.f32 %v2673, %v2928
      %v2979 = vadd.f32 %v2674, %v2929
      %v2980 = vadd.f32 %v2675, %v2930
      %v2981 = vadd.f32 %v2676, %v2931
      %v2982 = vadd.f32 %v2677, %v2932
      %v2983 = vadd.f32 %v2678, %v2933
      %v2984 = vadd.f32 %v2679, %v2934
      %v2985 = vadd.f32 %v2680, %v2935
      %v2986 = vadd.f32 %v2681, %v2936
      %v2987 = vadd.f32 %v2682, %v2937
      %v2988 = vadd.f32 %v2683, %v2938
      %v2989 = vadd.f32 %v2684, %v2939
      %v2990 = vld [vmem:[%s2] sm:$0x1]
      %v2992 = vlaneseq
      %v2993 = vshrl.u32 %v2992, 7
      %v2994 = vsub.s32 0, %v2993
      %v2995 = vrot.slane %v2990, %v2994
      %v2997 = vadd.f32 %v2940, %v2995
      %v2998 = vadd.f32 %v2941, %v2995
      %v2999 = vadd.f32 %v2942, %v2995
      %v3000 = vadd.f32 %v2943, %v2995
      %v3001 = vadd.f32 %v2944, %v2995
      %v3002 = vadd.f32 %v2945, %v2995
      %v3003 = vadd.f32 %v2946, %v2995
      %v3004 = vadd.f32 %v2947, %v2995
      %v3005 = vadd.f32 %v2948, %v2995
      %v3006 = vadd.f32 %v2949, %v2995
      %v3007 = vadd.f32 %v2950, %v2995
      %v3008 = vadd.f32 %v2951, %v2995
      %v3009 = vadd.f32 %v2952, %v2995
      %v3010 = vadd.f32 %v2953, %v2995
      %v3011 = vadd.f32 %v2954, %v2995
      %v3012 = vadd.f32 %v2955, %v2995
      %v3013 = vadd.f32 %v2956, %v2995
      %v3014 = vadd.f32 %v2957, %v2995
      %v3015 = vadd.f32 %v2958, %v2995
      %v3016 = vadd.f32 %v2959, %v2995
      %v3017 = vadd.f32 %v2960, %v2995
      %v3018 = vadd.f32 %v2961, %v2995
      %v3019 = vadd.f32 %v2962, %v2995
      %v3020 = vadd.f32 %v2963, %v2995
      %v3021 = vadd.f32 %v2964, %v2995
      %v3022 = vadd.f32 %v2965, %v2995
      %v3023 = vadd.f32 %v2966, %v2995
      %v3024 = vadd.f32 %v2967, %v2995
      %v3025 = vadd.f32 %v2968, %v2995
      %v3026 = vadd.f32 %v2969, %v2995
      %v3027 = vadd.f32 %v2970, %v2995
      %v3028 = vadd.f32 %v2971, %v2995
      %v3029 = vadd.f32 %v2972, %v2995
      %v3030 = vadd.f32 %v2973, %v2995
      %v3031 = vadd.f32 %v2974, %v2995
      %v3032 = vadd.f32 %v2975, %v2995
      %v3033 = vadd.f32 %v2976, %v2995
      %v3034 = vadd.f32 %v2977, %v2995
      %v3035 = vadd.f32 %v2978, %v2995
      %v3036 = vadd.f32 %v2979, %v2995
      %v3037 = vadd.f32 %v2980, %v2995
      %v3038 = vadd.f32 %v2981, %v2995
      %v3039 = vadd.f32 %v2982, %v2995
      %v3040 = vadd.f32 %v2983, %v2995
      %v3041 = vadd.f32 %v2984, %v2995
      %v3042 = vadd.f32 %v2985, %v2995
      %v3043 = vadd.f32 %v2986, %v2995
      %v3044 = vadd.f32 %v2987, %v2995
      %v3045 = vadd.f32 %v2988, %v2995
      %v3046 = vadd.f32 %v2989, %v2995
      %v3047 = vmax.f32 %v2997, 0.0
      %v3048 = vmax.f32 %v2998, 0.0
      %v3049 = vmax.f32 %v2999, 0.0
      %v3050 = vmax.f32 %v3000, 0.0
      %v3051 = vmax.f32 %v3001, 0.0
      %v3052 = vmax.f32 %v3002, 0.0
      %v3053 = vmax.f32 %v3003, 0.0
      %v3054 = vmax.f32 %v3004, 0.0
      %v3055 = vmax.f32 %v3005, 0.0
      %v3056 = vmax.f32 %v3006, 0.0
      %v3057 = vmax.f32 %v3007, 0.0
      %v3058 = vmax.f32 %v3008, 0.0
      %v3059 = vmax.f32 %v3009, 0.0
      %v3060 = vmax.f32 %v3010, 0.0
      %v3061 = vmax.f32 %v3011, 0.0
      %v3062 = vmax.f32 %v3012, 0.0
      %v3063 = vmax.f32 %v3013, 0.0
      %v3064 = vmax.f32 %v3014, 0.0
      %v3065 = vmax.f32 %v3015, 0.0
      %v3066 = vmax.f32 %v3016, 0.0
      %v3067 = vmax.f32 %v3017, 0.0
      %v3068 = vmax.f32 %v3018, 0.0
      %v3069 = vmax.f32 %v3019, 0.0
      %v3070 = vmax.f32 %v3020, 0.0
      %v3071 = vmax.f32 %v3021, 0.0
      %v3072 = vmax.f32 %v3022, 0.0
      %v3073 = vmax.f32 %v3023, 0.0
      %v3074 = vmax.f32 %v3024, 0.0
      %v3075 = vmax.f32 %v3025, 0.0
      %v3076 = vmax.f32 %v3026, 0.0
      %v3077 = vmax.f32 %v3027, 0.0
      %v3078 = vmax.f32 %v3028, 0.0
      %v3079 = vmax.f32 %v3029, 0.0
      %v3080 = vmax.f32 %v3030, 0.0
      %v3081 = vmax.f32 %v3031, 0.0
      %v3082 = vmax.f32 %v3032, 0.0
      %v3083 = vmax.f32 %v3033, 0.0
      %v3084 = vmax.f32 %v3034, 0.0
      %v3085 = vmax.f32 %v3035, 0.0
      %v3086 = vmax.f32 %v3036, 0.0
      %v3087 = vmax.f32 %v3037, 0.0
      %v3088 = vmax.f32 %v3038, 0.0
      %v3089 = vmax.f32 %v3039, 0.0
      %v3090 = vmax.f32 %v3040, 0.0
      %v3091 = vmax.f32 %v3041, 0.0
      %v3092 = vmax.f32 %v3042, 0.0
      %v3093 = vmax.f32 %v3043, 0.0
      %v3094 = vmax.f32 %v3044, 0.0
      %v3095 = vmax.f32 %v3045, 0.0
      %v3096 = vmax.f32 %v3046, 0.0
      %vm3097 = vcmask 261120
      %3098 = vst.msk [vmem:[#allocation5 + $0x8] sm:$0xff] %vm3097, %v3047
      %3099 = vst.msk [vmem:[#allocation5 + $0x10] sm:$0xff] %vm3097, %v3048
      %3100 = vst.msk [vmem:[#allocation5 + $0x18] sm:$0xff] %vm3097, %v3049
      %3101 = vst.msk [vmem:[#allocation5 + $0x20] sm:$0xff] %vm3097, %v3050
      %3102 = vst.msk [vmem:[#allocation5 + $0x28] sm:$0xff] %vm3097, %v3051
      %3103 = vst.msk [vmem:[#allocation5 + $0x30] sm:$0xff] %vm3097, %v3052
      %3104 = vst.msk [vmem:[#allocation5 + $0x38] sm:$0xff] %vm3097, %v3053
      %3105 = vst.msk [vmem:[#allocation5 + $0x40] sm:$0xff] %vm3097, %v3054
      %3106 = vst.msk [vmem:[#allocation5 + $0x48] sm:$0xff] %vm3097, %v3055
      %3107 = vst.msk [vmem:[#allocation5 + $0x50] sm:$0xff] %vm3097, %v3056
      %3108 = vst.msk [vmem:[#allocation5 + $0x58] sm:$0xff] %vm3097, %v3057
      %3109 = vst.msk [vmem:[#allocation5 + $0x60] sm:$0xff] %vm3097, %v3058
      %3110 = vst.msk [vmem:[#allocation5 + $0x68] sm:$0xff] %vm3097, %v3059
      %3111 = vst.msk [vmem:[#allocation5 + $0x70] sm:$0xff] %vm3097, %v3060
      %3112 = vst.msk [vmem:[#allocation5 + $0x78] sm:$0xff] %vm3097, %v3061
      %3113 = vst.msk [vmem:[#allocation5 + $0x80] sm:$0xff] %vm3097, %v3062
      %3114 = vst.msk [vmem:[#allocation5 + $0x88] sm:$0xff] %vm3097, %v3063
      %3115 = vst.msk [vmem:[#allocation5 + $0x90] sm:$0xff] %vm3097, %v3064
      %3116 = vst.msk [vmem:[#allocation5 + $0x98] sm:$0xff] %vm3097, %v3065
      %3117 = vst.msk [vmem:[#allocation5 + $0xa0] sm:$0xff] %vm3097, %v3066
      %3118 = vst.msk [vmem:[#allocation5 + $0xa8] sm:$0xff] %vm3097, %v3067
      %3119 = vst.msk [vmem:[#allocation5 + $0xb0] sm:$0xff] %vm3097, %v3068
      %3120 = vst.msk [vmem:[#allocation5 + $0xb8] sm:$0xff] %vm3097, %v3069
      %3121 = vst.msk [vmem:[#allocation5 + $0xc0] sm:$0xff] %vm3097, %v3070
      %3122 = vst.msk [vmem:[#allocation5 + $0xc8] sm:$0xff] %vm3097, %v3071
      %3123 = vst.msk [vmem:[#allocation5 + $0xd0] sm:$0xff] %vm3097, %v3072
      %3124 = vst.msk [vmem:[#allocation5 + $0xd8] sm:$0xff] %vm3097, %v3073
      %3125 = vst.msk [vmem:[#allocation5 + $0xe0] sm:$0xff] %vm3097, %v3074
      %3126 = vst.msk [vmem:[#allocation5 + $0xe8] sm:$0xff] %vm3097, %v3075
      %3127 = vst.msk [vmem:[#allocation5 + $0xf0] sm:$0xff] %vm3097, %v3076
      %3128 = vst.msk [vmem:[#allocation5 + $0xf8] sm:$0xff] %vm3097, %v3077
      %3129 = vst.msk [vmem:[#allocation5 + $0x100] sm:$0xff] %vm3097, %v3078
      %3130 = vst.msk [vmem:[#allocation5 + $0x108] sm:$0xff] %vm3097, %v3079
      %3131 = vst.msk [vmem:[#allocation5 + $0x110] sm:$0xff] %vm3097, %v3080
      %3132 = vst.msk [vmem:[#allocation5 + $0x118] sm:$0xff] %vm3097, %v3081
      %3133 = vst.msk [vmem:[#allocation5 + $0x120] sm:$0xff] %vm3097, %v3082
      %3134 = vst.msk [vmem:[#allocation5 + $0x128] sm:$0xff] %vm3097, %v3083
      %3135 = vst.msk [vmem:[#allocation5 + $0x130] sm:$0xff] %vm3097, %v3084
      %3136 = vst.msk [vmem:[#allocation5 + $0x138] sm:$0xff] %vm3097, %v3085
      %3137 = vst.msk [vmem:[#allocation5 + $0x140] sm:$0xff] %vm3097, %v3086
      %3138 = vst.msk [vmem:[#allocation5 + $0x148] sm:$0xff] %vm3097, %v3087
      %3139 = vst.msk [vmem:[#allocation5 + $0x150] sm:$0xff] %vm3097, %v3088
      %3140 = vst.msk [vmem:[#allocation5 + $0x158] sm:$0xff] %vm3097, %v3089
      %3141 = vst.msk [vmem:[#allocation5 + $0x160] sm:$0xff] %vm3097, %v3090
      %3142 = vst.msk [vmem:[#allocation5 + $0x168] sm:$0xff] %vm3097, %v3091
      %3143 = vst.msk [vmem:[#allocation5 + $0x170] sm:$0xff] %vm3097, %v3092
      %3144 = vst.msk [vmem:[#allocation5 + $0x178] sm:$0xff] %vm3097, %v3093
      %3145 = vst.msk [vmem:[#allocation5 + $0x180] sm:$0xff] %vm3097, %v3094
      %3146 = vst.msk [vmem:[#allocation5 + $0x188] sm:$0xff] %vm3097, %v3095
      %3147 = vst.msk [vmem:[#allocation5 + $0x190] sm:$0xff] %vm3097, %v3096
      %s3148 = scalar_lea.vmem [#allocation5], 7
      %v3149 = vld [vmem:[%s3148] ss:$2 sm:$0xff]
      %s3150 = scalar_lea.vmem [#allocation5], 23
      %v3151 = vld [vmem:[%s3150] ss:$2 sm:$0xff]
      %s3152 = scalar_lea.vmem [#allocation5], 39
      %v3153 = vld [vmem:[%s3152] ss:$2 sm:$0xff]
      %s3154 = scalar_lea.vmem [#allocation5], 55
      %v3155 = vld [vmem:[%s3154] ss:$2 sm:$0xff]
      %s3156 = scalar_lea.vmem [#allocation5], 71
      %v3157 = vld [vmem:[%s3156] ss:$2 sm:$0xff]
      %s3158 = scalar_lea.vmem [#allocation5], 87
      %v3159 = vld [vmem:[%s3158] ss:$2 sm:$0xff]
      %s3160 = scalar_lea.vmem [#allocation5], 103
      %v3161 = vld [vmem:[%s3160] ss:$2 sm:$0xff]
      %s3162 = scalar_lea.vmem [#allocation5], 119
      %v3163 = vld [vmem:[%s3162] ss:$2 sm:$0xff]
      %s3164 = scalar_lea.vmem [#allocation5], 135
      %v3165 = vld [vmem:[%s3164] ss:$2 sm:$0xff]
      %s3166 = scalar_lea.vmem [#allocation5], 151
      %v3167 = vld [vmem:[%s3166] ss:$2 sm:$0xff]
      %s3168 = scalar_lea.vmem [#allocation5], 167
      %v3169 = vld [vmem:[%s3168] ss:$2 sm:$0xff]
      %s3170 = scalar_lea.vmem [#allocation5], 183
      %v3171 = vld [vmem:[%s3170] ss:$2 sm:$0xff]
      %s3172 = scalar_lea.vmem [#allocation5], 199
      %v3173 = vld [vmem:[%s3172] ss:$2 sm:$0xff]
      %s3174 = scalar_lea.vmem [#allocation5], 215
      %v3175 = vld [vmem:[%s3174] ss:$2 sm:$0xff]
      %s3176 = scalar_lea.vmem [#allocation5], 231
      %v3177 = vld [vmem:[%s3176] ss:$2 sm:$0xff]
      %s3178 = scalar_lea.vmem [#allocation5], 247
      %v3179 = vld [vmem:[%s3178] ss:$2 sm:$0xff]
      %s3180 = scalar_lea.vmem [#allocation5], 263
      %v3181 = vld [vmem:[%s3180] ss:$2 sm:$0xff]
      %s3182 = scalar_lea.vmem [#allocation5], 279
      %v3183 = vld [vmem:[%s3182] ss:$2 sm:$0xff]
      %s3184 = scalar_lea.vmem [#allocation5], 295
      %v3185 = vld [vmem:[%s3184] ss:$2 sm:$0xff]
      %s3186 = scalar_lea.vmem [#allocation5], 311
      %v3187 = vld [vmem:[%s3186] ss:$2 sm:$0xff]
      %s3188 = scalar_lea.vmem [#allocation5], 327
      %v3189 = vld [vmem:[%s3188] ss:$2 sm:$0xff]
      %s3190 = scalar_lea.vmem [#allocation5], 343
      %v3191 = vld [vmem:[%s3190] ss:$2 sm:$0xff]
      %s3192 = scalar_lea.vmem [#allocation5], 359
      %v3193 = vld [vmem:[%s3192] ss:$2 sm:$0xff]
      %s3194 = scalar_lea.vmem [#allocation5], 375
      %v3195 = vld [vmem:[%s3194] ss:$2 sm:$0xff]
      %s3196 = scalar_lea.vmem [#allocation5], 391
      %v3197 = vld [vmem:[%s3196] ss:$2 sm:$0xff]
      %s3198 = scalar_lea.vmem [#allocation5], 8
      %v3199 = vld [vmem:[%s3198] ss:$2 sm:$0xff]
      %s3200 = scalar_lea.vmem [#allocation5], 24
      %v3201 = vld [vmem:[%s3200] ss:$2 sm:$0xff]
      %s3202 = scalar_lea.vmem [#allocation5], 40
      %v3203 = vld [vmem:[%s3202] ss:$2 sm:$0xff]
      %s3204 = scalar_lea.vmem [#allocation5], 56
      %v3205 = vld [vmem:[%s3204] ss:$2 sm:$0xff]
      %s3206 = scalar_lea.vmem [#allocation5], 72
      %v3207 = vld [vmem:[%s3206] ss:$2 sm:$0xff]
      %s3208 = scalar_lea.vmem [#allocation5], 88
      %v3209 = vld [vmem:[%s3208] ss:$2 sm:$0xff]
      %s3210 = scalar_lea.vmem [#allocation5], 104
      %v3211 = vld [vmem:[%s3210] ss:$2 sm:$0xff]
      %s3212 = scalar_lea.vmem [#allocation5], 120
      %v3213 = vld [vmem:[%s3212] ss:$2 sm:$0xff]
      %s3214 = scalar_lea.vmem [#allocation5], 136
      %v3215 = vld [vmem:[%s3214] ss:$2 sm:$0xff]
      %s3216 = scalar_lea.vmem [#allocation5], 152
      %v3217 = vld [vmem:[%s3216] ss:$2 sm:$0xff]
      %s3218 = scalar_lea.vmem [#allocation5], 168
      %v3219 = vld [vmem:[%s3218] ss:$2 sm:$0xff]
      %s3220 = scalar_lea.vmem [#allocation5], 184
      %v3221 = vld [vmem:[%s3220] ss:$2 sm:$0xff]
      %s3222 = scalar_lea.vmem [#allocation5], 200
      %v3223 = vld [vmem:[%s3222] ss:$2 sm:$0xff]
      %s3224 = scalar_lea.vmem [#allocation5], 216
      %v3225 = vld [vmem:[%s3224] ss:$2 sm:$0xff]
      %s3226 = scalar_lea.vmem [#allocation5], 232
      %v3227 = vld [vmem:[%s3226] ss:$2 sm:$0xff]
      %s3228 = scalar_lea.vmem [#allocation5], 248
      %v3229 = vld [vmem:[%s3228] ss:$2 sm:$0xff]
      %s3230 = scalar_lea.vmem [#allocation5], 264
      %v3231 = vld [vmem:[%s3230] ss:$2 sm:$0xff]
      %s3232 = scalar_lea.vmem [#allocation5], 280
      %v3233 = vld [vmem:[%s3232] ss:$2 sm:$0xff]
      %s3234 = scalar_lea.vmem [#allocation5], 296
      %v3235 = vld [vmem:[%s3234] ss:$2 sm:$0xff]
      %s3236 = scalar_lea.vmem [#allocation5], 312
      %v3237 = vld [vmem:[%s3236] ss:$2 sm:$0xff]
      %s3238 = scalar_lea.vmem [#allocation5], 328
      %v3239 = vld [vmem:[%s3238] ss:$2 sm:$0xff]
      %s3240 = scalar_lea.vmem [#allocation5], 344
      %v3241 = vld [vmem:[%s3240] ss:$2 sm:$0xff]
      %s3242 = scalar_lea.vmem [#allocation5], 360
      %v3243 = vld [vmem:[%s3242] ss:$2 sm:$0xff]
      %s3244 = scalar_lea.vmem [#allocation5], 376
      %v3245 = vld [vmem:[%s3244] ss:$2 sm:$0xff]
      %s3246 = scalar_lea.vmem [#allocation5], 392
      %v3247 = vld [vmem:[%s3246] ss:$2 sm:$0xff]
      %s3248 = scalar_lea.vmem [#allocation5], 9
      %v3249 = vld [vmem:[%s3248] ss:$2 sm:$0xff]
      %s3250 = scalar_lea.vmem [#allocation5], 25
      %v3251 = vld [vmem:[%s3250] ss:$2 sm:$0xff]
      %s3252 = scalar_lea.vmem [#allocation5], 41
      %v3253 = vld [vmem:[%s3252] ss:$2 sm:$0xff]
      %s3254 = scalar_lea.vmem [#allocation5], 57
      %v3255 = vld [vmem:[%s3254] ss:$2 sm:$0xff]
      %s3256 = scalar_lea.vmem [#allocation5], 73
      %v3257 = vld [vmem:[%s3256] ss:$2 sm:$0xff]
      %s3258 = scalar_lea.vmem [#allocation5], 89
      %v3259 = vld [vmem:[%s3258] ss:$2 sm:$0xff]
      %s3260 = scalar_lea.vmem [#allocation5], 105
      %v3261 = vld [vmem:[%s3260] ss:$2 sm:$0xff]
      %s3262 = scalar_lea.vmem [#allocation5], 121
      %v3263 = vld [vmem:[%s3262] ss:$2 sm:$0xff]
      %s3264 = scalar_lea.vmem [#allocation5], 137
      %v3265 = vld [vmem:[%s3264] ss:$2 sm:$0xff]
      %s3266 = scalar_lea.vmem [#allocation5], 153
      %v3267 = vld [vmem:[%s3266] ss:$2 sm:$0xff]
      %s3268 = scalar_lea.vmem [#allocation5], 169
      %v3269 = vld [vmem:[%s3268] ss:$2 sm:$0xff]
      %s3270 = scalar_lea.vmem [#allocation5], 185
      %v3271 = vld [vmem:[%s3270] ss:$2 sm:$0xff]
      %s3272 = scalar_lea.vmem [#allocation5], 201
      %v3273 = vld [vmem:[%s3272] ss:$2 sm:$0xff]
      %s3274 = scalar_lea.vmem [#allocation5], 217
      %v3275 = vld [vmem:[%s3274] ss:$2 sm:$0xff]
      %s3276 = scalar_lea.vmem [#allocation5], 233
      %v3277 = vld [vmem:[%s3276] ss:$2 sm:$0xff]
      %s3278 = scalar_lea.vmem [#allocation5], 249
      %v3279 = vld [vmem:[%s3278] ss:$2 sm:$0xff]
      %s3280 = scalar_lea.vmem [#allocation5], 265
      %v3281 = vld [vmem:[%s3280] ss:$2 sm:$0xff]
      %s3282 = scalar_lea.vmem [#allocation5], 281
      %v3283 = vld [vmem:[%s3282] ss:$2 sm:$0xff]
      %s3284 = scalar_lea.vmem [#allocation5], 297
      %v3285 = vld [vmem:[%s3284] ss:$2 sm:$0xff]
      %s3286 = scalar_lea.vmem [#allocation5], 313
      %v3287 = vld [vmem:[%s3286] ss:$2 sm:$0xff]
      %s3288 = scalar_lea.vmem [#allocation5], 329
      %v3289 = vld [vmem:[%s3288] ss:$2 sm:$0xff]
      %s3290 = scalar_lea.vmem [#allocation5], 345
      %v3291 = vld [vmem:[%s3290] ss:$2 sm:$0xff]
      %s3292 = scalar_lea.vmem [#allocation5], 361
      %v3293 = vld [vmem:[%s3292] ss:$2 sm:$0xff]
      %s3294 = scalar_lea.vmem [#allocation5], 377
      %v3295 = vld [vmem:[%s3294] ss:$2 sm:$0xff]
      %s3296 = scalar_lea.vmem [#allocation5], 393
      %v3297 = vld [vmem:[%s3296] ss:$2 sm:$0xff]
      %v3298 = vmax.f32 %v3149, %v3199
      %v3299 = vmax.f32 %v3151, %v3201
      %v3300 = vmax.f32 %v3153, %v3203
      %v3301 = vmax.f32 %v3155, %v3205
      %v3302 = vmax.f32 %v3157, %v3207
      %v3303 = vmax.f32 %v3159, %v3209
      %v3304 = vmax.f32 %v3161, %v3211
      %v3305 = vmax.f32 %v3163, %v3213
      %v3306 = vmax.f32 %v3165, %v3215
      %v3307 = vmax.f32 %v3167, %v3217
      %v3308 = vmax.f32 %v3169, %v3219
      %v3309 = vmax.f32 %v3171, %v3221
      %v3310 = vmax.f32 %v3173, %v3223
      %v3311 = vmax.f32 %v3175, %v3225
      %v3312 = vmax.f32 %v3177, %v3227
      %v3313 = vmax.f32 %v3179, %v3229
      %v3314 = vmax.f32 %v3181, %v3231
      %v3315 = vmax.f32 %v3183, %v3233
      %v3316 = vmax.f32 %v3185, %v3235
      %v3317 = vmax.f32 %v3187, %v3237
      %v3318 = vmax.f32 %v3189, %v3239
      %v3319 = vmax.f32 %v3191, %v3241
      %v3320 = vmax.f32 %v3193, %v3243
      %v3321 = vmax.f32 %v3195, %v3245
      %v3322 = vmax.f32 %v3197, %v3247
      %v3323 = vmax.f32 %v3298, %v3249
      %v3324 = vmax.f32 %v3299, %v3251
      %v3325 = vmax.f32 %v3300, %v3253
      %v3326 = vmax.f32 %v3301, %v3255
      %v3327 = vmax.f32 %v3302, %v3257
      %v3328 = vmax.f32 %v3303, %v3259
      %v3329 = vmax.f32 %v3304, %v3261
      %v3330 = vmax.f32 %v3305, %v3263
      %v3331 = vmax.f32 %v3306, %v3265
      %v3332 = vmax.f32 %v3307, %v3267
      %v3333 = vmax.f32 %v3308, %v3269
      %v3334 = vmax.f32 %v3309, %v3271
      %v3335 = vmax.f32 %v3310, %v3273
      %v3336 = vmax.f32 %v3311, %v3275
      %v3337 = vmax.f32 %v3312, %v3277
      %v3338 = vmax.f32 %v3313, %v3279
      %v3339 = vmax.f32 %v3314, %v3281
      %v3340 = vmax.f32 %v3315, %v3283
      %v3341 = vmax.f32 %v3316, %v3285
      %v3342 = vmax.f32 %v3317, %v3287
      %v3343 = vmax.f32 %v3318, %v3289
      %v3344 = vmax.f32 %v3319, %v3291
      %v3345 = vmax.f32 %v3320, %v3293
      %v3346 = vmax.f32 %v3321, %v3295
      %v3347 = vmax.f32 %v3322, %v3297
      %3348 = vst.msk [vmem:[#allocation3 + $0x8] sm:$0xff] %vm3097, %v3323
      %3349 = vst.msk [vmem:[#allocation3 + $0x10] sm:$0xff] %vm3097, %v3324
      %3350 = vst.msk [vmem:[#allocation3 + $0x18] sm:$0xff] %vm3097, %v3325
      %3351 = vst.msk [vmem:[#allocation3 + $0x20] sm:$0xff] %vm3097, %v3326
      %3352 = vst.msk [vmem:[#allocation3 + $0x28] sm:$0xff] %vm3097, %v3327
      %3353 = vst.msk [vmem:[#allocation3 + $0x30] sm:$0xff] %vm3097, %v3328
      %3354 = vst.msk [vmem:[#allocation3 + $0x38] sm:$0xff] %vm3097, %v3329
      %3355 = vst.msk [vmem:[#allocation3 + $0x40] sm:$0xff] %vm3097, %v3330
      %3356 = vst.msk [vmem:[#allocation3 + $0x48] sm:$0xff] %vm3097, %v3331
      %3357 = vst.msk [vmem:[#allocation3 + $0x50] sm:$0xff] %vm3097, %v3332
      %3358 = vst.msk [vmem:[#allocation3 + $0x58] sm:$0xff] %vm3097, %v3333
      %3359 = vst.msk [vmem:[#allocation3 + $0x60] sm:$0xff] %vm3097, %v3334
      %3360 = vst.msk [vmem:[#allocation3 + $0x68] sm:$0xff] %vm3097, %v3335
      %3361 = vst.msk [vmem:[#allocation3 + $0x70] sm:$0xff] %vm3097, %v3336
      %3362 = vst.msk [vmem:[#allocation3 + $0x78] sm:$0xff] %vm3097, %v3337
      %3363 = vst.msk [vmem:[#allocation3 + $0x80] sm:$0xff] %vm3097, %v3338
      %3364 = vst.msk [vmem:[#allocation3 + $0x88] sm:$0xff] %vm3097, %v3339
      %3365 = vst.msk [vmem:[#allocation3 + $0x90] sm:$0xff] %vm3097, %v3340
      %3366 = vst.msk [vmem:[#allocation3 + $0x98] sm:$0xff] %vm3097, %v3341
      %3367 = vst.msk [vmem:[#allocation3 + $0xa0] sm:$0xff] %vm3097, %v3342
      %3368 = vst.msk [vmem:[#allocation3 + $0xa8] sm:$0xff] %vm3097, %v3343
      %3369 = vst.msk [vmem:[#allocation3 + $0xb0] sm:$0xff] %vm3097, %v3344
      %3370 = vst.msk [vmem:[#allocation3 + $0xb8] sm:$0xff] %vm3097, %v3345
      %3371 = vst.msk [vmem:[#allocation3 + $0xc0] sm:$0xff] %vm3097, %v3346
      %3372 = vst.msk [vmem:[#allocation3 + $0xc8] sm:$0xff] %vm3097, %v3347
      %v3373 = vld [vmem:[%s4] sm:$0x1]
      %s3374 = scalar_lea.vmem [#allocation3], 5
      %v3375 = vld [vmem:[%s3374] ss:$2 sm:$0xff]
      %s3376 = scalar_lea.vmem [#allocation3], 21
      %v3377 = vld [vmem:[%s3376] ss:$2 sm:$0xff]
      %s3378 = scalar_lea.vmem [#allocation3], 37
      %v3379 = vld [vmem:[%s3378] ss:$2 sm:$0xff]
      %s3380 = scalar_lea.vmem [#allocation3], 53
      %v3381 = vld [vmem:[%s3380] ss:$2 sm:$0xff]
      %s3382 = scalar_lea.vmem [#allocation3], 69
      %v3383 = vld [vmem:[%s3382] ss:$2 sm:$0xff]
      %s3384 = scalar_lea.vmem [#allocation3], 85
      %v3385 = vld [vmem:[%s3384] ss:$2 sm:$0xff]
      %s3386 = scalar_lea.vmem [#allocation3], 101
      %v3387 = vld [vmem:[%s3386] ss:$2 sm:$0xff]
      %s3388 = scalar_lea.vmem [#allocation3], 117
      %v3389 = vld [vmem:[%s3388] ss:$2 sm:$0xff]
      %s3390 = scalar_lea.vmem [#allocation3], 133
      %v3391 = vld [vmem:[%s3390] ss:$2 sm:$0xff]
      %s3392 = scalar_lea.vmem [#allocation3], 149
      %v3393 = vld [vmem:[%s3392] ss:$2 sm:$0xff]
      %s3394 = scalar_lea.vmem [#allocation3], 165
      %v3395 = vld [vmem:[%s3394] ss:$2 sm:$0xff]
      %s3396 = scalar_lea.vmem [#allocation3], 181
      %v3397 = vld [vmem:[%s3396] ss:$2 sm:$0xff]
      %s3398 = scalar_lea.vmem [#allocation3], 197
      %v3399 = vld [vmem:[%s3398] ss:$2 sm:$0xf]
      %v3400 = vpack.c.bf16 %v3377, %v3375
      %v3401 = vpack.c.bf16 %v3381, %v3379
      %v3402 = vpack.c.bf16 %v3385, %v3383
      %v3403 = vpack.c.bf16 %v3389, %v3387
      %v3404 = vpack.c.bf16 %v3393, %v3391
      %v3405 = vpack.c.bf16 %v3397, %v3395
      %v3406 = vpack.c.bf16 %v3399, %v3399
      %v3407 = vld [vmem:[%s3] sm:$0xf]
      %v3408 = vld [vmem:[%s3 + $0x4] sm:$0xf]
      %v3409 = vld [vmem:[%s3 + $0x8] sm:$0xf]
      %v3410 = vld [vmem:[%s3 + $0xc] sm:$0xf]
      %s3411 = scalar_lea.vmem [#allocation3], 6
      %v3412 = vld [vmem:[%s3411] ss:$2 sm:$0xff]
      %s3413 = scalar_lea.vmem [#allocation3], 22
      %v3414 = vld [vmem:[%s3413] ss:$2 sm:$0xff]
      %s3415 = scalar_lea.vmem [#allocation3], 38
      %v3416 = vld [vmem:[%s3415] ss:$2 sm:$0xff]
      %s3417 = scalar_lea.vmem [#allocation3], 54
      %v3418 = vld [vmem:[%s3417] ss:$2 sm:$0xff]
      %s3419 = scalar_lea.vmem [#allocation3], 70
      %v3420 = vld [vmem:[%s3419] ss:$2 sm:$0xff]
      %s3421 = scalar_lea.vmem [#allocation3], 86
      %v3422 = vld [vmem:[%s3421] ss:$2 sm:$0xff]
      %s3423 = scalar_lea.vmem [#allocation3], 102
      %v3424 = vld [vmem:[%s3423] ss:$2 sm:$0xff]
      %s3425 = scalar_lea.vmem [#allocation3], 118
      %v3426 = vld [vmem:[%s3425] ss:$2 sm:$0xff]
      %s3427 = scalar_lea.vmem [#allocation3], 134
      %v3428 = vld [vmem:[%s3427] ss:$2 sm:$0xff]
      %s3429 = scalar_lea.vmem [#allocation3], 150
      %v3430 = vld [vmem:[%s3429] ss:$2 sm:$0xff]
      %s3431 = scalar_lea.vmem [#allocation3], 166
      %v3432 = vld [vmem:[%s3431] ss:$2 sm:$0xff]
      %s3433 = scalar_lea.vmem [#allocation3], 182
      %v3434 = vld [vmem:[%s3433] ss:$2 sm:$0xff]
      %s3435 = scalar_lea.vmem [#allocation3], 198
      %v3436 = vld [vmem:[%s3435] ss:$2 sm:$0xf]
      %v3437 = vpack.c.bf16 %v3414, %v3412
      %v3438 = vpack.c.bf16 %v3418, %v3416
      %v3439 = vpack.c.bf16 %v3422, %v3420
      %v3440 = vpack.c.bf16 %v3426, %v3424
      %v3441 = vpack.c.bf16 %v3430, %v3428
      %v3442 = vpack.c.bf16 %v3434, %v3432
      %v3443 = vpack.c.bf16 %v3436, %v3436
      %s3444 = scalar_lea.vmem %s3, 16
      %v3445 = vld [vmem:[%s3444] sm:$0xf]
      %v3446 = vld [vmem:[%s3444 + $0x4] sm:$0xf]
      %v3447 = vld [vmem:[%s3444 + $0x8] sm:$0xf]
      %v3448 = vld [vmem:[%s3444 + $0xc] sm:$0xf]
      %v3453 = vunpack.c.l.b16 %v3445
      %v3454 = vunpack.c.l.b16 %v3446
      %v3455 = vunpack.c.l.b16 %v3447
      %v3456 = vunpack.c.l.b16 %v3448
      %v3457 = vpack.c.b16 %v3454, %v3453
      %v3458 = vpack.c.b16 %v3456, %v3455
      %v3462 = vsel %vm3097, %v3437, 0
      %v3465 = vsel %vm3097, %v3438, 0
      %v3468 = vsel %vm3097, %v3439, 0
      %v3471 = vsel %vm3097, %v3440, 0
      %v3474 = vsel %vm3097, %v3441, 0
      %v3477 = vsel %vm3097, %v3442, 0
      %v3480 = vsel %vm3097, %v3443, 0
      %3482 = vmatprep.subr.bf16.mxu0 0
      %3483 = vmatpush1.bf16.msra.mxu0 %v3457
      %3484 = vmatprep.subr.bf16.mxu0 0
      %3485 = vmatpush1.bf16.msra.mxu0 %v3458
      %3486 = vmatprep.subr.bf16.mxu0 0
      %3487 = vmatpush1.bf16.msra.mxu0 0
      %3488 = vmatprep.subr.bf16.mxu0 0
      %3489 = vmatpush1.bf16.msra.mxu0 0
      %3490 = vmatprep.subr.bf16.mxu0 0
      %3491 = vmatpush1.bf16.msra.mxu0 0
      %3492 = vmatprep.subr.bf16.mxu0 0
      %3493 = vmatpush1.bf16.msra.mxu0 0
      %3494 = vmatprep.subr.bf16.mxu0 0
      %3495 = vmatpush1.bf16.msra.mxu0 0
      %3496 = vmatprep.subr.bf16.mxu0 0
      %3497 = vmatpush1.bf16.msra.mxu0 0
      %3498 = vmatprep.subr.bf16.mxu0 0
      %3499 = vmatpush1.bf16.msra.mxu0 0
      %3500 = vmatprep.subr.bf16.mxu0 0
      %3501 = vmatpush1.bf16.msra.mxu0 0
      %3502 = vmatprep.subr.bf16.mxu0 0
      %3503 = vmatpush1.bf16.msra.mxu0 0
      %3504 = vmatprep.subr.bf16.mxu0 0
      %3505 = vmatpush1.bf16.msra.mxu0 0
      %3506 = vmatprep.subr.bf16.mxu0 0
      %3507 = vmatpush1.bf16.msra.mxu0 0
      %3508 = vmatprep.subr.bf16.mxu0 0
      %3509 = vmatpush1.bf16.msra.mxu0 0
      %3510 = vmatprep.subr.bf16.mxu0 0
      %3511 = vmatpush1.bf16.msra.mxu0 0
      %3512 = vmatprep.subr.bf16.mxu0 0
      %3513 = vmatpush1.bf16.msra.mxu0 0
      %3514 = vmatprep.mubr.bf16.mxu0 0
      %3515 = vmatmul.mubr.bf16.gmra.mrb[0].mxu0 %v3462
      %v3516 = vpop.f32.mrb[0].mxu0
      %v3517 = vadd.f32 0.0, %v3516
      %v3518 = vpop.f32.mrb[0].mxu0
      %v3519 = vpop.f32.mrb[0].mxu0
      %v3520 = vadd.f32 0.0, %v3519
      %v3521 = vpop.f32.mrb[0].mxu0
      %3522 = vmatprep.mubr.bf16.mxu0 0
      %3523 = vmatmul.mubr.bf16.gmra.mrb[0].mxu0 %v3465
      %v3524 = vpop.f32.mrb[0].mxu0
      %v3525 = vadd.f32 0.0, %v3524
      %v3526 = vpop.f32.mrb[0].mxu0
      %v3527 = vpop.f32.mrb[0].mxu0
      %v3528 = vadd.f32 0.0, %v3527
      %v3529 = vpop.f32.mrb[0].mxu0
      %3530 = vmatprep.mubr.bf16.mxu0 0
      %3531 = vmatmul.mubr.bf16.gmra.mrb[0].mxu0 %v3468
      %v3532 = vpop.f32.mrb[0].mxu0
      %v3533 = vadd.f32 0.0, %v3532
      %v3534 = vpop.f32.mrb[0].mxu0
      %v3535 = vpop.f32.mrb[0].mxu0
      %v3536 = vadd.f32 0.0, %v3535
      %v3537 = vpop.f32.mrb[0].mxu0
      %3538 = vmatprep.mubr.bf16.mxu0 0
      %3539 = vmatmul.mubr.bf16.gmra.mrb[0].mxu0 %v3471
      %v3540 = vpop.f32.mrb[0].mxu0
      %v3541 = vadd.f32 0.0, %v3540
      %v3542 = vpop.f32.mrb[0].mxu0
      %v3543 = vpop.f32.mrb[0].mxu0
      %v3544 = vadd.f32 0.0, %v3543
      %v3545 = vpop.f32.mrb[0].mxu0
      %3546 = vmatprep.mubr.bf16.mxu0 0
      %3547 = vmatmul.mubr.bf16.gmra.mrb[0].mxu0 %v3474
      %v3548 = vpop.f32.mrb[0].mxu0
      %v3549 = vadd.f32 0.0, %v3548
      %v3550 = vpop.f32.mrb[0].mxu0
      %v3551 = vpop.f32.mrb[0].mxu0
      %v3552 = vadd.f32 0.0, %v3551
      %v3553 = vpop.f32.mrb[0].mxu0
      %3554 = vmatprep.mubr.bf16.mxu0 0
      %3555 = vmatmul.mubr.bf16.gmra.mrb[0].mxu0 %v3477
      %v3556 = vpop.f32.mrb[0].mxu0
      %v3557 = vadd.f32 0.0, %v3556
      %v3558 = vpop.f32.mrb[0].mxu0
      %v3559 = vpop.f32.mrb[0].mxu0
      %v3560 = vadd.f32 0.0, %v3559
      %v3561 = vpop.f32.mrb[0].mxu0
      %3562 = vmatprep.mubr.bf16.mxu0 0
      %3563 = vmatmul.mubr.bf16.gmra.mrb[0].mxu0 %v3480
      %v3564 = vpop.f32.mrb[0].mxu0
      %v3565 = vadd.f32 0.0, %v3564
      %v3566 = vpop.f32.mrb[0].mxu0
      %v3567 = vpop.f32.mrb[0].mxu0
      %v3568 = vpop.f32.mrb[0].mxu0
      %3569 = vdwg.mxu0
      %v3574 = vunpack.c.l.b16 %v3407
      %v3575 = vunpack.c.l.b16 %v3408
      %v3576 = vunpack.c.l.b16 %v3409
      %v3577 = vunpack.c.l.b16 %v3410
      %v3578 = vpack.c.b16 %v3575, %v3574
      %v3579 = vpack.c.b16 %v3577, %v3576
      %v3583 = vsel %vm3097, %v3400, 0
      %v3586 = vsel %vm3097, %v3401, 0
      %v3589 = vsel %vm3097, %v3402, 0
      %v3592 = vsel %vm3097, %v3403, 0
      %v3595 = vsel %vm3097, %v3404, 0
      %v3598 = vsel %vm3097, %v3405, 0
      %v3601 = vsel %vm3097, %v3406, 0
      %3603 = vmatprep.subr.bf16.mxu0 0
      %3604 = vmatpush1.bf16.msra.mxu0 %v3578
      %3605 = vmatprep.subr.bf16.mxu0 0
      %3606 = vmatpush1.bf16.msra.mxu0 %v3579
      %3607 = vmatprep.subr.bf16.mxu0 0
      %3608 = vmatpush1.bf16.msra.mxu0 0
      %3609 = vmatprep.subr.bf16.mxu0 0
      %3610 = vmatpush1.bf16.msra.mxu0 0
      %3611 = vmatprep.subr.bf16.mxu0 0
      %3612 = vmatpush1.bf16.msra.mxu0 0
      %3613 = vmatprep.subr.bf16.mxu0 0
      %3614 = vmatpush1.bf16.msra.mxu0 0
      %3615 = vmatprep.subr.bf16.mxu0 0
      %3616 = vmatpush1.bf16.msra.mxu0 0
      %3617 = vmatprep.subr.bf16.mxu0 0
      %3618 = vmatpush1.bf16.msra.mxu0 0
      %3619 = vmatprep.subr.bf16.mxu0 0
      %3620 = vmatpush1.bf16.msra.mxu0 0
      %3621 = vmatprep.subr.bf16.mxu0 0
      %3622 = vmatpush1.bf16.msra.mxu0 0
      %3623 = vmatprep.subr.bf16.mxu0 0
      %3624 = vmatpush1.bf16.msra.mxu0 0
      %3625 = vmatprep.subr.bf16.mxu0 0
      %3626 = vmatpush1.bf16.msra.mxu0 0
      %3627 = vmatprep.subr.bf16.mxu0 0
      %3628 = vmatpush1.bf16.msra.mxu0 0
      %3629 = vmatprep.subr.bf16.mxu0 0
      %3630 = vmatpush1.bf16.msra.mxu0 0
      %3631 = vmatprep.subr.bf16.mxu0 0
      %3632 = vmatpush1.bf16.msra.mxu0 0
      %3633 = vmatprep.subr.bf16.mxu0 0
      %3634 = vmatpush1.bf16.msra.mxu0 0
      %3635 = vmatprep.mubr.bf16.mxu0 0
      %3636 = vmatmul.mubr.bf16.gmra.mrb[0].mxu0 %v3583
      %v3637 = vpop.f32.mrb[0].mxu0
      %v3638 = vadd.f32 %v3517, %v3637
      %v3639 = vpop.f32.mrb[0].mxu0
      %v3640 = vpop.f32.mrb[0].mxu0
      %v3641 = vadd.f32 %v3520, %v3640
      %v3642 = vpop.f32.mrb[0].mxu0
      %3643 = vmatprep.mubr.bf16.mxu0 0
      %3644 = vmatmul.mubr.bf16.gmra.mrb[0].mxu0 %v3586
      %v3645 = vpop.f32.mrb[0].mxu0
      %v3646 = vadd.f32 %v3525, %v3645
      %v3647 = vpop.f32.mrb[0].mxu0
      %v3648 = vpop.f32.mrb[0].mxu0
      %v3649 = vadd.f32 %v3528, %v3648
      %v3650 = vpop.f32.mrb[0].mxu0
      %3651 = vmatprep.mubr.bf16.mxu0 0
      %3652 = vmatmul.mubr.bf16.gmra.mrb[0].mxu0 %v3589
      %v3653 = vpop.f32.mrb[0].mxu0
      %v3654 = vadd.f32 %v3533, %v3653
      %v3655 = vpop.f32.mrb[0].mxu0
      %v3656 = vpop.f32.mrb[0].mxu0
      %v3657 = vadd.f32 %v3536, %v3656
      %v3658 = vpop.f32.mrb[0].mxu0
      %3659 = vmatprep.mubr.bf16.mxu0 0
      %3660 = vmatmul.mubr.bf16.gmra.mrb[0].mxu0 %v3592
      %v3661 = vpop.f32.mrb[0].mxu0
      %v3662 = vadd.f32 %v3541, %v3661
      %v3663 = vpop.f32.mrb[0].mxu0
      %v3664 = vpop.f32.mrb[0].mxu0
      %v3665 = vadd.f32 %v3544, %v3664
      %v3666 = vpop.f32.mrb[0].mxu0
      %3667 = vmatprep.mubr.bf16.mxu0 0
      %3668 = vmatmul.mubr.bf16.gmra.mrb[0].mxu0 %v3595
      %v3669 = vpop.f32.mrb[0].mxu0
      %v3670 = vadd.f32 %v3549, %v3669
      %v3671 = vpop.f32.mrb[0].mxu0
      %v3672 = vpop.f32.mrb[0].mxu0
      %v3673 = vadd.f32 %v3552, %v3672
      %v3674 = vpop.f32.mrb[0].mxu0
      %3675 = vmatprep.mubr.bf16.mxu0 0
      %3676 = vmatmul.mubr.bf16.gmra.mrb[0].mxu0 %v3598
      %v3677 = vpop.f32.mrb[0].mxu0
      %v3678 = vadd.f32 %v3557, %v3677
      %v3679 = vpop.f32.mrb[0].mxu0
      %v3680 = vpop.f32.mrb[0].mxu0
      %v3681 = vadd.f32 %v3560, %v3680
      %v3682 = vpop.f32.mrb[0].mxu0
      %3683 = vmatprep.mubr.bf16.mxu0 0
      %3684 = vmatmul.mubr.bf16.gmra.mrb[0].mxu0 %v3601
      %v3685 = vpop.f32.mrb[0].mxu0
      %v3686 = vadd.f32 %v3565, %v3685
      %v3687 = vpop.f32.mrb[0].mxu0
      %v3688 = vpop.f32.mrb[0].mxu0
      %v3689 = vpop.f32.mrb[0].mxu0
      %3690 = vdwg.mxu0
      %s3691 = scalar_lea.vmem [#allocation3], 7
      %v3692 = vld [vmem:[%s3691] ss:$2 sm:$0xff]
      %s3693 = scalar_lea.vmem [#allocation3], 23
      %v3694 = vld [vmem:[%s3693] ss:$2 sm:$0xff]
      %s3695 = scalar_lea.vmem [#allocation3], 39
      %v3696 = vld [vmem:[%s3695] ss:$2 sm:$0xff]
      %s3697 = scalar_lea.vmem [#allocation3], 55
      %v3698 = vld [vmem:[%s3697] ss:$2 sm:$0xff]
      %s3699 = scalar_lea.vmem [#allocation3], 71
      %v3700 = vld [vmem:[%s3699] ss:$2 sm:$0xff]
      %s3701 = scalar_lea.vmem [#allocation3], 87
      %v3702 = vld [vmem:[%s3701] ss:$2 sm:$0xff]
      %s3703 = scalar_lea.vmem [#allocation3], 103
      %v3704 = vld [vmem:[%s3703] ss:$2 sm:$0xff]
      %s3705 = scalar_lea.vmem [#allocation3], 119
      %v3706 = vld [vmem:[%s3705] ss:$2 sm:$0xff]
      %s3707 = scalar_lea.vmem [#allocation3], 135
      %v3708 = vld [vmem:[%s3707] ss:$2 sm:$0xff]
      %s3709 = scalar_lea.vmem [#allocation3], 151
      %v3710 = vld [vmem:[%s3709] ss:$2 sm:$0xff]
      %s3711 = scalar_lea.vmem [#allocation3], 167
      %v3712 = vld [vmem:[%s3711] ss:$2 sm:$0xff]
      %s3713 = scalar_lea.vmem [#allocation3], 183
      %v3714 = vld [vmem:[%s3713] ss:$2 sm:$0xff]
      %s3715 = scalar_lea.vmem [#allocation3], 199
      %v3716 = vld [vmem:[%s3715] ss:$2 sm:$0xf]
      %v3717 = vpack.c.bf16 %v3694, %v3692
      %v3718 = vpack.c.bf16 %v3698, %v3696
      %v3719 = vpack.c.bf16 %v3702, %v3700
      %v3720 = vpack.c.bf16 %v3706, %v3704
      %v3721 = vpack.c.bf16 %v3710, %v3708
      %v3722 = vpack.c.bf16 %v3714, %v3712
      %v3723 = vpack.c.bf16 %v3716, %v3716
      %s3724 = scalar_lea.vmem %s3, 32
      %v3725 = vld [vmem:[%s3724] sm:$0xf]
      %v3726 = vld [vmem:[%s3724 + $0x4] sm:$0xf]
      %v3727 = vld [vmem:[%s3724 + $0x8] sm:$0xf]
      %v3728 = vld [vmem:[%s3724 + $0xc] sm:$0xf]
      %v3733 = vunpack.c.l.b16 %v3725
      %v3734 = vunpack.c.l.b16 %v3726
      %v3735 = vunpack.c.l.b16 %v3727
      %v3736 = vunpack.c.l.b16 %v3728
      %v3737 = vpack.c.b16 %v3734, %v3733
      %v3738 = vpack.c.b16 %v3736, %v3735
      %v3742 = vsel %vm3097, %v3717, 0
      %v3745 = vsel %vm3097, %v3718, 0
      %v3748 = vsel %vm3097, %v3719, 0
      %v3751 = vsel %vm3097, %v3720, 0
      %v3754 = vsel %vm3097, %v3721, 0
      %v3757 = vsel %vm3097, %v3722, 0
      %v3760 = vsel %vm3097, %v3723, 0
      %3762 = vmatprep.subr.bf16.mxu0 0
      %3763 = vmatpush1.bf16.msra.mxu0 %v3737
      %3764 = vmatprep.subr.bf16.mxu0 0
      %3765 = vmatpush1.bf16.msra.mxu0 %v3738
      %3766 = vmatprep.subr.bf16.mxu0 0
      %3767 = vmatpush1.bf16.msra.mxu0 0
      %3768 = vmatprep.subr.bf16.mxu0 0
      %3769 = vmatpush1.bf16.msra.mxu0 0
      %3770 = vmatprep.subr.bf16.mxu0 0
      %3771 = vmatpush1.bf16.msra.mxu0 0
      %3772 = vmatprep.subr.bf16.mxu0 0
      %3773 = vmatpush1.bf16.msra.mxu0 0
      %3774 = vmatprep.subr.bf16.mxu0 0
      %3775 = vmatpush1.bf16.msra.mxu0 0
      %3776 = vmatprep.subr.bf16.mxu0 0
      %3777 = vmatpush1.bf16.msra.mxu0 0
      %3778 = vmatprep.subr.bf16.mxu0 0
      %3779 = vmatpush1.bf16.msra.mxu0 0
      %3780 = vmatprep.subr.bf16.mxu0 0
      %3781 = vmatpush1.bf16.msra.mxu0 0
      %3782 = vmatprep.subr.bf16.mxu0 0
      %3783 = vmatpush1.bf16.msra.mxu0 0
      %3784 = vmatprep.subr.bf16.mxu0 0
      %3785 = vmatpush1.bf16.msra.mxu0 0
      %3786 = vmatprep.subr.bf16.mxu0 0
      %3787 = vmatpush1.bf16.msra.mxu0 0
      %3788 = vmatprep.subr.bf16.mxu0 0
      %3789 = vmatpush1.bf16.msra.mxu0 0
      %3790 = vmatprep.subr.bf16.mxu0 0
      %3791 = vmatpush1.bf16.msra.mxu0 0
      %3792 = vmatprep.subr.bf16.mxu0 0
      %3793 = vmatpush1.bf16.msra.mxu0 0
      %3794 = vmatprep.mubr.bf16.mxu0 0
      %3795 = vmatmul.mubr.bf16.gmra.mrb[0].mxu0 %v3742
      %v3796 = vpop.f32.mrb[0].mxu0
      %v3797 = vadd.f32 0.0, %v3796
      %v3798 = vpop.f32.mrb[0].mxu0
      %v3799 = vpop.f32.mrb[0].mxu0
      %v3800 = vadd.f32 0.0, %v3799
      %v3801 = vpop.f32.mrb[0].mxu0
      %3802 = vmatprep.mubr.bf16.mxu0 0
      %3803 = vmatmul.mubr.bf16.gmra.mrb[0].mxu0 %v3745
      %v3804 = vpop.f32.mrb[0].mxu0
      %v3805 = vadd.f32 0.0, %v3804
      %v3806 = vpop.f32.mrb[0].mxu0
      %v3807 = vpop.f32.mrb[0].mxu0
      %v3808 = vadd.f32 0.0, %v3807
      %v3809 = vpop.f32.mrb[0].mxu0
      %3810 = vmatprep.mubr.bf16.mxu0 0
      %3811 = vmatmul.mubr.bf16.gmra.mrb[0].mxu0 %v3748
      %v3812 = vpop.f32.mrb[0].mxu0
      %v3813 = vadd.f32 0.0, %v3812
      %v3814 = vpop.f32.mrb[0].mxu0
      %v3815 = vpop.f32.mrb[0].mxu0
      %v3816 = vadd.f32 0.0, %v3815
      %v3817 = vpop.f32.mrb[0].mxu0
      %3818 = vmatprep.mubr.bf16.mxu0 0
      %3819 = vmatmul.mubr.bf16.gmra.mrb[0].mxu0 %v3751
      %v3820 = vpop.f32.mrb[0].mxu0
      %v3821 = vadd.f32 0.0, %v3820
      %v3822 = vpop.f32.mrb[0].mxu0
      %v3823 = vpop.f32.mrb[0].mxu0
      %v3824 = vadd.f32 0.0, %v3823
      %v3825 = vpop.f32.mrb[0].mxu0
      %3826 = vmatprep.mubr.bf16.mxu0 0
      %3827 = vmatmul.mubr.bf16.gmra.mrb[0].mxu0 %v3754
      %v3828 = vpop.f32.mrb[0].mxu0
      %v3829 = vadd.f32 0.0, %v3828
      %v3830 = vpop.f32.mrb[0].mxu0
      %v3831 = vpop.f32.mrb[0].mxu0
      %v3832 = vadd.f32 0.0, %v3831
      %v3833 = vpop.f32.mrb[0].mxu0
      %3834 = vmatprep.mubr.bf16.mxu0 0
      %3835 = vmatmul.mubr.bf16.gmra.mrb[0].mxu0 %v3757
      %v3836 = vpop.f32.mrb[0].mxu0
      %v3837 = vadd.f32 0.0, %v3836
      %v3838 = vpop.f32.mrb[0].mxu0
      %v3839 = vpop.f32.mrb[0].mxu0
      %v3840 = vadd.f32 0.0, %v3839
      %v3841 = vpop.f32.mrb[0].mxu0
      %3842 = vmatprep.mubr.bf16.mxu0 0
      %3843 = vmatmul.mubr.bf16.gmra.mrb[0].mxu0 %v3760
      %v3844 = vpop.f32.mrb[0].mxu0
      %v3845 = vadd.f32 0.0, %v3844
      %v3846 = vpop.f32.mrb[0].mxu0
      %v3847 = vpop.f32.mrb[0].mxu0
      %v3848 = vpop.f32.mrb[0].mxu0
      %3849 = vdwg.mxu0
      %v3850 = vadd.f32 %v3638, %v3797
      %v3851 = vadd.f32 %v3641, %v3800
      %v3852 = vadd.f32 %v3646, %v3805
      %v3853 = vadd.f32 %v3649, %v3808
      %v3854 = vadd.f32 %v3654, %v3813
      %v3855 = vadd.f32 %v3657, %v3816
      %v3856 = vadd.f32 %v3662, %v3821
      %v3857 = vadd.f32 %v3665, %v3824
      %v3858 = vadd.f32 %v3670, %v3829
      %v3859 = vadd.f32 %v3673, %v3832
      %v3860 = vadd.f32 %v3678, %v3837
      %v3861 = vadd.f32 %v3681, %v3840
      %v3862 = vadd.f32 %v3686, %v3845
      %s3863 = scalar_lea.vmem [#allocation3], 8
      %v3864 = vld [vmem:[%s3863] ss:$2 sm:$0xff]
      %s3865 = scalar_lea.vmem [#allocation3], 24
      %v3866 = vld [vmem:[%s3865] ss:$2 sm:$0xff]
      %s3867 = scalar_lea.vmem [#allocation3], 40
      %v3868 = vld [vmem:[%s3867] ss:$2 sm:$0xff]
      %s3869 = scalar_lea.vmem [#allocation3], 56
      %v3870 = vld [vmem:[%s3869] ss:$2 sm:$0xff]
      %s3871 = scalar_lea.vmem [#allocation3], 72
      %v3872 = vld [vmem:[%s3871] ss:$2 sm:$0xff]
      %s3873 = scalar_lea.vmem [#allocation3], 88
      %v3874 = vld [vmem:[%s3873] ss:$2 sm:$0xff]
      %s3875 = scalar_lea.vmem [#allocation3], 104
      %v3876 = vld [vmem:[%s3875] ss:$2 sm:$0xff]
      %s3877 = scalar_lea.vmem [#allocation3], 120
      %v3878 = vld [vmem:[%s3877] ss:$2 sm:$0xff]
      %s3879 = scalar_lea.vmem [#allocation3], 136
      %v3880 = vld [vmem:[%s3879] ss:$2 sm:$0xff]
      %s3881 = scalar_lea.vmem [#allocation3], 152
      %v3882 = vld [vmem:[%s3881] ss:$2 sm:$0xff]
      %s3883 = scalar_lea.vmem [#allocation3], 168
      %v3884 = vld [vmem:[%s3883] ss:$2 sm:$0xff]
      %s3885 = scalar_lea.vmem [#allocation3], 184
      %v3886 = vld [vmem:[%s3885] ss:$2 sm:$0xff]
      %s3887 = scalar_lea.vmem [#allocation3], 200
      %v3888 = vld [vmem:[%s3887] ss:$2 sm:$0xf]
      %v3889 = vpack.c.bf16 %v3866, %v3864
      %v3890 = vpack.c.bf16 %v3870, %v3868
      %v3891 = vpack.c.bf16 %v3874, %v3872
      %v3892 = vpack.c.bf16 %v3878, %v3876
      %v3893 = vpack.c.bf16 %v3882, %v3880
      %v3894 = vpack.c.bf16 %v3886, %v3884
      %v3895 = vpack.c.bf16 %v3888, %v3888
      %s3896 = scalar_lea.vmem %s3, 48
      %v3897 = vld [vmem:[%s3896] sm:$0xf]
      %v3898 = vld [vmem:[%s3896 + $0x4] sm:$0xf]
      %v3899 = vld [vmem:[%s3896 + $0x8] sm:$0xf]
      %v3900 = vld [vmem:[%s3896 + $0xc] sm:$0xf]
      %v3905 = vunpack.c.l.b16 %v3897
      %v3906 = vunpack.c.l.b16 %v3898
      %v3907 = vunpack.c.l.b16 %v3899
      %v3908 = vunpack.c.l.b16 %v3900
      %v3909 = vpack.c.b16 %v3906, %v3905
      %v3910 = vpack.c.b16 %v3908, %v3907
      %v3914 = vsel %vm3097, %v3889, 0
      %v3917 = vsel %vm3097, %v3890, 0
      %v3920 = vsel %vm3097, %v3891, 0
      %v3923 = vsel %vm3097, %v3892, 0
      %v3926 = vsel %vm3097, %v3893, 0
      %v3929 = vsel %vm3097, %v3894, 0
      %v3932 = vsel %vm3097, %v3895, 0
      %3934 = vmatprep.subr.bf16.mxu0 0
      %3935 = vmatpush1.bf16.msra.mxu0 %v3909
      %3936 = vmatprep.subr.bf16.mxu0 0
      %3937 = vmatpush1.bf16.msra.mxu0 %v3910
      %3938 = vmatprep.subr.bf16.mxu0 0
      %3939 = vmatpush1.bf16.msra.mxu0 0
      %3940 = vmatprep.subr.bf16.mxu0 0
      %3941 = vmatpush1.bf16.msra.mxu0 0
      %3942 = vmatprep.subr.bf16.mxu0 0
      %3943 = vmatpush1.bf16.msra.mxu0 0
      %3944 = vmatprep.subr.bf16.mxu0 0
      %3945 = vmatpush1.bf16.msra.mxu0 0
      %3946 = vmatprep.subr.bf16.mxu0 0
      %3947 = vmatpush1.bf16.msra.mxu0 0
      %3948 = vmatprep.subr.bf16.mxu0 0
      %3949 = vmatpush1.bf16.msra.mxu0 0
      %3950 = vmatprep.subr.bf16.mxu0 0
      %3951 = vmatpush1.bf16.msra.mxu0 0
      %3952 = vmatprep.subr.bf16.mxu0 0
      %3953 = vmatpush1.bf16.msra.mxu0 0
      %3954 = vmatprep.subr.bf16.mxu0 0
      %3955 = vmatpush1.bf16.msra.mxu0 0
      %3956 = vmatprep.subr.bf16.mxu0 0
      %3957 = vmatpush1.bf16.msra.mxu0 0
      %3958 = vmatprep.subr.bf16.mxu0 0
      %3959 = vmatpush1.bf16.msra.mxu0 0
      %3960 = vmatprep.subr.bf16.mxu0 0
      %3961 = vmatpush1.bf16.msra.mxu0 0
      %3962 = vmatprep.subr.bf16.mxu0 0
      %3963 = vmatpush1.bf16.msra.mxu0 0
      %3964 = vmatprep.subr.bf16.mxu0 0
      %3965 = vmatpush1.bf16.msra.mxu0 0
      %3966 = vmatprep.mubr.bf16.mxu0 0
      %3967 = vmatmul.mubr.bf16.gmra.mrb[0].mxu0 %v3914
      %v3968 = vpop.f32.mrb[0].mxu0
      %v3969 = vadd.f32 0.0, %v3968
      %v3970 = vpop.f32.mrb[0].mxu0
      %v3971 = vpop.f32.mrb[0].mxu0
      %v3972 = vadd.f32 0.0, %v3971
      %v3973 = vpop.f32.mrb[0].mxu0
      %3974 = vmatprep.mubr.bf16.mxu0 0
      %3975 = vmatmul.mubr.bf16.gmra.mrb[0].mxu0 %v3917
      %v3976 = vpop.f32.mrb[0].mxu0
      %v3977 = vadd.f32 0.0, %v3976
      %v3978 = vpop.f32.mrb[0].mxu0
      %v3979 = vpop.f32.mrb[0].mxu0
      %v3980 = vadd.f32 0.0, %v3979
      %v3981 = vpop.f32.mrb[0].mxu0
      %3982 = vmatprep.mubr.bf16.mxu0 0
      %3983 = vmatmul.mubr.bf16.gmra.mrb[0].mxu0 %v3920
      %v3984 = vpop.f32.mrb[0].mxu0
      %v3985 = vadd.f32 0.0, %v3984
      %v3986 = vpop.f32.mrb[0].mxu0
      %v3987 = vpop.f32.mrb[0].mxu0
      %v3988 = vadd.f32 0.0, %v3987
      %v3989 = vpop.f32.mrb[0].mxu0
      %3990 = vmatprep.mubr.bf16.mxu0 0
      %3991 = vmatmul.mubr.bf16.gmra.mrb[0].mxu0 %v3923
      %v3992 = vpop.f32.mrb[0].mxu0
      %v3993 = vadd.f32 0.0, %v3992
      %v3994 = vpop.f32.mrb[0].mxu0
      %v3995 = vpop.f32.mrb[0].mxu0
      %v3996 = vadd.f32 0.0, %v3995
      %v3997 = vpop.f32.mrb[0].mxu0
      %3998 = vmatprep.mubr.bf16.mxu0 0
      %3999 = vmatmul.mubr.bf16.gmra.mrb[0].mxu0 %v3926
      %v4000 = vpop.f32.mrb[0].mxu0
      %v4001 = vadd.f32 0.0, %v4000
      %v4002 = vpop.f32.mrb[0].mxu0
      %v4003 = vpop.f32.mrb[0].mxu0
      %v4004 = vadd.f32 0.0, %v4003
      %v4005 = vpop.f32.mrb[0].mxu0
      %4006 = vmatprep.mubr.bf16.mxu0 0
      %4007 = vmatmul.mubr.bf16.gmra.mrb[0].mxu0 %v3929
      %v4008 = vpop.f32.mrb[0].mxu0
      %v4009 = vadd.f32 0.0, %v4008
      %v4010 = vpop.f32.mrb[0].mxu0
      %v4011 = vpop.f32.mrb[0].mxu0
      %v4012 = vadd.f32 0.0, %v4011
      %v4013 = vpop.f32.mrb[0].mxu0
      %4014 = vmatprep.mubr.bf16.mxu0 0
      %4015 = vmatmul.mubr.bf16.gmra.mrb[0].mxu0 %v3932
      %v4016 = vpop.f32.mrb[0].mxu0
      %v4017 = vadd.f32 0.0, %v4016
      %v4018 = vpop.f32.mrb[0].mxu0
      %v4019 = vpop.f32.mrb[0].mxu0
      %v4020 = vpop.f32.mrb[0].mxu0
      %4021 = vdwg.mxu0
      %v4022 = vadd.f32 %v3850, %v3969
      %v4023 = vadd.f32 %v3851, %v3972
      %v4024 = vadd.f32 %v3852, %v3977
      %v4025 = vadd.f32 %v3853, %v3980
      %v4026 = vadd.f32 %v3854, %v3985
      %v4027 = vadd.f32 %v3855, %v3988
      %v4028 = vadd.f32 %v3856, %v3993
      %v4029 = vadd.f32 %v3857, %v3996
      %v4030 = vadd.f32 %v3858, %v4001
      %v4031 = vadd.f32 %v3859, %v4004
      %v4032 = vadd.f32 %v3860, %v4009
      %v4033 = vadd.f32 %v3861, %v4012
      %v4034 = vadd.f32 %v3862, %v4017
      %s4035 = scalar_lea.vmem [#allocation3], 9
      %v4036 = vld [vmem:[%s4035] ss:$2 sm:$0xff]
      %s4037 = scalar_lea.vmem [#allocation3], 25
      %v4038 = vld [vmem:[%s4037] ss:$2 sm:$0xff]
      %s4039 = scalar_lea.vmem [#allocation3], 41
      %v4040 = vld [vmem:[%s4039] ss:$2 sm:$0xff]
      %s4041 = scalar_lea.vmem [#allocation3], 57
      %v4042 = vld [vmem:[%s4041] ss:$2 sm:$0xff]
      %s4043 = scalar_lea.vmem [#allocation3], 73
      %v4044 = vld [vmem:[%s4043] ss:$2 sm:$0xff]
      %s4045 = scalar_lea.vmem [#allocation3], 89
      %v4046 = vld [vmem:[%s4045] ss:$2 sm:$0xff]
      %s4047 = scalar_lea.vmem [#allocation3], 105
      %v4048 = vld [vmem:[%s4047] ss:$2 sm:$0xff]
      %s4049 = scalar_lea.vmem [#allocation3], 121
      %v4050 = vld [vmem:[%s4049] ss:$2 sm:$0xff]
      %s4051 = scalar_lea.vmem [#allocation3], 137
      %v4052 = vld [vmem:[%s4051] ss:$2 sm:$0xff]
      %s4053 = scalar_lea.vmem [#allocation3], 153
      %v4054 = vld [vmem:[%s4053] ss:$2 sm:$0xff]
      %s4055 = scalar_lea.vmem [#allocation3], 169
      %v4056 = vld [vmem:[%s4055] ss:$2 sm:$0xff]
      %s4057 = scalar_lea.vmem [#allocation3], 185
      %v4058 = vld [vmem:[%s4057] ss:$2 sm:$0xff]
      %s4059 = scalar_lea.vmem [#allocation3], 201
      %v4060 = vld [vmem:[%s4059] ss:$2 sm:$0xf]
      %v4061 = vpack.c.bf16 %v4038, %v4036
      %v4062 = vpack.c.bf16 %v4042, %v4040
      %v4063 = vpack.c.bf16 %v4046, %v4044
      %v4064 = vpack.c.bf16 %v4050, %v4048
      %v4065 = vpack.c.bf16 %v4054, %v4052
      %v4066 = vpack.c.bf16 %v4058, %v4056
      %v4067 = vpack.c.bf16 %v4060, %v4060
      %s4068 = scalar_lea.vmem %s3, 64
      %v4069 = vld [vmem:[%s4068] sm:$0xf]
      %v4070 = vld [vmem:[%s4068 + $0x4] sm:$0xf]
      %v4071 = vld [vmem:[%s4068 + $0x8] sm:$0xf]
      %v4072 = vld [vmem:[%s4068 + $0xc] sm:$0xf]
      %v4077 = vunpack.c.l.b16 %v4069
      %v4078 = vunpack.c.l.b16 %v4070
      %v4079 = vunpack.c.l.b16 %v4071
      %v4080 = vunpack.c.l.b16 %v4072
      %v4081 = vpack.c.b16 %v4078, %v4077
      %v4082 = vpack.c.b16 %v4080, %v4079
      %v4086 = vsel %vm3097, %v4061, 0
      %v4089 = vsel %vm3097, %v4062, 0
      %v4092 = vsel %vm3097, %v4063, 0
      %v4095 = vsel %vm3097, %v4064, 0
      %v4098 = vsel %vm3097, %v4065, 0
      %v4101 = vsel %vm3097, %v4066, 0
      %v4104 = vsel %vm3097, %v4067, 0
      %4106 = vmatprep.subr.bf16.mxu0 0
      %4107 = vmatpush1.bf16.msra.mxu0 %v4081
      %4108 = vmatprep.subr.bf16.mxu0 0
      %4109 = vmatpush1.bf16.msra.mxu0 %v4082
      %4110 = vmatprep.subr.bf16.mxu0 0
      %4111 = vmatpush1.bf16.msra.mxu0 0
      %4112 = vmatprep.subr.bf16.mxu0 0
      %4113 = vmatpush1.bf16.msra.mxu0 0
      %4114 = vmatprep.subr.bf16.mxu0 0
      %4115 = vmatpush1.bf16.msra.mxu0 0
      %4116 = vmatprep.subr.bf16.mxu0 0
      %4117 = vmatpush1.bf16.msra.mxu0 0
      %4118 = vmatprep.subr.bf16.mxu0 0
      %4119 = vmatpush1.bf16.msra.mxu0 0
      %4120 = vmatprep.subr.bf16.mxu0 0
      %4121 = vmatpush1.bf16.msra.mxu0 0
      %4122 = vmatprep.subr.bf16.mxu0 0
      %4123 = vmatpush1.bf16.msra.mxu0 0
      %4124 = vmatprep.subr.bf16.mxu0 0
      %4125 = vmatpush1.bf16.msra.mxu0 0
      %4126 = vmatprep.subr.bf16.mxu0 0
      %4127 = vmatpush1.bf16.msra.mxu0 0
      %4128 = vmatprep.subr.bf16.mxu0 0
      %4129 = vmatpush1.bf16.msra.mxu0 0
      %4130 = vmatprep.subr.bf16.mxu0 0
      %4131 = vmatpush1.bf16.msra.mxu0 0
      %4132 = vmatprep.subr.bf16.mxu0 0
      %4133 = vmatpush1.bf16.msra.mxu0 0
      %4134 = vmatprep.subr.bf16.mxu0 0
      %4135 = vmatpush1.bf16.msra.mxu0 0
      %4136 = vmatprep.subr.bf16.mxu0 0
      %4137 = vmatpush1.bf16.msra.mxu0 0
      %4138 = vmatprep.mubr.bf16.mxu0 0
      %4139 = vmatmul.mubr.bf16.gmra.mrb[0].mxu0 %v4086
      %v4140 = vpop.f32.mrb[0].mxu0
      %v4141 = vadd.f32 0.0, %v4140
      %v4142 = vpop.f32.mrb[0].mxu0
      %v4143 = vpop.f32.mrb[0].mxu0
      %v4144 = vadd.f32 0.0, %v4143
      %v4145 = vpop.f32.mrb[0].mxu0
      %4146 = vmatprep.mubr.bf16.mxu0 0
      %4147 = vmatmul.mubr.bf16.gmra.mrb[0].mxu0 %v4089
      %v4148 = vpop.f32.mrb[0].mxu0
      %v4149 = vadd.f32 0.0, %v4148
      %v4150 = vpop.f32.mrb[0].mxu0
      %v4151 = vpop.f32.mrb[0].mxu0
      %v4152 = vadd.f32 0.0, %v4151
      %v4153 = vpop.f32.mrb[0].mxu0
      %4154 = vmatprep.mubr.bf16.mxu0 0
      %4155 = vmatmul.mubr.bf16.gmra.mrb[0].mxu0 %v4092
      %v4156 = vpop.f32.mrb[0].mxu0
      %v4157 = vadd.f32 0.0, %v4156
      %v4158 = vpop.f32.mrb[0].mxu0
      %v4159 = vpop.f32.mrb[0].mxu0
      %v4160 = vadd.f32 0.0, %v4159
      %v4161 = vpop.f32.mrb[0].mxu0
      %4162 = vmatprep.mubr.bf16.mxu0 0
      %4163 = vmatmul.mubr.bf16.gmra.mrb[0].mxu0 %v4095
      %v4164 = vpop.f32.mrb[0].mxu0
      %v4165 = vadd.f32 0.0, %v4164
      %v4166 = vpop.f32.mrb[0].mxu0
      %v4167 = vpop.f32.mrb[0].mxu0
      %v4168 = vadd.f32 0.0, %v4167
      %v4169 = vpop.f32.mrb[0].mxu0
      %4170 = vmatprep.mubr.bf16.mxu0 0
      %4171 = vmatmul.mubr.bf16.gmra.mrb[0].mxu0 %v4098
      %v4172 = vpop.f32.mrb[0].mxu0
      %v4173 = vadd.f32 0.0, %v4172
      %v4174 = vpop.f32.mrb[0].mxu0
      %v4175 = vpop.f32.mrb[0].mxu0
      %v4176 = vadd.f32 0.0, %v4175
      %v4177 = vpop.f32.mrb[0].mxu0
      %4178 = vmatprep.mubr.bf16.mxu0 0
      %4179 = vmatmul.mubr.bf16.gmra.mrb[0].mxu0 %v4101
      %v4180 = vpop.f32.mrb[0].mxu0
      %v4181 = vadd.f32 0.0, %v4180
      %v4182 = vpop.f32.mrb[0].mxu0
      %v4183 = vpop.f32.mrb[0].mxu0
      %v4184 = vadd.f32 0.0, %v4183
      %v4185 = vpop.f32.mrb[0].mxu0
      %4186 = vmatprep.mubr.bf16.mxu0 0
      %4187 = vmatmul.mubr.bf16.gmra.mrb[0].mxu0 %v4104
      %v4188 = vpop.f32.mrb[0].mxu0
      %v4189 = vadd.f32 0.0, %v4188
      %v4190 = vpop.f32.mrb[0].mxu0
      %v4191 = vpop.f32.mrb[0].mxu0
      %v4192 = vpop.f32.mrb[0].mxu0
      %4193 = vdwg.mxu0
      %v4194 = vadd.f32 %v4022, %v4141
      %v4195 = vadd.f32 %v4023, %v4144
      %v4196 = vadd.f32 %v4024, %v4149
      %v4197 = vadd.f32 %v4025, %v4152
      %v4198 = vadd.f32 %v4026, %v4157
      %v4199 = vadd.f32 %v4027, %v4160
      %v4200 = vadd.f32 %v4028, %v4165
      %v4201 = vadd.f32 %v4029, %v4168
      %v4202 = vadd.f32 %v4030, %v4173
      %v4203 = vadd.f32 %v4031, %v4176
      %v4204 = vadd.f32 %v4032, %v4181
      %v4205 = vadd.f32 %v4033, %v4184
      %v4206 = vadd.f32 %v4034, %v4189
      %s4207 = scalar_lea.vmem [#allocation3], 10
      %v4208 = vld [vmem:[%s4207] ss:$2 sm:$0xff]
      %s4209 = scalar_lea.vmem [#allocation3], 26
      %v4210 = vld [vmem:[%s4209] ss:$2 sm:$0xff]
      %s4211 = scalar_lea.vmem [#allocation3], 42
      %v4212 = vld [vmem:[%s4211] ss:$2 sm:$0xff]
      %s4213 = scalar_lea.vmem [#allocation3], 58
      %v4214 = vld [vmem:[%s4213] ss:$2 sm:$0xff]
      %s4215 = scalar_lea.vmem [#allocation3], 74
      %v4216 = vld [vmem:[%s4215] ss:$2 sm:$0xff]
      %s4217 = scalar_lea.vmem [#allocation3], 90
      %v4218 = vld [vmem:[%s4217] ss:$2 sm:$0xff]
      %s4219 = scalar_lea.vmem [#allocation3], 106
      %v4220 = vld [vmem:[%s4219] ss:$2 sm:$0xff]
      %s4221 = scalar_lea.vmem [#allocation3], 122
      %v4222 = vld [vmem:[%s4221] ss:$2 sm:$0xff]
      %s4223 = scalar_lea.vmem [#allocation3], 138
      %v4224 = vld [vmem:[%s4223] ss:$2 sm:$0xff]
      %s4225 = scalar_lea.vmem [#allocation3], 154
      %v4226 = vld [vmem:[%s4225] ss:$2 sm:$0xff]
      %s4227 = scalar_lea.vmem [#allocation3], 170
      %v4228 = vld [vmem:[%s4227] ss:$2 sm:$0xff]
      %s4229 = scalar_lea.vmem [#allocation3], 186
      %v4230 = vld [vmem:[%s4229] ss:$2 sm:$0xff]
      %s4231 = scalar_lea.vmem [#allocation3], 202
      %v4232 = vld [vmem:[%s4231] ss:$2 sm:$0xf]
      %v4233 = vpack.c.bf16 %v4210, %v4208
      %v4234 = vpack.c.bf16 %v4214, %v4212
      %v4235 = vpack.c.bf16 %v4218, %v4216
      %v4236 = vpack.c.bf16 %v4222, %v4220
      %v4237 = vpack.c.bf16 %v4226, %v4224
      %v4238 = vpack.c.bf16 %v4230, %v4228
      %v4239 = vpack.c.bf16 %v4232, %v4232
      %s4240 = scalar_lea.vmem %s3, 80
      %v4241 = vld [vmem:[%s4240] sm:$0xf]
      %v4242 = vld [vmem:[%s4240 + $0x4] sm:$0xf]
      %v4243 = vld [vmem:[%s4240 + $0x8] sm:$0xf]
      %v4244 = vld [vmem:[%s4240 + $0xc] sm:$0xf]
      %v4249 = vunpack.c.l.b16 %v4241
      %v4250 = vunpack.c.l.b16 %v4242
      %v4251 = vunpack.c.l.b16 %v4243
      %v4252 = vunpack.c.l.b16 %v4244
      %v4253 = vpack.c.b16 %v4250, %v4249
      %v4254 = vpack.c.b16 %v4252, %v4251
      %v4258 = vsel %vm3097, %v4233, 0
      %v4261 = vsel %vm3097, %v4234, 0
      %v4264 = vsel %vm3097, %v4235, 0
      %v4267 = vsel %vm3097, %v4236, 0
      %v4270 = vsel %vm3097, %v4237, 0
      %v4273 = vsel %vm3097, %v4238, 0
      %v4276 = vsel %vm3097, %v4239, 0
      %4278 = vmatprep.subr.bf16.mxu0 0
      %4279 = vmatpush1.bf16.msra.mxu0 %v4253
      %4280 = vmatprep.subr.bf16.mxu0 0
      %4281 = vmatpush1.bf16.msra.mxu0 %v4254
      %4282 = vmatprep.subr.bf16.mxu0 0
      %4283 = vmatpush1.bf16.msra.mxu0 0
      %4284 = vmatprep.subr.bf16.mxu0 0
      %4285 = vmatpush1.bf16.msra.mxu0 0
      %4286 = vmatprep.subr.bf16.mxu0 0
      %4287 = vmatpush1.bf16.msra.mxu0 0
      %4288 = vmatprep.subr.bf16.mxu0 0
      %4289 = vmatpush1.bf16.msra.mxu0 0
      %4290 = vmatprep.subr.bf16.mxu0 0
      %4291 = vmatpush1.bf16.msra.mxu0 0
      %4292 = vmatprep.subr.bf16.mxu0 0
      %4293 = vmatpush1.bf16.msra.mxu0 0
      %4294 = vmatprep.subr.bf16.mxu0 0
      %4295 = vmatpush1.bf16.msra.mxu0 0
      %4296 = vmatprep.subr.bf16.mxu0 0
      %4297 = vmatpush1.bf16.msra.mxu0 0
      %4298 = vmatprep.subr.bf16.mxu0 0
      %4299 = vmatpush1.bf16.msra.mxu0 0
      %4300 = vmatprep.subr.bf16.mxu0 0
      %4301 = vmatpush1.bf16.msra.mxu0 0
      %4302 = vmatprep.subr.bf16.mxu0 0
      %4303 = vmatpush1.bf16.msra.mxu0 0
      %4304 = vmatprep.subr.bf16.mxu0 0
      %4305 = vmatpush1.bf16.msra.mxu0 0
      %4306 = vmatprep.subr.bf16.mxu0 0
      %4307 = vmatpush1.bf16.msra.mxu0 0
      %4308 = vmatprep.subr.bf16.mxu0 0
      %4309 = vmatpush1.bf16.msra.mxu0 0
      %4310 = vmatprep.mubr.bf16.mxu0 0
      %4311 = vmatmul.mubr.bf16.gmra.mrb[0].mxu0 %v4258
      %v4312 = vpop.f32.mrb[0].mxu0
      %v4313 = vadd.f32 0.0, %v4312
      %v4314 = vpop.f32.mrb[0].mxu0
      %v4315 = vpop.f32.mrb[0].mxu0
      %v4316 = vadd.f32 0.0, %v4315
      %v4317 = vpop.f32.mrb[0].mxu0
      %4318 = vmatprep.mubr.bf16.mxu0 0
      %4319 = vmatmul.mubr.bf16.gmra.mrb[0].mxu0 %v4261
      %v4320 = vpop.f32.mrb[0].mxu0
      %v4321 = vadd.f32 0.0, %v4320
      %v4322 = vpop.f32.mrb[0].mxu0
      %v4323 = vpop.f32.mrb[0].mxu0
      %v4324 = vadd.f32 0.0, %v4323
      %v4325 = vpop.f32.mrb[0].mxu0
      %4326 = vmatprep.mubr.bf16.mxu0 0
      %4327 = vmatmul.mubr.bf16.gmra.mrb[0].mxu0 %v4264
      %v4328 = vpop.f32.mrb[0].mxu0
      %v4329 = vadd.f32 0.0, %v4328
      %v4330 = vpop.f32.mrb[0].mxu0
      %v4331 = vpop.f32.mrb[0].mxu0
      %v4332 = vadd.f32 0.0, %v4331
      %v4333 = vpop.f32.mrb[0].mxu0
      %4334 = vmatprep.mubr.bf16.mxu0 0
      %4335 = vmatmul.mubr.bf16.gmra.mrb[0].mxu0 %v4267
      %v4336 = vpop.f32.mrb[0].mxu0
      %v4337 = vadd.f32 0.0, %v4336
      %v4338 = vpop.f32.mrb[0].mxu0
      %v4339 = vpop.f32.mrb[0].mxu0
      %v4340 = vadd.f32 0.0, %v4339
      %v4341 = vpop.f32.mrb[0].mxu0
      %4342 = vmatprep.mubr.bf16.mxu0 0
      %4343 = vmatmul.mubr.bf16.gmra.mrb[0].mxu0 %v4270
      %v4344 = vpop.f32.mrb[0].mxu0
      %v4345 = vadd.f32 0.0, %v4344
      %v4346 = vpop.f32.mrb[0].mxu0
      %v4347 = vpop.f32.mrb[0].mxu0
      %v4348 = vadd.f32 0.0, %v4347
      %v4349 = vpop.f32.mrb[0].mxu0
      %4350 = vmatprep.mubr.bf16.mxu0 0
      %4351 = vmatmul.mubr.bf16.gmra.mrb[0].mxu0 %v4273
      %v4352 = vpop.f32.mrb[0].mxu0
      %v4353 = vadd.f32 0.0, %v4352
      %v4354 = vpop.f32.mrb[0].mxu0
      %v4355 = vpop.f32.mrb[0].mxu0
      %v4356 = vadd.f32 0.0, %v4355
      %v4357 = vpop.f32.mrb[0].mxu0
      %4358 = vmatprep.mubr.bf16.mxu0 0
      %4359 = vmatmul.mubr.bf16.gmra.mrb[0].mxu0 %v4276
      %v4360 = vpop.f32.mrb[0].mxu0
      %v4361 = vadd.f32 0.0, %v4360
      %v4362 = vpop.f32.mrb[0].mxu0
      %v4363 = vpop.f32.mrb[0].mxu0
      %v4364 = vpop.f32.mrb[0].mxu0
      %4365 = vdwg.mxu0
      %v4366 = vadd.f32 %v4194, %v4313
      %v4367 = vadd.f32 %v4195, %v4316
      %v4368 = vadd.f32 %v4196, %v4321
      %v4369 = vadd.f32 %v4197, %v4324
      %v4370 = vadd.f32 %v4198, %v4329
      %v4371 = vadd.f32 %v4199, %v4332
      %v4372 = vadd.f32 %v4200, %v4337
      %v4373 = vadd.f32 %v4201, %v4340
      %v4374 = vadd.f32 %v4202, %v4345
      %v4375 = vadd.f32 %v4203, %v4348
      %v4376 = vadd.f32 %v4204, %v4353
      %v4377 = vadd.f32 %v4205, %v4356
      %v4378 = vadd.f32 %v4206, %v4361
      %s4379 = scalar_lea.vmem [#allocation3], 11
      %v4380 = vld [vmem:[%s4379] ss:$2 sm:$0xff]
      %s4381 = scalar_lea.vmem [#allocation3], 27
      %v4382 = vld [vmem:[%s4381] ss:$2 sm:$0xff]
      %s4383 = scalar_lea.vmem [#allocation3], 43
      %v4384 = vld [vmem:[%s4383] ss:$2 sm:$0xff]
      %s4385 = scalar_lea.vmem [#allocation3], 59
      %v4386 = vld [vmem:[%s4385] ss:$2 sm:$0xff]
      %s4387 = scalar_lea.vmem [#allocation3], 75
      %v4388 = vld [vmem:[%s4387] ss:$2 sm:$0xff]
      %s4389 = scalar_lea.vmem [#allocation3], 91
      %v4390 = vld [vmem:[%s4389] ss:$2 sm:$0xff]
      %s4391 = scalar_lea.vmem [#allocation3], 107
      %v4392 = vld [vmem:[%s4391] ss:$2 sm:$0xff]
      %s4393 = scalar_lea.vmem [#allocation3], 123
      %v4394 = vld [vmem:[%s4393] ss:$2 sm:$0xff]
      %s4395 = scalar_lea.vmem [#allocation3], 139
      %v4396 = vld [vmem:[%s4395] ss:$2 sm:$0xff]
      %s4397 = scalar_lea.vmem [#allocation3], 155
      %v4398 = vld [vmem:[%s4397] ss:$2 sm:$0xff]
      %s4399 = scalar_lea.vmem [#allocation3], 171
      %v4400 = vld [vmem:[%s4399] ss:$2 sm:$0xff]
      %s4401 = scalar_lea.vmem [#allocation3], 187
      %v4402 = vld [vmem:[%s4401] ss:$2 sm:$0xff]
      %s4403 = scalar_lea.vmem [#allocation3], 203
      %v4404 = vld [vmem:[%s4403] ss:$2 sm:$0xf]
      %v4405 = vpack.c.bf16 %v4382, %v4380
      %v4406 = vpack.c.bf16 %v4386, %v4384
      %v4407 = vpack.c.bf16 %v4390, %v4388
      %v4408 = vpack.c.bf16 %v4394, %v4392
      %v4409 = vpack.c.bf16 %v4398, %v4396
      %v4410 = vpack.c.bf16 %v4402, %v4400
      %v4411 = vpack.c.bf16 %v4404, %v4404
      %s4412 = scalar_lea.vmem %s3, 96
      %v4413 = vld [vmem:[%s4412] sm:$0xf]
      %v4414 = vld [vmem:[%s4412 + $0x4] sm:$0xf]
      %v4415 = vld [vmem:[%s4412 + $0x8] sm:$0xf]
      %v4416 = vld [vmem:[%s4412 + $0xc] sm:$0xf]
      %v4421 = vunpack.c.l.b16 %v4413
      %v4422 = vunpack.c.l.b16 %v4414
      %v4423 = vunpack.c.l.b16 %v4415
      %v4424 = vunpack.c.l.b16 %v4416
      %v4425 = vpack.c.b16 %v4422, %v4421
      %v4426 = vpack.c.b16 %v4424, %v4423
      %v4430 = vsel %vm3097, %v4405, 0
      %v4433 = vsel %vm3097, %v4406, 0
      %v4436 = vsel %vm3097, %v4407, 0
      %v4439 = vsel %vm3097, %v4408, 0
      %v4442 = vsel %vm3097, %v4409, 0
      %v4445 = vsel %vm3097, %v4410, 0
      %v4448 = vsel %vm3097, %v4411, 0
      %4450 = vmatprep.subr.bf16.mxu0 0
      %4451 = vmatpush1.bf16.msra.mxu0 %v4425
      %4452 = vmatprep.subr.bf16.mxu0 0
      %4453 = vmatpush1.bf16.msra.mxu0 %v4426
      %4454 = vmatprep.subr.bf16.mxu0 0
      %4455 = vmatpush1.bf16.msra.mxu0 0
      %4456 = vmatprep.subr.bf16.mxu0 0
      %4457 = vmatpush1.bf16.msra.mxu0 0
      %4458 = vmatprep.subr.bf16.mxu0 0
      %4459 = vmatpush1.bf16.msra.mxu0 0
      %4460 = vmatprep.subr.bf16.mxu0 0
      %4461 = vmatpush1.bf16.msra.mxu0 0
      %4462 = vmatprep.subr.bf16.mxu0 0
      %4463 = vmatpush1.bf16.msra.mxu0 0
      %4464 = vmatprep.subr.bf16.mxu0 0
      %4465 = vmatpush1.bf16.msra.mxu0 0
      %4466 = vmatprep.subr.bf16.mxu0 0
      %4467 = vmatpush1.bf16.msra.mxu0 0
      %4468 = vmatprep.subr.bf16.mxu0 0
      %4469 = vmatpush1.bf16.msra.mxu0 0
      %4470 = vmatprep.subr.bf16.mxu0 0
      %4471 = vmatpush1.bf16.msra.mxu0 0
      %4472 = vmatprep.subr.bf16.mxu0 0
      %4473 = vmatpush1.bf16.msra.mxu0 0
      %4474 = vmatprep.subr.bf16.mxu0 0
      %4475 = vmatpush1.bf16.msra.mxu0 0
      %4476 = vmatprep.subr.bf16.mxu0 0
      %4477 = vmatpush1.bf16.msra.mxu0 0
      %4478 = vmatprep.subr.bf16.mxu0 0
      %4479 = vmatpush1.bf16.msra.mxu0 0
      %4480 = vmatprep.subr.bf16.mxu0 0
      %4481 = vmatpush1.bf16.msra.mxu0 0
      %4482 = vmatprep.mubr.bf16.mxu0 0
      %4483 = vmatmul.mubr.bf16.gmra.mrb[0].mxu0 %v4430
      %v4484 = vpop.f32.mrb[0].mxu0
      %v4485 = vadd.f32 0.0, %v4484
      %v4486 = vpop.f32.mrb[0].mxu0
      %v4487 = vpop.f32.mrb[0].mxu0
      %v4488 = vadd.f32 0.0, %v4487
      %v4489 = vpop.f32.mrb[0].mxu0
      %4490 = vmatprep.mubr.bf16.mxu0 0
      %4491 = vmatmul.mubr.bf16.gmra.mrb[0].mxu0 %v4433
      %v4492 = vpop.f32.mrb[0].mxu0
      %v4493 = vadd.f32 0.0, %v4492
      %v4494 = vpop.f32.mrb[0].mxu0
      %v4495 = vpop.f32.mrb[0].mxu0
      %v4496 = vadd.f32 0.0, %v4495
      %v4497 = vpop.f32.mrb[0].mxu0
      %4498 = vmatprep.mubr.bf16.mxu0 0
      %4499 = vmatmul.mubr.bf16.gmra.mrb[0].mxu0 %v4436
      %v4500 = vpop.f32.mrb[0].mxu0
      %v4501 = vadd.f32 0.0, %v4500
      %v4502 = vpop.f32.mrb[0].mxu0
      %v4503 = vpop.f32.mrb[0].mxu0
      %v4504 = vadd.f32 0.0, %v4503
      %v4505 = vpop.f32.mrb[0].mxu0
      %4506 = vmatprep.mubr.bf16.mxu0 0
      %4507 = vmatmul.mubr.bf16.gmra.mrb[0].mxu0 %v4439
      %v4508 = vpop.f32.mrb[0].mxu0
      %v4509 = vadd.f32 0.0, %v4508
      %v4510 = vpop.f32.mrb[0].mxu0
      %v4511 = vpop.f32.mrb[0].mxu0
      %v4512 = vadd.f32 0.0, %v4511
      %v4513 = vpop.f32.mrb[0].mxu0
      %4514 = vmatprep.mubr.bf16.mxu0 0
      %4515 = vmatmul.mubr.bf16.gmra.mrb[0].mxu0 %v4442
      %v4516 = vpop.f32.mrb[0].mxu0
      %v4517 = vadd.f32 0.0, %v4516
      %v4518 = vpop.f32.mrb[0].mxu0
      %v4519 = vpop.f32.mrb[0].mxu0
      %v4520 = vadd.f32 0.0, %v4519
      %v4521 = vpop.f32.mrb[0].mxu0
      %4522 = vmatprep.mubr.bf16.mxu0 0
      %4523 = vmatmul.mubr.bf16.gmra.mrb[0].mxu0 %v4445
      %v4524 = vpop.f32.mrb[0].mxu0
      %v4525 = vadd.f32 0.0, %v4524
      %v4526 = vpop.f32.mrb[0].mxu0
      %v4527 = vpop.f32.mrb[0].mxu0
      %v4528 = vadd.f32 0.0, %v4527
      %v4529 = vpop.f32.mrb[0].mxu0
      %4530 = vmatprep.mubr.bf16.mxu0 0
      %4531 = vmatmul.mubr.bf16.gmra.mrb[0].mxu0 %v4448
      %v4532 = vpop.f32.mrb[0].mxu0
      %v4533 = vadd.f32 0.0, %v4532
      %v4534 = vpop.f32.mrb[0].mxu0
      %v4535 = vpop.f32.mrb[0].mxu0
      %v4536 = vpop.f32.mrb[0].mxu0
      %4537 = vdwg.mxu0
      %v4538 = vadd.f32 %v4366, %v4485
      %v4539 = vadd.f32 %v4367, %v4488
      %v4540 = vadd.f32 %v4368, %v4493
      %v4541 = vadd.f32 %v4369, %v4496
      %v4542 = vadd.f32 %v4370, %v4501
      %v4543 = vadd.f32 %v4371, %v4504
      %v4544 = vadd.f32 %v4372, %v4509
      %v4545 = vadd.f32 %v4373, %v4512
      %v4546 = vadd.f32 %v4374, %v4517
      %v4547 = vadd.f32 %v4375, %v4520
      %v4548 = vadd.f32 %v4376, %v4525
      %v4549 = vadd.f32 %v4377, %v4528
      %v4550 = vadd.f32 %v4378, %v4533
      %v4552 = vlaneseq
      %v4553 = vshrl.u32 %v4552, 7
      %v4554 = vsub.s32 0, %v4553
      %v4555 = vrot.slane %v3373, %v4554
      %v4557 = vadd.f32 %v4538, %v4555
      %v4558 = vadd.f32 %v4539, %v4555
      %v4559 = vadd.f32 %v4540, %v4555
      %v4560 = vadd.f32 %v4541, %v4555
      %v4561 = vadd.f32 %v4542, %v4555
      %v4562 = vadd.f32 %v4543, %v4555
      %v4563 = vadd.f32 %v4544, %v4555
      %v4564 = vadd.f32 %v4545, %v4555
      %v4565 = vadd.f32 %v4546, %v4555
      %v4566 = vadd.f32 %v4547, %v4555
      %v4567 = vadd.f32 %v4548, %v4555
      %v4568 = vadd.f32 %v4549, %v4555
      %v4569 = vadd.f32 %v4550, %v4555
      %v4570 = vmax.f32 %v4557, 0.0
      %v4571 = vmax.f32 %v4558, 0.0
      %v4572 = vmax.f32 %v4559, 0.0
      %v4573 = vmax.f32 %v4560, 0.0
      %v4574 = vmax.f32 %v4561, 0.0
      %v4575 = vmax.f32 %v4562, 0.0
      %v4576 = vmax.f32 %v4563, 0.0
      %v4577 = vmax.f32 %v4564, 0.0
      %v4578 = vmax.f32 %v4565, 0.0
      %v4579 = vmax.f32 %v4566, 0.0
      %v4580 = vmax.f32 %v4567, 0.0
      %v4581 = vmax.f32 %v4568, 0.0
      %v4582 = vmax.f32 %v4569, 0.0
      %vm4583 = vcmask 523264
      %4584 = vst.msk [vmem:[#allocation6 + $0x8] sm:$0xff] %vm4583, %v4570
      %4585 = vst.msk [vmem:[#allocation6 + $0x10] sm:$0xff] %vm4583, %v4571
      %4586 = vst.msk [vmem:[#allocation6 + $0x18] sm:$0xff] %vm4583, %v4572
      %4587 = vst.msk [vmem:[#allocation6 + $0x20] sm:$0xff] %vm4583, %v4573
      %4588 = vst.msk [vmem:[#allocation6 + $0x28] sm:$0xff] %vm4583, %v4574
      %4589 = vst.msk [vmem:[#allocation6 + $0x30] sm:$0xff] %vm4583, %v4575
      %4590 = vst.msk [vmem:[#allocation6 + $0x38] sm:$0xff] %vm4583, %v4576
      %4591 = vst.msk [vmem:[#allocation6 + $0x40] sm:$0xff] %vm4583, %v4577
      %4592 = vst.msk [vmem:[#allocation6 + $0x48] sm:$0xff] %vm4583, %v4578
      %4593 = vst.msk [vmem:[#allocation6 + $0x50] sm:$0xff] %vm4583, %v4579
      %4594 = vst.msk [vmem:[#allocation6 + $0x58] sm:$0xff] %vm4583, %v4580
      %4595 = vst.msk [vmem:[#allocation6 + $0x60] sm:$0xff] %vm4583, %v4581
      %vm4596 = vcmask 519168
      %4597 = vst.msk [vmem:[#allocation6 + $0x68] sm:$0xf] %vm4596, %v4582
      %s4598 = scalar_lea.vmem [#allocation6], 7
      %v4599 = vld [vmem:[%s4598] ss:$2 sm:$0xff]
      %s4600 = scalar_lea.vmem [#allocation6], 23
      %v4601 = vld [vmem:[%s4600] ss:$2 sm:$0xff]
      %s4602 = scalar_lea.vmem [#allocation6], 39
      %v4603 = vld [vmem:[%s4602] ss:$2 sm:$0xff]
      %s4604 = scalar_lea.vmem [#allocation6], 55
      %v4605 = vld [vmem:[%s4604] ss:$2 sm:$0xff]
      %s4606 = scalar_lea.vmem [#allocation6], 71
      %v4607 = vld [vmem:[%s4606] ss:$2 sm:$0xff]
      %s4608 = scalar_lea.vmem [#allocation6], 87
      %v4609 = vld [vmem:[%s4608] ss:$2 sm:$0xff]
      %s4610 = scalar_lea.vmem [#allocation6], 103
      %v4611 = vld [vmem:[%s4610] ss:$2 sm:$0x3]
      %s4612 = scalar_lea.vmem [#allocation6], 8
      %v4613 = vld [vmem:[%s4612] ss:$2 sm:$0xff]
      %s4614 = scalar_lea.vmem [#allocation6], 24
      %v4615 = vld [vmem:[%s4614] ss:$2 sm:$0xff]
      %s4616 = scalar_lea.vmem [#allocation6], 40
      %v4617 = vld [vmem:[%s4616] ss:$2 sm:$0xff]
      %s4618 = scalar_lea.vmem [#allocation6], 56
      %v4619 = vld [vmem:[%s4618] ss:$2 sm:$0xff]
      %s4620 = scalar_lea.vmem [#allocation6], 72
      %v4621 = vld [vmem:[%s4620] ss:$2 sm:$0xff]
      %s4622 = scalar_lea.vmem [#allocation6], 88
      %v4623 = vld [vmem:[%s4622] ss:$2 sm:$0xff]
      %s4624 = scalar_lea.vmem [#allocation6], 104
      %v4625 = vld [vmem:[%s4624] ss:$2 sm:$0x3]
      %s4626 = scalar_lea.vmem [#allocation6], 9
      %v4627 = vld [vmem:[%s4626] ss:$2 sm:$0xff]
      %s4628 = scalar_lea.vmem [#allocation6], 25
      %v4629 = vld [vmem:[%s4628] ss:$2 sm:$0xff]
      %s4630 = scalar_lea.vmem [#allocation6], 41
      %v4631 = vld [vmem:[%s4630] ss:$2 sm:$0xff]
      %s4632 = scalar_lea.vmem [#allocation6], 57
      %v4633 = vld [vmem:[%s4632] ss:$2 sm:$0xff]
      %s4634 = scalar_lea.vmem [#allocation6], 73
      %v4635 = vld [vmem:[%s4634] ss:$2 sm:$0xff]
      %s4636 = scalar_lea.vmem [#allocation6], 89
      %v4637 = vld [vmem:[%s4636] ss:$2 sm:$0xff]
      %s4638 = scalar_lea.vmem [#allocation6], 105
      %v4639 = vld [vmem:[%s4638] ss:$2 sm:$0x3]
      %v4640 = vmax.f32 %v4599, %v4613
      %v4641 = vmax.f32 %v4601, %v4615
      %v4642 = vmax.f32 %v4603, %v4617
      %v4643 = vmax.f32 %v4605, %v4619
      %v4644 = vmax.f32 %v4607, %v4621
      %v4645 = vmax.f32 %v4609, %v4623
      %v4646 = vmax.f32 %v4611, %v4625
      %v4647 = vmax.f32 %v4640, %v4627
      %v4648 = vmax.f32 %v4641, %v4629
      %v4649 = vmax.f32 %v4642, %v4631
      %v4650 = vmax.f32 %v4643, %v4633
      %v4651 = vmax.f32 %v4644, %v4635
      %v4652 = vmax.f32 %v4645, %v4637
      %v4653 = vmax.f32 %v4646, %v4639
      %4654 = vst.msk [vmem:[#allocation4 + $0x8] sm:$0xff] %vm4583, %v4647
      %4655 = vst.msk [vmem:[#allocation4 + $0x10] sm:$0xff] %vm4583, %v4648
      %4656 = vst.msk [vmem:[#allocation4 + $0x18] sm:$0xff] %vm4583, %v4649
      %4657 = vst.msk [vmem:[#allocation4 + $0x20] sm:$0xff] %vm4583, %v4650
      %4658 = vst.msk [vmem:[#allocation4 + $0x28] sm:$0xff] %vm4583, %v4651
      %4659 = vst.msk [vmem:[#allocation4 + $0x30] sm:$0xff] %vm4583, %v4652
      %4660 = vst.msk [vmem:[#allocation4 + $0x38] sm:$0x3] %vm396, %v4653
      %v4661 = vld [vmem:[%s6] sm:$0x1]
      %s4662 = scalar_lea.vmem [#allocation4], 5
      %v4663 = vld [vmem:[%s4662] ss:$2 sm:$0xff]
      %s4664 = scalar_lea.vmem [#allocation4], 21
      %v4665 = vld [vmem:[%s4664] ss:$2 sm:$0xff]
      %s4666 = scalar_lea.vmem [#allocation4], 37
      %v4667 = vld [vmem:[%s4666] ss:$2 sm:$0xff]
      %s4668 = scalar_lea.vmem [#allocation4], 53
      %v4669 = vld [vmem:[%s4668] ss:$2 sm:$0x1]
      %v4670 = vpack.c.bf16 %v4665, %v4663
      %v4671 = vpack.c.bf16 %v4669, %v4667
      %v4672 = vld [vmem:[%s5] sm:$0xf]
      %v4673 = vld [vmem:[%s5 + $0x4] sm:$0xf]
      %v4674 = vld [vmem:[%s5 + $0x8] sm:$0xf]
      %v4675 = vld [vmem:[%s5 + $0xc] sm:$0xf]
      %v4676 = vld [vmem:[%s5 + $0x10] sm:$0xf]
      %v4677 = vld [vmem:[%s5 + $0x14] sm:$0xf]
      %v4678 = vld [vmem:[%s5 + $0x18] sm:$0xf]
      %v4679 = vld [vmem:[%s5 + $0x1c] sm:$0xf]
      %s4680 = scalar_lea.vmem [#allocation4], 6
      %v4681 = vld [vmem:[%s4680] ss:$2 sm:$0xff]
      %s4682 = scalar_lea.vmem [#allocation4], 22
      %v4683 = vld [vmem:[%s4682] ss:$2 sm:$0xff]
      %s4684 = scalar_lea.vmem [#allocation4], 38
      %v4685 = vld [vmem:[%s4684] ss:$2 sm:$0xff]
      %s4686 = scalar_lea.vmem [#allocation4], 54
      %v4687 = vld [vmem:[%s4686] ss:$2 sm:$0x1]
      %v4688 = vpack.c.bf16 %v4683, %v4681
      %v4689 = vpack.c.bf16 %v4687, %v4685
      %s4690 = scalar_lea.vmem %s5, 32
      %v4691 = vld [vmem:[%s4690] sm:$0xf]
      %v4692 = vld [vmem:[%s4690 + $0x4] sm:$0xf]
      %v4693 = vld [vmem:[%s4690 + $0x8] sm:$0xf]
      %v4694 = vld [vmem:[%s4690 + $0xc] sm:$0xf]
      %v4695 = vld [vmem:[%s4690 + $0x10] sm:$0xf]
      %v4696 = vld [vmem:[%s4690 + $0x14] sm:$0xf]
      %v4697 = vld [vmem:[%s4690 + $0x18] sm:$0xf]
      %v4698 = vld [vmem:[%s4690 + $0x1c] sm:$0xf]
      %v4707 = vunpack.c.l.b16 %v4691
      %v4708 = vunpack.c.l.b16 %v4692
      %v4709 = vunpack.c.l.b16 %v4693
      %v4710 = vunpack.c.l.b16 %v4694
      %v4711 = vunpack.c.l.b16 %v4695
      %v4712 = vunpack.c.l.b16 %v4696
      %v4713 = vunpack.c.l.b16 %v4697
      %v4714 = vunpack.c.l.b16 %v4698
      %v4715 = vpack.c.b16 %v4708, %v4707
      %v4716 = vpack.c.b16 %v4710, %v4709
      %v4717 = vpack.c.b16 %v4712, %v4711
      %v4718 = vpack.c.b16 %v4714, %v4713
      %v4724 = vsel %vm4583, %v4688, 0
      %v4727 = vsel %vm4583, %v4689, 0
      %4729 = vmatprep.subr.bf16.mxu0 0
      %4730 = vmatpush1.bf16.msra.mxu0 %v4715
      %4731 = vmatprep.subr.bf16.mxu0 0
      %4732 = vmatpush1.bf16.msra.mxu0 %v4716
      %4733 = vmatprep.subr.bf16.mxu0 0
      %4734 = vmatpush1.bf16.msra.mxu0 %v4717
      %4735 = vmatprep.subr.bf16.mxu0 0
      %4736 = vmatpush1.bf16.msra.mxu0 %v4718
      %4737 = vmatprep.subr.bf16.mxu0 0
      %4738 = vmatpush1.bf16.msra.mxu0 0
      %4739 = vmatprep.subr.bf16.mxu0 0
      %4740 = vmatpush1.bf16.msra.mxu0 0
      %4741 = vmatprep.subr.bf16.mxu0 0
      %4742 = vmatpush1.bf16.msra.mxu0 0
      %4743 = vmatprep.subr.bf16.mxu0 0
      %4744 = vmatpush1.bf16.msra.mxu0 0
      %4745 = vmatprep.subr.bf16.mxu0 0
      %4746 = vmatpush1.bf16.msra.mxu0 0
      %4747 = vmatprep.subr.bf16.mxu0 0
      %4748 = vmatpush1.bf16.msra.mxu0 0
      %4749 = vmatprep.subr.bf16.mxu0 0
      %4750 = vmatpush1.bf16.msra.mxu0 0
      %4751 = vmatprep.subr.bf16.mxu0 0
      %4752 = vmatpush1.bf16.msra.mxu0 0
      %4753 = vmatprep.subr.bf16.mxu0 0
      %4754 = vmatpush1.bf16.msra.mxu0 0
      %4755 = vmatprep.subr.bf16.mxu0 0
      %4756 = vmatpush1.bf16.msra.mxu0 0
      %4757 = vmatprep.subr.bf16.mxu0 0
      %4758 = vmatpush1.bf16.msra.mxu0 0
      %4759 = vmatprep.subr.bf16.mxu0 0
      %4760 = vmatpush1.bf16.msra.mxu0 0
      %4761 = vmatprep.mubr.bf16.mxu0 0
      %4762 = vmatmul.mubr.bf16.gmra.mrb[0].mxu0 %v4724
      %v4763 = vpop.f32.mrb[0].mxu0
      %v4764 = vadd.f32 0.0, %v4763
      %v4765 = vpop.f32.mrb[0].mxu0
      %v4766 = vpop.f32.mrb[0].mxu0
      %v4767 = vadd.f32 0.0, %v4766
      %v4768 = vpop.f32.mrb[0].mxu0
      %4769 = vmatprep.mubr.bf16.mxu0 0
      %4770 = vmatmul.mubr.bf16.gmra.mrb[0].mxu0 %v4727
      %v4771 = vpop.f32.mrb[0].mxu0
      %v4772 = vadd.f32 0.0, %v4771
      %v4773 = vpop.f32.mrb[0].mxu0
      %v4774 = vpop.f32.mrb[0].mxu0
      %v4775 = vadd.f32 0.0, %v4774
      %v4776 = vpop.f32.mrb[0].mxu0
      %4777 = vdwg.mxu0
      %v4786 = vunpack.c.l.b16 %v4672
      %v4787 = vunpack.c.l.b16 %v4673
      %v4788 = vunpack.c.l.b16 %v4674
      %v4789 = vunpack.c.l.b16 %v4675
      %v4790 = vunpack.c.l.b16 %v4676
      %v4791 = vunpack.c.l.b16 %v4677
      %v4792 = vunpack.c.l.b16 %v4678
      %v4793 = vunpack.c.l.b16 %v4679
      %v4794 = vpack.c.b16 %v4787, %v4786
      %v4795 = vpack.c.b16 %v4789, %v4788
      %v4796 = vpack.c.b16 %v4791, %v4790
      %v4797 = vpack.c.b16 %v4793, %v4792
      %v4803 = vsel %vm4583, %v4670, 0
      %v4806 = vsel %vm4583, %v4671, 0
      %4808 = vmatprep.subr.bf16.mxu0 0
      %4809 = vmatpush1.bf16.msra.mxu0 %v4794
      %4810 = vmatprep.subr.bf16.mxu0 0
      %4811 = vmatpush1.bf16.msra.mxu0 %v4795
      %4812 = vmatprep.subr.bf16.mxu0 0
      %4813 = vmatpush1.bf16.msra.mxu0 %v4796
      %4814 = vmatprep.subr.bf16.mxu0 0
      %4815 = vmatpush1.bf16.msra.mxu0 %v4797
      %4816 = vmatprep.subr.bf16.mxu0 0
      %4817 = vmatpush1.bf16.msra.mxu0 0
      %4818 = vmatprep.subr.bf16.mxu0 0
      %4819 = vmatpush1.bf16.msra.mxu0 0
      %4820 = vmatprep.subr.bf16.mxu0 0
      %4821 = vmatpush1.bf16.msra.mxu0 0
      %4822 = vmatprep.subr.bf16.mxu0 0
      %4823 = vmatpush1.bf16.msra.mxu0 0
      %4824 = vmatprep.subr.bf16.mxu0 0
      %4825 = vmatpush1.bf16.msra.mxu0 0
      %4826 = vmatprep.subr.bf16.mxu0 0
      %4827 = vmatpush1.bf16.msra.mxu0 0
      %4828 = vmatprep.subr.bf16.mxu0 0
      %4829 = vmatpush1.bf16.msra.mxu0 0
      %4830 = vmatprep.subr.bf16.mxu0 0
      %4831 = vmatpush1.bf16.msra.mxu0 0
      %4832 = vmatprep.subr.bf16.mxu0 0
      %4833 = vmatpush1.bf16.msra.mxu0 0
      %4834 = vmatprep.subr.bf16.mxu0 0
      %4835 = vmatpush1.bf16.msra.mxu0 0
      %4836 = vmatprep.subr.bf16.mxu0 0
      %4837 = vmatpush1.bf16.msra.mxu0 0
      %4838 = vmatprep.subr.bf16.mxu0 0
      %4839 = vmatpush1.bf16.msra.mxu0 0
      %4840 = vmatprep.mubr.bf16.mxu0 0
      %4841 = vmatmul.mubr.bf16.gmra.mrb[0].mxu0 %v4803
      %v4842 = vpop.f32.mrb[0].mxu0
      %v4843 = vadd.f32 %v4764, %v4842
      %v4844 = vpop.f32.mrb[0].mxu0
      %v4845 = vpop.f32.mrb[0].mxu0
      %v4846 = vadd.f32 %v4767, %v4845
      %v4847 = vpop.f32.mrb[0].mxu0
      %4848 = vmatprep.mubr.bf16.mxu0 0
      %4849 = vmatmul.mubr.bf16.gmra.mrb[0].mxu0 %v4806
      %v4850 = vpop.f32.mrb[0].mxu0
      %v4851 = vadd.f32 %v4772, %v4850
      %v4852 = vpop.f32.mrb[0].mxu0
      %v4853 = vpop.f32.mrb[0].mxu0
      %v4854 = vadd.f32 %v4775, %v4853
      %v4855 = vpop.f32.mrb[0].mxu0
      %4856 = vdwg.mxu0
      %s4857 = scalar_lea.vmem [#allocation4], 7
      %v4858 = vld [vmem:[%s4857] ss:$2 sm:$0xff]
      %s4859 = scalar_lea.vmem [#allocation4], 23
      %v4860 = vld [vmem:[%s4859] ss:$2 sm:$0xff]
      %s4861 = scalar_lea.vmem [#allocation4], 39
      %v4862 = vld [vmem:[%s4861] ss:$2 sm:$0xff]
      %s4863 = scalar_lea.vmem [#allocation4], 55
      %v4864 = vld [vmem:[%s4863] ss:$2 sm:$0x1]
      %v4865 = vpack.c.bf16 %v4860, %v4858
      %v4866 = vpack.c.bf16 %v4864, %v4862
      %s4867 = scalar_lea.vmem %s5, 64
      %v4868 = vld [vmem:[%s4867] sm:$0xf]
      %v4869 = vld [vmem:[%s4867 + $0x4] sm:$0xf]
      %v4870 = vld [vmem:[%s4867 + $0x8] sm:$0xf]
      %v4871 = vld [vmem:[%s4867 + $0xc] sm:$0xf]
      %v4872 = vld [vmem:[%s4867 + $0x10] sm:$0xf]
      %v4873 = vld [vmem:[%s4867 + $0x14] sm:$0xf]
      %v4874 = vld [vmem:[%s4867 + $0x18] sm:$0xf]
      %v4875 = vld [vmem:[%s4867 + $0x1c] sm:$0xf]
      %v4884 = vunpack.c.l.b16 %v4868
      %v4885 = vunpack.c.l.b16 %v4869
      %v4886 = vunpack.c.l.b16 %v4870
      %v4887 = vunpack.c.l.b16 %v4871
      %v4888 = vunpack.c.l.b16 %v4872
      %v4889 = vunpack.c.l.b16 %v4873
      %v4890 = vunpack.c.l.b16 %v4874
      %v4891 = vunpack.c.l.b16 %v4875
      %v4892 = vpack.c.b16 %v4885, %v4884
      %v4893 = vpack.c.b16 %v4887, %v4886
      %v4894 = vpack.c.b16 %v4889, %v4888
      %v4895 = vpack.c.b16 %v4891, %v4890
      %v4901 = vsel %vm4583, %v4865, 0
      %v4904 = vsel %vm4583, %v4866, 0
      %4906 = vmatprep.subr.bf16.mxu0 0
      %4907 = vmatpush1.bf16.msra.mxu0 %v4892
      %4908 = vmatprep.subr.bf16.mxu0 0
      %4909 = vmatpush1.bf16.msra.mxu0 %v4893
      %4910 = vmatprep.subr.bf16.mxu0 0
      %4911 = vmatpush1.bf16.msra.mxu0 %v4894
      %4912 = vmatprep.subr.bf16.mxu0 0
      %4913 = vmatpush1.bf16.msra.mxu0 %v4895
      %4914 = vmatprep.subr.bf16.mxu0 0
      %4915 = vmatpush1.bf16.msra.mxu0 0
      %4916 = vmatprep.subr.bf16.mxu0 0
      %4917 = vmatpush1.bf16.msra.mxu0 0
      %4918 = vmatprep.subr.bf16.mxu0 0
      %4919 = vmatpush1.bf16.msra.mxu0 0
      %4920 = vmatprep.subr.bf16.mxu0 0
      %4921 = vmatpush1.bf16.msra.mxu0 0
      %4922 = vmatprep.subr.bf16.mxu0 0
      %4923 = vmatpush1.bf16.msra.mxu0 0
      %4924 = vmatprep.subr.bf16.mxu0 0
      %4925 = vmatpush1.bf16.msra.mxu0 0
      %4926 = vmatprep.subr.bf16.mxu0 0
      %4927 = vmatpush1.bf16.msra.mxu0 0
      %4928 = vmatprep.subr.bf16.mxu0 0
      %4929 = vmatpush1.bf16.msra.mxu0 0
      %4930 = vmatprep.subr.bf16.mxu0 0
      %4931 = vmatpush1.bf16.msra.mxu0 0
      %4932 = vmatprep.subr.bf16.mxu0 0
      %4933 = vmatpush1.bf16.msra.mxu0 0
      %4934 = vmatprep.subr.bf16.mxu0 0
      %4935 = vmatpush1.bf16.msra.mxu0 0
      %4936 = vmatprep.subr.bf16.mxu0 0
      %4937 = vmatpush1.bf16.msra.mxu0 0
      %4938 = vmatprep.mubr.bf16.mxu0 0
      %4939 = vmatmul.mubr.bf16.gmra.mrb[0].mxu0 %v4901
      %v4940 = vpop.f32.mrb[0].mxu0
      %v4941 = vadd.f32 0.0, %v4940
      %v4942 = vpop.f32.mrb[0].mxu0
      %v4943 = vpop.f32.mrb[0].mxu0
      %v4944 = vadd.f32 0.0, %v4943
      %v4945 = vpop.f32.mrb[0].mxu0
      %4946 = vmatprep.mubr.bf16.mxu0 0
      %4947 = vmatmul.mubr.bf16.gmra.mrb[0].mxu0 %v4904
      %v4948 = vpop.f32.mrb[0].mxu0
      %v4949 = vadd.f32 0.0, %v4948
      %v4950 = vpop.f32.mrb[0].mxu0
      %v4951 = vpop.f32.mrb[0].mxu0
      %v4952 = vadd.f32 0.0, %v4951
      %v4953 = vpop.f32.mrb[0].mxu0
      %4954 = vdwg.mxu0
      %v4955 = vadd.f32 %v4843, %v4941
      %v4956 = vadd.f32 %v4846, %v4944
      %v4957 = vadd.f32 %v4851, %v4949
      %v4958 = vadd.f32 %v4854, %v4952
      %s4959 = scalar_lea.vmem [#allocation4], 8
      %v4960 = vld [vmem:[%s4959] ss:$2 sm:$0xff]
      %s4961 = scalar_lea.vmem [#allocation4], 24
      %v4962 = vld [vmem:[%s4961] ss:$2 sm:$0xff]
      %s4963 = scalar_lea.vmem [#allocation4], 40
      %v4964 = vld [vmem:[%s4963] ss:$2 sm:$0xff]
      %s4965 = scalar_lea.vmem [#allocation4], 56
      %v4966 = vld [vmem:[%s4965] ss:$2 sm:$0x1]
      %v4967 = vpack.c.bf16 %v4962, %v4960
      %v4968 = vpack.c.bf16 %v4966, %v4964
      %s4969 = scalar_lea.vmem %s5, 96
      %v4970 = vld [vmem:[%s4969] sm:$0xf]
      %v4971 = vld [vmem:[%s4969 + $0x4] sm:$0xf]
      %v4972 = vld [vmem:[%s4969 + $0x8] sm:$0xf]
      %v4973 = vld [vmem:[%s4969 + $0xc] sm:$0xf]
      %v4974 = vld [vmem:[%s4969 + $0x10] sm:$0xf]
      %v4975 = vld [vmem:[%s4969 + $0x14] sm:$0xf]
      %v4976 = vld [vmem:[%s4969 + $0x18] sm:$0xf]
      %v4977 = vld [vmem:[%s4969 + $0x1c] sm:$0xf]
      %v4986 = vunpack.c.l.b16 %v4970
      %v4987 = vunpack.c.l.b16 %v4971
      %v4988 = vunpack.c.l.b16 %v4972
      %v4989 = vunpack.c.l.b16 %v4973
      %v4990 = vunpack.c.l.b16 %v4974
      %v4991 = vunpack.c.l.b16 %v4975
      %v4992 = vunpack.c.l.b16 %v4976
      %v4993 = vunpack.c.l.b16 %v4977
      %v4994 = vpack.c.b16 %v4987, %v4986
      %v4995 = vpack.c.b16 %v4989, %v4988
      %v4996 = vpack.c.b16 %v4991, %v4990
      %v4997 = vpack.c.b16 %v4993, %v4992
      %v5003 = vsel %vm4583, %v4967, 0
      %v5006 = vsel %vm4583, %v4968, 0
      %5008 = vmatprep.subr.bf16.mxu0 0
      %5009 = vmatpush1.bf16.msra.mxu0 %v4994
      %5010 = vmatprep.subr.bf16.mxu0 0
      %5011 = vmatpush1.bf16.msra.mxu0 %v4995
      %5012 = vmatprep.subr.bf16.mxu0 0
      %5013 = vmatpush1.bf16.msra.mxu0 %v4996
      %5014 = vmatprep.subr.bf16.mxu0 0
      %5015 = vmatpush1.bf16.msra.mxu0 %v4997
      %5016 = vmatprep.subr.bf16.mxu0 0
      %5017 = vmatpush1.bf16.msra.mxu0 0
      %5018 = vmatprep.subr.bf16.mxu0 0
      %5019 = vmatpush1.bf16.msra.mxu0 0
      %5020 = vmatprep.subr.bf16.mxu0 0
      %5021 = vmatpush1.bf16.msra.mxu0 0
      %5022 = vmatprep.subr.bf16.mxu0 0
      %5023 = vmatpush1.bf16.msra.mxu0 0
      %5024 = vmatprep.subr.bf16.mxu0 0
      %5025 = vmatpush1.bf16.msra.mxu0 0
      %5026 = vmatprep.subr.bf16.mxu0 0
      %5027 = vmatpush1.bf16.msra.mxu0 0
      %5028 = vmatprep.subr.bf16.mxu0 0
      %5029 = vmatpush1.bf16.msra.mxu0 0
      %5030 = vmatprep.subr.bf16.mxu0 0
      %5031 = vmatpush1.bf16.msra.mxu0 0
      %5032 = vmatprep.subr.bf16.mxu0 0
      %5033 = vmatpush1.bf16.msra.mxu0 0
      %5034 = vmatprep.subr.bf16.mxu0 0
      %5035 = vmatpush1.bf16.msra.mxu0 0
      %5036 = vmatprep.subr.bf16.mxu0 0
      %5037 = vmatpush1.bf16.msra.mxu0 0
      %5038 = vmatprep.subr.bf16.mxu0 0
      %5039 = vmatpush1.bf16.msra.mxu0 0
      %5040 = vmatprep.mubr.bf16.mxu0 0
      %5041 = vmatmul.mubr.bf16.gmra.mrb[0].mxu0 %v5003
      %v5042 = vpop.f32.mrb[0].mxu0
      %v5043 = vadd.f32 0.0, %v5042
      %v5044 = vpop.f32.mrb[0].mxu0
      %v5045 = vpop.f32.mrb[0].mxu0
      %v5046 = vadd.f32 0.0, %v5045
      %v5047 = vpop.f32.mrb[0].mxu0
      %5048 = vmatprep.mubr.bf16.mxu0 0
      %5049 = vmatmul.mubr.bf16.gmra.mrb[0].mxu0 %v5006
      %v5050 = vpop.f32.mrb[0].mxu0
      %v5051 = vadd.f32 0.0, %v5050
      %v5052 = vpop.f32.mrb[0].mxu0
      %v5053 = vpop.f32.mrb[0].mxu0
      %v5054 = vadd.f32 0.0, %v5053
      %v5055 = vpop.f32.mrb[0].mxu0
      %5056 = vdwg.mxu0
      %v5057 = vadd.f32 %v4955, %v5043
      %v5058 = vadd.f32 %v4956, %v5046
      %v5059 = vadd.f32 %v4957, %v5051
      %v5060 = vadd.f32 %v4958, %v5054
      %s5061 = scalar_lea.vmem [#allocation4], 9
      %v5062 = vld [vmem:[%s5061] ss:$2 sm:$0xff]
      %s5063 = scalar_lea.vmem [#allocation4], 25
      %v5064 = vld [vmem:[%s5063] ss:$2 sm:$0xff]
      %s5065 = scalar_lea.vmem [#allocation4], 41
      %v5066 = vld [vmem:[%s5065] ss:$2 sm:$0xff]
      %s5067 = scalar_lea.vmem [#allocation4], 57
      %v5068 = vld [vmem:[%s5067] ss:$2 sm:$0x1]
      %v5069 = vpack.c.bf16 %v5064, %v5062
      %v5070 = vpack.c.bf16 %v5068, %v5066
      %s5071 = scalar_lea.vmem %s5, 128
      %v5072 = vld [vmem:[%s5071] sm:$0xf]
      %v5073 = vld [vmem:[%s5071 + $0x4] sm:$0xf]
      %v5074 = vld [vmem:[%s5071 + $0x8] sm:$0xf]
      %v5075 = vld [vmem:[%s5071 + $0xc] sm:$0xf]
      %v5076 = vld [vmem:[%s5071 + $0x10] sm:$0xf]
      %v5077 = vld [vmem:[%s5071 + $0x14] sm:$0xf]
      %v5078 = vld [vmem:[%s5071 + $0x18] sm:$0xf]
      %v5079 = vld [vmem:[%s5071 + $0x1c] sm:$0xf]
      %v5088 = vunpack.c.l.b16 %v5072
      %v5089 = vunpack.c.l.b16 %v5073
      %v5090 = vunpack.c.l.b16 %v5074
      %v5091 = vunpack.c.l.b16 %v5075
      %v5092 = vunpack.c.l.b16 %v5076
      %v5093 = vunpack.c.l.b16 %v5077
      %v5094 = vunpack.c.l.b16 %v5078
      %v5095 = vunpack.c.l.b16 %v5079
      %v5096 = vpack.c.b16 %v5089, %v5088
      %v5097 = vpack.c.b16 %v5091, %v5090
      %v5098 = vpack.c.b16 %v5093, %v5092
      %v5099 = vpack.c.b16 %v5095, %v5094
      %v5105 = vsel %vm4583, %v5069, 0
      %v5108 = vsel %vm4583, %v5070, 0
      %5110 = vmatprep.subr.bf16.mxu0 0
      %5111 = vmatpush1.bf16.msra.mxu0 %v5096
      %5112 = vmatprep.subr.bf16.mxu0 0
      %5113 = vmatpush1.bf16.msra.mxu0 %v5097
      %5114 = vmatprep.subr.bf16.mxu0 0
      %5115 = vmatpush1.bf16.msra.mxu0 %v5098
      %5116 = vmatprep.subr.bf16.mxu0 0
      %5117 = vmatpush1.bf16.msra.mxu0 %v5099
      %5118 = vmatprep.subr.bf16.mxu0 0
      %5119 = vmatpush1.bf16.msra.mxu0 0
      %5120 = vmatprep.subr.bf16.mxu0 0
      %5121 = vmatpush1.bf16.msra.mxu0 0
      %5122 = vmatprep.subr.bf16.mxu0 0
      %5123 = vmatpush1.bf16.msra.mxu0 0
      %5124 = vmatprep.subr.bf16.mxu0 0
      %5125 = vmatpush1.bf16.msra.mxu0 0
      %5126 = vmatprep.subr.bf16.mxu0 0
      %5127 = vmatpush1.bf16.msra.mxu0 0
      %5128 = vmatprep.subr.bf16.mxu0 0
      %5129 = vmatpush1.bf16.msra.mxu0 0
      %5130 = vmatprep.subr.bf16.mxu0 0
      %5131 = vmatpush1.bf16.msra.mxu0 0
      %5132 = vmatprep.subr.bf16.mxu0 0
      %5133 = vmatpush1.bf16.msra.mxu0 0
      %5134 = vmatprep.subr.bf16.mxu0 0
      %5135 = vmatpush1.bf16.msra.mxu0 0
      %5136 = vmatprep.subr.bf16.mxu0 0
      %5137 = vmatpush1.bf16.msra.mxu0 0
      %5138 = vmatprep.subr.bf16.mxu0 0
      %5139 = vmatpush1.bf16.msra.mxu0 0
      %5140 = vmatprep.subr.bf16.mxu0 0
      %5141 = vmatpush1.bf16.msra.mxu0 0
      %5142 = vmatprep.mubr.bf16.mxu0 0
      %5143 = vmatmul.mubr.bf16.gmra.mrb[0].mxu0 %v5105
      %v5144 = vpop.f32.mrb[0].mxu0
      %v5145 = vadd.f32 0.0, %v5144
      %v5146 = vpop.f32.mrb[0].mxu0
      %v5147 = vpop.f32.mrb[0].mxu0
      %v5148 = vadd.f32 0.0, %v5147
      %v5149 = vpop.f32.mrb[0].mxu0
      %5150 = vmatprep.mubr.bf16.mxu0 0
      %5151 = vmatmul.mubr.bf16.gmra.mrb[0].mxu0 %v5108
      %v5152 = vpop.f32.mrb[0].mxu0
      %v5153 = vadd.f32 0.0, %v5152
      %v5154 = vpop.f32.mrb[0].mxu0
      %v5155 = vpop.f32.mrb[0].mxu0
      %v5156 = vadd.f32 0.0, %v5155
      %v5157 = vpop.f32.mrb[0].mxu0
      %5158 = vdwg.mxu0
      %v5159 = vadd.f32 %v5057, %v5145
      %v5160 = vadd.f32 %v5058, %v5148
      %v5161 = vadd.f32 %v5059, %v5153
      %v5162 = vadd.f32 %v5060, %v5156
      %s5163 = scalar_lea.vmem [#allocation4], 10
      %v5164 = vld [vmem:[%s5163] ss:$2 sm:$0xff]
      %s5165 = scalar_lea.vmem [#allocation4], 26
      %v5166 = vld [vmem:[%s5165] ss:$2 sm:$0xff]
      %s5167 = scalar_lea.vmem [#allocation4], 42
      %v5168 = vld [vmem:[%s5167] ss:$2 sm:$0xff]
      %s5169 = scalar_lea.vmem [#allocation4], 58
      %v5170 = vld [vmem:[%s5169] ss:$2 sm:$0x1]
      %v5171 = vpack.c.bf16 %v5166, %v5164
      %v5172 = vpack.c.bf16 %v5170, %v5168
      %s5173 = scalar_lea.vmem %s5, 160
      %v5174 = vld [vmem:[%s5173] sm:$0xf]
      %v5175 = vld [vmem:[%s5173 + $0x4] sm:$0xf]
      %v5176 = vld [vmem:[%s5173 + $0x8] sm:$0xf]
      %v5177 = vld [vmem:[%s5173 + $0xc] sm:$0xf]
      %v5178 = vld [vmem:[%s5173 + $0x10] sm:$0xf]
      %v5179 = vld [vmem:[%s5173 + $0x14] sm:$0xf]
      %v5180 = vld [vmem:[%s5173 + $0x18] sm:$0xf]
      %v5181 = vld [vmem:[%s5173 + $0x1c] sm:$0xf]
      %v5190 = vunpack.c.l.b16 %v5174
      %v5191 = vunpack.c.l.b16 %v5175
      %v5192 = vunpack.c.l.b16 %v5176
      %v5193 = vunpack.c.l.b16 %v5177
      %v5194 = vunpack.c.l.b16 %v5178
      %v5195 = vunpack.c.l.b16 %v5179
      %v5196 = vunpack.c.l.b16 %v5180
      %v5197 = vunpack.c.l.b16 %v5181
      %v5198 = vpack.c.b16 %v5191, %v5190
      %v5199 = vpack.c.b16 %v5193, %v5192
      %v5200 = vpack.c.b16 %v5195, %v5194
      %v5201 = vpack.c.b16 %v5197, %v5196
      %v5207 = vsel %vm4583, %v5171, 0
      %v5210 = vsel %vm4583, %v5172, 0
      %5212 = vmatprep.subr.bf16.mxu0 0
      %5213 = vmatpush1.bf16.msra.mxu0 %v5198
      %5214 = vmatprep.subr.bf16.mxu0 0
      %5215 = vmatpush1.bf16.msra.mxu0 %v5199
      %5216 = vmatprep.subr.bf16.mxu0 0
      %5217 = vmatpush1.bf16.msra.mxu0 %v5200
      %5218 = vmatprep.subr.bf16.mxu0 0
      %5219 = vmatpush1.bf16.msra.mxu0 %v5201
      %5220 = vmatprep.subr.bf16.mxu0 0
      %5221 = vmatpush1.bf16.msra.mxu0 0
      %5222 = vmatprep.subr.bf16.mxu0 0
      %5223 = vmatpush1.bf16.msra.mxu0 0
      %5224 = vmatprep.subr.bf16.mxu0 0
      %5225 = vmatpush1.bf16.msra.mxu0 0
      %5226 = vmatprep.subr.bf16.mxu0 0
      %5227 = vmatpush1.bf16.msra.mxu0 0
      %5228 = vmatprep.subr.bf16.mxu0 0
      %5229 = vmatpush1.bf16.msra.mxu0 0
      %5230 = vmatprep.subr.bf16.mxu0 0
      %5231 = vmatpush1.bf16.msra.mxu0 0
      %5232 = vmatprep.subr.bf16.mxu0 0
      %5233 = vmatpush1.bf16.msra.mxu0 0
      %5234 = vmatprep.subr.bf16.mxu0 0
      %5235 = vmatpush1.bf16.msra.mxu0 0
      %5236 = vmatprep.subr.bf16.mxu0 0
      %5237 = vmatpush1.bf16.msra.mxu0 0
      %5238 = vmatprep.subr.bf16.mxu0 0
      %5239 = vmatpush1.bf16.msra.mxu0 0
      %5240 = vmatprep.subr.bf16.mxu0 0
      %5241 = vmatpush1.bf16.msra.mxu0 0
      %5242 = vmatprep.subr.bf16.mxu0 0
      %5243 = vmatpush1.bf16.msra.mxu0 0
      %5244 = vmatprep.mubr.bf16.mxu0 0
      %5245 = vmatmul.mubr.bf16.gmra.mrb[0].mxu0 %v5207
      %v5246 = vpop.f32.mrb[0].mxu0
      %v5247 = vadd.f32 0.0, %v5246
      %v5248 = vpop.f32.mrb[0].mxu0
      %v5249 = vpop.f32.mrb[0].mxu0
      %v5250 = vadd.f32 0.0, %v5249
      %v5251 = vpop.f32.mrb[0].mxu0
      %5252 = vmatprep.mubr.bf16.mxu0 0
      %5253 = vmatmul.mubr.bf16.gmra.mrb[0].mxu0 %v5210
      %v5254 = vpop.f32.mrb[0].mxu0
      %v5255 = vadd.f32 0.0, %v5254
      %v5256 = vpop.f32.mrb[0].mxu0
      %v5257 = vpop.f32.mrb[0].mxu0
      %v5258 = vadd.f32 0.0, %v5257
      %v5259 = vpop.f32.mrb[0].mxu0
      %5260 = vdwg.mxu0
      %v5261 = vadd.f32 %v5159, %v5247
      %v5262 = vadd.f32 %v5160, %v5250
      %v5263 = vadd.f32 %v5161, %v5255
      %v5264 = vadd.f32 %v5162, %v5258
      %s5265 = scalar_lea.vmem [#allocation4], 11
      %v5266 = vld [vmem:[%s5265] ss:$2 sm:$0xff]
      %s5267 = scalar_lea.vmem [#allocation4], 27
      %v5268 = vld [vmem:[%s5267] ss:$2 sm:$0xff]
      %s5269 = scalar_lea.vmem [#allocation4], 43
      %v5270 = vld [vmem:[%s5269] ss:$2 sm:$0xff]
      %s5271 = scalar_lea.vmem [#allocation4], 59
      %v5272 = vld [vmem:[%s5271] ss:$2 sm:$0x1]
      %v5273 = vpack.c.bf16 %v5268, %v5266
      %v5274 = vpack.c.bf16 %v5272, %v5270
      %s5275 = scalar_lea.vmem %s5, 192
      %v5276 = vld [vmem:[%s5275] sm:$0xf]
      %v5277 = vld [vmem:[%s5275 + $0x4] sm:$0xf]
      %v5278 = vld [vmem:[%s5275 + $0x8] sm:$0xf]
      %v5279 = vld [vmem:[%s5275 + $0xc] sm:$0xf]
      %v5280 = vld [vmem:[%s5275 + $0x10] sm:$0xf]
      %v5281 = vld [vmem:[%s5275 + $0x14] sm:$0xf]
      %v5282 = vld [vmem:[%s5275 + $0x18] sm:$0xf]
      %v5283 = vld [vmem:[%s5275 + $0x1c] sm:$0xf]
      %v5292 = vunpack.c.l.b16 %v5276
      %v5293 = vunpack.c.l.b16 %v5277
      %v5294 = vunpack.c.l.b16 %v5278
      %v5295 = vunpack.c.l.b16 %v5279
      %v5296 = vunpack.c.l.b16 %v5280
      %v5297 = vunpack.c.l.b16 %v5281
      %v5298 = vunpack.c.l.b16 %v5282
      %v5299 = vunpack.c.l.b16 %v5283
      %v5300 = vpack.c.b16 %v5293, %v5292
      %v5301 = vpack.c.b16 %v5295, %v5294
      %v5302 = vpack.c.b16 %v5297, %v5296
      %v5303 = vpack.c.b16 %v5299, %v5298
      %v5309 = vsel %vm4583, %v5273, 0
      %v5312 = vsel %vm4583, %v5274, 0
      %5314 = vmatprep.subr.bf16.mxu0 0
      %5315 = vmatpush1.bf16.msra.mxu0 %v5300
      %5316 = vmatprep.subr.bf16.mxu0 0
      %5317 = vmatpush1.bf16.msra.mxu0 %v5301
      %5318 = vmatprep.subr.bf16.mxu0 0
      %5319 = vmatpush1.bf16.msra.mxu0 %v5302
      %5320 = vmatprep.subr.bf16.mxu0 0
      %5321 = vmatpush1.bf16.msra.mxu0 %v5303
      %5322 = vmatprep.subr.bf16.mxu0 0
      %5323 = vmatpush1.bf16.msra.mxu0 0
      %5324 = vmatprep.subr.bf16.mxu0 0
      %5325 = vmatpush1.bf16.msra.mxu0 0
      %5326 = vmatprep.subr.bf16.mxu0 0
      %5327 = vmatpush1.bf16.msra.mxu0 0
      %5328 = vmatprep.subr.bf16.mxu0 0
      %5329 = vmatpush1.bf16.msra.mxu0 0
      %5330 = vmatprep.subr.bf16.mxu0 0
      %5331 = vmatpush1.bf16.msra.mxu0 0
      %5332 = vmatprep.subr.bf16.mxu0 0
      %5333 = vmatpush1.bf16.msra.mxu0 0
      %5334 = vmatprep.subr.bf16.mxu0 0
      %5335 = vmatpush1.bf16.msra.mxu0 0
      %5336 = vmatprep.subr.bf16.mxu0 0
      %5337 = vmatpush1.bf16.msra.mxu0 0
      %5338 = vmatprep.subr.bf16.mxu0 0
      %5339 = vmatpush1.bf16.msra.mxu0 0
      %5340 = vmatprep.subr.bf16.mxu0 0
      %5341 = vmatpush1.bf16.msra.mxu0 0
      %5342 = vmatprep.subr.bf16.mxu0 0
      %5343 = vmatpush1.bf16.msra.mxu0 0
      %5344 = vmatprep.subr.bf16.mxu0 0
      %5345 = vmatpush1.bf16.msra.mxu0 0
      %5346 = vmatprep.mubr.bf16.mxu0 0
      %5347 = vmatmul.mubr.bf16.gmra.mrb[0].mxu0 %v5309
      %v5348 = vpop.f32.mrb[0].mxu0
      %v5349 = vadd.f32 0.0, %v5348
      %v5350 = vpop.f32.mrb[0].mxu0
      %v5351 = vpop.f32.mrb[0].mxu0
      %v5352 = vadd.f32 0.0, %v5351
      %v5353 = vpop.f32.mrb[0].mxu0
      %5354 = vmatprep.mubr.bf16.mxu0 0
      %5355 = vmatmul.mubr.bf16.gmra.mrb[0].mxu0 %v5312
      %v5356 = vpop.f32.mrb[0].mxu0
      %v5357 = vadd.f32 0.0, %v5356
      %v5358 = vpop.f32.mrb[0].mxu0
      %v5359 = vpop.f32.mrb[0].mxu0
      %v5360 = vadd.f32 0.0, %v5359
      %v5361 = vpop.f32.mrb[0].mxu0
      %5362 = vdwg.mxu0
      %v5363 = vadd.f32 %v5261, %v5349
      %v5364 = vadd.f32 %v5262, %v5352
      %v5365 = vadd.f32 %v5263, %v5357
      %v5366 = vadd.f32 %v5264, %v5360
      %v5368 = vlaneseq
      %v5369 = vshrl.u32 %v5368, 7
      %v5370 = vsub.s32 0, %v5369
      %v5371 = vrot.slane %v4661, %v5370
      %v5373 = vadd.f32 %v5363, %v5371
      %v5374 = vadd.f32 %v5364, %v5371
      %v5375 = vadd.f32 %v5365, %v5371
      %v5376 = vadd.f32 %v5366, %v5371
      %v5377 = vmax.f32 %v5373, 0.0
      %v5378 = vmax.f32 %v5374, 0.0
      %v5379 = vmax.f32 %v5375, 0.0
      %v5380 = vmax.f32 %v5376, 0.0
      %5381 = vst [vmem:[#allocation7 + $0x8] sm:$0xff] %v5377
      %5382 = vst [vmem:[#allocation7 + $0x10] sm:$0xff] %v5378
      %5383 = vst [vmem:[#allocation7 + $0x18] sm:$0xff] %v5379
      %5384 = vst [vmem:[#allocation7 + $0x20] sm:$0x1] %v5380
      %s5385 = scalar_lea.vmem [#allocation7], 7
      %v5386 = vld [vmem:[%s5385] ss:$2 sm:$0xff]
      %s5387 = scalar_lea.vmem [#allocation7], 23
      %v5388 = vld [vmem:[%s5387] ss:$2 sm:$0x1f]
      %s5389 = scalar_lea.vmem [#allocation7], 8
      %v5390 = vld [vmem:[%s5389] ss:$2 sm:$0xff]
      %s5391 = scalar_lea.vmem [#allocation7], 24
      %v5392 = vld [vmem:[%s5391] ss:$2 sm:$0x1f]
      %s5393 = scalar_lea.vmem [#allocation7], 9
      %v5394 = vld [vmem:[%s5393] ss:$2 sm:$0xff]
      %s5395 = scalar_lea.vmem [#allocation7], 25
      %v5396 = vld [vmem:[%s5395] ss:$2 sm:$0x1f]
      %v5397 = vmax.f32 %v5386, %v5390
      %v5398 = vmax.f32 %v5388, %v5392
      %v5399 = vmax.f32 %v5397, %v5394
      %v5400 = vmax.f32 %v5398, %v5396
      %v5401 = vlaneseq
      %vm5402 = vcmp.ge.s32.totalorder %v5401, 0
      %vm5403 = vcmp.lt.s32.totalorder %v5401, 128
      %vm5404 = vmand %vm5402, %vm5403
      %5405 = vst.msk [vmem:[#allocation8] sm:$0x1] %vm5404, %v5399
      %v5408 = vunpack.c.l.s4 1966171168
      %v5409 = vunpack.c.0.s8 %v5408
      %v5410 = vlaneseq
      %v5411 = vshrl.u32 %v5410, 7
      %v5412 = vsub.s32 %v5409, %v5411
      %v5413 = vrot.slane %v5399, %v5412
      %v5414 = vcombine.high %v5413, %v5413
      %v5416 = vunpack.c.l.s4 1966171168
      %v5417 = vunpack.c.0.s8 %v5416
      %v5418 = vlaneseq
      %v5419 = vshrl.u32 %v5418, 7
      %v5420 = vsub.s32 %v5417, %v5419
      %v5421 = vrot.slane %v5413, %v5420
      %v5423 = vunpack.c.l.s4 1966171168
      %v5424 = vunpack.c.0.s8 %v5423
      %v5425 = vlaneseq
      %v5426 = vshrl.u32 %v5425, 7
      %v5427 = vsub.s32 %v5424, %v5426
      %v5428 = vrot.slane %v5414, %v5427
      %5430 = vst.msk [vmem:[#allocation8 + $0x1] sm:$0x1] %vm5404, %v5428
      %v5431 = vcombine.high %v5421, %v5421
      %5433 = vst.msk [vmem:[#allocation8 + $0x2] sm:$0x1] %vm5404, %v5431
      %v5434 = vcombine.high %v5428, %v5428
      %5436 = vst.msk [vmem:[#allocation8 + $0x3] sm:$0x1] %vm5404, %v5434
      %v5437 = vcombine.high %v5399, %v5399
      %v5439 = vunpack.c.l.s4 1966171168
      %v5440 = vunpack.c.0.s8 %v5439
      %v5441 = vlaneseq
      %v5442 = vshrl.u32 %v5441, 7
      %v5443 = vsub.s32 %v5440, %v5442
      %v5444 = vrot.slane %v5437, %v5443
      %v5446 = vunpack.c.l.s4 1966171168
      %v5447 = vunpack.c.0.s8 %v5446
      %v5448 = vlaneseq
      %v5449 = vshrl.u32 %v5448, 7
      %v5450 = vsub.s32 %v5447, %v5449
      %v5451 = vrot.slane %v5444, %v5450
      %5453 = vst.msk [vmem:[#allocation8 + $0x4] sm:$0x1] %vm5404, %v5451
      %v5454 = vcombine.high %v5444, %v5444
      %v5456 = vunpack.c.l.s4 1966171168
      %v5457 = vunpack.c.0.s8 %v5456
      %v5458 = vlaneseq
      %v5459 = vshrl.u32 %v5458, 7
      %v5460 = vsub.s32 %v5457, %v5459
      %v5461 = vrot.slane %v5454, %v5460
      %5463 = vst.msk [vmem:[#allocation8 + $0x5] sm:$0x1] %vm5404, %v5461
      %v5464 = vcombine.high %v5451, %v5451
      %5466 = vst.msk [vmem:[#allocation8 + $0x6] sm:$0x1] %vm5404, %v5464
      %v5467 = vcombine.high %v5461, %v5461
      %5469 = vst.msk [vmem:[#allocation8 + $0x7] sm:$0x1] %vm5404, %v5467
      %5470 = vst.msk [vmem:[#allocation8 + $0x8] sm:$0x1] %vm5404, %v5400
      %v5473 = vunpack.c.l.s4 1966171168
      %v5474 = vunpack.c.0.s8 %v5473
      %v5475 = vlaneseq
      %v5476 = vshrl.u32 %v5475, 7
      %v5477 = vsub.s32 %v5474, %v5476
      %v5478 = vrot.slane %v5400, %v5477
      %v5479 = vcombine.high %v5478, %v5478
      %v5481 = vunpack.c.l.s4 1966171168
      %v5482 = vunpack.c.0.s8 %v5481
      %v5483 = vlaneseq
      %v5484 = vshrl.u32 %v5483, 7
      %v5485 = vsub.s32 %v5482, %v5484
      %v5486 = vrot.slane %v5478, %v5485
      %v5488 = vunpack.c.l.s4 1966171168
      %v5489 = vunpack.c.0.s8 %v5488
      %v5490 = vlaneseq
      %v5491 = vshrl.u32 %v5490, 7
      %v5492 = vsub.s32 %v5489, %v5491
      %v5493 = vrot.slane %v5479, %v5492
      %5495 = vst.msk [vmem:[#allocation8 + $0x9] sm:$0x1] %vm5404, %v5493
      %v5496 = vcombine.high %v5486, %v5486
      %5498 = vst.msk [vmem:[#allocation8 + $0xa] sm:$0x1] %vm5404, %v5496
      %v5499 = vcombine.high %v5493, %v5493
      %5501 = vst.msk [vmem:[#allocation8 + $0xb] sm:$0x1] %vm5404, %v5499
      %v5502 = vcombine.high %v5400, %v5400
      %v5504 = vunpack.c.l.s4 1966171168
      %v5505 = vunpack.c.0.s8 %v5504
      %v5506 = vlaneseq
      %v5507 = vshrl.u32 %v5506, 7
      %v5508 = vsub.s32 %v5505, %v5507
      %v5509 = vrot.slane %v5502, %v5508
      %v5511 = vunpack.c.l.s4 1966171168
      %v5512 = vunpack.c.0.s8 %v5511
      %v5513 = vlaneseq
      %v5514 = vshrl.u32 %v5513, 7
      %v5515 = vsub.s32 %v5512, %v5514
      %v5516 = vrot.slane %v5509, %v5515
      %5518 = vst.msk [vmem:[#allocation8 + $0xc] sm:$0x1] %vm5404, %v5516
      %v5519 = vld [vmem:[#allocation8] sm:$0xff]
      %v5520 = vld [vmem:[#allocation8 + $0x8] sm:$0x1f]
      %v5523 = vlaneseq
      %v5524 = vshrl.u32 %v5523, 7
      %v5525 = vsub.s32 0, %v5524
      %v5526 = vrot.slane %v5519, %v5525
      %v5527 = vlaneseq
      %v5528 = vshrl.u32 %v5527, 7
      %v5529 = vsub.s32 1, %v5528
      %v5530 = vrot.slane %v5519, %v5529
      %v5531 = vlaneseq
      %v5532 = vshrl.u32 %v5531, 7
      %v5533 = vsub.s32 2, %v5532
      %v5534 = vrot.slane %v5519, %v5533
      %v5535 = vlaneseq
      %v5536 = vshrl.u32 %v5535, 7
      %v5537 = vsub.s32 3, %v5536
      %v5538 = vrot.slane %v5519, %v5537
      %v5539 = vlaneseq
      %v5540 = vshrl.u32 %v5539, 7
      %v5541 = vsub.s32 4, %v5540
      %v5542 = vrot.slane %v5519, %v5541
      %v5543 = vlaneseq
      %v5544 = vshrl.u32 %v5543, 7
      %v5545 = vsub.s32 5, %v5544
      %v5546 = vrot.slane %v5519, %v5545
      %v5547 = vlaneseq
      %v5548 = vshrl.u32 %v5547, 7
      %v5549 = vsub.s32 6, %v5548
      %v5550 = vrot.slane %v5519, %v5549
      %v5551 = vlaneseq
      %v5552 = vshrl.u32 %v5551, 7
      %v5553 = vsub.s32 7, %v5552
      %v5554 = vrot.slane %v5519, %v5553
      %v5555 = vlaneseq
      %v5556 = vshrl.u32 %v5555, 7
      %v5557 = vsub.s32 0, %v5556
      %v5558 = vrot.slane %v5520, %v5557
      %v5559 = vlaneseq
      %v5560 = vshrl.u32 %v5559, 7
      %v5561 = vsub.s32 1, %v5560
      %v5562 = vrot.slane %v5520, %v5561
      %v5563 = vlaneseq
      %v5564 = vshrl.u32 %v5563, 7
      %v5565 = vsub.s32 2, %v5564
      %v5566 = vrot.slane %v5520, %v5565
      %v5567 = vlaneseq
      %v5568 = vshrl.u32 %v5567, 7
      %v5569 = vsub.s32 3, %v5568
      %v5570 = vrot.slane %v5520, %v5569
      %v5571 = vlaneseq
      %v5572 = vshrl.u32 %v5571, 7
      %v5573 = vsub.s32 4, %v5572
      %v5574 = vrot.slane %v5520, %v5573
      %v5588 = vpack.c.bf16 %v5526, %v5526
      %v5589 = vpack.c.bf16 %v5530, %v5530
      %v5590 = vpack.c.bf16 %v5534, %v5534
      %v5591 = vpack.c.bf16 %v5538, %v5538
      %v5592 = vpack.c.bf16 %v5542, %v5542
      %v5593 = vpack.c.bf16 %v5546, %v5546
      %v5594 = vpack.c.bf16 %v5550, %v5550
      %v5595 = vpack.c.bf16 %v5554, %v5554
      %v5596 = vpack.c.bf16 %v5558, %v5558
      %v5597 = vpack.c.bf16 %v5562, %v5562
      %v5598 = vpack.c.bf16 %v5566, %v5566
      %v5599 = vpack.c.bf16 %v5570, %v5570
      %v5600 = vpack.c.bf16 %v5574, %v5574
      %v5601 = vld [vmem:[%s7] sm:$0xf]
      %v5602 = vld [vmem:[%s7 + $0x4] sm:$0xf]
      %v5603 = vld [vmem:[%s7 + $0x8] sm:$0xf]
      %v5604 = vld [vmem:[%s7 + $0xc] sm:$0xf]
      %v5605 = vld [vmem:[%s7 + $0x10] sm:$0xf]
      %v5606 = vld [vmem:[%s7 + $0x14] sm:$0xf]
      %v5607 = vld [vmem:[%s7 + $0x18] sm:$0xf]
      %v5608 = vld [vmem:[%s7 + $0x1c] sm:$0xf]
      %v5609 = vld [vmem:[%s7 + $0x20] sm:$0xf]
      %v5610 = vld [vmem:[%s7 + $0x24] sm:$0xf]
      %v5611 = vld [vmem:[%s7 + $0x28] sm:$0xf]
      %v5612 = vld [vmem:[%s7 + $0x2c] sm:$0xf]
      %v5613 = vld [vmem:[%s7 + $0x30] sm:$0xf]
      %v5614 = vld [vmem:[%s7 + $0x34] sm:$0xf]
      %v5615 = vld [vmem:[%s7 + $0x38] sm:$0xf]
      %v5616 = vld [vmem:[%s7 + $0x3c] sm:$0xf]
      %v5617 = vld [vmem:[%s7 + $0x40] sm:$0xf]
      %v5618 = vld [vmem:[%s7 + $0x44] sm:$0xf]
      %v5619 = vld [vmem:[%s7 + $0x48] sm:$0xf]
      %v5620 = vld [vmem:[%s7 + $0x4c] sm:$0xf]
      %v5621 = vld [vmem:[%s7 + $0x50] sm:$0xf]
      %v5622 = vld [vmem:[%s7 + $0x54] sm:$0xf]
      %v5623 = vld [vmem:[%s7 + $0x58] sm:$0xf]
      %v5624 = vld [vmem:[%s7 + $0x5c] sm:$0xf]
      %v5625 = vld [vmem:[%s7 + $0x60] sm:$0xf]
      %v5626 = vld [vmem:[%s7 + $0x64] sm:$0xf]
      %v5627 = vld [vmem:[%s7 + $0x68] sm:$0xf]
      %v5628 = vld [vmem:[%s7 + $0x6c] sm:$0xf]
      %v5629 = vld [vmem:[%s7 + $0x70] sm:$0xf]
      %v5630 = vld [vmem:[%s7 + $0x74] sm:$0xf]
      %v5631 = vld [vmem:[%s7 + $0x78] sm:$0xf]
      %v5632 = vld [vmem:[%s7 + $0x7c] sm:$0xf]
      %v5633 = vld [vmem:[%s7 + $0x80] sm:$0xf]
      %v5634 = vld [vmem:[%s7 + $0x84] sm:$0xf]
      %v5635 = vld [vmem:[%s7 + $0x88] sm:$0xf]
      %v5636 = vld [vmem:[%s7 + $0x8c] sm:$0xf]
      %v5637 = vld [vmem:[%s7 + $0x90] sm:$0xf]
      %v5638 = vld [vmem:[%s7 + $0x94] sm:$0xf]
      %v5639 = vld [vmem:[%s7 + $0x98] sm:$0xf]
      %v5640 = vld [vmem:[%s7 + $0x9c] sm:$0xf]
      %v5641 = vld [vmem:[%s7 + $0xa0] sm:$0xf]
      %v5642 = vld [vmem:[%s7 + $0xa4] sm:$0xf]
      %v5643 = vld [vmem:[%s7 + $0xa8] sm:$0xf]
      %v5644 = vld [vmem:[%s7 + $0xac] sm:$0xf]
      %v5645 = vld [vmem:[%s7 + $0xb0] sm:$0xf]
      %v5646 = vld [vmem:[%s7 + $0xb4] sm:$0xf]
      %v5647 = vld [vmem:[%s7 + $0xb8] sm:$0xf]
      %v5648 = vld [vmem:[%s7 + $0xbc] sm:$0xf]
      %v5649 = vld [vmem:[%s7 + $0xc0] sm:$0xf]
      %v5650 = vld [vmem:[%s7 + $0xc4] sm:$0xf]
      %v5651 = vld [vmem:[%s7 + $0xc8] sm:$0xf]
      %v5652 = vld [vmem:[%s7 + $0xcc] sm:$0xf]
      %v5653 = vld [vmem:[%s7 + $0xd0] sm:$0xf]
      %v5654 = vld [vmem:[%s7 + $0xd4] sm:$0xf]
      %v5655 = vld [vmem:[%s7 + $0xd8] sm:$0xf]
      %v5656 = vld [vmem:[%s7 + $0xdc] sm:$0xf]
      %v5657 = vld [vmem:[%s7 + $0xe0] sm:$0xf]
      %v5658 = vld [vmem:[%s7 + $0xe4] sm:$0xf]
      %v5659 = vld [vmem:[%s7 + $0xe8] sm:$0xf]
      %v5660 = vld [vmem:[%s7 + $0xec] sm:$0xf]
      %v5661 = vld [vmem:[%s7 + $0xf0] sm:$0xf]
      %v5662 = vld [vmem:[%s7 + $0xf4] sm:$0xf]
      %v5663 = vld [vmem:[%s7 + $0xf8] sm:$0xf]
      %v5664 = vld [vmem:[%s7 + $0xfc] sm:$0xf]
      %v5665 = vld [vmem:[%s7 + $0x100] sm:$0xf]
      %v5666 = vld [vmem:[%s7 + $0x104] sm:$0xf]
      %v5667 = vld [vmem:[%s7 + $0x108] sm:$0xf]
      %v5668 = vld [vmem:[%s7 + $0x10c] sm:$0xf]
      %v5669 = vld [vmem:[%s7 + $0x110] sm:$0xf]
      %v5670 = vld [vmem:[%s7 + $0x114] sm:$0xf]
      %v5671 = vld [vmem:[%s7 + $0x118] sm:$0xf]
      %v5672 = vld [vmem:[%s7 + $0x11c] sm:$0xf]
      %v5673 = vld [vmem:[%s7 + $0x120] sm:$0xf]
      %v5674 = vld [vmem:[%s7 + $0x124] sm:$0xf]
      %v5675 = vld [vmem:[%s7 + $0x128] sm:$0xf]
      %v5676 = vld [vmem:[%s7 + $0x12c] sm:$0xf]
      %v5677 = vld [vmem:[%s7 + $0x130] sm:$0xf]
      %v5678 = vld [vmem:[%s7 + $0x134] sm:$0xf]
      %v5679 = vld [vmem:[%s7 + $0x138] sm:$0xf]
      %v5680 = vld [vmem:[%s7 + $0x13c] sm:$0xf]
      %v5681 = vld [vmem:[%s7 + $0x140] sm:$0xf]
      %v5682 = vld [vmem:[%s7 + $0x144] sm:$0xf]
      %v5683 = vld [vmem:[%s7 + $0x148] sm:$0xf]
      %v5684 = vld [vmem:[%s7 + $0x14c] sm:$0xf]
      %v5685 = vld [vmem:[%s7 + $0x150] sm:$0xf]
      %v5686 = vld [vmem:[%s7 + $0x154] sm:$0xf]
      %v5687 = vld [vmem:[%s7 + $0x158] sm:$0xf]
      %v5688 = vld [vmem:[%s7 + $0x15c] sm:$0xf]
      %v5689 = vld [vmem:[%s7 + $0x160] sm:$0xf]
      %v5690 = vld [vmem:[%s7 + $0x164] sm:$0xf]
      %v5691 = vld [vmem:[%s7 + $0x168] sm:$0xf]
      %v5692 = vld [vmem:[%s7 + $0x16c] sm:$0xf]
      %v5693 = vld [vmem:[%s7 + $0x170] sm:$0xf]
      %v5694 = vld [vmem:[%s7 + $0x174] sm:$0xf]
      %v5695 = vld [vmem:[%s7 + $0x178] sm:$0xf]
      %v5696 = vld [vmem:[%s7 + $0x17c] sm:$0xf]
      %v5697 = vld [vmem:[%s7 + $0x180] sm:$0xf]
      %v5698 = vld [vmem:[%s7 + $0x184] sm:$0xf]
      %v5699 = vld [vmem:[%s7 + $0x188] sm:$0xf]
      %v5700 = vld [vmem:[%s7 + $0x18c] sm:$0xf]
      %v5701 = vld [vmem:[%s7 + $0x190] sm:$0xf]
      %v5702 = vld [vmem:[%s7 + $0x194] sm:$0xf]
      %v5703 = vld [vmem:[%s7 + $0x198] sm:$0xf]
      %v5704 = vld [vmem:[%s7 + $0x19c] sm:$0xf]
      %v5705 = vld [vmem:[%s7 + $0x1a0] sm:$0xf]
      %v5706 = vld [vmem:[%s7 + $0x1a4] sm:$0xf]
      %v5707 = vld [vmem:[%s7 + $0x1a8] sm:$0xf]
      %v5708 = vld [vmem:[%s7 + $0x1ac] sm:$0xf]
      %v5709 = vld [vmem:[%s7 + $0x1b0] sm:$0xf]
      %v5710 = vld [vmem:[%s7 + $0x1b4] sm:$0xf]
      %v5711 = vld [vmem:[%s7 + $0x1b8] sm:$0xf]
      %v5712 = vld [vmem:[%s7 + $0x1bc] sm:$0xf]
      %v5713 = vld [vmem:[%s7 + $0x1c0] sm:$0xf]
      %v5714 = vld [vmem:[%s7 + $0x1c4] sm:$0xf]
      %v5715 = vld [vmem:[%s7 + $0x1c8] sm:$0xf]
      %v5716 = vld [vmem:[%s7 + $0x1cc] sm:$0xf]
      %v5717 = vld [vmem:[%s7 + $0x1d0] sm:$0xf]
      %v5718 = vld [vmem:[%s7 + $0x1d4] sm:$0xf]
      %v5719 = vld [vmem:[%s7 + $0x1d8] sm:$0xf]
      %v5720 = vld [vmem:[%s7 + $0x1dc] sm:$0xf]
      %v5721 = vld [vmem:[%s7 + $0x1e0] sm:$0xf]
      %v5722 = vld [vmem:[%s7 + $0x1e4] sm:$0xf]
      %v5723 = vld [vmem:[%s7 + $0x1e8] sm:$0xf]
      %v5724 = vld [vmem:[%s7 + $0x1ec] sm:$0xf]
      %v5725 = vld [vmem:[%s7 + $0x1f0] sm:$0xf]
      %v5726 = vld [vmem:[%s7 + $0x1f4] sm:$0xf]
      %v5727 = vld [vmem:[%s7 + $0x1f8] sm:$0xf]
      %v5728 = vld [vmem:[%s7 + $0x1fc] sm:$0xf]
      %v5729 = vld [vmem:[%s7 + $0x200] sm:$0xf]
      %v5730 = vld [vmem:[%s7 + $0x204] sm:$0xf]
      %v5731 = vld [vmem:[%s7 + $0x208] sm:$0xf]
      %v5732 = vld [vmem:[%s7 + $0x20c] sm:$0xf]
      %v5733 = vld [vmem:[%s7 + $0x210] sm:$0xf]
      %v5734 = vld [vmem:[%s7 + $0x214] sm:$0xf]
      %v5735 = vld [vmem:[%s7 + $0x218] sm:$0xf]
      %v5736 = vld [vmem:[%s7 + $0x21c] sm:$0xf]
      %v5737 = vld [vmem:[%s7 + $0x220] sm:$0xf]
      %v5738 = vld [vmem:[%s7 + $0x224] sm:$0xf]
      %v5739 = vld [vmem:[%s7 + $0x228] sm:$0xf]
      %v5740 = vld [vmem:[%s7 + $0x22c] sm:$0xf]
      %v5741 = vld [vmem:[%s7 + $0x230] sm:$0xf]
      %v5742 = vld [vmem:[%s7 + $0x234] sm:$0xf]
      %v5743 = vld [vmem:[%s7 + $0x238] sm:$0xf]
      %v5744 = vld [vmem:[%s7 + $0x23c] sm:$0xf]
      %v5745 = vld [vmem:[%s7 + $0x240] sm:$0xf]
      %v5746 = vld [vmem:[%s7 + $0x244] sm:$0xf]
      %v5747 = vld [vmem:[%s7 + $0x248] sm:$0xf]
      %v5748 = vld [vmem:[%s7 + $0x24c] sm:$0xf]
      %v5749 = vld [vmem:[%s7 + $0x250] sm:$0xf]
      %v5750 = vld [vmem:[%s7 + $0x254] sm:$0xf]
      %v5751 = vld [vmem:[%s7 + $0x258] sm:$0xf]
      %v5752 = vld [vmem:[%s7 + $0x25c] sm:$0xf]
      %v5753 = vld [vmem:[%s7 + $0x260] sm:$0xf]
      %v5754 = vld [vmem:[%s7 + $0x264] sm:$0xf]
      %v5755 = vld [vmem:[%s7 + $0x268] sm:$0xf]
      %v5756 = vld [vmem:[%s7 + $0x26c] sm:$0xf]
      %v5757 = vld [vmem:[%s7 + $0x270] sm:$0xf]
      %v5758 = vld [vmem:[%s7 + $0x274] sm:$0xf]
      %v5759 = vld [vmem:[%s7 + $0x278] sm:$0xf]
      %v5760 = vld [vmem:[%s7 + $0x27c] sm:$0xf]
      %v5761 = vld [vmem:[%s7 + $0x280] sm:$0xf]
      %v5762 = vld [vmem:[%s7 + $0x284] sm:$0xf]
      %v5763 = vld [vmem:[%s7 + $0x288] sm:$0xf]
      %v5764 = vld [vmem:[%s7 + $0x28c] sm:$0xf]
      %v5765 = vld [vmem:[%s7 + $0x290] sm:$0xf]
      %v5766 = vld [vmem:[%s7 + $0x294] sm:$0xf]
      %v5767 = vld [vmem:[%s7 + $0x298] sm:$0xf]
      %v5768 = vld [vmem:[%s7 + $0x29c] sm:$0xf]
      %v5769 = vld [vmem:[%s7 + $0x2a0] sm:$0xf]
      %v5770 = vld [vmem:[%s7 + $0x2a4] sm:$0xf]
      %v5771 = vld [vmem:[%s7 + $0x2a8] sm:$0xf]
      %v5772 = vld [vmem:[%s7 + $0x2ac] sm:$0xf]
      %v5773 = vld [vmem:[%s7 + $0x2b0] sm:$0xf]
      %v5774 = vld [vmem:[%s7 + $0x2b4] sm:$0xf]
      %v5775 = vld [vmem:[%s7 + $0x2b8] sm:$0xf]
      %v5776 = vld [vmem:[%s7 + $0x2bc] sm:$0xf]
      %v5777 = vld [vmem:[%s7 + $0x2c0] sm:$0xf]
      %v5778 = vld [vmem:[%s7 + $0x2c4] sm:$0xf]
      %v5779 = vld [vmem:[%s7 + $0x2c8] sm:$0xf]
      %v5780 = vld [vmem:[%s7 + $0x2cc] sm:$0xf]
      %v5781 = vld [vmem:[%s7 + $0x2d0] sm:$0xf]
      %v5782 = vld [vmem:[%s7 + $0x2d4] sm:$0xf]
      %v5783 = vld [vmem:[%s7 + $0x2d8] sm:$0xf]
      %v5784 = vld [vmem:[%s7 + $0x2dc] sm:$0xf]
      %v5785 = vld [vmem:[%s7 + $0x2e0] sm:$0xf]
      %v5786 = vld [vmem:[%s7 + $0x2e4] sm:$0xf]
      %v5787 = vld [vmem:[%s7 + $0x2e8] sm:$0xf]
      %v5788 = vld [vmem:[%s7 + $0x2ec] sm:$0xf]
      %v5789 = vld [vmem:[%s7 + $0x2f0] sm:$0xf]
      %v5790 = vld [vmem:[%s7 + $0x2f4] sm:$0xf]
      %v5791 = vld [vmem:[%s7 + $0x2f8] sm:$0xf]
      %v5792 = vld [vmem:[%s7 + $0x2fc] sm:$0xf]
      %v5793 = vld [vmem:[%s7 + $0x300] sm:$0xf]
      %v5794 = vld [vmem:[%s7 + $0x304] sm:$0xf]
      %v5795 = vld [vmem:[%s7 + $0x308] sm:$0xf]
      %v5796 = vld [vmem:[%s7 + $0x30c] sm:$0xf]
      %v5797 = vld [vmem:[%s7 + $0x310] sm:$0xf]
      %v5798 = vld [vmem:[%s7 + $0x314] sm:$0xf]
      %v5799 = vld [vmem:[%s7 + $0x318] sm:$0xf]
      %v5800 = vld [vmem:[%s7 + $0x31c] sm:$0xf]
      %v5801 = vld [vmem:[%s7 + $0x320] sm:$0xf]
      %v5802 = vld [vmem:[%s7 + $0x324] sm:$0xf]
      %v5803 = vld [vmem:[%s7 + $0x328] sm:$0xf]
      %v5804 = vld [vmem:[%s7 + $0x32c] sm:$0xf]
      %v5805 = vld [vmem:[%s7 + $0x330] sm:$0xf]
      %v5806 = vld [vmem:[%s7 + $0x334] sm:$0xf]
      %v5807 = vld [vmem:[%s7 + $0x338] sm:$0xf]
      %v5808 = vld [vmem:[%s7 + $0x33c] sm:$0xf]
      %v5809 = vld [vmem:[%s8] sm:$0x1]
      %v6018 = vunpack.c.l.b16 %v5601
      %v6019 = vunpack.c.l.b16 %v5602
      %v6020 = vunpack.c.l.b16 %v5603
      %v6021 = vunpack.c.l.b16 %v5604
      %v6022 = vunpack.c.l.b16 %v5605
      %v6023 = vunpack.c.l.b16 %v5606
      %v6024 = vunpack.c.l.b16 %v5607
      %v6025 = vunpack.c.l.b16 %v5608
      %v6026 = vunpack.c.l.b16 %v5609
      %v6027 = vunpack.c.l.b16 %v5610
      %v6028 = vunpack.c.l.b16 %v5611
      %v6029 = vunpack.c.l.b16 %v5612
      %v6030 = vunpack.c.l.b16 %v5613
      %v6031 = vunpack.c.l.b16 %v5614
      %v6032 = vunpack.c.l.b16 %v5615
      %v6033 = vunpack.c.l.b16 %v5616
      %v6034 = vunpack.c.l.b16 %v5617
      %v6035 = vunpack.c.l.b16 %v5618
      %v6036 = vunpack.c.l.b16 %v5619
      %v6037 = vunpack.c.l.b16 %v5620
      %v6038 = vunpack.c.l.b16 %v5621
      %v6039 = vunpack.c.l.b16 %v5622
      %v6040 = vunpack.c.l.b16 %v5623
      %v6041 = vunpack.c.l.b16 %v5624
      %v6042 = vunpack.c.l.b16 %v5625
      %v6043 = vunpack.c.l.b16 %v5626
      %v6044 = vunpack.c.l.b16 %v5627
      %v6045 = vunpack.c.l.b16 %v5628
      %v6046 = vunpack.c.l.b16 %v5629
      %v6047 = vunpack.c.l.b16 %v5630
      %v6048 = vunpack.c.l.b16 %v5631
      %v6049 = vunpack.c.l.b16 %v5632
      %v6050 = vunpack.c.l.b16 %v5633
      %v6051 = vunpack.c.l.b16 %v5634
      %v6052 = vunpack.c.l.b16 %v5635
      %v6053 = vunpack.c.l.b16 %v5636
      %v6054 = vunpack.c.l.b16 %v5637
      %v6055 = vunpack.c.l.b16 %v5638
      %v6056 = vunpack.c.l.b16 %v5639
      %v6057 = vunpack.c.l.b16 %v5640
      %v6058 = vunpack.c.l.b16 %v5641
      %v6059 = vunpack.c.l.b16 %v5642
      %v6060 = vunpack.c.l.b16 %v5643
      %v6061 = vunpack.c.l.b16 %v5644
      %v6062 = vunpack.c.l.b16 %v5645
      %v6063 = vunpack.c.l.b16 %v5646
      %v6064 = vunpack.c.l.b16 %v5647
      %v6065 = vunpack.c.l.b16 %v5648
      %v6066 = vunpack.c.l.b16 %v5649
      %v6067 = vunpack.c.l.b16 %v5650
      %v6068 = vunpack.c.l.b16 %v5651
      %v6069 = vunpack.c.l.b16 %v5652
      %v6070 = vunpack.c.l.b16 %v5653
      %v6071 = vunpack.c.l.b16 %v5654
      %v6072 = vunpack.c.l.b16 %v5655
      %v6073 = vunpack.c.l.b16 %v5656
      %v6074 = vunpack.c.l.b16 %v5657
      %v6075 = vunpack.c.l.b16 %v5658
      %v6076 = vunpack.c.l.b16 %v5659
      %v6077 = vunpack.c.l.b16 %v5660
      %v6078 = vunpack.c.l.b16 %v5661
      %v6079 = vunpack.c.l.b16 %v5662
      %v6080 = vunpack.c.l.b16 %v5663
      %v6081 = vunpack.c.l.b16 %v5664
      %v6082 = vunpack.c.l.b16 %v5665
      %v6083 = vunpack.c.l.b16 %v5666
      %v6084 = vunpack.c.l.b16 %v5667
      %v6085 = vunpack.c.l.b16 %v5668
      %v6086 = vunpack.c.l.b16 %v5669
      %v6087 = vunpack.c.l.b16 %v5670
      %v6088 = vunpack.c.l.b16 %v5671
      %v6089 = vunpack.c.l.b16 %v5672
      %v6090 = vunpack.c.l.b16 %v5673
      %v6091 = vunpack.c.l.b16 %v5674
      %v6092 = vunpack.c.l.b16 %v5675
      %v6093 = vunpack.c.l.b16 %v5676
      %v6094 = vunpack.c.l.b16 %v5677
      %v6095 = vunpack.c.l.b16 %v5678
      %v6096 = vunpack.c.l.b16 %v5679
      %v6097 = vunpack.c.l.b16 %v5680
      %v6098 = vunpack.c.l.b16 %v5681
      %v6099 = vunpack.c.l.b16 %v5682
      %v6100 = vunpack.c.l.b16 %v5683
      %v6101 = vunpack.c.l.b16 %v5684
      %v6102 = vunpack.c.l.b16 %v5685
      %v6103 = vunpack.c.l.b16 %v5686
      %v6104 = vunpack.c.l.b16 %v5687
      %v6105 = vunpack.c.l.b16 %v5688
      %v6106 = vunpack.c.l.b16 %v5689
      %v6107 = vunpack.c.l.b16 %v5690
      %v6108 = vunpack.c.l.b16 %v5691
      %v6109 = vunpack.c.l.b16 %v5692
      %v6110 = vunpack.c.l.b16 %v5693
      %v6111 = vunpack.c.l.b16 %v5694
      %v6112 = vunpack.c.l.b16 %v5695
      %v6113 = vunpack.c.l.b16 %v5696
      %v6114 = vunpack.c.l.b16 %v5697
      %v6115 = vunpack.c.l.b16 %v5698
      %v6116 = vunpack.c.l.b16 %v5699
      %v6117 = vunpack.c.l.b16 %v5700
      %v6118 = vunpack.c.l.b16 %v5701
      %v6119 = vunpack.c.l.b16 %v5702
      %v6120 = vunpack.c.l.b16 %v5703
      %v6121 = vunpack.c.l.b16 %v5704
      %v6122 = vunpack.c.l.b16 %v5705
      %v6123 = vunpack.c.l.b16 %v5706
      %v6124 = vunpack.c.l.b16 %v5707
      %v6125 = vunpack.c.l.b16 %v5708
      %v6126 = vunpack.c.l.b16 %v5709
      %v6127 = vunpack.c.l.b16 %v5710
      %v6128 = vunpack.c.l.b16 %v5711
      %v6129 = vunpack.c.l.b16 %v5712
      %v6130 = vunpack.c.l.b16 %v5713
      %v6131 = vunpack.c.l.b16 %v5714
      %v6132 = vunpack.c.l.b16 %v5715
      %v6133 = vunpack.c.l.b16 %v5716
      %v6134 = vunpack.c.l.b16 %v5717
      %v6135 = vunpack.c.l.b16 %v5718
      %v6136 = vunpack.c.l.b16 %v5719
      %v6137 = vunpack.c.l.b16 %v5720
      %v6138 = vunpack.c.l.b16 %v5721
      %v6139 = vunpack.c.l.b16 %v5722
      %v6140 = vunpack.c.l.b16 %v5723
      %v6141 = vunpack.c.l.b16 %v5724
      %v6142 = vunpack.c.l.b16 %v5725
      %v6143 = vunpack.c.l.b16 %v5726
      %v6144 = vunpack.c.l.b16 %v5727
      %v6145 = vunpack.c.l.b16 %v5728
      %v6146 = vunpack.c.l.b16 %v5729
      %v6147 = vunpack.c.l.b16 %v5730
      %v6148 = vunpack.c.l.b16 %v5731
      %v6149 = vunpack.c.l.b16 %v5732
      %v6150 = vunpack.c.l.b16 %v5733
      %v6151 = vunpack.c.l.b16 %v5734
      %v6152 = vunpack.c.l.b16 %v5735
      %v6153 = vunpack.c.l.b16 %v5736
      %v6154 = vunpack.c.l.b16 %v5737
      %v6155 = vunpack.c.l.b16 %v5738
      %v6156 = vunpack.c.l.b16 %v5739
      %v6157 = vunpack.c.l.b16 %v5740
      %v6158 = vunpack.c.l.b16 %v5741
      %v6159 = vunpack.c.l.b16 %v5742
      %v6160 = vunpack.c.l.b16 %v5743
      %v6161 = vunpack.c.l.b16 %v5744
      %v6162 = vunpack.c.l.b16 %v5745
      %v6163 = vunpack.c.l.b16 %v5746
      %v6164 = vunpack.c.l.b16 %v5747
      %v6165 = vunpack.c.l.b16 %v5748
      %v6166 = vunpack.c.l.b16 %v5749
      %v6167 = vunpack.c.l.b16 %v5750
      %v6168 = vunpack.c.l.b16 %v5751
      %v6169 = vunpack.c.l.b16 %v5752
      %v6170 = vunpack.c.l.b16 %v5753
      %v6171 = vunpack.c.l.b16 %v5754
      %v6172 = vunpack.c.l.b16 %v5755
      %v6173 = vunpack.c.l.b16 %v5756
      %v6174 = vunpack.c.l.b16 %v5757
      %v6175 = vunpack.c.l.b16 %v5758
      %v6176 = vunpack.c.l.b16 %v5759
      %v6177 = vunpack.c.l.b16 %v5760
      %v6178 = vunpack.c.l.b16 %v5761
      %v6179 = vunpack.c.l.b16 %v5762
      %v6180 = vunpack.c.l.b16 %v5763
      %v6181 = vunpack.c.l.b16 %v5764
      %v6182 = vunpack.c.l.b16 %v5765
      %v6183 = vunpack.c.l.b16 %v5766
      %v6184 = vunpack.c.l.b16 %v5767
      %v6185 = vunpack.c.l.b16 %v5768
      %v6186 = vunpack.c.l.b16 %v5769
      %v6187 = vunpack.c.l.b16 %v5770
      %v6188 = vunpack.c.l.b16 %v5771
      %v6189 = vunpack.c.l.b16 %v5772
      %v6190 = vunpack.c.l.b16 %v5773
      %v6191 = vunpack.c.l.b16 %v5774
      %v6192 = vunpack.c.l.b16 %v5775
      %v6193 = vunpack.c.l.b16 %v5776
      %v6194 = vunpack.c.l.b16 %v5777
      %v6195 = vunpack.c.l.b16 %v5778
      %v6196 = vunpack.c.l.b16 %v5779
      %v6197 = vunpack.c.l.b16 %v5780
      %v6198 = vunpack.c.l.b16 %v5781
      %v6199 = vunpack.c.l.b16 %v5782
      %v6200 = vunpack.c.l.b16 %v5783
      %v6201 = vunpack.c.l.b16 %v5784
      %v6202 = vunpack.c.l.b16 %v5785
      %v6203 = vunpack.c.l.b16 %v5786
      %v6204 = vunpack.c.l.b16 %v5787
      %v6205 = vunpack.c.l.b16 %v5788
      %v6206 = vunpack.c.l.b16 %v5789
      %v6207 = vunpack.c.l.b16 %v5790
      %v6208 = vunpack.c.l.b16 %v5791
      %v6209 = vunpack.c.l.b16 %v5792
      %v6210 = vunpack.c.l.b16 %v5793
      %v6211 = vunpack.c.l.b16 %v5794
      %v6212 = vunpack.c.l.b16 %v5795
      %v6213 = vunpack.c.l.b16 %v5796
      %v6214 = vunpack.c.l.b16 %v5797
      %v6215 = vunpack.c.l.b16 %v5798
      %v6216 = vunpack.c.l.b16 %v5799
      %v6217 = vunpack.c.l.b16 %v5800
      %v6218 = vunpack.c.l.b16 %v5801
      %v6219 = vunpack.c.l.b16 %v5802
      %v6220 = vunpack.c.l.b16 %v5803
      %v6221 = vunpack.c.l.b16 %v5804
      %v6222 = vunpack.c.l.b16 %v5805
      %v6223 = vunpack.c.l.b16 %v5806
      %v6224 = vunpack.c.l.b16 %v5807
      %v6225 = vunpack.c.l.b16 %v5808
      %v6226 = vpack.c.b16 %v6019, %v6018
      %v6227 = vpack.c.b16 %v6021, %v6020
      %v6228 = vpack.c.b16 %v6023, %v6022
      %v6229 = vpack.c.b16 %v6025, %v6024
      %v6230 = vpack.c.b16 %v6027, %v6026
      %v6231 = vpack.c.b16 %v6029, %v6028
      %v6232 = vpack.c.b16 %v6031, %v6030
      %v6233 = vpack.c.b16 %v6033, %v6032
      %v6234 = vpack.c.b16 %v6035, %v6034
      %v6235 = vpack.c.b16 %v6037, %v6036
      %v6236 = vpack.c.b16 %v6039, %v6038
      %v6237 = vpack.c.b16 %v6041, %v6040
      %v6238 = vpack.c.b16 %v6043, %v6042
      %v6239 = vpack.c.b16 %v6045, %v6044
      %v6240 = vpack.c.b16 %v6047, %v6046
      %v6241 = vpack.c.b16 %v6049, %v6048
      %v6242 = vpack.c.b16 %v6051, %v6050
      %v6243 = vpack.c.b16 %v6053, %v6052
      %v6244 = vpack.c.b16 %v6055, %v6054
      %v6245 = vpack.c.b16 %v6057, %v6056
      %v6246 = vpack.c.b16 %v6059, %v6058
      %v6247 = vpack.c.b16 %v6061, %v6060
      %v6248 = vpack.c.b16 %v6063, %v6062
      %v6249 = vpack.c.b16 %v6065, %v6064
      %v6250 = vpack.c.b16 %v6067, %v6066
      %v6251 = vpack.c.b16 %v6069, %v6068
      %v6252 = vpack.c.b16 %v6071, %v6070
      %v6253 = vpack.c.b16 %v6073, %v6072
      %v6254 = vpack.c.b16 %v6075, %v6074
      %v6255 = vpack.c.b16 %v6077, %v6076
      %v6256 = vpack.c.b16 %v6079, %v6078
      %v6257 = vpack.c.b16 %v6081, %v6080
      %v6258 = vpack.c.b16 %v6083, %v6082
      %v6259 = vpack.c.b16 %v6085, %v6084
      %v6260 = vpack.c.b16 %v6087, %v6086
      %v6261 = vpack.c.b16 %v6089, %v6088
      %v6262 = vpack.c.b16 %v6091, %v6090
      %v6263 = vpack.c.b16 %v6093, %v6092
      %v6264 = vpack.c.b16 %v6095, %v6094
      %v6265 = vpack.c.b16 %v6097, %v6096
      %v6266 = vpack.c.b16 %v6099, %v6098
      %v6267 = vpack.c.b16 %v6101, %v6100
      %v6268 = vpack.c.b16 %v6103, %v6102
      %v6269 = vpack.c.b16 %v6105, %v6104
      %v6270 = vpack.c.b16 %v6107, %v6106
      %v6271 = vpack.c.b16 %v6109, %v6108
      %v6272 = vpack.c.b16 %v6111, %v6110
      %v6273 = vpack.c.b16 %v6113, %v6112
      %v6274 = vpack.c.b16 %v6115, %v6114
      %v6275 = vpack.c.b16 %v6117, %v6116
      %v6276 = vpack.c.b16 %v6119, %v6118
      %v6277 = vpack.c.b16 %v6121, %v6120
      %v6278 = vpack.c.b16 %v6123, %v6122
      %v6279 = vpack.c.b16 %v6125, %v6124
      %v6280 = vpack.c.b16 %v6127, %v6126
      %v6281 = vpack.c.b16 %v6129, %v6128
      %v6282 = vpack.c.b16 %v6131, %v6130
      %v6283 = vpack.c.b16 %v6133, %v6132
      %v6284 = vpack.c.b16 %v6135, %v6134
      %v6285 = vpack.c.b16 %v6137, %v6136
      %v6286 = vpack.c.b16 %v6139, %v6138
      %v6287 = vpack.c.b16 %v6141, %v6140
      %v6288 = vpack.c.b16 %v6143, %v6142
      %v6289 = vpack.c.b16 %v6145, %v6144
      %v6290 = vpack.c.b16 %v6147, %v6146
      %v6291 = vpack.c.b16 %v6149, %v6148
      %v6292 = vpack.c.b16 %v6151, %v6150
      %v6293 = vpack.c.b16 %v6153, %v6152
      %v6294 = vpack.c.b16 %v6155, %v6154
      %v6295 = vpack.c.b16 %v6157, %v6156
      %v6296 = vpack.c.b16 %v6159, %v6158
      %v6297 = vpack.c.b16 %v6161, %v6160
      %v6298 = vpack.c.b16 %v6163, %v6162
      %v6299 = vpack.c.b16 %v6165, %v6164
      %v6300 = vpack.c.b16 %v6167, %v6166
      %v6301 = vpack.c.b16 %v6169, %v6168
      %v6302 = vpack.c.b16 %v6171, %v6170
      %v6303 = vpack.c.b16 %v6173, %v6172
      %v6304 = vpack.c.b16 %v6175, %v6174
      %v6305 = vpack.c.b16 %v6177, %v6176
      %v6306 = vpack.c.b16 %v6179, %v6178
      %v6307 = vpack.c.b16 %v6181, %v6180
      %v6308 = vpack.c.b16 %v6183, %v6182
      %v6309 = vpack.c.b16 %v6185, %v6184
      %v6310 = vpack.c.b16 %v6187, %v6186
      %v6311 = vpack.c.b16 %v6189, %v6188
      %v6312 = vpack.c.b16 %v6191, %v6190
      %v6313 = vpack.c.b16 %v6193, %v6192
      %v6314 = vpack.c.b16 %v6195, %v6194
      %v6315 = vpack.c.b16 %v6197, %v6196
      %v6316 = vpack.c.b16 %v6199, %v6198
      %v6317 = vpack.c.b16 %v6201, %v6200
      %v6318 = vpack.c.b16 %v6203, %v6202
      %v6319 = vpack.c.b16 %v6205, %v6204
      %v6320 = vpack.c.b16 %v6207, %v6206
      %v6321 = vpack.c.b16 %v6209, %v6208
      %v6322 = vpack.c.b16 %v6211, %v6210
      %v6323 = vpack.c.b16 %v6213, %v6212
      %v6324 = vpack.c.b16 %v6215, %v6214
      %v6325 = vpack.c.b16 %v6217, %v6216
      %v6326 = vpack.c.b16 %v6219, %v6218
      %v6327 = vpack.c.b16 %v6221, %v6220
      %v6328 = vpack.c.b16 %v6223, %v6222
      %v6329 = vpack.c.b16 %v6225, %v6224
      %6434 = vmatprep.subr.bf16.mxu0 0
      %6435 = vmatpush1.bf16.msra.mxu0 %v6226
      %6436 = vmatprep.subr.bf16.mxu0 0
      %6437 = vmatpush1.bf16.msra.mxu0 %v6227
      %6438 = vmatprep.subr.bf16.mxu0 0
      %6439 = vmatpush1.bf16.msra.mxu0 %v6228
      %6440 = vmatprep.subr.bf16.mxu0 0
      %6441 = vmatpush1.bf16.msra.mxu0 %v6229
      %6442 = vmatprep.subr.bf16.mxu0 0
      %6443 = vmatpush1.bf16.msra.mxu0 %v6230
      %6444 = vmatprep.subr.bf16.mxu0 0
      %6445 = vmatpush1.bf16.msra.mxu0 %v6231
      %6446 = vmatprep.subr.bf16.mxu0 0
      %6447 = vmatpush1.bf16.msra.mxu0 %v6232
      %6448 = vmatprep.subr.bf16.mxu0 0
      %6449 = vmatpush1.bf16.msra.mxu0 %v6233
      %6450 = vmatprep.subr.bf16.mxu0 0
      %6451 = vmatpush1.bf16.msra.mxu0 %v6234
      %6452 = vmatprep.subr.bf16.mxu0 0
      %6453 = vmatpush1.bf16.msra.mxu0 %v6235
      %6454 = vmatprep.subr.bf16.mxu0 0
      %6455 = vmatpush1.bf16.msra.mxu0 %v6236
      %6456 = vmatprep.subr.bf16.mxu0 0
      %6457 = vmatpush1.bf16.msra.mxu0 %v6237
      %6458 = vmatprep.subr.bf16.mxu0 0
      %6459 = vmatpush1.bf16.msra.mxu0 %v6238
      %6460 = vmatprep.subr.bf16.mxu0 0
      %6461 = vmatpush1.bf16.msra.mxu0 %v6239
      %6462 = vmatprep.subr.bf16.mxu0 0
      %6463 = vmatpush1.bf16.msra.mxu0 %v6240
      %6464 = vmatprep.subr.bf16.mxu0 0
      %6465 = vmatpush1.bf16.msra.mxu0 %v6241
      %6466 = vmatprep.mubr.bf16.mxu0 %v5589
      %6467 = vmatmul.mubr.bf16.gmra.mrb[0].mxu0 %v5588
      %v6468 = vpop.f32.mrb[0].mxu0
      %v6469 = vadd.f32 %v5809, %v6468
      %v6470 = vpop.f32.mrb[0].mxu0
      %v6471 = vpop.f32.mrb[0].mxu0
      %v6472 = vpop.f32.mrb[0].mxu0
      %6473 = vdwg.mxu0
      %6474 = vmatprep.subr.bf16.mxu0 0
      %6475 = vmatpush1.bf16.msra.mxu0 %v6242
      %6476 = vmatprep.subr.bf16.mxu0 0
      %6477 = vmatpush1.bf16.msra.mxu0 %v6243
      %6478 = vmatprep.subr.bf16.mxu0 0
      %6479 = vmatpush1.bf16.msra.mxu0 %v6244
      %6480 = vmatprep.subr.bf16.mxu0 0
      %6481 = vmatpush1.bf16.msra.mxu0 %v6245
      %6482 = vmatprep.subr.bf16.mxu0 0
      %6483 = vmatpush1.bf16.msra.mxu0 %v6246
      %6484 = vmatprep.subr.bf16.mxu0 0
      %6485 = vmatpush1.bf16.msra.mxu0 %v6247
      %6486 = vmatprep.subr.bf16.mxu0 0
      %6487 = vmatpush1.bf16.msra.mxu0 %v6248
      %6488 = vmatprep.subr.bf16.mxu0 0
      %6489 = vmatpush1.bf16.msra.mxu0 %v6249
      %6490 = vmatprep.subr.bf16.mxu0 0
      %6491 = vmatpush1.bf16.msra.mxu0 %v6250
      %6492 = vmatprep.subr.bf16.mxu0 0
      %6493 = vmatpush1.bf16.msra.mxu0 %v6251
      %6494 = vmatprep.subr.bf16.mxu0 0
      %6495 = vmatpush1.bf16.msra.mxu0 %v6252
      %6496 = vmatprep.subr.bf16.mxu0 0
      %6497 = vmatpush1.bf16.msra.mxu0 %v6253
      %6498 = vmatprep.subr.bf16.mxu0 0
      %6499 = vmatpush1.bf16.msra.mxu0 %v6254
      %6500 = vmatprep.subr.bf16.mxu0 0
      %6501 = vmatpush1.bf16.msra.mxu0 %v6255
      %6502 = vmatprep.subr.bf16.mxu0 0
      %6503 = vmatpush1.bf16.msra.mxu0 %v6256
      %6504 = vmatprep.subr.bf16.mxu0 0
      %6505 = vmatpush1.bf16.msra.mxu0 %v6257
      %6506 = vmatprep.mubr.bf16.mxu0 %v5591
      %6507 = vmatmul.mubr.bf16.gmra.mrb[0].mxu0 %v5590
      %v6508 = vpop.f32.mrb[0].mxu0
      %v6509 = vadd.f32 %v6469, %v6508
      %v6510 = vpop.f32.mrb[0].mxu0
      %v6511 = vpop.f32.mrb[0].mxu0
      %v6512 = vpop.f32.mrb[0].mxu0
      %6513 = vdwg.mxu0
      %6514 = vmatprep.subr.bf16.mxu0 0
      %6515 = vmatpush1.bf16.msra.mxu0 %v6258
      %6516 = vmatprep.subr.bf16.mxu0 0
      %6517 = vmatpush1.bf16.msra.mxu0 %v6259
      %6518 = vmatprep.subr.bf16.mxu0 0
      %6519 = vmatpush1.bf16.msra.mxu0 %v6260
      %6520 = vmatprep.subr.bf16.mxu0 0
      %6521 = vmatpush1.bf16.msra.mxu0 %v6261
      %6522 = vmatprep.subr.bf16.mxu0 0
      %6523 = vmatpush1.bf16.msra.mxu0 %v6262
      %6524 = vmatprep.subr.bf16.mxu0 0
      %6525 = vmatpush1.bf16.msra.mxu0 %v6263
      %6526 = vmatprep.subr.bf16.mxu0 0
      %6527 = vmatpush1.bf16.msra.mxu0 %v6264
      %6528 = vmatprep.subr.bf16.mxu0 0
      %6529 = vmatpush1.bf16.msra.mxu0 %v6265
      %6530 = vmatprep.subr.bf16.mxu0 0
      %6531 = vmatpush1.bf16.msra.mxu0 %v6266
      %6532 = vmatprep.subr.bf16.mxu0 0
      %6533 = vmatpush1.bf16.msra.mxu0 %v6267
      %6534 = vmatprep.subr.bf16.mxu0 0
      %6535 = vmatpush1.bf16.msra.mxu0 %v6268
      %6536 = vmatprep.subr.bf16.mxu0 0
      %6537 = vmatpush1.bf16.msra.mxu0 %v6269
      %6538 = vmatprep.subr.bf16.mxu0 0
      %6539 = vmatpush1.bf16.msra.mxu0 %v6270
      %6540 = vmatprep.subr.bf16.mxu0 0
      %6541 = vmatpush1.bf16.msra.mxu0 %v6271
      %6542 = vmatprep.subr.bf16.mxu0 0
      %6543 = vmatpush1.bf16.msra.mxu0 %v6272
      %6544 = vmatprep.subr.bf16.mxu0 0
      %6545 = vmatpush1.bf16.msra.mxu0 %v6273
      %6546 = vmatprep.mubr.bf16.mxu0 %v5593
      %6547 = vmatmul.mubr.bf16.gmra.mrb[0].mxu0 %v5592
      %v6548 = vpop.f32.mrb[0].mxu0
      %v6549 = vadd.f32 %v6509, %v6548
      %v6550 = vpop.f32.mrb[0].mxu0
      %v6551 = vpop.f32.mrb[0].mxu0
      %v6552 = vpop.f32.mrb[0].mxu0
      %6553 = vdwg.mxu0
      %6554 = vmatprep.subr.bf16.mxu0 0
      %6555 = vmatpush1.bf16.msra.mxu0 %v6274
      %6556 = vmatprep.subr.bf16.mxu0 0
      %6557 = vmatpush1.bf16.msra.mxu0 %v6275
      %6558 = vmatprep.subr.bf16.mxu0 0
      %6559 = vmatpush1.bf16.msra.mxu0 %v6276
      %6560 = vmatprep.subr.bf16.mxu0 0
      %6561 = vmatpush1.bf16.msra.mxu0 %v6277
      %6562 = vmatprep.subr.bf16.mxu0 0
      %6563 = vmatpush1.bf16.msra.mxu0 %v6278
      %6564 = vmatprep.subr.bf16.mxu0 0
      %6565 = vmatpush1.bf16.msra.mxu0 %v6279
      %6566 = vmatprep.subr.bf16.mxu0 0
      %6567 = vmatpush1.bf16.msra.mxu0 %v6280
      %6568 = vmatprep.subr.bf16.mxu0 0
      %6569 = vmatpush1.bf16.msra.mxu0 %v6281
      %6570 = vmatprep.subr.bf16.mxu0 0
      %6571 = vmatpush1.bf16.msra.mxu0 %v6282
      %6572 = vmatprep.subr.bf16.mxu0 0
      %6573 = vmatpush1.bf16.msra.mxu0 %v6283
      %6574 = vmatprep.subr.bf16.mxu0 0
      %6575 = vmatpush1.bf16.msra.mxu0 %v6284
      %6576 = vmatprep.subr.bf16.mxu0 0
      %6577 = vmatpush1.bf16.msra.mxu0 %v6285
      %6578 = vmatprep.subr.bf16.mxu0 0
      %6579 = vmatpush1.bf16.msra.mxu0 %v6286
      %6580 = vmatprep.subr.bf16.mxu0 0
      %6581 = vmatpush1.bf16.msra.mxu0 %v6287
      %6582 = vmatprep.subr.bf16.mxu0 0
      %6583 = vmatpush1.bf16.msra.mxu0 %v6288
      %6584 = vmatprep.subr.bf16.mxu0 0
      %6585 = vmatpush1.bf16.msra.mxu0 %v6289
      %6586 = vmatprep.mubr.bf16.mxu0 %v5595
      %6587 = vmatmul.mubr.bf16.gmra.mrb[0].mxu0 %v5594
      %v6588 = vpop.f32.mrb[0].mxu0
      %v6589 = vadd.f32 %v6549, %v6588
      %v6590 = vpop.f32.mrb[0].mxu0
      %v6591 = vpop.f32.mrb[0].mxu0
      %v6592 = vpop.f32.mrb[0].mxu0
      %6593 = vdwg.mxu0
      %6594 = vmatprep.subr.bf16.mxu0 0
      %6595 = vmatpush1.bf16.msra.mxu0 %v6290
      %6596 = vmatprep.subr.bf16.mxu0 0
      %6597 = vmatpush1.bf16.msra.mxu0 %v6291
      %6598 = vmatprep.subr.bf16.mxu0 0
      %6599 = vmatpush1.bf16.msra.mxu0 %v6292
      %6600 = vmatprep.subr.bf16.mxu0 0
      %6601 = vmatpush1.bf16.msra.mxu0 %v6293
      %6602 = vmatprep.subr.bf16.mxu0 0
      %6603 = vmatpush1.bf16.msra.mxu0 %v6294
      %6604 = vmatprep.subr.bf16.mxu0 0
      %6605 = vmatpush1.bf16.msra.mxu0 %v6295
      %6606 = vmatprep.subr.bf16.mxu0 0
      %6607 = vmatpush1.bf16.msra.mxu0 %v6296
      %6608 = vmatprep.subr.bf16.mxu0 0
      %6609 = vmatpush1.bf16.msra.mxu0 %v6297
      %6610 = vmatprep.subr.bf16.mxu0 0
      %6611 = vmatpush1.bf16.msra.mxu0 %v6298
      %6612 = vmatprep.subr.bf16.mxu0 0
      %6613 = vmatpush1.bf16.msra.mxu0 %v6299
      %6614 = vmatprep.subr.bf16.mxu0 0
      %6615 = vmatpush1.bf16.msra.mxu0 %v6300
      %6616 = vmatprep.subr.bf16.mxu0 0
      %6617 = vmatpush1.bf16.msra.mxu0 %v6301
      %6618 = vmatprep.subr.bf16.mxu0 0
      %6619 = vmatpush1.bf16.msra.mxu0 %v6302
      %6620 = vmatprep.subr.bf16.mxu0 0
      %6621 = vmatpush1.bf16.msra.mxu0 %v6303
      %6622 = vmatprep.subr.bf16.mxu0 0
      %6623 = vmatpush1.bf16.msra.mxu0 %v6304
      %6624 = vmatprep.subr.bf16.mxu0 0
      %6625 = vmatpush1.bf16.msra.mxu0 %v6305
      %6626 = vmatprep.mubr.bf16.mxu0 %v5597
      %6627 = vmatmul.mubr.bf16.gmra.mrb[0].mxu0 %v5596
      %v6628 = vpop.f32.mrb[0].mxu0
      %v6629 = vadd.f32 %v6589, %v6628
      %v6630 = vpop.f32.mrb[0].mxu0
      %v6631 = vpop.f32.mrb[0].mxu0
      %v6632 = vpop.f32.mrb[0].mxu0
      %6633 = vdwg.mxu0
      %6634 = vmatprep.subr.bf16.mxu0 0
      %6635 = vmatpush1.bf16.msra.mxu0 %v6306
      %6636 = vmatprep.subr.bf16.mxu0 0
      %6637 = vmatpush1.bf16.msra.mxu0 %v6307
      %6638 = vmatprep.subr.bf16.mxu0 0
      %6639 = vmatpush1.bf16.msra.mxu0 %v6308
      %6640 = vmatprep.subr.bf16.mxu0 0
      %6641 = vmatpush1.bf16.msra.mxu0 %v6309
      %6642 = vmatprep.subr.bf16.mxu0 0
      %6643 = vmatpush1.bf16.msra.mxu0 %v6310
      %6644 = vmatprep.subr.bf16.mxu0 0
      %6645 = vmatpush1.bf16.msra.mxu0 %v6311
      %6646 = vmatprep.subr.bf16.mxu0 0
      %6647 = vmatpush1.bf16.msra.mxu0 %v6312
      %6648 = vmatprep.subr.bf16.mxu0 0
      %6649 = vmatpush1.bf16.msra.mxu0 %v6313
      %6650 = vmatprep.subr.bf16.mxu0 0
      %6651 = vmatpush1.bf16.msra.mxu0 %v6314
      %6652 = vmatprep.subr.bf16.mxu0 0
      %6653 = vmatpush1.bf16.msra.mxu0 %v6315
      %6654 = vmatprep.subr.bf16.mxu0 0
      %6655 = vmatpush1.bf16.msra.mxu0 %v6316
      %6656 = vmatprep.subr.bf16.mxu0 0
      %6657 = vmatpush1.bf16.msra.mxu0 %v6317
      %6658 = vmatprep.subr.bf16.mxu0 0
      %6659 = vmatpush1.bf16.msra.mxu0 %v6318
      %6660 = vmatprep.subr.bf16.mxu0 0
      %6661 = vmatpush1.bf16.msra.mxu0 %v6319
      %6662 = vmatprep.subr.bf16.mxu0 0
      %6663 = vmatpush1.bf16.msra.mxu0 %v6320
      %6664 = vmatprep.subr.bf16.mxu0 0
      %6665 = vmatpush1.bf16.msra.mxu0 %v6321
      %6666 = vmatprep.mubr.bf16.mxu0 %v5599
      %6667 = vmatmul.mubr.bf16.gmra.mrb[0].mxu0 %v5598
      %v6668 = vpop.f32.mrb[0].mxu0
      %v6669 = vadd.f32 %v6629, %v6668
      %v6670 = vpop.f32.mrb[0].mxu0
      %v6671 = vpop.f32.mrb[0].mxu0
      %v6672 = vpop.f32.mrb[0].mxu0
      %6673 = vdwg.mxu0
      %6674 = vmatprep.subr.bf16.mxu0 0
      %6675 = vmatpush1.bf16.msra.mxu0 %v6322
      %6676 = vmatprep.subr.bf16.mxu0 0
      %6677 = vmatpush1.bf16.msra.mxu0 %v6323
      %6678 = vmatprep.subr.bf16.mxu0 0
      %6679 = vmatpush1.bf16.msra.mxu0 %v6324
      %6680 = vmatprep.subr.bf16.mxu0 0
      %6681 = vmatpush1.bf16.msra.mxu0 %v6325
      %6682 = vmatprep.subr.bf16.mxu0 0
      %6683 = vmatpush1.bf16.msra.mxu0 %v6326
      %6684 = vmatprep.subr.bf16.mxu0 0
      %6685 = vmatpush1.bf16.msra.mxu0 %v6327
      %6686 = vmatprep.subr.bf16.mxu0 0
      %6687 = vmatpush1.bf16.msra.mxu0 %v6328
      %6688 = vmatprep.subr.bf16.mxu0 0
      %6689 = vmatpush1.bf16.msra.mxu0 %v6329
      %6690 = vmatprep.subr.bf16.mxu0 0
      %6691 = vmatpush1.bf16.msra.mxu0 0
      %6692 = vmatprep.subr.bf16.mxu0 0
      %6693 = vmatpush1.bf16.msra.mxu0 0
      %6694 = vmatprep.subr.bf16.mxu0 0
      %6695 = vmatpush1.bf16.msra.mxu0 0
      %6696 = vmatprep.subr.bf16.mxu0 0
      %6697 = vmatpush1.bf16.msra.mxu0 0
      %6698 = vmatprep.subr.bf16.mxu0 0
      %6699 = vmatpush1.bf16.msra.mxu0 0
      %6700 = vmatprep.subr.bf16.mxu0 0
      %6701 = vmatpush1.bf16.msra.mxu0 0
      %6702 = vmatprep.subr.bf16.mxu0 0
      %6703 = vmatpush1.bf16.msra.mxu0 0
      %6704 = vmatprep.subr.bf16.mxu0 0
      %6705 = vmatpush1.bf16.msra.mxu0 0
      %6706 = vmatprep.mubr.bf16.mxu0 0
      %6707 = vmatmul.mubr.bf16.gmra.mrb[0].mxu0 %v5600
      %v6708 = vpop.f32.mrb[0].mxu0
      %v6709 = vadd.f32 %v6669, %v6708
      %v6710 = vpop.f32.mrb[0].mxu0
      %v6711 = vpop.f32.mrb[0].mxu0
      %v6712 = vpop.f32.mrb[0].mxu0
      %6713 = vdwg.mxu0
      %v6714 = vmax.f32 %v6709, 0.0
      %v6715 = vld [vmem:[%s9] sm:$0x1]
      %v6716 = vmul.f32 %v6714, %v6715
      %v6717 = vsel %vm400, %v6716, 0.0
      %6718 = vadd.xlane.f32.xlu0 %v6717
      %v6719 = vpop.xlane.xlu0 %6718
      %v6720 = vld [vmem:[#allocation9] sm:$0x1]
      %v6721 = vadd.f32 %v6719, %v6720
      %v6722 = vxor.u32 %v6721, 2147483648
      %v6723 = vmul.f32 %v6722, 1.442695
      %v6724 = vpow.pop %v6723
      %v6725 = vadd.f32 %v6724, 1.0
      %v6726 = vrcp.pop %v6725
      %v6727 = vmul.f32 1.0, %v6726
      %vm6728 = vcmask 0
      %6729 = vst.msk [vmem:[%s384] sm:$0x1] %vm6728, %v6727
      %p6730 = scmp.lt.s32.totalorder %s24, 1
      %s6731 = scalar_select %p6730, %s24, 1
      %s6732 = scalar_lea.vmem %s11, %s6731
      // Predicated region
      $region65: #{cnn_forward_pallas.1} parent=63 // pred_check
        %p6733 = pneg %p278
      $region66: #{cnn_forward_pallas.1} parent=63 // pred_check_branch
        %6735 = sbr.rel (%p6733) target = $region68
      $region67: #{cnn_forward_pallas.1} parent=63 // pred_region
        _
      $region68: #{cnn_forward_pallas.1} parent=63 // pred_fallthru
        _
    $region64: #{cnn_forward_pallas.1} parent=5 // pred_fallthru
      _
    %p6736 = scmp.le.s32.totalorder 2, %s19
    // Predicated region
    $region69: #{cnn_forward_pallas.1} parent=5 // pred_check
      %p6737 = pneg %p6736
    $region70: #{cnn_forward_pallas.1} parent=5 // pred_check_branch
      %6739 = sbr.rel (%p6737) target = $region72
    $region71: #{cnn_forward_pallas.1} parent=5 // pred_region
      %s6740 = ssub.s32 %s19, 2
      // Predicated region
      $region73: #{cnn_forward_pallas.1} parent=71 // pred_check
        %p6741 = pneg %p284
      $region74: #{cnn_forward_pallas.1} parent=71 // pred_check_branch
        %6743 = sbr.rel (%p6741) target = $region76
      $region75: #{cnn_forward_pallas.1} parent=71 // pred_region
        %p6744 = scmp.lt.s32.totalorder %s25, 1
        %s6745 = scalar_select %p6744, %s25, 1
        %s6746 = scalar_lea.vmem %s11, %s6745
      $region76: #{cnn_forward_pallas.1} parent=71 // pred_fallthru
        _
    $region72: #{cnn_forward_pallas.1} parent=5 // pred_fallthru
      _
  $region6: #{cnn_forward_pallas.1} parent=0 // loop_footer
    %s23 = sadd.s32 1, %s19
  $region7: #{cnn_forward_pallas.1} parent=0 // loop_footer_branch
    %18 = sbr.rel target = $region3
  $region8: #{cnn_forward_pallas.1} parent=0 // loop_exit
    _

</llo_original>
